<compile_context>
chip_gen: v7x
topology: tpu7x:2x2x1
jax: 0.10.0
libtpu: 0.0.40
codegen_flags: <defaults>
</compile_context>

<pallas_src>
import jax
import jax.numpy as jnp
import numpy as np
from jax.experimental import pallas as pl
from jax.experimental.pallas import tpu as pltpu

VMEM_SPEC = pl.BlockSpec(memory_space=pltpu.MemorySpace.VMEM)


# ------------------------------ Pallas kernel -------------------------------

def _year_gnn_kernel(x_ref, a_ref,
                     w1_ref, b1_ref, w2_ref, b2_ref, w3_ref, b3_ref,
                     s1l_ref, s1r_ref, s1b_ref,
                     s2l_ref, s2r_ref, s2b_ref,
                     s3l_ref, s3r_ref, s3b_ref,
                     wc1_ref, bc1_ref, wc2_ref, bc2_ref, wc3_ref, bc3_ref,
                     let_ref, lm_ref,
                     fe_ref, fm_ref, fet_ref, xml_ref, xmr_ref,
                     o_ref, act_pad_ref):
    hid = act_pad_ref.shape[1]
    r_sz = fe_ref.shape[0]                       # R = N * hidden
    pad = (act_pad_ref.shape[0] - r_sz) // 2     # == hidden (multiple of 8)

    # --------------- input Linear chain: linear1 -> linear2 -> linear3 -------
    t = jnp.dot(x_ref[...], w1_ref[...],
                preferred_element_type=jnp.float32) + b1_ref[...]
    t = jnp.dot(t, w2_ref[...],
                preferred_element_type=jnp.float32) + b2_ref[...]
    # linear3 (out_features=1) as multiply + lane reduction -> (N*L, 1).
    col = jnp.sum(t * w3_ref[...], axis=-1, keepdims=True) + b3_ref[...]
    # unflatten (N*L, 1) -> (N, L) with the precomputed one-hot selectors.
    x_nodes = jnp.dot(let_ref[...], col * lm_ref[...],
                      preferred_element_type=jnp.float32)

    # --------------------------------- SAGE ----------------------------------
    a = a_ref[...]                               # adjacency resident once, 6 reuses

    def sage(h, wl_ref_, wr_ref_, b_ref_):
        # PyG SAGEConv (mean): lin_l(mean_nbr(h)) + lin_r(h); two small matmuls.
        agg = jnp.dot(a, h, preferred_element_type=jnp.float32)
        return (jnp.dot(agg, wl_ref_[...], preferred_element_type=jnp.float32)
                + jnp.dot(h, wr_ref_[...], preferred_element_type=jnp.float32)
                + b_ref_[...])

    h = sage(x_nodes, s1l_ref, s1r_ref, s1b_ref)
    h = sage(h, s2l_ref, s2r_ref, s2b_ref)
    out_1 = sage(h, s2l_ref, s2r_ref, s2b_ref)   # (N, hid); sage2 reused as in torch

    # --------- Conv2d block on the (N, hid) image, flattened layout ----------
    # rows r = y*hid + x (R = N*hid), output channels on the lane axis.
    # TODO(synk): nn.Dropout between the convs is stochastic only in torch
    # train mode; implemented here as identity (eval / inference semantics).
    # (self.bn / self.relu are defined in the module but never used in forward.)
    fm = fm_ref[...]                             # (R, hid) one-hot of x = r % hid
    xm_l = xml_ref[...]                          # (R, hid) validity of the x-1 tap
    xm_r = xmr_ref[...]                          # (R, hid) validity of the x+1 tap

    # Zero only the pad strips once; interior rows are overwritten before reads.
    act_pad_ref[0:pad, :] = jnp.zeros((pad, hid), jnp.float32)
    act_pad_ref[pad + r_sz:pad + r_sz + pad, :] = jnp.zeros((pad, hid), jnp.float32)

    def taps9():
        # 9 conv taps (ky-major, then kx) of the image in act_pad_ref's interior.
        # ky slabs are 8-aligned slices; kx = +-1 taps come from an XLU sublane
        # roll + precomputed validity masks (no misaligned sublane slices).
        out = []
        for ky in range(3):
            base = pad + (ky - 1) * hid          # 0, pad, 2*pad: all % 8 == 0
            slab = act_pad_ref[base:base + r_sz, :]
            out.append(pltpu.roll(slab, shift=1, axis=0) * xm_l)          # dx = -1
            out.append(slab)                                              # dx =  0
            out.append(pltpu.roll(slab, shift=r_sz - 1, axis=0) * xm_r)   # dx = +1
        return out

    # flatten (N, hid) -> (R, 1), broadcast across hid lanes, store ONCE.
    f_img = jnp.sum(jnp.dot(fe_ref[...], out_1,
                            preferred_element_type=jnp.float32) * fm,
                    axis=-1, keepdims=True)
    act_pad_ref[pad:pad + r_sz, :] = jnp.broadcast_to(f_img, (r_sz, hid))

    # cnn1 (C_in = 1): 9 VPU MACs against sublane-broadcast weight rows.
    w1r = wc1_ref[...]                           # (9, hid)
    t1 = taps9()
    acc = t1[0] * w1r[0:1, :]
    for tt in range(1, 9):
        acc = acc + t1[tt] * w1r[tt:tt + 1, :]
    act1 = acc + bc1_ref[...]                    # (R, hid)

    # cnn2: 9 accumulated (R, hid) @ (hid, hid) matmuls (no 288-lane concat).
    act_pad_ref[pad:pad + r_sz, :] = act1
    t2 = taps9()
    acc = jnp.dot(t2[0], wc2_ref[0], preferred_element_type=jnp.float32)
    for tt in range(1, 9):
        acc = acc + jnp.dot(t2[tt], wc2_ref[tt],
                            preferred_element_type=jnp.float32)
    act2 = acc + bc2_ref[...]                    # (R, hid)

    # cnn3 (C_out = 1): 9 VPU MACs + one 32-lane reduction.
    act_pad_ref[pad:pad + r_sz, :] = act2
    w3r = wc3_ref[...]                           # (9, hid)
    t3 = taps9()
    acc = t3[0] * w3r[0:1, :]
    for tt in range(1, 9):
        acc = acc + t3[tt] * w3r[tt:tt + 1, :]
    f_out = jnp.sum(acc, axis=-1, keepdims=True) + bc3_ref[...]   # (R, 1)

    # unflatten (R, 1) -> (N, hid), residual, shared linear2.
    conv_out = jnp.dot(fet_ref[...], f_out * fm,
                       preferred_element_type=jnp.float32)
    out = conv_out + out_1
    out = jnp.dot(out, w2_ref[...],
                  preferred_element_type=jnp.float32) + b2_ref[...]

    # ------------------------------ SAGE block 2 ------------------------------
    h = sage(out, s2l_ref, s2r_ref, s2b_ref)
    h = sage(h, s2l_ref, s2r_ref, s2b_ref)
    o_ref[...] = sage(h, s3l_ref, s3r_ref, s3b_ref)   # (N, output_dim)


# ------------------------------- forward glue -------------------------------

def year_gnn_forward(params, x, a_norm):
    n, c, l = x.shape                            # c == 8 (linear1 in_features)
    hid = params["lin1_w"].shape[1]
    out_dim = params["sage3_wl"].shape[1]
    assert hid % 8 == 0, "hidden_dim must be a multiple of 8 for the conv layout"
    r_sz = n * hid
    pad = hid                                    # keeps ky slab offsets 8-aligned

    # x.permute(0, 2, 1) then flatten node/position rows (layout plumbing only).
    x2d = jnp.transpose(x, (0, 2, 1)).reshape(n * l, c)

    args = (
        x2d, a_norm,
        params["lin1_w"], params["lin1_b"], params["lin2_w"], params["lin2_b"],
        params["lin3_w"], params["lin3_b"],
        params["sage1_wl"], params["sage1_wr"], params["sage1_b"],
        params["sage2_wl"], params["sage2_wr"], params["sage2_b"],
        params["sage3_wl"], params["sage3_wr"], params["sage3_b"],
        params["cnn1_w"], params["cnn1_b"], params["cnn2_w"], params["cnn2_b"],
        params["cnn3_w"], params["cnn3_b"],
        params["lin_et"], params["lin_m"],
        params["flat_e"], params["flat_m"], params["flat_et"],
        params["xmask_l"], params["xmask_r"],
    )
    return pl.pallas_call(
        _year_gnn_kernel,
        out_shape=jax.ShapeDtypeStruct((n, out_dim), jnp.float32),
        in_specs=[VMEM_SPEC] * len(args),
        out_specs=VMEM_SPEC,
        scratch_shapes=[pltpu.VMEM((r_sz + 2 * pad, hid), jnp.float32)],
        # Guardrail for v7x (64 MiB physical / 32 MiB scoped default) and for
        # scaling to bigger graphs; at N=8 the resident footprint is < 1 MiB.
        compiler_params=pltpu.CompilerParams(vmem_limit_bytes=32 * 1024 * 1024),
    )(*args)


def build_mean_adj(edge_index, num_nodes):
    """Dense row-normalized adjacency: A[i, j] = 1/deg_in(i) for edge j->i."""
    src, dst = edge_index[0], edge_index[1]
    a = jnp.zeros((num_nodes, num_nodes), jnp.float32).at[dst, src].add(1.0)
    deg = a.sum(axis=1, keepdims=True)
    return a / jnp.maximum(deg, 1.0)


# ------------------------------ params / packing ----------------------------

def init_raw_params(key, input_dim, hidden_dim, output_dim, num_edges):
    ks = iter(jax.random.split(key, 32))

    def unif(k, shape, fan_in):
        lim = 1.0 / float(np.sqrt(fan_in))
        return jax.random.uniform(k, shape, jnp.float32, -lim, lim)

    raw = {}
    raw["linear1_w"] = unif(next(ks), (hidden_dim, 8), 8)
    raw["linear1_b"] = unif(next(ks), (hidden_dim,), 8)
    raw["linear2_w"] = unif(next(ks), (hidden_dim, hidden_dim), hidden_dim)
    raw["linear2_b"] = unif(next(ks), (hidden_dim,), hidden_dim)
    raw["linear3_w"] = unif(next(ks), (1, hidden_dim), hidden_dim)
    raw["linear3_b"] = unif(next(ks), (1,), hidden_dim)

    sage_dims = [(input_dim, hidden_dim), (hidden_dim, hidden_dim),
                 (hidden_dim, output_dim)]
    for i, (ci, co) in enumerate(sage_dims, start=1):
        raw[f"sage{i}_wl"] = unif(next(ks), (co, ci), ci)   # lin_l (with bias)
        raw[f"sage{i}_bl"] = unif(next(ks), (co,), ci)
        raw[f"sage{i}_wr"] = unif(next(ks), (co, ci), ci)   # lin_r (no bias)

    conv_dims = [(1, hidden_dim), (hidden_dim, hidden_dim), (hidden_dim, 1)]
    for i, (ci, co) in enumerate(conv_dims, start=1):
        raw[f"cnn{i}_w"] = unif(next(ks), (co, ci, 3, 3), ci * 9)
        raw[f"cnn{i}_b"] = unif(next(ks), (co,), ci * 9)

    # nn.Parameter(edge_weight): present in the module but unused in forward.
    raw["edge_weight"] = jnp.ones((num_edges,), jnp.float32)
    return raw


def prepare_params(raw, num_nodes, input_dim, hidden_dim):
    """Pack torch-layout params into kernel-ready form (done once, hoisted)."""
    p = {}
    # linear chain (linear2 is shared with the post-conv linear2).
    p["lin1_w"] = raw["linear1_w"].T
    p["lin1_b"] = raw["linear1_b"].reshape(1, -1)
    p["lin2_w"] = raw["linear2_w"].T
    p["lin2_b"] = raw["linear2_b"].reshape(1, -1)
    p["lin3_w"] = raw["linear3_w"].reshape(1, hidden_dim)
    p["lin3_b"] = raw["linear3_b"].reshape(1, 1)

    # SAGEConv weights, unstacked and transposed (two matmuls per layer).
    for i in (1, 2, 3):
        p[f"sage{i}_wl"] = raw[f"sage{i}_wl"].T
        p[f"sage{i}_wr"] = raw[f"sage{i}_wr"].T
        p[f"sage{i}_b"] = raw[f"sage{i}_bl"].reshape(1, -1)

    # Conv2d weights (tap order: ky-major, then kx).
    p["cnn1_w"] = jnp.transpose(raw["cnn1_w"], (2, 3, 1, 0)).reshape(
        9, hidden_dim)                                       # (9, C_out)
    p["cnn1_b"] = raw["cnn1_b"].reshape(1, -1)
    p["cnn2_w"] = jnp.transpose(raw["cnn2_w"], (2, 3, 1, 0)).reshape(
        9, hidden_dim, hidden_dim)                           # (9, C_in, C_out)
    p["cnn2_b"] = raw["cnn2_b"].reshape(1, -1)
    p["cnn3_w"] = jnp.transpose(raw["cnn3_w"], (2, 3, 1, 0)).reshape(
        9, hidden_dim)                                       # (9, C_in)
    p["cnn3_b"] = raw["cnn3_b"].reshape(1, 1)

    # Flatten / unflatten selectors for the conv image (R = N*hid rows).
    w = hidden_dim
    r = jnp.arange(num_nodes * w)
    p["flat_e"] = (r[:, None] // w == jnp.arange(num_nodes)[None, :]
                   ).astype(jnp.float32)                     # (R, N)
    p["flat_m"] = (r[:, None] % w == jnp.arange(w)[None, :]
                   ).astype(jnp.float32)                     # (R, hid)
    p["flat_et"] = p["flat_e"].T                             # (N, R)
    xcoord = r % w
    p["xmask_l"] = jnp.broadcast_to(
        (xcoord >= 1).astype(jnp.float32)[:, None], (num_nodes * w, w))
    p["xmask_r"] = jnp.broadcast_to(
        (xcoord <= w - 2).astype(jnp.float32)[:, None], (num_nodes * w, w))

    # Unflatten selectors for the linear-chain output (N*L, 1) -> (N, L).
    rl = jnp.arange(num_nodes * input_dim)
    p["lin_et"] = (rl[None, :] // input_dim == jnp.arange(num_nodes)[:, None]
                   ).astype(jnp.float32)                     # (N, N*L)
    p["lin_m"] = (rl[:, None] % input_dim == jnp.arange(input_dim)[None, :]
                  ).astype(jnp.float32)                      # (N*L, L)

    p["edge_weight"] = raw["edge_weight"]                    # unused in forward
    return p


# --------------------------- numpy (f64) reference --------------------------

def _np_conv3x3(img, w, b):
    cin, h, wd = img.shape
    cout = w.shape[0]
    padded = np.zeros((cin, h + 2, wd + 2), np.float64)
    padded[:, 1:h + 1, 1:wd + 1] = img
    out = np.zeros((cout, h, wd), np.float64)
    for ky in range(3):
        for kx in range(3):
            patch = padded[:, ky:ky + h, kx:kx + wd]
            out += np.einsum("oc,chw->ohw", w[:, :, ky, kx], patch)
    return out + b[:, None, None]


def reference_forward_np(raw, x, a_norm):
    g = lambda k: np.asarray(raw[k], np.float64)
    xp = np.asarray(x, np.float64)
    a = np.asarray(a_norm, np.float64)

    t = np.transpose(xp, (0, 2, 1))
    t = t @ g("linear1_w").T + g("linear1_b")
    t = t @ g("linear2_w").T + g("linear2_b")
    t = t @ g("linear3_w").T + g("linear3_b")
    xf = t[..., 0]

    def sage(h, i):
        return (a @ h) @ g(f"sage{i}_wl").T + g(f"sage{i}_bl") + h @ g(f"sage{i}_wr").T

    h = sage(xf, 1)
    h = sage(h, 2)
    h = sage(h, 2)
    out_1 = h
    o = _np_conv3x3(h[None, :, :], g("cnn1_w"), g("cnn1_b"))
    o = _np_conv3x3(o, g("cnn2_w"), g("cnn2_b"))
    o = _np_conv3x3(o, g("cnn3_w"), g("cnn3_b"))
    out = o[0] + out_1
    out = out @ g("linear2_w").T + g("linear2_b")
    h = sage(out, 2)
    h = sage(h, 2)
    h = sage(h, 3)
    return h


if __name__ == "__main__":
    num_nodes, input_dim, hidden_dim, output_dim = 8, 16, 32, 4
    num_edges = 24

    key = jax.random.PRNGKey(0)
    k_x, k_e, k_p = jax.random.split(key, 3)

    # x is (num_nodes, 8, input_dim): channel dim 8 matches nn.Linear(8, hidden).
    x = jax.random.normal(k_x, (num_nodes, 8, input_dim), jnp.float32)
    edge_index = jax.random.randint(k_e, (2, num_edges), 0, num_nodes)

    raw = init_raw_params(k_p, input_dim, hidden_dim, output_dim, num_edges)
    params = prepare_params(raw, num_nodes, input_dim, hidden_dim)
    a_norm = build_mean_adj(edge_index, num_nodes)

    out = jax.jit(year_gnn_forward)(params, x, a_norm)
    out = jax.block_until_ready(out)
    assert out.shape == (num_nodes, output_dim), out.shape
    assert bool(jnp.all(jnp.isfinite(out)))

    ref = reference_forward_np(raw, np.asarray(x), np.asarray(a_norm))
    max_err = float(np.max(np.abs(np.asarray(out, np.float64) - ref)))
    tol = 1e-3 * float(np.max(np.abs(ref))) + 1e-5
    assert max_err <= tol, f"max|err|={max_err:.3e} tol={tol:.3e}"

    print("KERNEL_OK")
</pallas_src>

<mosaic_0001>
module attributes {stable_mosaic.version = 11 : i64} {
  func.func @_year_gnn_kernel(%arg0: memref<128x8xf32, #tpu.memory_space<vmem>>, %arg1: memref<8x8xf32, #tpu.memory_space<vmem>>, %arg2: memref<8x32xf32, #tpu.memory_space<vmem>>, %arg3: memref<1x32xf32, #tpu.memory_space<vmem>>, %arg4: memref<32x32xf32, #tpu.memory_space<vmem>>, %arg5: memref<1x32xf32, #tpu.memory_space<vmem>>, %arg6: memref<1x32xf32, #tpu.memory_space<vmem>>, %arg7: memref<1x1xf32, #tpu.memory_space<vmem>>, %arg8: memref<16x32xf32, #tpu.memory_space<vmem>>, %arg9: memref<16x32xf32, #tpu.memory_space<vmem>>, %arg10: memref<1x32xf32, #tpu.memory_space<vmem>>, %arg11: memref<32x32xf32, #tpu.memory_space<vmem>>, %arg12: memref<32x32xf32, #tpu.memory_space<vmem>>, %arg13: memref<1x32xf32, #tpu.memory_space<vmem>>, %arg14: memref<32x4xf32, #tpu.memory_space<vmem>>, %arg15: memref<32x4xf32, #tpu.memory_space<vmem>>, %arg16: memref<1x4xf32, #tpu.memory_space<vmem>>, %arg17: memref<9x32xf32, #tpu.memory_space<vmem>>, %arg18: memref<1x32xf32, #tpu.memory_space<vmem>>, %arg19: memref<9x32x32xf32, #tpu.memory_space<vmem>>, %arg20: memref<1x32xf32, #tpu.memory_space<vmem>>, %arg21: memref<9x32xf32, #tpu.memory_space<vmem>>, %arg22: memref<1x1xf32, #tpu.memory_space<vmem>>, %arg23: memref<8x128xf32, #tpu.memory_space<vmem>>, %arg24: memref<128x16xf32, #tpu.memory_space<vmem>>, %arg25: memref<256x8xf32, #tpu.memory_space<vmem>>, %arg26: memref<256x32xf32, #tpu.memory_space<vmem>>, %arg27: memref<8x256xf32, #tpu.memory_space<vmem>>, %arg28: memref<256x32xf32, #tpu.memory_space<vmem>>, %arg29: memref<256x32xf32, #tpu.memory_space<vmem>>, %arg30: memref<8x4xf32, #tpu.memory_space<vmem>>, %arg31: memref<320x32xf32, #tpu.memory_space<vmem>>) attributes {dimension_semantics = [], scalar_prefetch = 0 : i64, scratch_operands = 1 : i64, tpu.core_type = #tpu.core_type<tc>} {
    %c0 = arith.constant 0 : index
    %c0_0 = arith.constant 0 : index
    %0 = vector.load %arg0[%c0, %c0_0] : memref<128x8xf32, #tpu.memory_space<vmem>>, vector<128x8xf32>
    %c0_1 = arith.constant 0 : index
    %c0_2 = arith.constant 0 : index
    %1 = vector.load %arg2[%c0_1, %c0_2] : memref<8x32xf32, #tpu.memory_space<vmem>>, vector<8x32xf32>
    %cst = arith.constant dense<0.000000e+00> : vector<128x32xf32>
    %2 = tpu.matmul %0, %1, %cst {dimension_numbers = #tpu.dot_dimension_numbers<[1], [0], [0], [1], [0, 0, 1, 1], [], []>} : vector<128x8xf32>, vector<8x32xf32>, vector<128x32xf32> -> vector<128x32xf32>
    %c0_3 = arith.constant 0 : index
    %c0_4 = arith.constant 0 : index
    %3 = vector.load %arg3[%c0_3, %c0_4] : memref<1x32xf32, #tpu.memory_space<vmem>>, vector<1x32xf32>
    %4 = vector.broadcast %3 : vector<1x32xf32> to vector<128x32xf32>
    %5 = arith.addf %2, %4 : vector<128x32xf32>
    %c0_5 = arith.constant 0 : index
    %c0_6 = arith.constant 0 : index
    %6 = vector.load %arg4[%c0_5, %c0_6] : memref<32x32xf32, #tpu.memory_space<vmem>>, vector<32x32xf32>
    %cst_7 = arith.constant dense<0.000000e+00> : vector<128x32xf32>
    %7 = tpu.matmul %5, %6, %cst_7 {dimension_numbers = #tpu.dot_dimension_numbers<[1], [0], [0], [1], [0, 0, 1, 1], [], []>} : vector<128x32xf32>, vector<32x32xf32>, vector<128x32xf32> -> vector<128x32xf32>
    %c0_8 = arith.constant 0 : index
    %c0_9 = arith.constant 0 : index
    %8 = vector.load %arg5[%c0_8, %c0_9] : memref<1x32xf32, #tpu.memory_space<vmem>>, vector<1x32xf32>
    %9 = vector.broadcast %8 : vector<1x32xf32> to vector<128x32xf32>
    %10 = arith.addf %7, %9 : vector<128x32xf32>
    %c0_10 = arith.constant 0 : index
    %c0_11 = arith.constant 0 : index
    %11 = vector.load %arg6[%c0_10, %c0_11] : memref<1x32xf32, #tpu.memory_space<vmem>>, vector<1x32xf32>
    %12 = vector.broadcast %11 : vector<1x32xf32> to vector<128x32xf32>
    %13 = arith.mulf %10, %12 : vector<128x32xf32>
    %cst_12 = arith.constant dense<0.000000e+00> : vector<128xf32>
    %14 = vector.multi_reduction <add>, %13, %cst_12 [1] : vector<128x32xf32> to vector<128xf32>
    %15 = vector.shape_cast %14 : vector<128xf32> to vector<128x1xf32>
    %c0_13 = arith.constant 0 : index
    %c0_14 = arith.constant 0 : index
    %16 = vector.load %arg7[%c0_13, %c0_14] : memref<1x1xf32, #tpu.memory_space<vmem>>, vector<1x1xf32>
    %17 = vector.broadcast %16 : vector<1x1xf32> to vector<128x1xf32>
    %18 = arith.addf %15, %17 : vector<128x1xf32>
    %c0_15 = arith.constant 0 : index
    %c0_16 = arith.constant 0 : index
    %19 = vector.load %arg23[%c0_15, %c0_16] : memref<8x128xf32, #tpu.memory_space<vmem>>, vector<8x128xf32>
    %c0_17 = arith.constant 0 : index
    %c0_18 = arith.constant 0 : index
    %20 = vector.load %arg24[%c0_17, %c0_18] : memref<128x16xf32, #tpu.memory_space<vmem>>, vector<128x16xf32>
    %21 = vector.broadcast %18 : vector<128x1xf32> to vector<128x16xf32>
    %22 = arith.mulf %21, %20 : vector<128x16xf32>
    %cst_19 = arith.constant dense<0.000000e+00> : vector<8x16xf32>
    %23 = tpu.matmul %19, %22, %cst_19 {dimension_numbers = #tpu.dot_dimension_numbers<[1], [0], [0], [1], [0, 0, 1, 1], [], []>} : vector<8x128xf32>, vector<128x16xf32>, vector<8x16xf32> -> vector<8x16xf32>
    %c0_20 = arith.constant 0 : index
    %c0_21 = arith.constant 0 : index
    %24 = vector.load %arg1[%c0_20, %c0_21] : memref<8x8xf32, #tpu.memory_space<vmem>>, vector<8x8xf32>
    %cst_22 = arith.constant dense<0.000000e+00> : vector<8x16xf32>
    %25 = tpu.matmul %24, %23, %cst_22 {dimension_numbers = #tpu.dot_dimension_numbers<[1], [0], [0], [1], [0, 0, 1, 1], [], []>} : vector<8x8xf32>, vector<8x16xf32>, vector<8x16xf32> -> vector<8x16xf32>
    %c0_23 = arith.constant 0 : index
    %c0_24 = arith.constant 0 : index
    %26 = vector.load %arg8[%c0_23, %c0_24] : memref<16x32xf32, #tpu.memory_space<vmem>>, vector<16x32xf32>
    %cst_25 = arith.constant dense<0.000000e+00> : vector<8x32xf32>
    %27 = tpu.matmul %25, %26, %cst_25 {dimension_numbers = #tpu.dot_dimension_numbers<[1], [0], [0], [1], [0, 0, 1, 1], [], []>} : vector<8x16xf32>, vector<16x32xf32>, vector<8x32xf32> -> vector<8x32xf32>
    %c0_26 = arith.constant 0 : index
    %c0_27 = arith.constant 0 : index
    %28 = vector.load %arg9[%c0_26, %c0_27] : memref<16x32xf32, #tpu.memory_space<vmem>>, vector<16x32xf32>
    %cst_28 = arith.constant dense<0.000000e+00> : vector<8x32xf32>
    %29 = tpu.matmul %23, %28, %cst_28 {dimension_numbers = #tpu.dot_dimension_numbers<[1], [0], [0], [1], [0, 0, 1, 1], [], []>} : vector<8x16xf32>, vector<16x32xf32>, vector<8x32xf32> -> vector<8x32xf32>
    %30 = arith.addf %27, %29 : vector<8x32xf32>
    %c0_29 = arith.constant 0 : index
    %c0_30 = arith.constant 0 : index
    %31 = vector.load %arg10[%c0_29, %c0_30] : memref<1x32xf32, #tpu.memory_space<vmem>>, vector<1x32xf32>
    %32 = vector.broadcast %31 : vector<1x32xf32> to vector<8x32xf32>
    %33 = arith.addf %30, %32 : vector<8x32xf32>
    %cst_31 = arith.constant dense<0.000000e+00> : vector<8x32xf32>
    %34 = tpu.matmul %24, %33, %cst_31 {dimension_numbers = #tpu.dot_dimension_numbers<[1], [0], [0], [1], [0, 0, 1, 1], [], []>} : vector<8x8xf32>, vector<8x32xf32>, vector<8x32xf32> -> vector<8x32xf32>
    %c0_32 = arith.constant 0 : index
    %c0_33 = arith.constant 0 : index
    %35 = vector.load %arg11[%c0_32, %c0_33] : memref<32x32xf32, #tpu.memory_space<vmem>>, vector<32x32xf32>
    %cst_34 = arith.constant dense<0.000000e+00> : vector<8x32xf32>
    %36 = tpu.matmul %34, %35, %cst_34 {dimension_numbers = #tpu.dot_dimension_numbers<[1], [0], [0], [1], [0, 0, 1, 1], [], []>} : vector<8x32xf32>, vector<32x32xf32>, vector<8x32xf32> -> vector<8x32xf32>
    %c0_35 = arith.constant 0 : index
    %c0_36 = arith.constant 0 : index
    %37 = vector.load %arg12[%c0_35, %c0_36] : memref<32x32xf32, #tpu.memory_space<vmem>>, vector<32x32xf32>
    %cst_37 = arith.constant dense<0.000000e+00> : vector<8x32xf32>
    %38 = tpu.matmul %33, %37, %cst_37 {dimension_numbers = #tpu.dot_dimension_numbers<[1], [0], [0], [1], [0, 0, 1, 1], [], []>} : vector<8x32xf32>, vector<32x32xf32>, vector<8x32xf32> -> vector<8x32xf32>
    %39 = arith.addf %36, %38 : vector<8x32xf32>
    %c0_38 = arith.constant 0 : index
    %c0_39 = arith.constant 0 : index
    %40 = vector.load %arg13[%c0_38, %c0_39] : memref<1x32xf32, #tpu.memory_space<vmem>>, vector<1x32xf32>
    %41 = vector.broadcast %40 : vector<1x32xf32> to vector<8x32xf32>
    %42 = arith.addf %39, %41 : vector<8x32xf32>
    %cst_40 = arith.constant dense<0.000000e+00> : vector<8x32xf32>
    %43 = tpu.matmul %24, %42, %cst_40 {dimension_numbers = #tpu.dot_dimension_numbers<[1], [0], [0], [1], [0, 0, 1, 1], [], []>} : vector<8x8xf32>, vector<8x32xf32>, vector<8x32xf32> -> vector<8x32xf32>
    %c0_41 = arith.constant 0 : index
    %c0_42 = arith.constant 0 : index
    %44 = vector.load %arg11[%c0_41, %c0_42] : memref<32x32xf32, #tpu.memory_space<vmem>>, vector<32x32xf32>
    %cst_43 = arith.constant dense<0.000000e+00> : vector<8x32xf32>
    %45 = tpu.matmul %43, %44, %cst_43 {dimension_numbers = #tpu.dot_dimension_numbers<[1], [0], [0], [1], [0, 0, 1, 1], [], []>} : vector<8x32xf32>, vector<32x32xf32>, vector<8x32xf32> -> vector<8x32xf32>
    %c0_44 = arith.constant 0 : index
    %c0_45 = arith.constant 0 : index
    %46 = vector.load %arg12[%c0_44, %c0_45] : memref<32x32xf32, #tpu.memory_space<vmem>>, vector<32x32xf32>
    %cst_46 = arith.constant dense<0.000000e+00> : vector<8x32xf32>
    %47 = tpu.matmul %42, %46, %cst_46 {dimension_numbers = #tpu.dot_dimension_numbers<[1], [0], [0], [1], [0, 0, 1, 1], [], []>} : vector<8x32xf32>, vector<32x32xf32>, vector<8x32xf32> -> vector<8x32xf32>
    %48 = arith.addf %45, %47 : vector<8x32xf32>
    %c0_47 = arith.constant 0 : index
    %c0_48 = arith.constant 0 : index
    %49 = vector.load %arg13[%c0_47, %c0_48] : memref<1x32xf32, #tpu.memory_space<vmem>>, vector<1x32xf32>
    %50 = vector.broadcast %49 : vector<1x32xf32> to vector<8x32xf32>
    %51 = arith.addf %48, %50 : vector<8x32xf32>
    %c0_49 = arith.constant 0 : index
    %c0_50 = arith.constant 0 : index
    %52 = vector.load %arg26[%c0_49, %c0_50] : memref<256x32xf32, #tpu.memory_space<vmem>>, vector<256x32xf32>
    %c0_51 = arith.constant 0 : index
    %c0_52 = arith.constant 0 : index
    %53 = vector.load %arg28[%c0_51, %c0_52] : memref<256x32xf32, #tpu.memory_space<vmem>>, vector<256x32xf32>
    %c0_53 = arith.constant 0 : index
    %c0_54 = arith.constant 0 : index
    %54 = vector.load %arg29[%c0_53, %c0_54] : memref<256x32xf32, #tpu.memory_space<vmem>>, vector<256x32xf32>
    %cst_55 = arith.constant 0.000000e+00 : f32
    %55 = vector.broadcast %cst_55 : f32 to vector<32x32xf32>
    %c0_56 = arith.constant 0 : index
    %c0_57 = arith.constant 0 : index
    %56 = vector.load %arg31[%c0_56, %c0_57] : memref<320x32xf32, #tpu.memory_space<vmem>>, vector<32x32xf32>
    tpu.vector_store %arg31[%c0_56, %c0_57], %55 {strides = array<i32>} : memref<320x32xf32, #tpu.memory_space<vmem>>, vector<32x32xf32>,
    %cst_58 = arith.constant 0.000000e+00 : f32
    %57 = vector.broadcast %cst_58 : f32 to vector<32x32xf32>
    %c288 = arith.constant 288 : index
    %c0_59 = arith.constant 0 : index
    %58 = vector.load %arg31[%c288, %c0_59] : memref<320x32xf32, #tpu.memory_space<vmem>>, vector<32x32xf32>
    tpu.vector_store %arg31[%c288, %c0_59], %57 {strides = array<i32>} : memref<320x32xf32, #tpu.memory_space<vmem>>, vector<32x32xf32>,
    %c0_60 = arith.constant 0 : index
    %c0_61 = arith.constant 0 : index
    %59 = vector.load %arg25[%c0_60, %c0_61] : memref<256x8xf32, #tpu.memory_space<vmem>>, vector<256x8xf32>
    %cst_62 = arith.constant dense<0.000000e+00> : vector<256x32xf32>
    %60 = tpu.matmul %59, %51, %cst_62 {dimension_numbers = #tpu.dot_dimension_numbers<[1], [0], [0], [1], [0, 0, 1, 1], [], []>} : vector<256x8xf32>, vector<8x32xf32>, vector<256x32xf32> -> vector<256x32xf32>
    %61 = arith.mulf %60, %52 : vector<256x32xf32>
    %cst_63 = arith.constant dense<0.000000e+00> : vector<256xf32>
    %62 = vector.multi_reduction <add>, %61, %cst_63 [1] : vector<256x32xf32> to vector<256xf32>
    %63 = vector.shape_cast %62 : vector<256xf32> to vector<256x1xf32>
    %64 = vector.shape_cast %63 : vector<256x1xf32> to vector<256x1xf32>
    %65 = vector.broadcast %64 : vector<256x1xf32> to vector<256x32xf32>
    %c32 = arith.constant 32 : index
    %c0_64 = arith.constant 0 : index
    %66 = vector.load %arg31[%c32, %c0_64] : memref<320x32xf32, #tpu.memory_space<vmem>>, vector<256x32xf32>
    tpu.vector_store %arg31[%c32, %c0_64], %65 {strides = array<i32>} : memref<320x32xf32, #tpu.memory_space<vmem>>, vector<256x32xf32>,
    %c0_65 = arith.constant 0 : index
    %c0_66 = arith.constant 0 : index
    %67 = vector.load %arg17[%c0_65, %c0_66] : memref<9x32xf32, #tpu.memory_space<vmem>>, vector<9x32xf32>
    %c0_67 = arith.constant 0 : index
    %c0_68 = arith.constant 0 : index
    %68 = vector.load %arg31[%c0_67, %c0_68] : memref<320x32xf32, #tpu.memory_space<vmem>>, vector<256x32xf32>
    %c1_i32 = arith.constant 1 : i32
    %69 = tpu.dynamic_rotate %68 by %c1_i32 dim 0 : vector<256x32xf32>, i32 -> vector<256x32xf32>
    %70 = arith.mulf %69, %53 : vector<256x32xf32>
    %c255_i32 = arith.constant 255 : i32
    %71 = tpu.dynamic_rotate %68 by %c255_i32 dim 0 : vector<256x32xf32>, i32 -> vector<256x32xf32>
    %72 = arith.mulf %71, %54 : vector<256x32xf32>
    %c32_69 = arith.constant 32 : index
    %c0_70 = arith.constant 0 : index
    %73 = vector.load %arg31[%c32_69, %c0_70] : memref<320x32xf32, #tpu.memory_space<vmem>>, vector<256x32xf32>
    %c1_i32_71 = arith.constant 1 : i32
    %74 = tpu.dynamic_rotate %73 by %c1_i32_71 dim 0 : vector<256x32xf32>, i32 -> vector<256x32xf32>
    %75 = arith.mulf %74, %53 : vector<256x32xf32>
    %c255_i32_72 = arith.constant 255 : i32
    %76 = tpu.dynamic_rotate %73 by %c255_i32_72 dim 0 : vector<256x32xf32>, i32 -> vector<256x32xf32>
    %77 = arith.mulf %76, %54 : vector<256x32xf32>
    %c64 = arith.constant 64 : index
    %c0_73 = arith.constant 0 : index
    %78 = vector.load %arg31[%c64, %c0_73] : memref<320x32xf32, #tpu.memory_space<vmem>>, vector<256x32xf32>
    %c1_i32_74 = arith.constant 1 : i32
    %79 = tpu.dynamic_rotate %78 by %c1_i32_74 dim 0 : vector<256x32xf32>, i32 -> vector<256x32xf32>
    %80 = arith.mulf %79, %53 : vector<256x32xf32>
    %c255_i32_75 = arith.constant 255 : i32
    %81 = tpu.dynamic_rotate %78 by %c255_i32_75 dim 0 : vector<256x32xf32>, i32 -> vector<256x32xf32>
    %82 = arith.mulf %81, %54 : vector<256x32xf32>
    %83 = vector.extract_strided_slice %67 {offsets = [0, 0], sizes = [1, 32], strides = [1, 1]} : vector<9x32xf32> to vector<1x32xf32>
    %84 = vector.broadcast %83 : vector<1x32xf32> to vector<256x32xf32>
    %85 = arith.mulf %70, %84 : vector<256x32xf32>
    %86 = vector.extract_strided_slice %67 {offsets = [1, 0], sizes = [1, 32], strides = [1, 1]} : vector<9x32xf32> to vector<1x32xf32>
    %87 = vector.broadcast %86 : vector<1x32xf32> to vector<256x32xf32>
    %88 = arith.mulf %68, %87 : vector<256x32xf32>
    %89 = arith.addf %85, %88 : vector<256x32xf32>
    %90 = vector.extract_strided_slice %67 {offsets = [2, 0], sizes = [1, 32], strides = [1, 1]} : vector<9x32xf32> to vector<1x32xf32>
    %91 = vector.broadcast %90 : vector<1x32xf32> to vector<256x32xf32>
    %92 = arith.mulf %72, %91 : vector<256x32xf32>
    %93 = arith.addf %89, %92 : vector<256x32xf32>
    %94 = vector.extract_strided_slice %67 {offsets = [3, 0], sizes = [1, 32], strides = [1, 1]} : vector<9x32xf32> to vector<1x32xf32>
    %95 = vector.broadcast %94 : vector<1x32xf32> to vector<256x32xf32>
    %96 = arith.mulf %75, %95 : vector<256x32xf32>
    %97 = arith.addf %93, %96 : vector<256x32xf32>
    %98 = vector.extract_strided_slice %67 {offsets = [4, 0], sizes = [1, 32], strides = [1, 1]} : vector<9x32xf32> to vector<1x32xf32>
    %99 = vector.broadcast %98 : vector<1x32xf32> to vector<256x32xf32>
    %100 = arith.mulf %73, %99 : vector<256x32xf32>
    %101 = arith.addf %97, %100 : vector<256x32xf32>
    %102 = vector.extract_strided_slice %67 {offsets = [5, 0], sizes = [1, 32], strides = [1, 1]} : vector<9x32xf32> to vector<1x32xf32>
    %103 = vector.broadcast %102 : vector<1x32xf32> to vector<256x32xf32>
    %104 = arith.mulf %77, %103 : vector<256x32xf32>
    %105 = arith.addf %101, %104 : vector<256x32xf32>
    %106 = vector.extract_strided_slice %67 {offsets = [6, 0], sizes = [1, 32], strides = [1, 1]} : vector<9x32xf32> to vector<1x32xf32>
    %107 = vector.broadcast %106 : vector<1x32xf32> to vector<256x32xf32>
    %108 = arith.mulf %80, %107 : vector<256x32xf32>
    %109 = arith.addf %105, %108 : vector<256x32xf32>
    %110 = vector.extract_strided_slice %67 {offsets = [7, 0], sizes = [1, 32], strides = [1, 1]} : vector<9x32xf32> to vector<1x32xf32>
    %111 = vector.broadcast %110 : vector<1x32xf32> to vector<256x32xf32>
    %112 = arith.mulf %78, %111 : vector<256x32xf32>
    %113 = arith.addf %109, %112 : vector<256x32xf32>
    %114 = vector.extract_strided_slice %67 {offsets = [8, 0], sizes = [1, 32], strides = [1, 1]} : vector<9x32xf32> to vector<1x32xf32>
    %115 = vector.broadcast %114 : vector<1x32xf32> to vector<256x32xf32>
    %116 = arith.mulf %82, %115 : vector<256x32xf32>
    %117 = arith.addf %113, %116 : vector<256x32xf32>
    %c0_76 = arith.constant 0 : index
    %c0_77 = arith.constant 0 : index
    %118 = vector.load %arg18[%c0_76, %c0_77] : memref<1x32xf32, #tpu.memory_space<vmem>>, vector<1x32xf32>
    %119 = vector.broadcast %118 : vector<1x32xf32> to vector<256x32xf32>
    %120 = arith.addf %117, %119 : vector<256x32xf32>
    %c32_78 = arith.constant 32 : index
    %c0_79 = arith.constant 0 : index
    %121 = vector.load %arg31[%c32_78, %c0_79] : memref<320x32xf32, #tpu.memory_space<vmem>>, vector<256x32xf32>
    tpu.vector_store %arg31[%c32_78, %c0_79], %120 {strides = array<i32>} : memref<320x32xf32, #tpu.memory_space<vmem>>, vector<256x32xf32>,
    %c0_80 = arith.constant 0 : index
    %c0_81 = arith.constant 0 : index
    %122 = vector.load %arg31[%c0_80, %c0_81] : memref<320x32xf32, #tpu.memory_space<vmem>>, vector<256x32xf32>
    %c1_i32_82 = arith.constant 1 : i32
    %123 = tpu.dynamic_rotate %122 by %c1_i32_82 dim 0 : vector<256x32xf32>, i32 -> vector<256x32xf32>
    %124 = arith.mulf %123, %53 : vector<256x32xf32>
    %c255_i32_83 = arith.constant 255 : i32
    %125 = tpu.dynamic_rotate %122 by %c255_i32_83 dim 0 : vector<256x32xf32>, i32 -> vector<256x32xf32>
    %126 = arith.mulf %125, %54 : vector<256x32xf32>
    %c32_84 = arith.constant 32 : index
    %c0_85 = arith.constant 0 : index
    %127 = vector.load %arg31[%c32_84, %c0_85] : memref<320x32xf32, #tpu.memory_space<vmem>>, vector<256x32xf32>
    %c1_i32_86 = arith.constant 1 : i32
    %128 = tpu.dynamic_rotate %127 by %c1_i32_86 dim 0 : vector<256x32xf32>, i32 -> vector<256x32xf32>
    %129 = arith.mulf %128, %53 : vector<256x32xf32>
    %c255_i32_87 = arith.constant 255 : i32
    %130 = tpu.dynamic_rotate %127 by %c255_i32_87 dim 0 : vector<256x32xf32>, i32 -> vector<256x32xf32>
    %131 = arith.mulf %130, %54 : vector<256x32xf32>
    %c64_88 = arith.constant 64 : index
    %c0_89 = arith.constant 0 : index
    %132 = vector.load %arg31[%c64_88, %c0_89] : memref<320x32xf32, #tpu.memory_space<vmem>>, vector<256x32xf32>
    %c1_i32_90 = arith.constant 1 : i32
    %133 = tpu.dynamic_rotate %132 by %c1_i32_90 dim 0 : vector<256x32xf32>, i32 -> vector<256x32xf32>
    %134 = arith.mulf %133, %53 : vector<256x32xf32>
    %c255_i32_91 = arith.constant 255 : i32
    %135 = tpu.dynamic_rotate %132 by %c255_i32_91 dim 0 : vector<256x32xf32>, i32 -> vector<256x32xf32>
    %136 = arith.mulf %135, %54 : vector<256x32xf32>
    %c0_92 = arith.constant 0 : index
    %c0_93 = arith.constant 0 : index
    %c0_94 = arith.constant 0 : index
    %137 = vector.load %arg19[%c0_92, %c0_93, %c0_94] : memref<9x32x32xf32, #tpu.memory_space<vmem>>, vector<1x32x32xf32>
    %138 = vector.shape_cast %137 : vector<1x32x32xf32> to vector<32x32xf32>
    %cst_95 = arith.constant dense<0.000000e+00> : vector<256x32xf32>
    %139 = tpu.matmul %124, %138, %cst_95 {dimension_numbers = #tpu.dot_dimension_numbers<[1], [0], [0], [1], [0, 0, 1, 1], [], []>} : vector<256x32xf32>, vector<32x32xf32>, vector<256x32xf32> -> vector<256x32xf32>
    %c1 = arith.constant 1 : index
    %c0_96 = arith.constant 0 : index
    %c0_97 = arith.constant 0 : index
    %140 = vector.load %arg19[%c1, %c0_96, %c0_97] : memref<9x32x32xf32, #tpu.memory_space<vmem>>, vector<1x32x32xf32>
    %141 = vector.shape_cast %140 : vector<1x32x32xf32> to vector<32x32xf32>
    %cst_98 = arith.constant dense<0.000000e+00> : vector<256x32xf32>
    %142 = tpu.matmul %122, %141, %cst_98 {dimension_numbers = #tpu.dot_dimension_numbers<[1], [0], [0], [1], [0, 0, 1, 1], [], []>} : vector<256x32xf32>, vector<32x32xf32>, vector<256x32xf32> -> vector<256x32xf32>
    %143 = arith.addf %139, %142 : vector<256x32xf32>
    %c2 = arith.constant 2 : index
    %c0_99 = arith.constant 0 : index
    %c0_100 = arith.constant 0 : index
    %144 = vector.load %arg19[%c2, %c0_99, %c0_100] : memref<9x32x32xf32, #tpu.memory_space<vmem>>, vector<1x32x32xf32>
    %145 = vector.shape_cast %144 : vector<1x32x32xf32> to vector<32x32xf32>
    %cst_101 = arith.constant dense<0.000000e+00> : vector<256x32xf32>
    %146 = tpu.matmul %126, %145, %cst_101 {dimension_numbers = #tpu.dot_dimension_numbers<[1], [0], [0], [1], [0, 0, 1, 1], [], []>} : vector<256x32xf32>, vector<32x32xf32>, vector<256x32xf32> -> vector<256x32xf32>
    %147 = arith.addf %143, %146 : vector<256x32xf32>
    %c3 = arith.constant 3 : index
    %c0_102 = arith.constant 0 : index
    %c0_103 = arith.constant 0 : index
    %148 = vector.load %arg19[%c3, %c0_102, %c0_103] : memref<9x32x32xf32, #tpu.memory_space<vmem>>, vector<1x32x32xf32>
    %149 = vector.shape_cast %148 : vector<1x32x32xf32> to vector<32x32xf32>
    %cst_104 = arith.constant dense<0.000000e+00> : vector<256x32xf32>
    %150 = tpu.matmul %129, %149, %cst_104 {dimension_numbers = #tpu.dot_dimension_numbers<[1], [0], [0], [1], [0, 0, 1, 1], [], []>} : vector<256x32xf32>, vector<32x32xf32>, vector<256x32xf32> -> vector<256x32xf32>
    %151 = arith.addf %147, %150 : vector<256x32xf32>
    %c4 = arith.constant 4 : index
    %c0_105 = arith.constant 0 : index
    %c0_106 = arith.constant 0 : index
    %152 = vector.load %arg19[%c4, %c0_105, %c0_106] : memref<9x32x32xf32, #tpu.memory_space<vmem>>, vector<1x32x32xf32>
    %153 = vector.shape_cast %152 : vector<1x32x32xf32> to vector<32x32xf32>
    %cst_107 = arith.constant dense<0.000000e+00> : vector<256x32xf32>
    %154 = tpu.matmul %127, %153, %cst_107 {dimension_numbers = #tpu.dot_dimension_numbers<[1], [0], [0], [1], [0, 0, 1, 1], [], []>} : vector<256x32xf32>, vector<32x32xf32>, vector<256x32xf32> -> vector<256x32xf32>
    %155 = arith.addf %151, %154 : vector<256x32xf32>
    %c5 = arith.constant 5 : index
    %c0_108 = arith.constant 0 : index
    %c0_109 = arith.constant 0 : index
    %156 = vector.load %arg19[%c5, %c0_108, %c0_109] : memref<9x32x32xf32, #tpu.memory_space<vmem>>, vector<1x32x32xf32>
    %157 = vector.shape_cast %156 : vector<1x32x32xf32> to vector<32x32xf32>
    %cst_110 = arith.constant dense<0.000000e+00> : vector<256x32xf32>
    %158 = tpu.matmul %131, %157, %cst_110 {dimension_numbers = #tpu.dot_dimension_numbers<[1], [0], [0], [1], [0, 0, 1, 1], [], []>} : vector<256x32xf32>, vector<32x32xf32>, vector<256x32xf32> -> vector<256x32xf32>
    %159 = arith.addf %155, %158 : vector<256x32xf32>
    %c6 = arith.constant 6 : index
    %c0_111 = arith.constant 0 : index
    %c0_112 = arith.constant 0 : index
    %160 = vector.load %arg19[%c6, %c0_111, %c0_112] : memref<9x32x32xf32, #tpu.memory_space<vmem>>, vector<1x32x32xf32>
    %161 = vector.shape_cast %160 : vector<1x32x32xf32> to vector<32x32xf32>
    %cst_113 = arith.constant dense<0.000000e+00> : vector<256x32xf32>
    %162 = tpu.matmul %134, %161, %cst_113 {dimension_numbers = #tpu.dot_dimension_numbers<[1], [0], [0], [1], [0, 0, 1, 1], [], []>} : vector<256x32xf32>, vector<32x32xf32>, vector<256x32xf32> -> vector<256x32xf32>
    %163 = arith.addf %159, %162 : vector<256x32xf32>
    %c7 = arith.constant 7 : index
    %c0_114 = arith.constant 0 : index
    %c0_115 = arith.constant 0 : index
    %164 = vector.load %arg19[%c7, %c0_114, %c0_115] : memref<9x32x32xf32, #tpu.memory_space<vmem>>, vector<1x32x32xf32>
    %165 = vector.shape_cast %164 : vector<1x32x32xf32> to vector<32x32xf32>
    %cst_116 = arith.constant dense<0.000000e+00> : vector<256x32xf32>
    %166 = tpu.matmul %132, %165, %cst_116 {dimension_numbers = #tpu.dot_dimension_numbers<[1], [0], [0], [1], [0, 0, 1, 1], [], []>} : vector<256x32xf32>, vector<32x32xf32>, vector<256x32xf32> -> vector<256x32xf32>
    %167 = arith.addf %163, %166 : vector<256x32xf32>
    %c8 = arith.constant 8 : index
    %c0_117 = arith.constant 0 : index
    %c0_118 = arith.constant 0 : index
    %168 = vector.load %arg19[%c8, %c0_117, %c0_118] : memref<9x32x32xf32, #tpu.memory_space<vmem>>, vector<1x32x32xf32>
    %169 = vector.shape_cast %168 : vector<1x32x32xf32> to vector<32x32xf32>
    %cst_119 = arith.constant dense<0.000000e+00> : vector<256x32xf32>
    %170 = tpu.matmul %136, %169, %cst_119 {dimension_numbers = #tpu.dot_dimension_numbers<[1], [0], [0], [1], [0, 0, 1, 1], [], []>} : vector<256x32xf32>, vector<32x32xf32>, vector<256x32xf32> -> vector<256x32xf32>
    %171 = arith.addf %167, %170 : vector<256x32xf32>
    %c0_120 = arith.constant 0 : index
    %c0_121 = arith.constant 0 : index
    %172 = vector.load %arg20[%c0_120, %c0_121] : memref<1x32xf32, #tpu.memory_space<vmem>>, vector<1x32xf32>
    %173 = vector.broadcast %172 : vector<1x32xf32> to vector<256x32xf32>
    %174 = arith.addf %171, %173 : vector<256x32xf32>
    %c32_122 = arith.constant 32 : index
    %c0_123 = arith.constant 0 : index
    %175 = vector.load %arg31[%c32_122, %c0_123] : memref<320x32xf32, #tpu.memory_space<vmem>>, vector<256x32xf32>
    tpu.vector_store %arg31[%c32_122, %c0_123], %174 {strides = array<i32>} : memref<320x32xf32, #tpu.memory_space<vmem>>, vector<256x32xf32>,
    %c0_124 = arith.constant 0 : index
    %c0_125 = arith.constant 0 : index
    %176 = vector.load %arg21[%c0_124, %c0_125] : memref<9x32xf32, #tpu.memory_space<vmem>>, vector<9x32xf32>
    %c0_126 = arith.constant 0 : index
    %c0_127 = arith.constant 0 : index
    %177 = vector.load %arg31[%c0_126, %c0_127] : memref<320x32xf32, #tpu.memory_space<vmem>>, vector<256x32xf32>
    %c1_i32_128 = arith.constant 1 : i32
    %178 = tpu.dynamic_rotate %177 by %c1_i32_128 dim 0 : vector<256x32xf32>, i32 -> vector<256x32xf32>
    %179 = arith.mulf %178, %53 : vector<256x32xf32>
    %c255_i32_129 = arith.constant 255 : i32
    %180 = tpu.dynamic_rotate %177 by %c255_i32_129 dim 0 : vector<256x32xf32>, i32 -> vector<256x32xf32>
    %181 = arith.mulf %180, %54 : vector<256x32xf32>
    %c32_130 = arith.constant 32 : index
    %c0_131 = arith.constant 0 : index
    %182 = vector.load %arg31[%c32_130, %c0_131] : memref<320x32xf32, #tpu.memory_space<vmem>>, vector<256x32xf32>
    %c1_i32_132 = arith.constant 1 : i32
    %183 = tpu.dynamic_rotate %182 by %c1_i32_132 dim 0 : vector<256x32xf32>, i32 -> vector<256x32xf32>
    %184 = arith.mulf %183, %53 : vector<256x32xf32>
    %c255_i32_133 = arith.constant 255 : i32
    %185 = tpu.dynamic_rotate %182 by %c255_i32_133 dim 0 : vector<256x32xf32>, i32 -> vector<256x32xf32>
    %186 = arith.mulf %185, %54 : vector<256x32xf32>
    %c64_134 = arith.constant 64 : index
    %c0_135 = arith.constant 0 : index
    %187 = vector.load %arg31[%c64_134, %c0_135] : memref<320x32xf32, #tpu.memory_space<vmem>>, vector<256x32xf32>
    %c1_i32_136 = arith.constant 1 : i32
    %188 = tpu.dynamic_rotate %187 by %c1_i32_136 dim 0 : vector<256x32xf32>, i32 -> vector<256x32xf32>
    %189 = arith.mulf %188, %53 : vector<256x32xf32>
    %c255_i32_137 = arith.constant 255 : i32
    %190 = tpu.dynamic_rotate %187 by %c255_i32_137 dim 0 : vector<256x32xf32>, i32 -> vector<256x32xf32>
    %191 = arith.mulf %190, %54 : vector<256x32xf32>
    %192 = vector.extract_strided_slice %176 {offsets = [0, 0], sizes = [1, 32], strides = [1, 1]} : vector<9x32xf32> to vector<1x32xf32>
    %193 = vector.broadcast %192 : vector<1x32xf32> to vector<256x32xf32>
    %194 = arith.mulf %179, %193 : vector<256x32xf32>
    %195 = vector.extract_strided_slice %176 {offsets = [1, 0], sizes = [1, 32], strides = [1, 1]} : vector<9x32xf32> to vector<1x32xf32>
    %196 = vector.broadcast %195 : vector<1x32xf32> to vector<256x32xf32>
    %197 = arith.mulf %177, %196 : vector<256x32xf32>
    %198 = arith.addf %194, %197 : vector<256x32xf32>
    %199 = vector.extract_strided_slice %176 {offsets = [2, 0], sizes = [1, 32], strides = [1, 1]} : vector<9x32xf32> to vector<1x32xf32>
    %200 = vector.broadcast %199 : vector<1x32xf32> to vector<256x32xf32>
    %201 = arith.mulf %181, %200 : vector<256x32xf32>
    %202 = arith.addf %198, %201 : vector<256x32xf32>
    %203 = vector.extract_strided_slice %176 {offsets = [3, 0], sizes = [1, 32], strides = [1, 1]} : vector<9x32xf32> to vector<1x32xf32>
    %204 = vector.broadcast %203 : vector<1x32xf32> to vector<256x32xf32>
    %205 = arith.mulf %184, %204 : vector<256x32xf32>
    %206 = arith.addf %202, %205 : vector<256x32xf32>
    %207 = vector.extract_strided_slice %176 {offsets = [4, 0], sizes = [1, 32], strides = [1, 1]} : vector<9x32xf32> to vector<1x32xf32>
    %208 = vector.broadcast %207 : vector<1x32xf32> to vector<256x32xf32>
    %209 = arith.mulf %182, %208 : vector<256x32xf32>
    %210 = arith.addf %206, %209 : vector<256x32xf32>
    %211 = vector.extract_strided_slice %176 {offsets = [5, 0], sizes = [1, 32], strides = [1, 1]} : vector<9x32xf32> to vector<1x32xf32>
    %212 = vector.broadcast %211 : vector<1x32xf32> to vector<256x32xf32>
    %213 = arith.mulf %186, %212 : vector<256x32xf32>
    %214 = arith.addf %210, %213 : vector<256x32xf32>
    %215 = vector.extract_strided_slice %176 {offsets = [6, 0], sizes = [1, 32], strides = [1, 1]} : vector<9x32xf32> to vector<1x32xf32>
    %216 = vector.broadcast %215 : vector<1x32xf32> to vector<256x32xf32>
    %217 = arith.mulf %189, %216 : vector<256x32xf32>
    %218 = arith.addf %214, %217 : vector<256x32xf32>
    %219 = vector.extract_strided_slice %176 {offsets = [7, 0], sizes = [1, 32], strides = [1, 1]} : vector<9x32xf32> to vector<1x32xf32>
    %220 = vector.broadcast %219 : vector<1x32xf32> to vector<256x32xf32>
    %221 = arith.mulf %187, %220 : vector<256x32xf32>
    %222 = arith.addf %218, %221 : vector<256x32xf32>
    %223 = vector.extract_strided_slice %176 {offsets = [8, 0], sizes = [1, 32], strides = [1, 1]} : vector<9x32xf32> to vector<1x32xf32>
    %224 = vector.broadcast %223 : vector<1x32xf32> to vector<256x32xf32>
    %225 = arith.mulf %191, %224 : vector<256x32xf32>
    %226 = arith.addf %222, %225 : vector<256x32xf32>
    %cst_138 = arith.constant dense<0.000000e+00> : vector<256xf32>
    %227 = vector.multi_reduction <add>, %226, %cst_138 [1] : vector<256x32xf32> to vector<256xf32>
    %228 = vector.shape_cast %227 : vector<256xf32> to vector<256x1xf32>
    %c0_139 = arith.constant 0 : index
    %c0_140 = arith.constant 0 : index
    %229 = vector.load %arg22[%c0_139, %c0_140] : memref<1x1xf32, #tpu.memory_space<vmem>>, vector<1x1xf32>
    %230 = vector.broadcast %229 : vector<1x1xf32> to vector<256x1xf32>
    %231 = arith.addf %228, %230 : vector<256x1xf32>
    %c0_141 = arith.constant 0 : index
    %c0_142 = arith.constant 0 : index
    %232 = vector.load %arg27[%c0_141, %c0_142] : memref<8x256xf32, #tpu.memory_space<vmem>>, vector<8x256xf32>
    %233 = vector.broadcast %231 : vector<256x1xf32> to vector<256x32xf32>
    %234 = arith.mulf %233, %52 : vector<256x32xf32>
    %cst_143 = arith.constant dense<0.000000e+00> : vector<8x32xf32>
    %235 = tpu.matmul %232, %234, %cst_143 {dimension_numbers = #tpu.dot_dimension_numbers<[1], [0], [0], [1], [0, 0, 1, 1], [], []>} : vector<8x256xf32>, vector<256x32xf32>, vector<8x32xf32> -> vector<8x32xf32>
    %236 = arith.addf %235, %51 : vector<8x32xf32>
    %c0_144 = arith.constant 0 : index
    %c0_145 = arith.constant 0 : index
    %237 = vector.load %arg4[%c0_144, %c0_145] : memref<32x32xf32, #tpu.memory_space<vmem>>, vector<32x32xf32>
    %cst_146 = arith.constant dense<0.000000e+00> : vector<8x32xf32>
    %238 = tpu.matmul %236, %237, %cst_146 {dimension_numbers = #tpu.dot_dimension_numbers<[1], [0], [0], [1], [0, 0, 1, 1], [], []>} : vector<8x32xf32>, vector<32x32xf32>, vector<8x32xf32> -> vector<8x32xf32>
    %c0_147 = arith.constant 0 : index
    %c0_148 = arith.constant 0 : index
    %239 = vector.load %arg5[%c0_147, %c0_148] : memref<1x32xf32, #tpu.memory_space<vmem>>, vector<1x32xf32>
    %240 = vector.broadcast %239 : vector<1x32xf32> to vector<8x32xf32>
    %241 = arith.addf %238, %240 : vector<8x32xf32>
    %cst_149 = arith.constant dense<0.000000e+00> : vector<8x32xf32>
    %242 = tpu.matmul %24, %241, %cst_149 {dimension_numbers = #tpu.dot_dimension_numbers<[1], [0], [0], [1], [0, 0, 1, 1], [], []>} : vector<8x8xf32>, vector<8x32xf32>, vector<8x32xf32> -> vector<8x32xf32>
    %c0_150 = arith.constant 0 : index
    %c0_151 = arith.constant 0 : index
    %243 = vector.load %arg11[%c0_150, %c0_151] : memref<32x32xf32, #tpu.memory_space<vmem>>, vector<32x32xf32>
    %cst_152 = arith.constant dense<0.000000e+00> : vector<8x32xf32>
    %244 = tpu.matmul %242, %243, %cst_152 {dimension_numbers = #tpu.dot_dimension_numbers<[1], [0], [0], [1], [0, 0, 1, 1], [], []>} : vector<8x32xf32>, vector<32x32xf32>, vector<8x32xf32> -> vector<8x32xf32>
    %c0_153 = arith.constant 0 : index
    %c0_154 = arith.constant 0 : index
    %245 = vector.load %arg12[%c0_153, %c0_154] : memref<32x32xf32, #tpu.memory_space<vmem>>, vector<32x32xf32>
    %cst_155 = arith.constant dense<0.000000e+00> : vector<8x32xf32>
    %246 = tpu.matmul %241, %245, %cst_155 {dimension_numbers = #tpu.dot_dimension_numbers<[1], [0], [0], [1], [0, 0, 1, 1], [], []>} : vector<8x32xf32>, vector<32x32xf32>, vector<8x32xf32> -> vector<8x32xf32>
    %247 = arith.addf %244, %246 : vector<8x32xf32>
    %c0_156 = arith.constant 0 : index
    %c0_157 = arith.constant 0 : index
    %248 = vector.load %arg13[%c0_156, %c0_157] : memref<1x32xf32, #tpu.memory_space<vmem>>, vector<1x32xf32>
    %249 = vector.broadcast %248 : vector<1x32xf32> to vector<8x32xf32>
    %250 = arith.addf %247, %249 : vector<8x32xf32>
    %cst_158 = arith.constant dense<0.000000e+00> : vector<8x32xf32>
    %251 = tpu.matmul %24, %250, %cst_158 {dimension_numbers = #tpu.dot_dimension_numbers<[1], [0], [0], [1], [0, 0, 1, 1], [], []>} : vector<8x8xf32>, vector<8x32xf32>, vector<8x32xf32> -> vector<8x32xf32>
    %c0_159 = arith.constant 0 : index
    %c0_160 = arith.constant 0 : index
    %252 = vector.load %arg11[%c0_159, %c0_160] : memref<32x32xf32, #tpu.memory_space<vmem>>, vector<32x32xf32>
    %cst_161 = arith.constant dense<0.000000e+00> : vector<8x32xf32>
    %253 = tpu.matmul %251, %252, %cst_161 {dimension_numbers = #tpu.dot_dimension_numbers<[1], [0], [0], [1], [0, 0, 1, 1], [], []>} : vector<8x32xf32>, vector<32x32xf32>, vector<8x32xf32> -> vector<8x32xf32>
    %c0_162 = arith.constant 0 : index
    %c0_163 = arith.constant 0 : index
    %254 = vector.load %arg12[%c0_162, %c0_163] : memref<32x32xf32, #tpu.memory_space<vmem>>, vector<32x32xf32>
    %cst_164 = arith.constant dense<0.000000e+00> : vector<8x32xf32>
    %255 = tpu.matmul %250, %254, %cst_164 {dimension_numbers = #tpu.dot_dimension_numbers<[1], [0], [0], [1], [0, 0, 1, 1], [], []>} : vector<8x32xf32>, vector<32x32xf32>, vector<8x32xf32> -> vector<8x32xf32>
    %256 = arith.addf %253, %255 : vector<8x32xf32>
    %c0_165 = arith.constant 0 : index
    %c0_166 = arith.constant 0 : index
    %257 = vector.load %arg13[%c0_165, %c0_166] : memref<1x32xf32, #tpu.memory_space<vmem>>, vector<1x32xf32>
    %258 = vector.broadcast %257 : vector<1x32xf32> to vector<8x32xf32>
    %259 = arith.addf %256, %258 : vector<8x32xf32>
    %cst_167 = arith.constant dense<0.000000e+00> : vector<8x32xf32>
    %260 = tpu.matmul %24, %259, %cst_167 {dimension_numbers = #tpu.dot_dimension_numbers<[1], [0], [0], [1], [0, 0, 1, 1], [], []>} : vector<8x8xf32>, vector<8x32xf32>, vector<8x32xf32> -> vector<8x32xf32>
    %c0_168 = arith.constant 0 : index
    %c0_169 = arith.constant 0 : index
    %261 = vector.load %arg14[%c0_168, %c0_169] : memref<32x4xf32, #tpu.memory_space<vmem>>, vector<32x4xf32>
    %cst_170 = arith.constant dense<0.000000e+00> : vector<8x4xf32>
    %262 = tpu.matmul %260, %261, %cst_170 {dimension_numbers = #tpu.dot_dimension_numbers<[1], [0], [0], [1], [0, 0, 1, 1], [], []>} : vector<8x32xf32>, vector<32x4xf32>, vector<8x4xf32> -> vector<8x4xf32>
    %c0_171 = arith.constant 0 : index
    %c0_172 = arith.constant 0 : index
    %263 = vector.load %arg15[%c0_171, %c0_172] : memref<32x4xf32, #tpu.memory_space<vmem>>, vector<32x4xf32>
    %cst_173 = arith.constant dense<0.000000e+00> : vector<8x4xf32>
    %264 = tpu.matmul %259, %263, %cst_173 {dimension_numbers = #tpu.dot_dimension_numbers<[1], [0], [0], [1], [0, 0, 1, 1], [], []>} : vector<8x32xf32>, vector<32x4xf32>, vector<8x4xf32> -> vector<8x4xf32>
    %265 = arith.addf %262, %264 : vector<8x4xf32>
    %c0_174 = arith.constant 0 : index
    %c0_175 = arith.constant 0 : index
    %266 = vector.load %arg16[%c0_174, %c0_175] : memref<1x4xf32, #tpu.memory_space<vmem>>, vector<1x4xf32>
    %267 = vector.broadcast %266 : vector<1x4xf32> to vector<8x4xf32>
    %268 = arith.addf %265, %267 : vector<8x4xf32>
    %c0_176 = arith.constant 0 : index
    %c0_177 = arith.constant 0 : index
    %269 = vector.load %arg30[%c0_176, %c0_177] : memref<8x4xf32, #tpu.memory_space<vmem>>, vector<8x4xf32>
    tpu.vector_store %arg30[%c0_176, %c0_177], %268 {strides = array<i32>} : memref<8x4xf32, #tpu.memory_space<vmem>>, vector<8x4xf32>,
    return
  }
}

</mosaic_0001>

<llo_original>
// kernel: year_gnn_forward.1
$region0: #{year_gnn_forward.1}
  #allocation0 [shape = 'u32[]', space=smem, size = 0x4, offset = 0x4, fixed_abs, tag = 'smem constant byte address 0x4 - core index']
  #allocation1 [shape = 'u32[144,128]{1,0:T(1,128)}', space=vmem, size = 0x12000, scoped, tag = 'internal scratch']
  #allocation2 [shape = 'f32[320,32]{1,0:T(8,128)}', space=vmem, size = 0x28000, scoped, tag = 'scratch operand']
  #allocation3 [shape = 'f32[1,1]{1,0:T(1,128)S(1)}', space=vmem, size = 0x200, scoped, tag = 'scoped memory for year_gnn_forward.1']
  #allocation4 [shape = 'f32[1,1]{1,0:T(1,128)S(1)}', space=vmem, size = 0x200, scoped, tag = 'scoped memory for year_gnn_forward.1']
  %s0 = inlined_call_operand.smem [shape: u32[31], index: -1, kind: input, shape index: {}]
  %s1 = sld [smem:[%s0]]
  %s2 = scalar_lea.smem %s0, 1
  %s3 = sld [smem:[%s2]]
  %s4 = scalar_lea.smem %s0, 2
  %s5 = sld [smem:[%s4]]
  %s6 = scalar_lea.smem %s0, 3
  %s7 = sld [smem:[%s6]]
  %s8 = scalar_lea.smem %s0, 4
  %s9 = sld [smem:[%s8]]
  %s10 = scalar_lea.smem %s0, 5
  %s11 = sld [smem:[%s10]]
  %s12 = scalar_lea.smem %s0, 6
  %s13 = sld [smem:[%s12]]
  %s14 = scalar_lea.smem %s0, 7
  %s15 = sld [smem:[%s14]]
  %s16 = scalar_lea.smem %s0, 8
  %s17 = sld [smem:[%s16]]
  %s18 = scalar_lea.smem %s0, 9
  %s19 = sld [smem:[%s18]]
  %s20 = scalar_lea.smem %s0, 10
  %s21 = sld [smem:[%s20]]
  %s22 = scalar_lea.smem %s0, 11
  %s23 = sld [smem:[%s22]]
  %s24 = scalar_lea.smem %s0, 12
  %s25 = sld [smem:[%s24]]
  %s26 = scalar_lea.smem %s0, 13
  %s27 = sld [smem:[%s26]]
  %s28 = scalar_lea.smem %s0, 14
  %s29 = sld [smem:[%s28]]
  %s30 = scalar_lea.smem %s0, 15
  %s31 = sld [smem:[%s30]]
  %s32 = scalar_lea.smem %s0, 16
  %s33 = sld [smem:[%s32]]
  %s34 = scalar_lea.smem %s0, 17
  %s35 = sld [smem:[%s34]]
  %s36 = scalar_lea.smem %s0, 18
  %s37 = sld [smem:[%s36]]
  %s38 = scalar_lea.smem %s0, 19
  %s39 = sld [smem:[%s38]]
  %s40 = scalar_lea.smem %s0, 20
  %s41 = sld [smem:[%s40]]
  %s42 = scalar_lea.smem %s0, 21
  %s43 = sld [smem:[%s42]]
  %s44 = scalar_lea.smem %s0, 22
  %s45 = sld [smem:[%s44]]
  %s46 = scalar_lea.smem %s0, 23
  %s47 = sld [smem:[%s46]]
  %s48 = scalar_lea.smem %s0, 24
  %s49 = sld [smem:[%s48]]
  %s50 = scalar_lea.smem %s0, 25
  %s51 = sld [smem:[%s50]]
  %s52 = scalar_lea.smem %s0, 26
  %s53 = sld [smem:[%s52]]
  %s54 = scalar_lea.smem %s0, 27
  %s55 = sld [smem:[%s54]]
  %s56 = scalar_lea.smem %s0, 28
  %s57 = sld [smem:[%s56]]
  %s58 = scalar_lea.smem %s0, 29
  %s59 = sld [smem:[%s58]]
  %s60 = scalar_lea.smem %s0, 30
  %s61 = sld [smem:[%s60]]
  %s62 = sld [smem:[#allocation0]]
  $region130: #{year_gnn_forward.1} parent=0
    _
  %s64 = ssub.s32 1, %s62
  %s65 = scalar_select 0, %s64, %s62
  %v66 = vstv %s15
  %67 = vst [vmem:[#allocation3] sm:$0x1] %v66
  %v68 = vstv %s45
  %69 = vst [vmem:[#allocation4] sm:$0x1] %v68
  // Predicated region
  $region2: #{year_gnn_forward.1} parent=0 // pred_check
    _
  $region3: #{year_gnn_forward.1} parent=0 // pred_check_branch
    %71 = sbr.rel (0) target = $region5
  $region4: #{year_gnn_forward.1} parent=0 // pred_region
    _
  $region5: #{year_gnn_forward.1} parent=0 // pred_fallthru
    _
  // Predicated region
  $region6: #{year_gnn_forward.1} parent=0 // pred_check
    _
  $region7: #{year_gnn_forward.1} parent=0 // pred_check_branch
    %73 = sbr.rel (0) target = $region9
  $region8: #{year_gnn_forward.1} parent=0 // pred_region
    _
  $region9: #{year_gnn_forward.1} parent=0 // pred_fallthru
    _
  // Predicated region
  $region10: #{year_gnn_forward.1} parent=0 // pred_check
    _
  $region11: #{year_gnn_forward.1} parent=0 // pred_check_branch
    %75 = sbr.rel (0) target = $region13
  $region12: #{year_gnn_forward.1} parent=0 // pred_region
    _
  $region13: #{year_gnn_forward.1} parent=0 // pred_fallthru
    _
  // Predicated region
  $region14: #{year_gnn_forward.1} parent=0 // pred_check
    _
  $region15: #{year_gnn_forward.1} parent=0 // pred_check_branch
    %77 = sbr.rel (0) target = $region17
  $region16: #{year_gnn_forward.1} parent=0 // pred_region
    _
  $region17: #{year_gnn_forward.1} parent=0 // pred_fallthru
    _
  // Predicated region
  $region18: #{year_gnn_forward.1} parent=0 // pred_check
    _
  $region19: #{year_gnn_forward.1} parent=0 // pred_check_branch
    %79 = sbr.rel (0) target = $region21
  $region20: #{year_gnn_forward.1} parent=0 // pred_region
    _
  $region21: #{year_gnn_forward.1} parent=0 // pred_fallthru
    _
  // Predicated region
  $region22: #{year_gnn_forward.1} parent=0 // pred_check
    _
  $region23: #{year_gnn_forward.1} parent=0 // pred_check_branch
    %81 = sbr.rel (0) target = $region25
  $region24: #{year_gnn_forward.1} parent=0 // pred_region
    _
  $region25: #{year_gnn_forward.1} parent=0 // pred_fallthru
    _
  // Predicated region
  $region26: #{year_gnn_forward.1} parent=0 // pred_check
    _
  $region27: #{year_gnn_forward.1} parent=0 // pred_check_branch
    %83 = sbr.rel (0) target = $region29
  $region28: #{year_gnn_forward.1} parent=0 // pred_region
    _
  $region29: #{year_gnn_forward.1} parent=0 // pred_fallthru
    _
  // Predicated region
  $region30: #{year_gnn_forward.1} parent=0 // pred_check
    _
  $region31: #{year_gnn_forward.1} parent=0 // pred_check_branch
    %85 = sbr.rel (0) target = $region33
  $region32: #{year_gnn_forward.1} parent=0 // pred_region
    _
  $region33: #{year_gnn_forward.1} parent=0 // pred_fallthru
    _
  // Predicated region
  $region34: #{year_gnn_forward.1} parent=0 // pred_check
    _
  $region35: #{year_gnn_forward.1} parent=0 // pred_check_branch
    %87 = sbr.rel (0) target = $region37
  $region36: #{year_gnn_forward.1} parent=0 // pred_region
    _
  $region37: #{year_gnn_forward.1} parent=0 // pred_fallthru
    _
  // Predicated region
  $region38: #{year_gnn_forward.1} parent=0 // pred_check
    _
  $region39: #{year_gnn_forward.1} parent=0 // pred_check_branch
    %89 = sbr.rel (0) target = $region41
  $region40: #{year_gnn_forward.1} parent=0 // pred_region
    _
  $region41: #{year_gnn_forward.1} parent=0 // pred_fallthru
    _
  // Predicated region
  $region42: #{year_gnn_forward.1} parent=0 // pred_check
    _
  $region43: #{year_gnn_forward.1} parent=0 // pred_check_branch
    %91 = sbr.rel (0) target = $region45
  $region44: #{year_gnn_forward.1} parent=0 // pred_region
    _
  $region45: #{year_gnn_forward.1} parent=0 // pred_fallthru
    _
  // Predicated region
  $region46: #{year_gnn_forward.1} parent=0 // pred_check
    _
  $region47: #{year_gnn_forward.1} parent=0 // pred_check_branch
    %93 = sbr.rel (0) target = $region49
  $region48: #{year_gnn_forward.1} parent=0 // pred_region
    _
  $region49: #{year_gnn_forward.1} parent=0 // pred_fallthru
    _
  // Predicated region
  $region50: #{year_gnn_forward.1} parent=0 // pred_check
    _
  $region51: #{year_gnn_forward.1} parent=0 // pred_check_branch
    %95 = sbr.rel (0) target = $region53
  $region52: #{year_gnn_forward.1} parent=0 // pred_region
    _
  $region53: #{year_gnn_forward.1} parent=0 // pred_fallthru
    _
  // Predicated region
  $region54: #{year_gnn_forward.1} parent=0 // pred_check
    _
  $region55: #{year_gnn_forward.1} parent=0 // pred_check_branch
    %97 = sbr.rel (0) target = $region57
  $region56: #{year_gnn_forward.1} parent=0 // pred_region
    _
  $region57: #{year_gnn_forward.1} parent=0 // pred_fallthru
    _
  // Predicated region
  $region58: #{year_gnn_forward.1} parent=0 // pred_check
    _
  $region59: #{year_gnn_forward.1} parent=0 // pred_check_branch
    %99 = sbr.rel (0) target = $region61
  $region60: #{year_gnn_forward.1} parent=0 // pred_region
    _
  $region61: #{year_gnn_forward.1} parent=0 // pred_fallthru
    _
  // Predicated region
  $region62: #{year_gnn_forward.1} parent=0 // pred_check
    _
  $region63: #{year_gnn_forward.1} parent=0 // pred_check_branch
    %101 = sbr.rel (0) target = $region65
  $region64: #{year_gnn_forward.1} parent=0 // pred_region
    _
  $region65: #{year_gnn_forward.1} parent=0 // pred_fallthru
    _
  // Predicated region
  $region66: #{year_gnn_forward.1} parent=0 // pred_check
    _
  $region67: #{year_gnn_forward.1} parent=0 // pred_check_branch
    %103 = sbr.rel (0) target = $region69
  $region68: #{year_gnn_forward.1} parent=0 // pred_region
    _
  $region69: #{year_gnn_forward.1} parent=0 // pred_fallthru
    _
  // Predicated region
  $region70: #{year_gnn_forward.1} parent=0 // pred_check
    _
  $region71: #{year_gnn_forward.1} parent=0 // pred_check_branch
    %105 = sbr.rel (0) target = $region73
  $region72: #{year_gnn_forward.1} parent=0 // pred_region
    _
  $region73: #{year_gnn_forward.1} parent=0 // pred_fallthru
    _
  // Predicated region
  $region74: #{year_gnn_forward.1} parent=0 // pred_check
    _
  $region75: #{year_gnn_forward.1} parent=0 // pred_check_branch
    %107 = sbr.rel (0) target = $region77
  $region76: #{year_gnn_forward.1} parent=0 // pred_region
    _
  $region77: #{year_gnn_forward.1} parent=0 // pred_fallthru
    _
  // Predicated region
  $region78: #{year_gnn_forward.1} parent=0 // pred_check
    _
  $region79: #{year_gnn_forward.1} parent=0 // pred_check_branch
    %109 = sbr.rel (0) target = $region81
  $region80: #{year_gnn_forward.1} parent=0 // pred_region
    _
  $region81: #{year_gnn_forward.1} parent=0 // pred_fallthru
    _
  // Predicated region
  $region82: #{year_gnn_forward.1} parent=0 // pred_check
    _
  $region83: #{year_gnn_forward.1} parent=0 // pred_check_branch
    %111 = sbr.rel (0) target = $region85
  $region84: #{year_gnn_forward.1} parent=0 // pred_region
    _
  $region85: #{year_gnn_forward.1} parent=0 // pred_fallthru
    _
  // Predicated region
  $region86: #{year_gnn_forward.1} parent=0 // pred_check
    _
  $region87: #{year_gnn_forward.1} parent=0 // pred_check_branch
    %113 = sbr.rel (0) target = $region89
  $region88: #{year_gnn_forward.1} parent=0 // pred_region
    _
  $region89: #{year_gnn_forward.1} parent=0 // pred_fallthru
    _
  // Predicated region
  $region90: #{year_gnn_forward.1} parent=0 // pred_check
    _
  $region91: #{year_gnn_forward.1} parent=0 // pred_check_branch
    %115 = sbr.rel (0) target = $region93
  $region92: #{year_gnn_forward.1} parent=0 // pred_region
    _
  $region93: #{year_gnn_forward.1} parent=0 // pred_fallthru
    _
  // Predicated region
  $region94: #{year_gnn_forward.1} parent=0 // pred_check
    _
  $region95: #{year_gnn_forward.1} parent=0 // pred_check_branch
    %117 = sbr.rel (0) target = $region97
  $region96: #{year_gnn_forward.1} parent=0 // pred_region
    _
  $region97: #{year_gnn_forward.1} parent=0 // pred_fallthru
    _
  // Predicated region
  $region98: #{year_gnn_forward.1} parent=0 // pred_check
    _
  $region99: #{year_gnn_forward.1} parent=0 // pred_check_branch
    %119 = sbr.rel (0) target = $region101
  $region100: #{year_gnn_forward.1} parent=0 // pred_region
    _
  $region101: #{year_gnn_forward.1} parent=0 // pred_fallthru
    _
  // Predicated region
  $region102: #{year_gnn_forward.1} parent=0 // pred_check
    _
  $region103: #{year_gnn_forward.1} parent=0 // pred_check_branch
    %121 = sbr.rel (0) target = $region105
  $region104: #{year_gnn_forward.1} parent=0 // pred_region
    _
  $region105: #{year_gnn_forward.1} parent=0 // pred_fallthru
    _
  // Predicated region
  $region106: #{year_gnn_forward.1} parent=0 // pred_check
    _
  $region107: #{year_gnn_forward.1} parent=0 // pred_check_branch
    %123 = sbr.rel (0) target = $region109
  $region108: #{year_gnn_forward.1} parent=0 // pred_region
    _
  $region109: #{year_gnn_forward.1} parent=0 // pred_fallthru
    _
  // Predicated region
  $region110: #{year_gnn_forward.1} parent=0 // pred_check
    _
  $region111: #{year_gnn_forward.1} parent=0 // pred_check_branch
    %125 = sbr.rel (0) target = $region113
  $region112: #{year_gnn_forward.1} parent=0 // pred_region
    _
  $region113: #{year_gnn_forward.1} parent=0 // pred_fallthru
    _
  // Predicated region
  $region114: #{year_gnn_forward.1} parent=0 // pred_check
    _
  $region115: #{year_gnn_forward.1} parent=0 // pred_check_branch
    %127 = sbr.rel (0) target = $region117
  $region116: #{year_gnn_forward.1} parent=0 // pred_region
    _
  $region117: #{year_gnn_forward.1} parent=0 // pred_fallthru
    _
  // Predicated region
  $region118: #{year_gnn_forward.1} parent=0 // pred_check
    _
  $region119: #{year_gnn_forward.1} parent=0 // pred_check_branch
    %129 = sbr.rel (0) target = $region121
  $region120: #{year_gnn_forward.1} parent=0 // pred_region
    _
  $region121: #{year_gnn_forward.1} parent=0 // pred_fallthru
    _
  %v130 = vld [vmem:[%s1] sm:$0xff]
  %v131 = vld [vmem:[%s1 + $0x8] sm:$0xff]
  %v132 = vld [vmem:[%s1 + $0x10] sm:$0xff]
  %v133 = vld [vmem:[%s1 + $0x18] sm:$0xff]
  %v134 = vld [vmem:[%s1 + $0x20] sm:$0xff]
  %v135 = vld [vmem:[%s1 + $0x28] sm:$0xff]
  %v136 = vld [vmem:[%s1 + $0x30] sm:$0xff]
  %v137 = vld [vmem:[%s1 + $0x38] sm:$0xff]
  %v138 = vld [vmem:[%s1 + $0x40] sm:$0xff]
  %v139 = vld [vmem:[%s1 + $0x48] sm:$0xff]
  %v140 = vld [vmem:[%s1 + $0x50] sm:$0xff]
  %v141 = vld [vmem:[%s1 + $0x58] sm:$0xff]
  %v142 = vld [vmem:[%s1 + $0x60] sm:$0xff]
  %v143 = vld [vmem:[%s1 + $0x68] sm:$0xff]
  %v144 = vld [vmem:[%s1 + $0x70] sm:$0xff]
  %v145 = vld [vmem:[%s1 + $0x78] sm:$0xff]
  %v146 = vld [vmem:[%s5] sm:$0xff]
  %v147 = vld [vmem:[%s7] sm:$0x1]
  %v149 = vlaneseq
  %v150 = vshrl.u32 %v149, 7
  %v151 = vsub.s32 0, %v150
  %v152 = vrot.slane %v147, %v151
  %vm154 = vcmask 64512
  %v156 = vsel %vm154, %v130, 0
  %v159 = vsel %vm154, %v131, 0
  %v162 = vsel %vm154, %v132, 0
  %v165 = vsel %vm154, %v133, 0
  %v168 = vsel %vm154, %v134, 0
  %v171 = vsel %vm154, %v135, 0
  %v174 = vsel %vm154, %v136, 0
  %v177 = vsel %vm154, %v137, 0
  %v180 = vsel %vm154, %v138, 0
  %v183 = vsel %vm154, %v139, 0
  %v186 = vsel %vm154, %v140, 0
  %v189 = vsel %vm154, %v141, 0
  %v192 = vsel %vm154, %v142, 0
  %v195 = vsel %vm154, %v143, 0
  %v198 = vsel %vm154, %v144, 0
  %v201 = vsel %vm154, %v145, 0
  %203 = vmatprep.subr.mxu0 0.0
  %204 = vmatpush1.msra.mxu0 %v146
  %205 = vmatprep.subr.mxu0 0.0
  %206 = vmatpush1.msra.mxu0 0.0
  %207 = vmatprep.subr.mxu0 0.0
  %208 = vmatpush1.msra.mxu0 0.0
  %209 = vmatprep.subr.mxu0 0.0
  %210 = vmatpush1.msra.mxu0 0.0
  %211 = vmatprep.subr.mxu0 0.0
  %212 = vmatpush1.msra.mxu0 0.0
  %213 = vmatprep.subr.mxu0 0.0
  %214 = vmatpush1.msra.mxu0 0.0
  %215 = vmatprep.subr.mxu0 0.0
  %216 = vmatpush1.msra.mxu0 0.0
  %217 = vmatprep.subr.mxu0 0.0
  %218 = vmatpush1.msra.mxu0 0.0
  %219 = vmatprep.subr.mxu0 0.0
  %220 = vmatpush1.msra.mxu0 0.0
  %221 = vmatprep.subr.mxu0 0.0
  %222 = vmatpush1.msra.mxu0 0.0
  %223 = vmatprep.subr.mxu0 0.0
  %224 = vmatpush1.msra.mxu0 0.0
  %225 = vmatprep.subr.mxu0 0.0
  %226 = vmatpush1.msra.mxu0 0.0
  %227 = vmatprep.subr.mxu0 0.0
  %228 = vmatpush1.msra.mxu0 0.0
  %229 = vmatprep.subr.mxu0 0.0
  %230 = vmatpush1.msra.mxu0 0.0
  %231 = vmatprep.subr.mxu0 0.0
  %232 = vmatpush1.msra.mxu0 0.0
  %233 = vmatprep.subr.mxu0 0.0
  %234 = vmatpush1.msra.mxu0 0.0
  %235 = vmatprep.subr.mxu0 0.0
  %236 = vmatpush1.msra.mxu0 0.0
  %237 = vmatprep.subr.mxu0 0.0
  %238 = vmatpush1.msra.mxu0 0.0
  %239 = vmatprep.subr.mxu0 0.0
  %240 = vmatpush1.msra.mxu0 0.0
  %241 = vmatprep.subr.mxu0 0.0
  %242 = vmatpush1.msra.mxu0 0.0
  %243 = vmatprep.subr.mxu0 0.0
  %244 = vmatpush1.msra.mxu0 0.0
  %245 = vmatprep.subr.mxu0 0.0
  %246 = vmatpush1.msra.mxu0 0.0
  %247 = vmatprep.subr.mxu0 0.0
  %248 = vmatpush1.msra.mxu0 0.0
  %249 = vmatprep.subr.mxu0 0.0
  %250 = vmatpush1.msra.mxu0 0.0
  %251 = vmatprep.subr.mxu0 0.0
  %252 = vmatpush1.msra.mxu0 0.0
  %253 = vmatprep.subr.mxu0 0.0
  %254 = vmatpush1.msra.mxu0 0.0
  %255 = vmatprep.subr.mxu0 0.0
  %256 = vmatpush1.msra.mxu0 0.0
  %257 = vmatprep.subr.mxu0 0.0
  %258 = vmatpush1.msra.mxu0 0.0
  %259 = vmatprep.subr.mxu0 0.0
  %260 = vmatpush1.msra.mxu0 0.0
  %261 = vmatprep.subr.mxu0 0.0
  %262 = vmatpush1.msra.mxu0 0.0
  %263 = vmatprep.subr.mxu0 0.0
  %264 = vmatpush1.msra.mxu0 0.0
  %265 = vmatprep.subr.mxu0 0.0
  %266 = vmatpush1.msra.mxu0 0.0
  %267 = vmatprep.mubr.f32.mxu0 0.0
  %268 = vmatmul.mubr.f32.gmra.mrb[0].mxu0 %v156
  %v269 = vpop.f32.mrb[0].mxu0
  %v270 = vadd.f32 %v152, %v269
  %v271 = vpop.f32.mrb[0].mxu0
  %272 = vmatprep.mubr.f32.mxu0 0.0
  %273 = vmatmul.mubr.f32.gmra.mrb[0].mxu0 %v159
  %v274 = vpop.f32.mrb[0].mxu0
  %v275 = vadd.f32 %v152, %v274
  %v276 = vpop.f32.mrb[0].mxu0
  %277 = vmatprep.mubr.f32.mxu0 0.0
  %278 = vmatmul.mubr.f32.gmra.mrb[0].mxu0 %v162
  %v279 = vpop.f32.mrb[0].mxu0
  %v280 = vadd.f32 %v152, %v279
  %v281 = vpop.f32.mrb[0].mxu0
  %282 = vmatprep.mubr.f32.mxu0 0.0
  %283 = vmatmul.mubr.f32.gmra.mrb[0].mxu0 %v165
  %v284 = vpop.f32.mrb[0].mxu0
  %v285 = vadd.f32 %v152, %v284
  %v286 = vpop.f32.mrb[0].mxu0
  %287 = vmatprep.mubr.f32.mxu0 0.0
  %288 = vmatmul.mubr.f32.gmra.mrb[0].mxu0 %v168
  %v289 = vpop.f32.mrb[0].mxu0
  %v290 = vadd.f32 %v152, %v289
  %v291 = vpop.f32.mrb[0].mxu0
  %292 = vmatprep.mubr.f32.mxu0 0.0
  %293 = vmatmul.mubr.f32.gmra.mrb[0].mxu0 %v171
  %v294 = vpop.f32.mrb[0].mxu0
  %v295 = vadd.f32 %v152, %v294
  %v296 = vpop.f32.mrb[0].mxu0
  %297 = vmatprep.mubr.f32.mxu0 0.0
  %298 = vmatmul.mubr.f32.gmra.mrb[0].mxu0 %v174
  %v299 = vpop.f32.mrb[0].mxu0
  %v300 = vadd.f32 %v152, %v299
  %v301 = vpop.f32.mrb[0].mxu0
  %302 = vmatprep.mubr.f32.mxu0 0.0
  %303 = vmatmul.mubr.f32.gmra.mrb[0].mxu0 %v177
  %v304 = vpop.f32.mrb[0].mxu0
  %v305 = vadd.f32 %v152, %v304
  %v306 = vpop.f32.mrb[0].mxu0
  %307 = vmatprep.mubr.f32.mxu0 0.0
  %308 = vmatmul.mubr.f32.gmra.mrb[0].mxu0 %v180
  %v309 = vpop.f32.mrb[0].mxu0
  %v310 = vadd.f32 %v152, %v309
  %v311 = vpop.f32.mrb[0].mxu0
  %312 = vmatprep.mubr.f32.mxu0 0.0
  %313 = vmatmul.mubr.f32.gmra.mrb[0].mxu0 %v183
  %v314 = vpop.f32.mrb[0].mxu0
  %v315 = vadd.f32 %v152, %v314
  %v316 = vpop.f32.mrb[0].mxu0
  %317 = vmatprep.mubr.f32.mxu0 0.0
  %318 = vmatmul.mubr.f32.gmra.mrb[0].mxu0 %v186
  %v319 = vpop.f32.mrb[0].mxu0
  %v320 = vadd.f32 %v152, %v319
  %v321 = vpop.f32.mrb[0].mxu0
  %322 = vmatprep.mubr.f32.mxu0 0.0
  %323 = vmatmul.mubr.f32.gmra.mrb[0].mxu0 %v189
  %v324 = vpop.f32.mrb[0].mxu0
  %v325 = vadd.f32 %v152, %v324
  %v326 = vpop.f32.mrb[0].mxu0
  %327 = vmatprep.mubr.f32.mxu0 0.0
  %328 = vmatmul.mubr.f32.gmra.mrb[0].mxu0 %v192
  %v329 = vpop.f32.mrb[0].mxu0
  %v330 = vadd.f32 %v152, %v329
  %v331 = vpop.f32.mrb[0].mxu0
  %332 = vmatprep.mubr.f32.mxu0 0.0
  %333 = vmatmul.mubr.f32.gmra.mrb[0].mxu0 %v195
  %v334 = vpop.f32.mrb[0].mxu0
  %v335 = vadd.f32 %v152, %v334
  %v336 = vpop.f32.mrb[0].mxu0
  %337 = vmatprep.mubr.f32.mxu0 0.0
  %338 = vmatmul.mubr.f32.gmra.mrb[0].mxu0 %v198
  %v339 = vpop.f32.mrb[0].mxu0
  %v340 = vadd.f32 %v152, %v339
  %v341 = vpop.f32.mrb[0].mxu0
  %342 = vmatprep.mubr.f32.mxu0 0.0
  %343 = vmatmul.mubr.f32.gmra.mrb[0].mxu0 %v201
  %v344 = vpop.f32.mrb[0].mxu0
  %v345 = vadd.f32 %v152, %v344
  %v346 = vpop.f32.mrb[0].mxu0
  %347 = vdwg.mxu0
  %v348 = vld [vmem:[%s9] sm:$0xff]
  %v349 = vld [vmem:[%s9 + $0x8] sm:$0xff]
  %v350 = vld [vmem:[%s9 + $0x10] sm:$0xff]
  %v351 = vld [vmem:[%s9 + $0x18] sm:$0xff]
  %v352 = vld [vmem:[%s11] sm:$0x1]
  %v354 = vlaneseq
  %v355 = vshrl.u32 %v354, 7
  %v356 = vsub.s32 0, %v355
  %v357 = vrot.slane %v352, %v356
  %vm359 = vcmask 261120
  %v361 = vsel %vm359, %v270, 0
  %v364 = vsel %vm359, %v275, 0
  %v367 = vsel %vm359, %v280, 0
  %v370 = vsel %vm359, %v285, 0
  %v373 = vsel %vm359, %v290, 0
  %v376 = vsel %vm359, %v295, 0
  %v379 = vsel %vm359, %v300, 0
  %v382 = vsel %vm359, %v305, 0
  %v385 = vsel %vm359, %v310, 0
  %v388 = vsel %vm359, %v315, 0
  %v391 = vsel %vm359, %v320, 0
  %v394 = vsel %vm359, %v325, 0
  %v397 = vsel %vm359, %v330, 0
  %v400 = vsel %vm359, %v335, 0
  %v403 = vsel %vm359, %v340, 0
  %v406 = vsel %vm359, %v345, 0
  %408 = vmatprep.subr.mxu0 0.0
  %409 = vmatpush1.msra.mxu0 %v348
  %410 = vmatprep.subr.mxu0 0.0
  %411 = vmatpush1.msra.mxu0 %v349
  %412 = vmatprep.subr.mxu0 0.0
  %413 = vmatpush1.msra.mxu0 %v350
  %414 = vmatprep.subr.mxu0 0.0
  %415 = vmatpush1.msra.mxu0 %v351
  %416 = vmatprep.subr.mxu0 0.0
  %417 = vmatpush1.msra.mxu0 0.0
  %418 = vmatprep.subr.mxu0 0.0
  %419 = vmatpush1.msra.mxu0 0.0
  %420 = vmatprep.subr.mxu0 0.0
  %421 = vmatpush1.msra.mxu0 0.0
  %422 = vmatprep.subr.mxu0 0.0
  %423 = vmatpush1.msra.mxu0 0.0
  %424 = vmatprep.subr.mxu0 0.0
  %425 = vmatpush1.msra.mxu0 0.0
  %426 = vmatprep.subr.mxu0 0.0
  %427 = vmatpush1.msra.mxu0 0.0
  %428 = vmatprep.subr.mxu0 0.0
  %429 = vmatpush1.msra.mxu0 0.0
  %430 = vmatprep.subr.mxu0 0.0
  %431 = vmatpush1.msra.mxu0 0.0
  %432 = vmatprep.subr.mxu0 0.0
  %433 = vmatpush1.msra.mxu0 0.0
  %434 = vmatprep.subr.mxu0 0.0
  %435 = vmatpush1.msra.mxu0 0.0
  %436 = vmatprep.subr.mxu0 0.0
  %437 = vmatpush1.msra.mxu0 0.0
  %438 = vmatprep.subr.mxu0 0.0
  %439 = vmatpush1.msra.mxu0 0.0
  %440 = vmatprep.subr.mxu0 0.0
  %441 = vmatpush1.msra.mxu0 0.0
  %442 = vmatprep.subr.mxu0 0.0
  %443 = vmatpush1.msra.mxu0 0.0
  %444 = vmatprep.subr.mxu0 0.0
  %445 = vmatpush1.msra.mxu0 0.0
  %446 = vmatprep.subr.mxu0 0.0
  %447 = vmatpush1.msra.mxu0 0.0
  %448 = vmatprep.subr.mxu0 0.0
  %449 = vmatpush1.msra.mxu0 0.0
  %450 = vmatprep.subr.mxu0 0.0
  %451 = vmatpush1.msra.mxu0 0.0
  %452 = vmatprep.subr.mxu0 0.0
  %453 = vmatpush1.msra.mxu0 0.0
  %454 = vmatprep.subr.mxu0 0.0
  %455 = vmatpush1.msra.mxu0 0.0
  %456 = vmatprep.subr.mxu0 0.0
  %457 = vmatpush1.msra.mxu0 0.0
  %458 = vmatprep.subr.mxu0 0.0
  %459 = vmatpush1.msra.mxu0 0.0
  %460 = vmatprep.subr.mxu0 0.0
  %461 = vmatpush1.msra.mxu0 0.0
  %462 = vmatprep.subr.mxu0 0.0
  %463 = vmatpush1.msra.mxu0 0.0
  %464 = vmatprep.subr.mxu0 0.0
  %465 = vmatpush1.msra.mxu0 0.0
  %466 = vmatprep.subr.mxu0 0.0
  %467 = vmatpush1.msra.mxu0 0.0
  %468 = vmatprep.subr.mxu0 0.0
  %469 = vmatpush1.msra.mxu0 0.0
  %470 = vmatprep.subr.mxu0 0.0
  %471 = vmatpush1.msra.mxu0 0.0
  %472 = vmatprep.mubr.f32.mxu0 0.0
  %473 = vmatmul.mubr.f32.gmra.mrb[0].mxu0 %v361
  %v474 = vpop.f32.mrb[0].mxu0
  %v475 = vadd.f32 %v357, %v474
  %v476 = vpop.f32.mrb[0].mxu0
  %477 = vmatprep.mubr.f32.mxu0 0.0
  %478 = vmatmul.mubr.f32.gmra.mrb[0].mxu0 %v364
  %v479 = vpop.f32.mrb[0].mxu0
  %v480 = vadd.f32 %v357, %v479
  %v481 = vpop.f32.mrb[0].mxu0
  %482 = vmatprep.mubr.f32.mxu0 0.0
  %483 = vmatmul.mubr.f32.gmra.mrb[0].mxu0 %v367
  %v484 = vpop.f32.mrb[0].mxu0
  %v485 = vadd.f32 %v357, %v484
  %v486 = vpop.f32.mrb[0].mxu0
  %487 = vmatprep.mubr.f32.mxu0 0.0
  %488 = vmatmul.mubr.f32.gmra.mrb[0].mxu0 %v370
  %v489 = vpop.f32.mrb[0].mxu0
  %v490 = vadd.f32 %v357, %v489
  %v491 = vpop.f32.mrb[0].mxu0
  %492 = vmatprep.mubr.f32.mxu0 0.0
  %493 = vmatmul.mubr.f32.gmra.mrb[0].mxu0 %v373
  %v494 = vpop.f32.mrb[0].mxu0
  %v495 = vadd.f32 %v357, %v494
  %v496 = vpop.f32.mrb[0].mxu0
  %497 = vmatprep.mubr.f32.mxu0 0.0
  %498 = vmatmul.mubr.f32.gmra.mrb[0].mxu0 %v376
  %v499 = vpop.f32.mrb[0].mxu0
  %v500 = vadd.f32 %v357, %v499
  %v501 = vpop.f32.mrb[0].mxu0
  %502 = vmatprep.mubr.f32.mxu0 0.0
  %503 = vmatmul.mubr.f32.gmra.mrb[0].mxu0 %v379
  %v504 = vpop.f32.mrb[0].mxu0
  %v505 = vadd.f32 %v357, %v504
  %v506 = vpop.f32.mrb[0].mxu0
  %507 = vmatprep.mubr.f32.mxu0 0.0
  %508 = vmatmul.mubr.f32.gmra.mrb[0].mxu0 %v382
  %v509 = vpop.f32.mrb[0].mxu0
  %v510 = vadd.f32 %v357, %v509
  %v511 = vpop.f32.mrb[0].mxu0
  %512 = vmatprep.mubr.f32.mxu0 0.0
  %513 = vmatmul.mubr.f32.gmra.mrb[0].mxu0 %v385
  %v514 = vpop.f32.mrb[0].mxu0
  %v515 = vadd.f32 %v357, %v514
  %v516 = vpop.f32.mrb[0].mxu0
  %517 = vmatprep.mubr.f32.mxu0 0.0
  %518 = vmatmul.mubr.f32.gmra.mrb[0].mxu0 %v388
  %v519 = vpop.f32.mrb[0].mxu0
  %v520 = vadd.f32 %v357, %v519
  %v521 = vpop.f32.mrb[0].mxu0
  %522 = vmatprep.mubr.f32.mxu0 0.0
  %523 = vmatmul.mubr.f32.gmra.mrb[0].mxu0 %v391
  %v524 = vpop.f32.mrb[0].mxu0
  %v525 = vadd.f32 %v357, %v524
  %v526 = vpop.f32.mrb[0].mxu0
  %527 = vmatprep.mubr.f32.mxu0 0.0
  %528 = vmatmul.mubr.f32.gmra.mrb[0].mxu0 %v394
  %v529 = vpop.f32.mrb[0].mxu0
  %v530 = vadd.f32 %v357, %v529
  %v531 = vpop.f32.mrb[0].mxu0
  %532 = vmatprep.mubr.f32.mxu0 0.0
  %533 = vmatmul.mubr.f32.gmra.mrb[0].mxu0 %v397
  %v534 = vpop.f32.mrb[0].mxu0
  %v535 = vadd.f32 %v357, %v534
  %v536 = vpop.f32.mrb[0].mxu0
  %537 = vmatprep.mubr.f32.mxu0 0.0
  %538 = vmatmul.mubr.f32.gmra.mrb[0].mxu0 %v400
  %v539 = vpop.f32.mrb[0].mxu0
  %v540 = vadd.f32 %v357, %v539
  %v541 = vpop.f32.mrb[0].mxu0
  %542 = vmatprep.mubr.f32.mxu0 0.0
  %543 = vmatmul.mubr.f32.gmra.mrb[0].mxu0 %v403
  %v544 = vpop.f32.mrb[0].mxu0
  %v545 = vadd.f32 %v357, %v544
  %v546 = vpop.f32.mrb[0].mxu0
  %547 = vmatprep.mubr.f32.mxu0 0.0
  %548 = vmatmul.mubr.f32.gmra.mrb[0].mxu0 %v406
  %v549 = vpop.f32.mrb[0].mxu0
  %v550 = vadd.f32 %v357, %v549
  %v551 = vpop.f32.mrb[0].mxu0
  %552 = vdwg.mxu0
  %v553 = vld [vmem:[%s13] sm:$0x1]
  %v555 = vlaneseq
  %v556 = vshrl.u32 %v555, 7
  %v557 = vsub.s32 0, %v556
  %v558 = vrot.slane %v553, %v557
  %v560 = vmul.f32 %v475, %v558
  %v561 = vmul.f32 %v480, %v558
  %v562 = vmul.f32 %v485, %v558
  %v563 = vmul.f32 %v490, %v558
  %v564 = vmul.f32 %v495, %v558
  %v565 = vmul.f32 %v500, %v558
  %v566 = vmul.f32 %v505, %v558
  %v567 = vmul.f32 %v510, %v558
  %v568 = vmul.f32 %v515, %v558
  %v569 = vmul.f32 %v520, %v558
  %v570 = vmul.f32 %v525, %v558
  %v571 = vmul.f32 %v530, %v558
  %v572 = vmul.f32 %v535, %v558
  %v573 = vmul.f32 %v540, %v558
  %v574 = vmul.f32 %v545, %v558
  %v575 = vmul.f32 %v550, %v558
  %v576 = vsel %vm359, %v560, 0.0
  %577 = vadd.xlane.f32.xlu0 %v576
  %v578 = vpop.xlane.xlu0 %577
  %v579 = vsel %vm359, %v561, 0.0
  %580 = vadd.xlane.f32.xlu0 %v579
  %v581 = vpop.xlane.xlu0 %580
  %v582 = vsel %vm359, %v562, 0.0
  %583 = vadd.xlane.f32.xlu0 %v582
  %v584 = vpop.xlane.xlu0 %583
  %v585 = vsel %vm359, %v563, 0.0
  %586 = vadd.xlane.f32.xlu0 %v585
  %v587 = vpop.xlane.xlu0 %586
  %v588 = vsel %vm359, %v564, 0.0
  %589 = vadd.xlane.f32.xlu0 %v588
  %v590 = vpop.xlane.xlu0 %589
  %v591 = vsel %vm359, %v565, 0.0
  %592 = vadd.xlane.f32.xlu0 %v591
  %v593 = vpop.xlane.xlu0 %592
  %v594 = vsel %vm359, %v566, 0.0
  %595 = vadd.xlane.f32.xlu0 %v594
  %v596 = vpop.xlane.xlu0 %595
  %v597 = vsel %vm359, %v567, 0.0
  %598 = vadd.xlane.f32.xlu0 %v597
  %v599 = vpop.xlane.xlu0 %598
  %v600 = vsel %vm359, %v568, 0.0
  %601 = vadd.xlane.f32.xlu0 %v600
  %v602 = vpop.xlane.xlu0 %601
  %v603 = vsel %vm359, %v569, 0.0
  %604 = vadd.xlane.f32.xlu0 %v603
  %v605 = vpop.xlane.xlu0 %604
  %v606 = vsel %vm359, %v570, 0.0
  %607 = vadd.xlane.f32.xlu0 %v606
  %v608 = vpop.xlane.xlu0 %607
  %v609 = vsel %vm359, %v571, 0.0
  %610 = vadd.xlane.f32.xlu0 %v609
  %v611 = vpop.xlane.xlu0 %610
  %v612 = vsel %vm359, %v572, 0.0
  %613 = vadd.xlane.f32.xlu0 %v612
  %v614 = vpop.xlane.xlu0 %613
  %v615 = vsel %vm359, %v573, 0.0
  %616 = vadd.xlane.f32.xlu0 %v615
  %v617 = vpop.xlane.xlu0 %616
  %v618 = vsel %vm359, %v574, 0.0
  %619 = vadd.xlane.f32.xlu0 %v618
  %v620 = vpop.xlane.xlu0 %619
  %v621 = vsel %vm359, %v575, 0.0
  %622 = vadd.xlane.f32.xlu0 %v621
  %v623 = vpop.xlane.xlu0 %622
  %v624 = vld [vmem:[#allocation3] sm:$0x1]
  %v626 = vlaneseq
  %v627 = vshrl.u32 %v626, 7
  %v628 = vsub.s32 0, %v627
  %v629 = vrot.slane %v624, %v628
  %v631 = vadd.f32 %v578, %v629
  %v632 = vadd.f32 %v581, %v629
  %v633 = vadd.f32 %v584, %v629
  %v634 = vadd.f32 %v587, %v629
  %v635 = vadd.f32 %v590, %v629
  %v636 = vadd.f32 %v593, %v629
  %v637 = vadd.f32 %v596, %v629
  %v638 = vadd.f32 %v599, %v629
  %v639 = vadd.f32 %v602, %v629
  %v640 = vadd.f32 %v605, %v629
  %v641 = vadd.f32 %v608, %v629
  %v642 = vadd.f32 %v611, %v629
  %v643 = vadd.f32 %v614, %v629
  %v644 = vadd.f32 %v617, %v629
  %v645 = vadd.f32 %v620, %v629
  %v646 = vadd.f32 %v623, %v629
  %v647 = vld [vmem:[%s47] sm:$0xff]
  %v648 = vld [vmem:[%s49] sm:$0xff]
  %v649 = vld [vmem:[%s49 + $0x8] sm:$0xff]
  %v650 = vld [vmem:[%s49 + $0x10] sm:$0xff]
  %v651 = vld [vmem:[%s49 + $0x18] sm:$0xff]
  %v652 = vld [vmem:[%s49 + $0x20] sm:$0xff]
  %v653 = vld [vmem:[%s49 + $0x28] sm:$0xff]
  %v654 = vld [vmem:[%s49 + $0x30] sm:$0xff]
  %v655 = vld [vmem:[%s49 + $0x38] sm:$0xff]
  %v656 = vld [vmem:[%s49 + $0x40] sm:$0xff]
  %v657 = vld [vmem:[%s49 + $0x48] sm:$0xff]
  %v658 = vld [vmem:[%s49 + $0x50] sm:$0xff]
  %v659 = vld [vmem:[%s49 + $0x58] sm:$0xff]
  %v660 = vld [vmem:[%s49 + $0x60] sm:$0xff]
  %v661 = vld [vmem:[%s49 + $0x68] sm:$0xff]
  %v662 = vld [vmem:[%s49 + $0x70] sm:$0xff]
  %v663 = vld [vmem:[%s49 + $0x78] sm:$0xff]
  %665 = vset.pattern.permute.xlu0 0
  %666 = vperm.xlu0 %665, %v631
  %v667 = vpop.permute.xlu0 %666
  %670 = vset.pattern.permute.xlu0 0
  %671 = vperm.xlu0 %670, %v632
  %v672 = vpop.permute.xlu0 %671
  %675 = vset.pattern.permute.xlu0 0
  %676 = vperm.xlu0 %675, %v633
  %v677 = vpop.permute.xlu0 %676
  %680 = vset.pattern.permute.xlu0 0
  %681 = vperm.xlu0 %680, %v634
  %v682 = vpop.permute.xlu0 %681
  %685 = vset.pattern.permute.xlu0 0
  %686 = vperm.xlu0 %685, %v635
  %v687 = vpop.permute.xlu0 %686
  %690 = vset.pattern.permute.xlu0 0
  %691 = vperm.xlu0 %690, %v636
  %v692 = vpop.permute.xlu0 %691
  %695 = vset.pattern.permute.xlu0 0
  %696 = vperm.xlu0 %695, %v637
  %v697 = vpop.permute.xlu0 %696
  %700 = vset.pattern.permute.xlu0 0
  %701 = vperm.xlu0 %700, %v638
  %v702 = vpop.permute.xlu0 %701
  %705 = vset.pattern.permute.xlu0 0
  %706 = vperm.xlu0 %705, %v639
  %v707 = vpop.permute.xlu0 %706
  %710 = vset.pattern.permute.xlu0 0
  %711 = vperm.xlu0 %710, %v640
  %v712 = vpop.permute.xlu0 %711
  %715 = vset.pattern.permute.xlu0 0
  %716 = vperm.xlu0 %715, %v641
  %v717 = vpop.permute.xlu0 %716
  %720 = vset.pattern.permute.xlu0 0
  %721 = vperm.xlu0 %720, %v642
  %v722 = vpop.permute.xlu0 %721
  %725 = vset.pattern.permute.xlu0 0
  %726 = vperm.xlu0 %725, %v643
  %v727 = vpop.permute.xlu0 %726
  %730 = vset.pattern.permute.xlu0 0
  %731 = vperm.xlu0 %730, %v644
  %v732 = vpop.permute.xlu0 %731
  %735 = vset.pattern.permute.xlu0 0
  %736 = vperm.xlu0 %735, %v645
  %v737 = vpop.permute.xlu0 %736
  %740 = vset.pattern.permute.xlu0 0
  %741 = vperm.xlu0 %740, %v646
  %v742 = vpop.permute.xlu0 %741
  %v744 = vmul.f32 %v667, %v648
  %v745 = vmul.f32 %v672, %v649
  %v746 = vmul.f32 %v677, %v650
  %v747 = vmul.f32 %v682, %v651
  %v748 = vmul.f32 %v687, %v652
  %v749 = vmul.f32 %v692, %v653
  %v750 = vmul.f32 %v697, %v654
  %v751 = vmul.f32 %v702, %v655
  %v752 = vmul.f32 %v707, %v656
  %v753 = vmul.f32 %v712, %v657
  %v754 = vmul.f32 %v717, %v658
  %v755 = vmul.f32 %v722, %v659
  %v756 = vmul.f32 %v727, %v660
  %v757 = vmul.f32 %v732, %v661
  %v758 = vmul.f32 %v737, %v662
  %v759 = vmul.f32 %v742, %v663
  %760 = vmatprep.subr.mxu0 0.0
  %761 = vmatpush1.msra.mxu0 %v744
  %762 = vmatprep.subr.mxu0 0.0
  %763 = vmatpush1.msra.mxu0 %v745
  %764 = vmatprep.subr.mxu0 0.0
  %765 = vmatpush1.msra.mxu0 %v746
  %766 = vmatprep.subr.mxu0 0.0
  %767 = vmatpush1.msra.mxu0 %v747
  %768 = vmatprep.subr.mxu0 0.0
  %769 = vmatpush1.msra.mxu0 %v748
  %770 = vmatprep.subr.mxu0 0.0
  %771 = vmatpush1.msra.mxu0 %v749
  %772 = vmatprep.subr.mxu0 0.0
  %773 = vmatpush1.msra.mxu0 %v750
  %774 = vmatprep.subr.mxu0 0.0
  %775 = vmatpush1.msra.mxu0 %v751
  %776 = vmatprep.subr.mxu0 0.0
  %777 = vmatpush1.msra.mxu0 %v752
  %778 = vmatprep.subr.mxu0 0.0
  %779 = vmatpush1.msra.mxu0 %v753
  %780 = vmatprep.subr.mxu0 0.0
  %781 = vmatpush1.msra.mxu0 %v754
  %782 = vmatprep.subr.mxu0 0.0
  %783 = vmatpush1.msra.mxu0 %v755
  %784 = vmatprep.subr.mxu0 0.0
  %785 = vmatpush1.msra.mxu0 %v756
  %786 = vmatprep.subr.mxu0 0.0
  %787 = vmatpush1.msra.mxu0 %v757
  %788 = vmatprep.subr.mxu0 0.0
  %789 = vmatpush1.msra.mxu0 %v758
  %790 = vmatprep.subr.mxu0 0.0
  %791 = vmatpush1.msra.mxu0 %v759
  %792 = vmatprep.subr.mxu0 0.0
  %793 = vmatpush1.msra.mxu0 0.0
  %794 = vmatprep.subr.mxu0 0.0
  %795 = vmatpush1.msra.mxu0 0.0
  %796 = vmatprep.subr.mxu0 0.0
  %797 = vmatpush1.msra.mxu0 0.0
  %798 = vmatprep.subr.mxu0 0.0
  %799 = vmatpush1.msra.mxu0 0.0
  %800 = vmatprep.subr.mxu0 0.0
  %801 = vmatpush1.msra.mxu0 0.0
  %802 = vmatprep.subr.mxu0 0.0
  %803 = vmatpush1.msra.mxu0 0.0
  %804 = vmatprep.subr.mxu0 0.0
  %805 = vmatpush1.msra.mxu0 0.0
  %806 = vmatprep.subr.mxu0 0.0
  %807 = vmatpush1.msra.mxu0 0.0
  %808 = vmatprep.subr.mxu0 0.0
  %809 = vmatpush1.msra.mxu0 0.0
  %810 = vmatprep.subr.mxu0 0.0
  %811 = vmatpush1.msra.mxu0 0.0
  %812 = vmatprep.subr.mxu0 0.0
  %813 = vmatpush1.msra.mxu0 0.0
  %814 = vmatprep.subr.mxu0 0.0
  %815 = vmatpush1.msra.mxu0 0.0
  %816 = vmatprep.subr.mxu0 0.0
  %817 = vmatpush1.msra.mxu0 0.0
  %818 = vmatprep.subr.mxu0 0.0
  %819 = vmatpush1.msra.mxu0 0.0
  %820 = vmatprep.subr.mxu0 0.0
  %821 = vmatpush1.msra.mxu0 0.0
  %822 = vmatprep.subr.mxu0 0.0
  %823 = vmatpush1.msra.mxu0 0.0
  %824 = vmatprep.mubr.f32.mxu0 0.0
  %825 = vmatmul.mubr.f32.gmra.mrb[0].mxu0 %v647
  %v826 = vpop.f32.mrb[0].mxu0
  %v827 = vadd.f32 0.0, %v826
  %v828 = vpop.f32.mrb[0].mxu0
  %829 = vdwg.mxu0
  %v830 = vld [vmem:[%s3] sm:$0xff]
  %v832 = vsel %vm154, %v830, 0
  %834 = vmatprep.subr.mxu0 0.0
  %835 = vmatpush1.msra.mxu0 %v827
  %836 = vmatprep.subr.mxu0 0.0
  %837 = vmatpush1.msra.mxu0 0.0
  %838 = vmatprep.subr.mxu0 0.0
  %839 = vmatpush1.msra.mxu0 0.0
  %840 = vmatprep.subr.mxu0 0.0
  %841 = vmatpush1.msra.mxu0 0.0
  %842 = vmatprep.subr.mxu0 0.0
  %843 = vmatpush1.msra.mxu0 0.0
  %844 = vmatprep.subr.mxu0 0.0
  %845 = vmatpush1.msra.mxu0 0.0
  %846 = vmatprep.subr.mxu0 0.0
  %847 = vmatpush1.msra.mxu0 0.0
  %848 = vmatprep.subr.mxu0 0.0
  %849 = vmatpush1.msra.mxu0 0.0
  %850 = vmatprep.subr.mxu0 0.0
  %851 = vmatpush1.msra.mxu0 0.0
  %852 = vmatprep.subr.mxu0 0.0
  %853 = vmatpush1.msra.mxu0 0.0
  %854 = vmatprep.subr.mxu0 0.0
  %855 = vmatpush1.msra.mxu0 0.0
  %856 = vmatprep.subr.mxu0 0.0
  %857 = vmatpush1.msra.mxu0 0.0
  %858 = vmatprep.subr.mxu0 0.0
  %859 = vmatpush1.msra.mxu0 0.0
  %860 = vmatprep.subr.mxu0 0.0
  %861 = vmatpush1.msra.mxu0 0.0
  %862 = vmatprep.subr.mxu0 0.0
  %863 = vmatpush1.msra.mxu0 0.0
  %864 = vmatprep.subr.mxu0 0.0
  %865 = vmatpush1.msra.mxu0 0.0
  %866 = vmatprep.subr.mxu0 0.0
  %867 = vmatpush1.msra.mxu0 0.0
  %868 = vmatprep.subr.mxu0 0.0
  %869 = vmatpush1.msra.mxu0 0.0
  %870 = vmatprep.subr.mxu0 0.0
  %871 = vmatpush1.msra.mxu0 0.0
  %872 = vmatprep.subr.mxu0 0.0
  %873 = vmatpush1.msra.mxu0 0.0
  %874 = vmatprep.subr.mxu0 0.0
  %875 = vmatpush1.msra.mxu0 0.0
  %876 = vmatprep.subr.mxu0 0.0
  %877 = vmatpush1.msra.mxu0 0.0
  %878 = vmatprep.subr.mxu0 0.0
  %879 = vmatpush1.msra.mxu0 0.0
  %880 = vmatprep.subr.mxu0 0.0
  %881 = vmatpush1.msra.mxu0 0.0
  %882 = vmatprep.subr.mxu0 0.0
  %883 = vmatpush1.msra.mxu0 0.0
  %884 = vmatprep.subr.mxu0 0.0
  %885 = vmatpush1.msra.mxu0 0.0
  %886 = vmatprep.subr.mxu0 0.0
  %887 = vmatpush1.msra.mxu0 0.0
  %888 = vmatprep.subr.mxu0 0.0
  %889 = vmatpush1.msra.mxu0 0.0
  %890 = vmatprep.subr.mxu0 0.0
  %891 = vmatpush1.msra.mxu0 0.0
  %892 = vmatprep.subr.mxu0 0.0
  %893 = vmatpush1.msra.mxu0 0.0
  %894 = vmatprep.subr.mxu0 0.0
  %895 = vmatpush1.msra.mxu0 0.0
  %896 = vmatprep.subr.mxu0 0.0
  %897 = vmatpush1.msra.mxu0 0.0
  %898 = vmatprep.mubr.f32.mxu0 0.0
  %899 = vmatmul.mubr.f32.gmra.mrb[0].mxu0 %v832
  %v900 = vpop.f32.mrb[0].mxu0
  %v901 = vadd.f32 0.0, %v900
  %v902 = vpop.f32.mrb[0].mxu0
  %903 = vdwg.mxu0
  %v904 = vld [vmem:[%s17] sm:$0xff]
  %v905 = vld [vmem:[%s17 + $0x8] sm:$0xff]
  %v906 = vld [vmem:[%s19] sm:$0xff]
  %v907 = vld [vmem:[%s19 + $0x8] sm:$0xff]
  %vm908 = vcmask 130048
  %v910 = vsel %vm908, %v827, 0
  %912 = vmatprep.subr.mxu0 0.0
  %913 = vmatpush1.msra.mxu0 %v906
  %914 = vmatprep.subr.mxu0 0.0
  %915 = vmatpush1.msra.mxu0 %v907
  %916 = vmatprep.subr.mxu0 0.0
  %917 = vmatpush1.msra.mxu0 0.0
  %918 = vmatprep.subr.mxu0 0.0
  %919 = vmatpush1.msra.mxu0 0.0
  %920 = vmatprep.subr.mxu0 0.0
  %921 = vmatpush1.msra.mxu0 0.0
  %922 = vmatprep.subr.mxu0 0.0
  %923 = vmatpush1.msra.mxu0 0.0
  %924 = vmatprep.subr.mxu0 0.0
  %925 = vmatpush1.msra.mxu0 0.0
  %926 = vmatprep.subr.mxu0 0.0
  %927 = vmatpush1.msra.mxu0 0.0
  %928 = vmatprep.subr.mxu0 0.0
  %929 = vmatpush1.msra.mxu0 0.0
  %930 = vmatprep.subr.mxu0 0.0
  %931 = vmatpush1.msra.mxu0 0.0
  %932 = vmatprep.subr.mxu0 0.0
  %933 = vmatpush1.msra.mxu0 0.0
  %934 = vmatprep.subr.mxu0 0.0
  %935 = vmatpush1.msra.mxu0 0.0
  %936 = vmatprep.subr.mxu0 0.0
  %937 = vmatpush1.msra.mxu0 0.0
  %938 = vmatprep.subr.mxu0 0.0
  %939 = vmatpush1.msra.mxu0 0.0
  %940 = vmatprep.subr.mxu0 0.0
  %941 = vmatpush1.msra.mxu0 0.0
  %942 = vmatprep.subr.mxu0 0.0
  %943 = vmatpush1.msra.mxu0 0.0
  %944 = vmatprep.subr.mxu0 0.0
  %945 = vmatpush1.msra.mxu0 0.0
  %946 = vmatprep.subr.mxu0 0.0
  %947 = vmatpush1.msra.mxu0 0.0
  %948 = vmatprep.subr.mxu0 0.0
  %949 = vmatpush1.msra.mxu0 0.0
  %950 = vmatprep.subr.mxu0 0.0
  %951 = vmatpush1.msra.mxu0 0.0
  %952 = vmatprep.subr.mxu0 0.0
  %953 = vmatpush1.msra.mxu0 0.0
  %954 = vmatprep.subr.mxu0 0.0
  %955 = vmatpush1.msra.mxu0 0.0
  %956 = vmatprep.subr.mxu0 0.0
  %957 = vmatpush1.msra.mxu0 0.0
  %958 = vmatprep.subr.mxu0 0.0
  %959 = vmatpush1.msra.mxu0 0.0
  %960 = vmatprep.subr.mxu0 0.0
  %961 = vmatpush1.msra.mxu0 0.0
  %962 = vmatprep.subr.mxu0 0.0
  %963 = vmatpush1.msra.mxu0 0.0
  %964 = vmatprep.subr.mxu0 0.0
  %965 = vmatpush1.msra.mxu0 0.0
  %966 = vmatprep.subr.mxu0 0.0
  %967 = vmatpush1.msra.mxu0 0.0
  %968 = vmatprep.subr.mxu0 0.0
  %969 = vmatpush1.msra.mxu0 0.0
  %970 = vmatprep.subr.mxu0 0.0
  %971 = vmatpush1.msra.mxu0 0.0
  %972 = vmatprep.subr.mxu0 0.0
  %973 = vmatpush1.msra.mxu0 0.0
  %974 = vmatprep.subr.mxu0 0.0
  %975 = vmatpush1.msra.mxu0 0.0
  %976 = vmatprep.mubr.f32.mxu0 0.0
  %977 = vmatmul.mubr.f32.gmra.mrb[0].mxu0 %v910
  %v978 = vpop.f32.mrb[0].mxu0
  %v979 = vadd.f32 0.0, %v978
  %v980 = vpop.f32.mrb[0].mxu0
  %981 = vdwg.mxu0
  %v983 = vsel %vm908, %v901, 0
  %985 = vmatprep.subr.mxu0 0.0
  %986 = vmatpush1.msra.mxu0 %v904
  %987 = vmatprep.subr.mxu0 0.0
  %988 = vmatpush1.msra.mxu0 %v905
  %989 = vmatprep.subr.mxu0 0.0
  %990 = vmatpush1.msra.mxu0 0.0
  %991 = vmatprep.subr.mxu0 0.0
  %992 = vmatpush1.msra.mxu0 0.0
  %993 = vmatprep.subr.mxu0 0.0
  %994 = vmatpush1.msra.mxu0 0.0
  %995 = vmatprep.subr.mxu0 0.0
  %996 = vmatpush1.msra.mxu0 0.0
  %997 = vmatprep.subr.mxu0 0.0
  %998 = vmatpush1.msra.mxu0 0.0
  %999 = vmatprep.subr.mxu0 0.0
  %1000 = vmatpush1.msra.mxu0 0.0
  %1001 = vmatprep.subr.mxu0 0.0
  %1002 = vmatpush1.msra.mxu0 0.0
  %1003 = vmatprep.subr.mxu0 0.0
  %1004 = vmatpush1.msra.mxu0 0.0
  %1005 = vmatprep.subr.mxu0 0.0
  %1006 = vmatpush1.msra.mxu0 0.0
  %1007 = vmatprep.subr.mxu0 0.0
  %1008 = vmatpush1.msra.mxu0 0.0
  %1009 = vmatprep.subr.mxu0 0.0
  %1010 = vmatpush1.msra.mxu0 0.0
  %1011 = vmatprep.subr.mxu0 0.0
  %1012 = vmatpush1.msra.mxu0 0.0
  %1013 = vmatprep.subr.mxu0 0.0
  %1014 = vmatpush1.msra.mxu0 0.0
  %1015 = vmatprep.subr.mxu0 0.0
  %1016 = vmatpush1.msra.mxu0 0.0
  %1017 = vmatprep.subr.mxu0 0.0
  %1018 = vmatpush1.msra.mxu0 0.0
  %1019 = vmatprep.subr.mxu0 0.0
  %1020 = vmatpush1.msra.mxu0 0.0
  %1021 = vmatprep.subr.mxu0 0.0
  %1022 = vmatpush1.msra.mxu0 0.0
  %1023 = vmatprep.subr.mxu0 0.0
  %1024 = vmatpush1.msra.mxu0 0.0
  %1025 = vmatprep.subr.mxu0 0.0
  %1026 = vmatpush1.msra.mxu0 0.0
  %1027 = vmatprep.subr.mxu0 0.0
  %1028 = vmatpush1.msra.mxu0 0.0
  %1029 = vmatprep.subr.mxu0 0.0
  %1030 = vmatpush1.msra.mxu0 0.0
  %1031 = vmatprep.subr.mxu0 0.0
  %1032 = vmatpush1.msra.mxu0 0.0
  %1033 = vmatprep.subr.mxu0 0.0
  %1034 = vmatpush1.msra.mxu0 0.0
  %1035 = vmatprep.subr.mxu0 0.0
  %1036 = vmatpush1.msra.mxu0 0.0
  %1037 = vmatprep.subr.mxu0 0.0
  %1038 = vmatpush1.msra.mxu0 0.0
  %1039 = vmatprep.subr.mxu0 0.0
  %1040 = vmatpush1.msra.mxu0 0.0
  %1041 = vmatprep.subr.mxu0 0.0
  %1042 = vmatpush1.msra.mxu0 0.0
  %1043 = vmatprep.subr.mxu0 0.0
  %1044 = vmatpush1.msra.mxu0 0.0
  %1045 = vmatprep.subr.mxu0 0.0
  %1046 = vmatpush1.msra.mxu0 0.0
  %1047 = vmatprep.subr.mxu0 0.0
  %1048 = vmatpush1.msra.mxu0 0.0
  %1049 = vmatprep.mubr.f32.mxu0 0.0
  %1050 = vmatmul.mubr.f32.gmra.mrb[0].mxu0 %v983
  %v1051 = vpop.f32.mrb[0].mxu0
  %v1052 = vadd.f32 %v979, %v1051
  %v1053 = vpop.f32.mrb[0].mxu0
  %1054 = vdwg.mxu0
  %v1055 = vld [vmem:[%s21] sm:$0x1]
  %v1057 = vlaneseq
  %v1058 = vshrl.u32 %v1057, 7
  %v1059 = vsub.s32 0, %v1058
  %v1060 = vrot.slane %v1055, %v1059
  %v1062 = vadd.f32 %v1052, %v1060
  %1063 = vmatprep.subr.mxu0 0.0
  %1064 = vmatpush1.msra.mxu0 %v1062
  %1065 = vmatprep.subr.mxu0 0.0
  %1066 = vmatpush1.msra.mxu0 0.0
  %1067 = vmatprep.subr.mxu0 0.0
  %1068 = vmatpush1.msra.mxu0 0.0
  %1069 = vmatprep.subr.mxu0 0.0
  %1070 = vmatpush1.msra.mxu0 0.0
  %1071 = vmatprep.subr.mxu0 0.0
  %1072 = vmatpush1.msra.mxu0 0.0
  %1073 = vmatprep.subr.mxu0 0.0
  %1074 = vmatpush1.msra.mxu0 0.0
  %1075 = vmatprep.subr.mxu0 0.0
  %1076 = vmatpush1.msra.mxu0 0.0
  %1077 = vmatprep.subr.mxu0 0.0
  %1078 = vmatpush1.msra.mxu0 0.0
  %1079 = vmatprep.subr.mxu0 0.0
  %1080 = vmatpush1.msra.mxu0 0.0
  %1081 = vmatprep.subr.mxu0 0.0
  %1082 = vmatpush1.msra.mxu0 0.0
  %1083 = vmatprep.subr.mxu0 0.0
  %1084 = vmatpush1.msra.mxu0 0.0
  %1085 = vmatprep.subr.mxu0 0.0
  %1086 = vmatpush1.msra.mxu0 0.0
  %1087 = vmatprep.subr.mxu0 0.0
  %1088 = vmatpush1.msra.mxu0 0.0
  %1089 = vmatprep.subr.mxu0 0.0
  %1090 = vmatpush1.msra.mxu0 0.0
  %1091 = vmatprep.subr.mxu0 0.0
  %1092 = vmatpush1.msra.mxu0 0.0
  %1093 = vmatprep.subr.mxu0 0.0
  %1094 = vmatpush1.msra.mxu0 0.0
  %1095 = vmatprep.subr.mxu0 0.0
  %1096 = vmatpush1.msra.mxu0 0.0
  %1097 = vmatprep.subr.mxu0 0.0
  %1098 = vmatpush1.msra.mxu0 0.0
  %1099 = vmatprep.subr.mxu0 0.0
  %1100 = vmatpush1.msra.mxu0 0.0
  %1101 = vmatprep.subr.mxu0 0.0
  %1102 = vmatpush1.msra.mxu0 0.0
  %1103 = vmatprep.subr.mxu0 0.0
  %1104 = vmatpush1.msra.mxu0 0.0
  %1105 = vmatprep.subr.mxu0 0.0
  %1106 = vmatpush1.msra.mxu0 0.0
  %1107 = vmatprep.subr.mxu0 0.0
  %1108 = vmatpush1.msra.mxu0 0.0
  %1109 = vmatprep.subr.mxu0 0.0
  %1110 = vmatpush1.msra.mxu0 0.0
  %1111 = vmatprep.subr.mxu0 0.0
  %1112 = vmatpush1.msra.mxu0 0.0
  %1113 = vmatprep.subr.mxu0 0.0
  %1114 = vmatpush1.msra.mxu0 0.0
  %1115 = vmatprep.subr.mxu0 0.0
  %1116 = vmatpush1.msra.mxu0 0.0
  %1117 = vmatprep.subr.mxu0 0.0
  %1118 = vmatpush1.msra.mxu0 0.0
  %1119 = vmatprep.subr.mxu0 0.0
  %1120 = vmatpush1.msra.mxu0 0.0
  %1121 = vmatprep.subr.mxu0 0.0
  %1122 = vmatpush1.msra.mxu0 0.0
  %1123 = vmatprep.subr.mxu0 0.0
  %1124 = vmatpush1.msra.mxu0 0.0
  %1125 = vmatprep.subr.mxu0 0.0
  %1126 = vmatpush1.msra.mxu0 0.0
  %1127 = vmatprep.mubr.f32.mxu0 0.0
  %1128 = vmatmul.mubr.f32.gmra.mrb[0].mxu0 %v832
  %v1129 = vpop.f32.mrb[0].mxu0
  %v1130 = vadd.f32 0.0, %v1129
  %v1131 = vpop.f32.mrb[0].mxu0
  %1132 = vdwg.mxu0
  %v1133 = vld [vmem:[%s23] sm:$0xff]
  %v1134 = vld [vmem:[%s23 + $0x8] sm:$0xff]
  %v1135 = vld [vmem:[%s23 + $0x10] sm:$0xff]
  %v1136 = vld [vmem:[%s23 + $0x18] sm:$0xff]
  %v1137 = vld [vmem:[%s25] sm:$0xff]
  %v1138 = vld [vmem:[%s25 + $0x8] sm:$0xff]
  %v1139 = vld [vmem:[%s25 + $0x10] sm:$0xff]
  %v1140 = vld [vmem:[%s25 + $0x18] sm:$0xff]
  %v1142 = vsel %vm359, %v1062, 0
  %1144 = vmatprep.subr.mxu0 0.0
  %1145 = vmatpush1.msra.mxu0 %v1137
  %1146 = vmatprep.subr.mxu0 0.0
  %1147 = vmatpush1.msra.mxu0 %v1138
  %1148 = vmatprep.subr.mxu0 0.0
  %1149 = vmatpush1.msra.mxu0 %v1139
  %1150 = vmatprep.subr.mxu0 0.0
  %1151 = vmatpush1.msra.mxu0 %v1140
  %1152 = vmatprep.subr.mxu0 0.0
  %1153 = vmatpush1.msra.mxu0 0.0
  %1154 = vmatprep.subr.mxu0 0.0
  %1155 = vmatpush1.msra.mxu0 0.0
  %1156 = vmatprep.subr.mxu0 0.0
  %1157 = vmatpush1.msra.mxu0 0.0
  %1158 = vmatprep.subr.mxu0 0.0
  %1159 = vmatpush1.msra.mxu0 0.0
  %1160 = vmatprep.subr.mxu0 0.0
  %1161 = vmatpush1.msra.mxu0 0.0
  %1162 = vmatprep.subr.mxu0 0.0
  %1163 = vmatpush1.msra.mxu0 0.0
  %1164 = vmatprep.subr.mxu0 0.0
  %1165 = vmatpush1.msra.mxu0 0.0
  %1166 = vmatprep.subr.mxu0 0.0
  %1167 = vmatpush1.msra.mxu0 0.0
  %1168 = vmatprep.subr.mxu0 0.0
  %1169 = vmatpush1.msra.mxu0 0.0
  %1170 = vmatprep.subr.mxu0 0.0
  %1171 = vmatpush1.msra.mxu0 0.0
  %1172 = vmatprep.subr.mxu0 0.0
  %1173 = vmatpush1.msra.mxu0 0.0
  %1174 = vmatprep.subr.mxu0 0.0
  %1175 = vmatpush1.msra.mxu0 0.0
  %1176 = vmatprep.subr.mxu0 0.0
  %1177 = vmatpush1.msra.mxu0 0.0
  %1178 = vmatprep.subr.mxu0 0.0
  %1179 = vmatpush1.msra.mxu0 0.0
  %1180 = vmatprep.subr.mxu0 0.0
  %1181 = vmatpush1.msra.mxu0 0.0
  %1182 = vmatprep.subr.mxu0 0.0
  %1183 = vmatpush1.msra.mxu0 0.0
  %1184 = vmatprep.subr.mxu0 0.0
  %1185 = vmatpush1.msra.mxu0 0.0
  %1186 = vmatprep.subr.mxu0 0.0
  %1187 = vmatpush1.msra.mxu0 0.0
  %1188 = vmatprep.subr.mxu0 0.0
  %1189 = vmatpush1.msra.mxu0 0.0
  %1190 = vmatprep.subr.mxu0 0.0
  %1191 = vmatpush1.msra.mxu0 0.0
  %1192 = vmatprep.subr.mxu0 0.0
  %1193 = vmatpush1.msra.mxu0 0.0
  %1194 = vmatprep.subr.mxu0 0.0
  %1195 = vmatpush1.msra.mxu0 0.0
  %1196 = vmatprep.subr.mxu0 0.0
  %1197 = vmatpush1.msra.mxu0 0.0
  %1198 = vmatprep.subr.mxu0 0.0
  %1199 = vmatpush1.msra.mxu0 0.0
  %1200 = vmatprep.subr.mxu0 0.0
  %1201 = vmatpush1.msra.mxu0 0.0
  %1202 = vmatprep.subr.mxu0 0.0
  %1203 = vmatpush1.msra.mxu0 0.0
  %1204 = vmatprep.subr.mxu0 0.0
  %1205 = vmatpush1.msra.mxu0 0.0
  %1206 = vmatprep.subr.mxu0 0.0
  %1207 = vmatpush1.msra.mxu0 0.0
  %1208 = vmatprep.mubr.f32.mxu0 0.0
  %1209 = vmatmul.mubr.f32.gmra.mrb[0].mxu0 %v1142
  %v1210 = vpop.f32.mrb[0].mxu0
  %v1211 = vadd.f32 0.0, %v1210
  %v1212 = vpop.f32.mrb[0].mxu0
  %1213 = vdwg.mxu0
  %v1215 = vsel %vm359, %v1130, 0
  %1217 = vmatprep.subr.mxu0 0.0
  %1218 = vmatpush1.msra.mxu0 %v1133
  %1219 = vmatprep.subr.mxu0 0.0
  %1220 = vmatpush1.msra.mxu0 %v1134
  %1221 = vmatprep.subr.mxu0 0.0
  %1222 = vmatpush1.msra.mxu0 %v1135
  %1223 = vmatprep.subr.mxu0 0.0
  %1224 = vmatpush1.msra.mxu0 %v1136
  %1225 = vmatprep.subr.mxu0 0.0
  %1226 = vmatpush1.msra.mxu0 0.0
  %1227 = vmatprep.subr.mxu0 0.0
  %1228 = vmatpush1.msra.mxu0 0.0
  %1229 = vmatprep.subr.mxu0 0.0
  %1230 = vmatpush1.msra.mxu0 0.0
  %1231 = vmatprep.subr.mxu0 0.0
  %1232 = vmatpush1.msra.mxu0 0.0
  %1233 = vmatprep.subr.mxu0 0.0
  %1234 = vmatpush1.msra.mxu0 0.0
  %1235 = vmatprep.subr.mxu0 0.0
  %1236 = vmatpush1.msra.mxu0 0.0
  %1237 = vmatprep.subr.mxu0 0.0
  %1238 = vmatpush1.msra.mxu0 0.0
  %1239 = vmatprep.subr.mxu0 0.0
  %1240 = vmatpush1.msra.mxu0 0.0
  %1241 = vmatprep.subr.mxu0 0.0
  %1242 = vmatpush1.msra.mxu0 0.0
  %1243 = vmatprep.subr.mxu0 0.0
  %1244 = vmatpush1.msra.mxu0 0.0
  %1245 = vmatprep.subr.mxu0 0.0
  %1246 = vmatpush1.msra.mxu0 0.0
  %1247 = vmatprep.subr.mxu0 0.0
  %1248 = vmatpush1.msra.mxu0 0.0
  %1249 = vmatprep.subr.mxu0 0.0
  %1250 = vmatpush1.msra.mxu0 0.0
  %1251 = vmatprep.subr.mxu0 0.0
  %1252 = vmatpush1.msra.mxu0 0.0
  %1253 = vmatprep.subr.mxu0 0.0
  %1254 = vmatpush1.msra.mxu0 0.0
  %1255 = vmatprep.subr.mxu0 0.0
  %1256 = vmatpush1.msra.mxu0 0.0
  %1257 = vmatprep.subr.mxu0 0.0
  %1258 = vmatpush1.msra.mxu0 0.0
  %1259 = vmatprep.subr.mxu0 0.0
  %1260 = vmatpush1.msra.mxu0 0.0
  %1261 = vmatprep.subr.mxu0 0.0
  %1262 = vmatpush1.msra.mxu0 0.0
  %1263 = vmatprep.subr.mxu0 0.0
  %1264 = vmatpush1.msra.mxu0 0.0
  %1265 = vmatprep.subr.mxu0 0.0
  %1266 = vmatpush1.msra.mxu0 0.0
  %1267 = vmatprep.subr.mxu0 0.0
  %1268 = vmatpush1.msra.mxu0 0.0
  %1269 = vmatprep.subr.mxu0 0.0
  %1270 = vmatpush1.msra.mxu0 0.0
  %1271 = vmatprep.subr.mxu0 0.0
  %1272 = vmatpush1.msra.mxu0 0.0
  %1273 = vmatprep.subr.mxu0 0.0
  %1274 = vmatpush1.msra.mxu0 0.0
  %1275 = vmatprep.subr.mxu0 0.0
  %1276 = vmatpush1.msra.mxu0 0.0
  %1277 = vmatprep.subr.mxu0 0.0
  %1278 = vmatpush1.msra.mxu0 0.0
  %1279 = vmatprep.subr.mxu0 0.0
  %1280 = vmatpush1.msra.mxu0 0.0
  %1281 = vmatprep.mubr.f32.mxu0 0.0
  %1282 = vmatmul.mubr.f32.gmra.mrb[0].mxu0 %v1215
  %v1283 = vpop.f32.mrb[0].mxu0
  %v1284 = vadd.f32 %v1211, %v1283
  %v1285 = vpop.f32.mrb[0].mxu0
  %1286 = vdwg.mxu0
  %v1287 = vld [vmem:[%s27] sm:$0x1]
  %v1289 = vlaneseq
  %v1290 = vshrl.u32 %v1289, 7
  %v1291 = vsub.s32 0, %v1290
  %v1292 = vrot.slane %v1287, %v1291
  %v1294 = vadd.f32 %v1284, %v1292
  %1295 = vmatprep.subr.mxu0 0.0
  %1296 = vmatpush1.msra.mxu0 %v1294
  %1297 = vmatprep.subr.mxu0 0.0
  %1298 = vmatpush1.msra.mxu0 0.0
  %1299 = vmatprep.subr.mxu0 0.0
  %1300 = vmatpush1.msra.mxu0 0.0
  %1301 = vmatprep.subr.mxu0 0.0
  %1302 = vmatpush1.msra.mxu0 0.0
  %1303 = vmatprep.subr.mxu0 0.0
  %1304 = vmatpush1.msra.mxu0 0.0
  %1305 = vmatprep.subr.mxu0 0.0
  %1306 = vmatpush1.msra.mxu0 0.0
  %1307 = vmatprep.subr.mxu0 0.0
  %1308 = vmatpush1.msra.mxu0 0.0
  %1309 = vmatprep.subr.mxu0 0.0
  %1310 = vmatpush1.msra.mxu0 0.0
  %1311 = vmatprep.subr.mxu0 0.0
  %1312 = vmatpush1.msra.mxu0 0.0
  %1313 = vmatprep.subr.mxu0 0.0
  %1314 = vmatpush1.msra.mxu0 0.0
  %1315 = vmatprep.subr.mxu0 0.0
  %1316 = vmatpush1.msra.mxu0 0.0
  %1317 = vmatprep.subr.mxu0 0.0
  %1318 = vmatpush1.msra.mxu0 0.0
  %1319 = vmatprep.subr.mxu0 0.0
  %1320 = vmatpush1.msra.mxu0 0.0
  %1321 = vmatprep.subr.mxu0 0.0
  %1322 = vmatpush1.msra.mxu0 0.0
  %1323 = vmatprep.subr.mxu0 0.0
  %1324 = vmatpush1.msra.mxu0 0.0
  %1325 = vmatprep.subr.mxu0 0.0
  %1326 = vmatpush1.msra.mxu0 0.0
  %1327 = vmatprep.subr.mxu0 0.0
  %1328 = vmatpush1.msra.mxu0 0.0
  %1329 = vmatprep.subr.mxu0 0.0
  %1330 = vmatpush1.msra.mxu0 0.0
  %1331 = vmatprep.subr.mxu0 0.0
  %1332 = vmatpush1.msra.mxu0 0.0
  %1333 = vmatprep.subr.mxu0 0.0
  %1334 = vmatpush1.msra.mxu0 0.0
  %1335 = vmatprep.subr.mxu0 0.0
  %1336 = vmatpush1.msra.mxu0 0.0
  %1337 = vmatprep.subr.mxu0 0.0
  %1338 = vmatpush1.msra.mxu0 0.0
  %1339 = vmatprep.subr.mxu0 0.0
  %1340 = vmatpush1.msra.mxu0 0.0
  %1341 = vmatprep.subr.mxu0 0.0
  %1342 = vmatpush1.msra.mxu0 0.0
  %1343 = vmatprep.subr.mxu0 0.0
  %1344 = vmatpush1.msra.mxu0 0.0
  %1345 = vmatprep.subr.mxu0 0.0
  %1346 = vmatpush1.msra.mxu0 0.0
  %1347 = vmatprep.subr.mxu0 0.0
  %1348 = vmatpush1.msra.mxu0 0.0
  %1349 = vmatprep.subr.mxu0 0.0
  %1350 = vmatpush1.msra.mxu0 0.0
  %1351 = vmatprep.subr.mxu0 0.0
  %1352 = vmatpush1.msra.mxu0 0.0
  %1353 = vmatprep.subr.mxu0 0.0
  %1354 = vmatpush1.msra.mxu0 0.0
  %1355 = vmatprep.subr.mxu0 0.0
  %1356 = vmatpush1.msra.mxu0 0.0
  %1357 = vmatprep.subr.mxu0 0.0
  %1358 = vmatpush1.msra.mxu0 0.0
  %1359 = vmatprep.mubr.f32.mxu0 0.0
  %1360 = vmatmul.mubr.f32.gmra.mrb[0].mxu0 %v832
  %v1361 = vpop.f32.mrb[0].mxu0
  %v1362 = vadd.f32 0.0, %v1361
  %v1363 = vpop.f32.mrb[0].mxu0
  %1364 = vdwg.mxu0
  %v1366 = vsel %vm359, %v1294, 0
  %1368 = vmatprep.subr.mxu0 0.0
  %1369 = vmatpush1.msra.mxu0 %v1137
  %1370 = vmatprep.subr.mxu0 0.0
  %1371 = vmatpush1.msra.mxu0 %v1138
  %1372 = vmatprep.subr.mxu0 0.0
  %1373 = vmatpush1.msra.mxu0 %v1139
  %1374 = vmatprep.subr.mxu0 0.0
  %1375 = vmatpush1.msra.mxu0 %v1140
  %1376 = vmatprep.subr.mxu0 0.0
  %1377 = vmatpush1.msra.mxu0 0.0
  %1378 = vmatprep.subr.mxu0 0.0
  %1379 = vmatpush1.msra.mxu0 0.0
  %1380 = vmatprep.subr.mxu0 0.0
  %1381 = vmatpush1.msra.mxu0 0.0
  %1382 = vmatprep.subr.mxu0 0.0
  %1383 = vmatpush1.msra.mxu0 0.0
  %1384 = vmatprep.subr.mxu0 0.0
  %1385 = vmatpush1.msra.mxu0 0.0
  %1386 = vmatprep.subr.mxu0 0.0
  %1387 = vmatpush1.msra.mxu0 0.0
  %1388 = vmatprep.subr.mxu0 0.0
  %1389 = vmatpush1.msra.mxu0 0.0
  %1390 = vmatprep.subr.mxu0 0.0
  %1391 = vmatpush1.msra.mxu0 0.0
  %1392 = vmatprep.subr.mxu0 0.0
  %1393 = vmatpush1.msra.mxu0 0.0
  %1394 = vmatprep.subr.mxu0 0.0
  %1395 = vmatpush1.msra.mxu0 0.0
  %1396 = vmatprep.subr.mxu0 0.0
  %1397 = vmatpush1.msra.mxu0 0.0
  %1398 = vmatprep.subr.mxu0 0.0
  %1399 = vmatpush1.msra.mxu0 0.0
  %1400 = vmatprep.subr.mxu0 0.0
  %1401 = vmatpush1.msra.mxu0 0.0
  %1402 = vmatprep.subr.mxu0 0.0
  %1403 = vmatpush1.msra.mxu0 0.0
  %1404 = vmatprep.subr.mxu0 0.0
  %1405 = vmatpush1.msra.mxu0 0.0
  %1406 = vmatprep.subr.mxu0 0.0
  %1407 = vmatpush1.msra.mxu0 0.0
  %1408 = vmatprep.subr.mxu0 0.0
  %1409 = vmatpush1.msra.mxu0 0.0
  %1410 = vmatprep.subr.mxu0 0.0
  %1411 = vmatpush1.msra.mxu0 0.0
  %1412 = vmatprep.subr.mxu0 0.0
  %1413 = vmatpush1.msra.mxu0 0.0
  %1414 = vmatprep.subr.mxu0 0.0
  %1415 = vmatpush1.msra.mxu0 0.0
  %1416 = vmatprep.subr.mxu0 0.0
  %1417 = vmatpush1.msra.mxu0 0.0
  %1418 = vmatprep.subr.mxu0 0.0
  %1419 = vmatpush1.msra.mxu0 0.0
  %1420 = vmatprep.subr.mxu0 0.0
  %1421 = vmatpush1.msra.mxu0 0.0
  %1422 = vmatprep.subr.mxu0 0.0
  %1423 = vmatpush1.msra.mxu0 0.0
  %1424 = vmatprep.subr.mxu0 0.0
  %1425 = vmatpush1.msra.mxu0 0.0
  %1426 = vmatprep.subr.mxu0 0.0
  %1427 = vmatpush1.msra.mxu0 0.0
  %1428 = vmatprep.subr.mxu0 0.0
  %1429 = vmatpush1.msra.mxu0 0.0
  %1430 = vmatprep.subr.mxu0 0.0
  %1431 = vmatpush1.msra.mxu0 0.0
  %1432 = vmatprep.mubr.f32.mxu0 0.0
  %1433 = vmatmul.mubr.f32.gmra.mrb[0].mxu0 %v1366
  %v1434 = vpop.f32.mrb[0].mxu0
  %v1435 = vadd.f32 0.0, %v1434
  %v1436 = vpop.f32.mrb[0].mxu0
  %1437 = vdwg.mxu0
  %v1439 = vsel %vm359, %v1362, 0
  %1441 = vmatprep.subr.mxu0 0.0
  %1442 = vmatpush1.msra.mxu0 %v1133
  %1443 = vmatprep.subr.mxu0 0.0
  %1444 = vmatpush1.msra.mxu0 %v1134
  %1445 = vmatprep.subr.mxu0 0.0
  %1446 = vmatpush1.msra.mxu0 %v1135
  %1447 = vmatprep.subr.mxu0 0.0
  %1448 = vmatpush1.msra.mxu0 %v1136
  %1449 = vmatprep.subr.mxu0 0.0
  %1450 = vmatpush1.msra.mxu0 0.0
  %1451 = vmatprep.subr.mxu0 0.0
  %1452 = vmatpush1.msra.mxu0 0.0
  %1453 = vmatprep.subr.mxu0 0.0
  %1454 = vmatpush1.msra.mxu0 0.0
  %1455 = vmatprep.subr.mxu0 0.0
  %1456 = vmatpush1.msra.mxu0 0.0
  %1457 = vmatprep.subr.mxu0 0.0
  %1458 = vmatpush1.msra.mxu0 0.0
  %1459 = vmatprep.subr.mxu0 0.0
  %1460 = vmatpush1.msra.mxu0 0.0
  %1461 = vmatprep.subr.mxu0 0.0
  %1462 = vmatpush1.msra.mxu0 0.0
  %1463 = vmatprep.subr.mxu0 0.0
  %1464 = vmatpush1.msra.mxu0 0.0
  %1465 = vmatprep.subr.mxu0 0.0
  %1466 = vmatpush1.msra.mxu0 0.0
  %1467 = vmatprep.subr.mxu0 0.0
  %1468 = vmatpush1.msra.mxu0 0.0
  %1469 = vmatprep.subr.mxu0 0.0
  %1470 = vmatpush1.msra.mxu0 0.0
  %1471 = vmatprep.subr.mxu0 0.0
  %1472 = vmatpush1.msra.mxu0 0.0
  %1473 = vmatprep.subr.mxu0 0.0
  %1474 = vmatpush1.msra.mxu0 0.0
  %1475 = vmatprep.subr.mxu0 0.0
  %1476 = vmatpush1.msra.mxu0 0.0
  %1477 = vmatprep.subr.mxu0 0.0
  %1478 = vmatpush1.msra.mxu0 0.0
  %1479 = vmatprep.subr.mxu0 0.0
  %1480 = vmatpush1.msra.mxu0 0.0
  %1481 = vmatprep.subr.mxu0 0.0
  %1482 = vmatpush1.msra.mxu0 0.0
  %1483 = vmatprep.subr.mxu0 0.0
  %1484 = vmatpush1.msra.mxu0 0.0
  %1485 = vmatprep.subr.mxu0 0.0
  %1486 = vmatpush1.msra.mxu0 0.0
  %1487 = vmatprep.subr.mxu0 0.0
  %1488 = vmatpush1.msra.mxu0 0.0
  %1489 = vmatprep.subr.mxu0 0.0
  %1490 = vmatpush1.msra.mxu0 0.0
  %1491 = vmatprep.subr.mxu0 0.0
  %1492 = vmatpush1.msra.mxu0 0.0
  %1493 = vmatprep.subr.mxu0 0.0
  %1494 = vmatpush1.msra.mxu0 0.0
  %1495 = vmatprep.subr.mxu0 0.0
  %1496 = vmatpush1.msra.mxu0 0.0
  %1497 = vmatprep.subr.mxu0 0.0
  %1498 = vmatpush1.msra.mxu0 0.0
  %1499 = vmatprep.subr.mxu0 0.0
  %1500 = vmatpush1.msra.mxu0 0.0
  %1501 = vmatprep.subr.mxu0 0.0
  %1502 = vmatpush1.msra.mxu0 0.0
  %1503 = vmatprep.subr.mxu0 0.0
  %1504 = vmatpush1.msra.mxu0 0.0
  %1505 = vmatprep.mubr.f32.mxu0 0.0
  %1506 = vmatmul.mubr.f32.gmra.mrb[0].mxu0 %v1439
  %v1507 = vpop.f32.mrb[0].mxu0
  %v1508 = vadd.f32 %v1435, %v1507
  %v1509 = vpop.f32.mrb[0].mxu0
  %1510 = vdwg.mxu0
  %v1511 = vadd.f32 %v1508, %v1292
  %v1512 = vld [vmem:[%s53] sm:$0xff]
  %v1513 = vld [vmem:[%s53 + $0x8] sm:$0xff]
  %v1514 = vld [vmem:[%s53 + $0x10] sm:$0xff]
  %v1515 = vld [vmem:[%s53 + $0x18] sm:$0xff]
  %v1516 = vld [vmem:[%s53 + $0x20] sm:$0xff]
  %v1517 = vld [vmem:[%s53 + $0x28] sm:$0xff]
  %v1518 = vld [vmem:[%s53 + $0x30] sm:$0xff]
  %v1519 = vld [vmem:[%s53 + $0x38] sm:$0xff]
  %v1520 = vld [vmem:[%s53 + $0x40] sm:$0xff]
  %v1521 = vld [vmem:[%s53 + $0x48] sm:$0xff]
  %v1522 = vld [vmem:[%s53 + $0x50] sm:$0xff]
  %v1523 = vld [vmem:[%s53 + $0x58] sm:$0xff]
  %v1524 = vld [vmem:[%s53 + $0x60] sm:$0xff]
  %v1525 = vld [vmem:[%s53 + $0x68] sm:$0xff]
  %v1526 = vld [vmem:[%s53 + $0x70] sm:$0xff]
  %v1527 = vld [vmem:[%s53 + $0x78] sm:$0xff]
  %v1528 = vld [vmem:[%s53 + $0x80] sm:$0xff]
  %v1529 = vld [vmem:[%s53 + $0x88] sm:$0xff]
  %v1530 = vld [vmem:[%s53 + $0x90] sm:$0xff]
  %v1531 = vld [vmem:[%s53 + $0x98] sm:$0xff]
  %v1532 = vld [vmem:[%s53 + $0xa0] sm:$0xff]
  %v1533 = vld [vmem:[%s53 + $0xa8] sm:$0xff]
  %v1534 = vld [vmem:[%s53 + $0xb0] sm:$0xff]
  %v1535 = vld [vmem:[%s53 + $0xb8] sm:$0xff]
  %v1536 = vld [vmem:[%s53 + $0xc0] sm:$0xff]
  %v1537 = vld [vmem:[%s53 + $0xc8] sm:$0xff]
  %v1538 = vld [vmem:[%s53 + $0xd0] sm:$0xff]
  %v1539 = vld [vmem:[%s53 + $0xd8] sm:$0xff]
  %v1540 = vld [vmem:[%s53 + $0xe0] sm:$0xff]
  %v1541 = vld [vmem:[%s53 + $0xe8] sm:$0xff]
  %v1542 = vld [vmem:[%s53 + $0xf0] sm:$0xff]
  %v1543 = vld [vmem:[%s53 + $0xf8] sm:$0xff]
  %v1544 = vld [vmem:[%s57] sm:$0xff]
  %v1545 = vld [vmem:[%s57 + $0x8] sm:$0xff]
  %v1546 = vld [vmem:[%s57 + $0x10] sm:$0xff]
  %v1547 = vld [vmem:[%s57 + $0x18] sm:$0xff]
  %v1548 = vld [vmem:[%s57 + $0x20] sm:$0xff]
  %v1549 = vld [vmem:[%s57 + $0x28] sm:$0xff]
  %v1550 = vld [vmem:[%s57 + $0x30] sm:$0xff]
  %v1551 = vld [vmem:[%s57 + $0x38] sm:$0xff]
  %v1552 = vld [vmem:[%s57 + $0x40] sm:$0xff]
  %v1553 = vld [vmem:[%s57 + $0x48] sm:$0xff]
  %v1554 = vld [vmem:[%s57 + $0x50] sm:$0xff]
  %v1555 = vld [vmem:[%s57 + $0x58] sm:$0xff]
  %v1556 = vld [vmem:[%s57 + $0x60] sm:$0xff]
  %v1557 = vld [vmem:[%s57 + $0x68] sm:$0xff]
  %v1558 = vld [vmem:[%s57 + $0x70] sm:$0xff]
  %v1559 = vld [vmem:[%s57 + $0x78] sm:$0xff]
  %v1560 = vld [vmem:[%s57 + $0x80] sm:$0xff]
  %v1561 = vld [vmem:[%s57 + $0x88] sm:$0xff]
  %v1562 = vld [vmem:[%s57 + $0x90] sm:$0xff]
  %v1563 = vld [vmem:[%s57 + $0x98] sm:$0xff]
  %v1564 = vld [vmem:[%s57 + $0xa0] sm:$0xff]
  %v1565 = vld [vmem:[%s57 + $0xa8] sm:$0xff]
  %v1566 = vld [vmem:[%s57 + $0xb0] sm:$0xff]
  %v1567 = vld [vmem:[%s57 + $0xb8] sm:$0xff]
  %v1568 = vld [vmem:[%s57 + $0xc0] sm:$0xff]
  %v1569 = vld [vmem:[%s57 + $0xc8] sm:$0xff]
  %v1570 = vld [vmem:[%s57 + $0xd0] sm:$0xff]
  %v1571 = vld [vmem:[%s57 + $0xd8] sm:$0xff]
  %v1572 = vld [vmem:[%s57 + $0xe0] sm:$0xff]
  %v1573 = vld [vmem:[%s57 + $0xe8] sm:$0xff]
  %v1574 = vld [vmem:[%s57 + $0xf0] sm:$0xff]
  %v1575 = vld [vmem:[%s57 + $0xf8] sm:$0xff]
  %v1576 = vld [vmem:[%s59] sm:$0xff]
  %v1577 = vld [vmem:[%s59 + $0x8] sm:$0xff]
  %v1578 = vld [vmem:[%s59 + $0x10] sm:$0xff]
  %v1579 = vld [vmem:[%s59 + $0x18] sm:$0xff]
  %v1580 = vld [vmem:[%s59 + $0x20] sm:$0xff]
  %v1581 = vld [vmem:[%s59 + $0x28] sm:$0xff]
  %v1582 = vld [vmem:[%s59 + $0x30] sm:$0xff]
  %v1583 = vld [vmem:[%s59 + $0x38] sm:$0xff]
  %v1584 = vld [vmem:[%s59 + $0x40] sm:$0xff]
  %v1585 = vld [vmem:[%s59 + $0x48] sm:$0xff]
  %v1586 = vld [vmem:[%s59 + $0x50] sm:$0xff]
  %v1587 = vld [vmem:[%s59 + $0x58] sm:$0xff]
  %v1588 = vld [vmem:[%s59 + $0x60] sm:$0xff]
  %v1589 = vld [vmem:[%s59 + $0x68] sm:$0xff]
  %v1590 = vld [vmem:[%s59 + $0x70] sm:$0xff]
  %v1591 = vld [vmem:[%s59 + $0x78] sm:$0xff]
  %v1592 = vld [vmem:[%s59 + $0x80] sm:$0xff]
  %v1593 = vld [vmem:[%s59 + $0x88] sm:$0xff]
  %v1594 = vld [vmem:[%s59 + $0x90] sm:$0xff]
  %v1595 = vld [vmem:[%s59 + $0x98] sm:$0xff]
  %v1596 = vld [vmem:[%s59 + $0xa0] sm:$0xff]
  %v1597 = vld [vmem:[%s59 + $0xa8] sm:$0xff]
  %v1598 = vld [vmem:[%s59 + $0xb0] sm:$0xff]
  %v1599 = vld [vmem:[%s59 + $0xb8] sm:$0xff]
  %v1600 = vld [vmem:[%s59 + $0xc0] sm:$0xff]
  %v1601 = vld [vmem:[%s59 + $0xc8] sm:$0xff]
  %v1602 = vld [vmem:[%s59 + $0xd0] sm:$0xff]
  %v1603 = vld [vmem:[%s59 + $0xd8] sm:$0xff]
  %v1604 = vld [vmem:[%s59 + $0xe0] sm:$0xff]
  %v1605 = vld [vmem:[%s59 + $0xe8] sm:$0xff]
  %v1606 = vld [vmem:[%s59 + $0xf0] sm:$0xff]
  %v1607 = vld [vmem:[%s59 + $0xf8] sm:$0xff]
  %1608 = vst.msk [vmem:[#allocation2] sm:$0xff] %vm359, 0.0
  %1609 = vst.msk [vmem:[#allocation2 + $0x8] sm:$0xff] %vm359, 0.0
  %1610 = vst.msk [vmem:[#allocation2 + $0x10] sm:$0xff] %vm359, 0.0
  %1611 = vst.msk [vmem:[#allocation2 + $0x18] sm:$0xff] %vm359, 0.0
  %1612 = vst.msk [vmem:[#allocation2 + $0x120] sm:$0xff] %vm359, 0.0
  %1613 = vst.msk [vmem:[#allocation2 + $0x128] sm:$0xff] %vm359, 0.0
  %1614 = vst.msk [vmem:[#allocation2 + $0x130] sm:$0xff] %vm359, 0.0
  %1615 = vst.msk [vmem:[#allocation2 + $0x138] sm:$0xff] %vm359, 0.0
  %v1616 = vld [vmem:[%s51] sm:$0xff]
  %v1617 = vld [vmem:[%s51 + $0x8] sm:$0xff]
  %v1618 = vld [vmem:[%s51 + $0x10] sm:$0xff]
  %v1619 = vld [vmem:[%s51 + $0x18] sm:$0xff]
  %v1620 = vld [vmem:[%s51 + $0x20] sm:$0xff]
  %v1621 = vld [vmem:[%s51 + $0x28] sm:$0xff]
  %v1622 = vld [vmem:[%s51 + $0x30] sm:$0xff]
  %v1623 = vld [vmem:[%s51 + $0x38] sm:$0xff]
  %v1624 = vld [vmem:[%s51 + $0x40] sm:$0xff]
  %v1625 = vld [vmem:[%s51 + $0x48] sm:$0xff]
  %v1626 = vld [vmem:[%s51 + $0x50] sm:$0xff]
  %v1627 = vld [vmem:[%s51 + $0x58] sm:$0xff]
  %v1628 = vld [vmem:[%s51 + $0x60] sm:$0xff]
  %v1629 = vld [vmem:[%s51 + $0x68] sm:$0xff]
  %v1630 = vld [vmem:[%s51 + $0x70] sm:$0xff]
  %v1631 = vld [vmem:[%s51 + $0x78] sm:$0xff]
  %v1632 = vld [vmem:[%s51 + $0x80] sm:$0xff]
  %v1633 = vld [vmem:[%s51 + $0x88] sm:$0xff]
  %v1634 = vld [vmem:[%s51 + $0x90] sm:$0xff]
  %v1635 = vld [vmem:[%s51 + $0x98] sm:$0xff]
  %v1636 = vld [vmem:[%s51 + $0xa0] sm:$0xff]
  %v1637 = vld [vmem:[%s51 + $0xa8] sm:$0xff]
  %v1638 = vld [vmem:[%s51 + $0xb0] sm:$0xff]
  %v1639 = vld [vmem:[%s51 + $0xb8] sm:$0xff]
  %v1640 = vld [vmem:[%s51 + $0xc0] sm:$0xff]
  %v1641 = vld [vmem:[%s51 + $0xc8] sm:$0xff]
  %v1642 = vld [vmem:[%s51 + $0xd0] sm:$0xff]
  %v1643 = vld [vmem:[%s51 + $0xd8] sm:$0xff]
  %v1644 = vld [vmem:[%s51 + $0xe0] sm:$0xff]
  %v1645 = vld [vmem:[%s51 + $0xe8] sm:$0xff]
  %v1646 = vld [vmem:[%s51 + $0xf0] sm:$0xff]
  %v1647 = vld [vmem:[%s51 + $0xf8] sm:$0xff]
  %v1649 = vsel %vm154, %v1616, 0
  %v1652 = vsel %vm154, %v1617, 0
  %v1655 = vsel %vm154, %v1618, 0
  %v1658 = vsel %vm154, %v1619, 0
  %v1661 = vsel %vm154, %v1620, 0
  %v1664 = vsel %vm154, %v1621, 0
  %v1667 = vsel %vm154, %v1622, 0
  %v1670 = vsel %vm154, %v1623, 0
  %v1673 = vsel %vm154, %v1624, 0
  %v1676 = vsel %vm154, %v1625, 0
  %v1679 = vsel %vm154, %v1626, 0
  %v1682 = vsel %vm154, %v1627, 0
  %v1685 = vsel %vm154, %v1628, 0
  %v1688 = vsel %vm154, %v1629, 0
  %v1691 = vsel %vm154, %v1630, 0
  %v1694 = vsel %vm154, %v1631, 0
  %v1697 = vsel %vm154, %v1632, 0
  %v1700 = vsel %vm154, %v1633, 0
  %v1703 = vsel %vm154, %v1634, 0
  %v1706 = vsel %vm154, %v1635, 0
  %v1709 = vsel %vm154, %v1636, 0
  %v1712 = vsel %vm154, %v1637, 0
  %v1715 = vsel %vm154, %v1638, 0
  %v1718 = vsel %vm154, %v1639, 0
  %v1721 = vsel %vm154, %v1640, 0
  %v1724 = vsel %vm154, %v1641, 0
  %v1727 = vsel %vm154, %v1642, 0
  %v1730 = vsel %vm154, %v1643, 0
  %v1733 = vsel %vm154, %v1644, 0
  %v1736 = vsel %vm154, %v1645, 0
  %v1739 = vsel %vm154, %v1646, 0
  %v1742 = vsel %vm154, %v1647, 0
  %1744 = vmatprep.subr.mxu0 0.0
  %1745 = vmatpush1.msra.mxu0 %v1511
  %1746 = vmatprep.subr.mxu0 0.0
  %1747 = vmatpush1.msra.mxu0 0.0
  %1748 = vmatprep.subr.mxu0 0.0
  %1749 = vmatpush1.msra.mxu0 0.0
  %1750 = vmatprep.subr.mxu0 0.0
  %1751 = vmatpush1.msra.mxu0 0.0
  %1752 = vmatprep.subr.mxu0 0.0
  %1753 = vmatpush1.msra.mxu0 0.0
  %1754 = vmatprep.subr.mxu0 0.0
  %1755 = vmatpush1.msra.mxu0 0.0
  %1756 = vmatprep.subr.mxu0 0.0
  %1757 = vmatpush1.msra.mxu0 0.0
  %1758 = vmatprep.subr.mxu0 0.0
  %1759 = vmatpush1.msra.mxu0 0.0
  %1760 = vmatprep.subr.mxu0 0.0
  %1761 = vmatpush1.msra.mxu0 0.0
  %1762 = vmatprep.subr.mxu0 0.0
  %1763 = vmatpush1.msra.mxu0 0.0
  %1764 = vmatprep.subr.mxu0 0.0
  %1765 = vmatpush1.msra.mxu0 0.0
  %1766 = vmatprep.subr.mxu0 0.0
  %1767 = vmatpush1.msra.mxu0 0.0
  %1768 = vmatprep.subr.mxu0 0.0
  %1769 = vmatpush1.msra.mxu0 0.0
  %1770 = vmatprep.subr.mxu0 0.0
  %1771 = vmatpush1.msra.mxu0 0.0
  %1772 = vmatprep.subr.mxu0 0.0
  %1773 = vmatpush1.msra.mxu0 0.0
  %1774 = vmatprep.subr.mxu0 0.0
  %1775 = vmatpush1.msra.mxu0 0.0
  %1776 = vmatprep.subr.mxu0 0.0
  %1777 = vmatpush1.msra.mxu0 0.0
  %1778 = vmatprep.subr.mxu0 0.0
  %1779 = vmatpush1.msra.mxu0 0.0
  %1780 = vmatprep.subr.mxu0 0.0
  %1781 = vmatpush1.msra.mxu0 0.0
  %1782 = vmatprep.subr.mxu0 0.0
  %1783 = vmatpush1.msra.mxu0 0.0
  %1784 = vmatprep.subr.mxu0 0.0
  %1785 = vmatpush1.msra.mxu0 0.0
  %1786 = vmatprep.subr.mxu0 0.0
  %1787 = vmatpush1.msra.mxu0 0.0
  %1788 = vmatprep.subr.mxu0 0.0
  %1789 = vmatpush1.msra.mxu0 0.0
  %1790 = vmatprep.subr.mxu0 0.0
  %1791 = vmatpush1.msra.mxu0 0.0
  %1792 = vmatprep.subr.mxu0 0.0
  %1793 = vmatpush1.msra.mxu0 0.0
  %1794 = vmatprep.subr.mxu0 0.0
  %1795 = vmatpush1.msra.mxu0 0.0
  %1796 = vmatprep.subr.mxu0 0.0
  %1797 = vmatpush1.msra.mxu0 0.0
  %1798 = vmatprep.subr.mxu0 0.0
  %1799 = vmatpush1.msra.mxu0 0.0
  %1800 = vmatprep.subr.mxu0 0.0
  %1801 = vmatpush1.msra.mxu0 0.0
  %1802 = vmatprep.subr.mxu0 0.0
  %1803 = vmatpush1.msra.mxu0 0.0
  %1804 = vmatprep.subr.mxu0 0.0
  %1805 = vmatpush1.msra.mxu0 0.0
  %1806 = vmatprep.subr.mxu0 0.0
  %1807 = vmatpush1.msra.mxu0 0.0
  %1808 = vmatprep.mubr.f32.mxu0 0.0
  %1809 = vmatmul.mubr.f32.gmra.mrb[0].mxu0 %v1649
  %v1810 = vpop.f32.mrb[0].mxu0
  %v1811 = vadd.f32 0.0, %v1810
  %v1812 = vpop.f32.mrb[0].mxu0
  %1813 = vmatprep.mubr.f32.mxu0 0.0
  %1814 = vmatmul.mubr.f32.gmra.mrb[0].mxu0 %v1652
  %v1815 = vpop.f32.mrb[0].mxu0
  %v1816 = vadd.f32 0.0, %v1815
  %v1817 = vpop.f32.mrb[0].mxu0
  %1818 = vmatprep.mubr.f32.mxu0 0.0
  %1819 = vmatmul.mubr.f32.gmra.mrb[0].mxu0 %v1655
  %v1820 = vpop.f32.mrb[0].mxu0
  %v1821 = vadd.f32 0.0, %v1820
  %v1822 = vpop.f32.mrb[0].mxu0
  %1823 = vmatprep.mubr.f32.mxu0 0.0
  %1824 = vmatmul.mubr.f32.gmra.mrb[0].mxu0 %v1658
  %v1825 = vpop.f32.mrb[0].mxu0
  %v1826 = vadd.f32 0.0, %v1825
  %v1827 = vpop.f32.mrb[0].mxu0
  %1828 = vmatprep.mubr.f32.mxu0 0.0
  %1829 = vmatmul.mubr.f32.gmra.mrb[0].mxu0 %v1661
  %v1830 = vpop.f32.mrb[0].mxu0
  %v1831 = vadd.f32 0.0, %v1830
  %v1832 = vpop.f32.mrb[0].mxu0
  %1833 = vmatprep.mubr.f32.mxu0 0.0
  %1834 = vmatmul.mubr.f32.gmra.mrb[0].mxu0 %v1664
  %v1835 = vpop.f32.mrb[0].mxu0
  %v1836 = vadd.f32 0.0, %v1835
  %v1837 = vpop.f32.mrb[0].mxu0
  %1838 = vmatprep.mubr.f32.mxu0 0.0
  %1839 = vmatmul.mubr.f32.gmra.mrb[0].mxu0 %v1667
  %v1840 = vpop.f32.mrb[0].mxu0
  %v1841 = vadd.f32 0.0, %v1840
  %v1842 = vpop.f32.mrb[0].mxu0
  %1843 = vmatprep.mubr.f32.mxu0 0.0
  %1844 = vmatmul.mubr.f32.gmra.mrb[0].mxu0 %v1670
  %v1845 = vpop.f32.mrb[0].mxu0
  %v1846 = vadd.f32 0.0, %v1845
  %v1847 = vpop.f32.mrb[0].mxu0
  %1848 = vmatprep.mubr.f32.mxu0 0.0
  %1849 = vmatmul.mubr.f32.gmra.mrb[0].mxu0 %v1673
  %v1850 = vpop.f32.mrb[0].mxu0
  %v1851 = vadd.f32 0.0, %v1850
  %v1852 = vpop.f32.mrb[0].mxu0
  %1853 = vmatprep.mubr.f32.mxu0 0.0
  %1854 = vmatmul.mubr.f32.gmra.mrb[0].mxu0 %v1676
  %v1855 = vpop.f32.mrb[0].mxu0
  %v1856 = vadd.f32 0.0, %v1855
  %v1857 = vpop.f32.mrb[0].mxu0
  %1858 = vmatprep.mubr.f32.mxu0 0.0
  %1859 = vmatmul.mubr.f32.gmra.mrb[0].mxu0 %v1679
  %v1860 = vpop.f32.mrb[0].mxu0
  %v1861 = vadd.f32 0.0, %v1860
  %v1862 = vpop.f32.mrb[0].mxu0
  %1863 = vmatprep.mubr.f32.mxu0 0.0
  %1864 = vmatmul.mubr.f32.gmra.mrb[0].mxu0 %v1682
  %v1865 = vpop.f32.mrb[0].mxu0
  %v1866 = vadd.f32 0.0, %v1865
  %v1867 = vpop.f32.mrb[0].mxu0
  %1868 = vmatprep.mubr.f32.mxu0 0.0
  %1869 = vmatmul.mubr.f32.gmra.mrb[0].mxu0 %v1685
  %v1870 = vpop.f32.mrb[0].mxu0
  %v1871 = vadd.f32 0.0, %v1870
  %v1872 = vpop.f32.mrb[0].mxu0
  %1873 = vmatprep.mubr.f32.mxu0 0.0
  %1874 = vmatmul.mubr.f32.gmra.mrb[0].mxu0 %v1688
  %v1875 = vpop.f32.mrb[0].mxu0
  %v1876 = vadd.f32 0.0, %v1875
  %v1877 = vpop.f32.mrb[0].mxu0
  %1878 = vmatprep.mubr.f32.mxu0 0.0
  %1879 = vmatmul.mubr.f32.gmra.mrb[0].mxu0 %v1691
  %v1880 = vpop.f32.mrb[0].mxu0
  %v1881 = vadd.f32 0.0, %v1880
  %v1882 = vpop.f32.mrb[0].mxu0
  %1883 = vmatprep.mubr.f32.mxu0 0.0
  %1884 = vmatmul.mubr.f32.gmra.mrb[0].mxu0 %v1694
  %v1885 = vpop.f32.mrb[0].mxu0
  %v1886 = vadd.f32 0.0, %v1885
  %v1887 = vpop.f32.mrb[0].mxu0
  %1888 = vmatprep.mubr.f32.mxu0 0.0
  %1889 = vmatmul.mubr.f32.gmra.mrb[0].mxu0 %v1697
  %v1890 = vpop.f32.mrb[0].mxu0
  %v1891 = vadd.f32 0.0, %v1890
  %v1892 = vpop.f32.mrb[0].mxu0
  %1893 = vmatprep.mubr.f32.mxu0 0.0
  %1894 = vmatmul.mubr.f32.gmra.mrb[0].mxu0 %v1700
  %v1895 = vpop.f32.mrb[0].mxu0
  %v1896 = vadd.f32 0.0, %v1895
  %v1897 = vpop.f32.mrb[0].mxu0
  %1898 = vmatprep.mubr.f32.mxu0 0.0
  %1899 = vmatmul.mubr.f32.gmra.mrb[0].mxu0 %v1703
  %v1900 = vpop.f32.mrb[0].mxu0
  %v1901 = vadd.f32 0.0, %v1900
  %v1902 = vpop.f32.mrb[0].mxu0
  %1903 = vmatprep.mubr.f32.mxu0 0.0
  %1904 = vmatmul.mubr.f32.gmra.mrb[0].mxu0 %v1706
  %v1905 = vpop.f32.mrb[0].mxu0
  %v1906 = vadd.f32 0.0, %v1905
  %v1907 = vpop.f32.mrb[0].mxu0
  %1908 = vmatprep.mubr.f32.mxu0 0.0
  %1909 = vmatmul.mubr.f32.gmra.mrb[0].mxu0 %v1709
  %v1910 = vpop.f32.mrb[0].mxu0
  %v1911 = vadd.f32 0.0, %v1910
  %v1912 = vpop.f32.mrb[0].mxu0
  %1913 = vmatprep.mubr.f32.mxu0 0.0
  %1914 = vmatmul.mubr.f32.gmra.mrb[0].mxu0 %v1712
  %v1915 = vpop.f32.mrb[0].mxu0
  %v1916 = vadd.f32 0.0, %v1915
  %v1917 = vpop.f32.mrb[0].mxu0
  %1918 = vmatprep.mubr.f32.mxu0 0.0
  %1919 = vmatmul.mubr.f32.gmra.mrb[0].mxu0 %v1715
  %v1920 = vpop.f32.mrb[0].mxu0
  %v1921 = vadd.f32 0.0, %v1920
  %v1922 = vpop.f32.mrb[0].mxu0
  %1923 = vmatprep.mubr.f32.mxu0 0.0
  %1924 = vmatmul.mubr.f32.gmra.mrb[0].mxu0 %v1718
  %v1925 = vpop.f32.mrb[0].mxu0
  %v1926 = vadd.f32 0.0, %v1925
  %v1927 = vpop.f32.mrb[0].mxu0
  %1928 = vmatprep.mubr.f32.mxu0 0.0
  %1929 = vmatmul.mubr.f32.gmra.mrb[0].mxu0 %v1721
  %v1930 = vpop.f32.mrb[0].mxu0
  %v1931 = vadd.f32 0.0, %v1930
  %v1932 = vpop.f32.mrb[0].mxu0
  %1933 = vmatprep.mubr.f32.mxu0 0.0
  %1934 = vmatmul.mubr.f32.gmra.mrb[0].mxu0 %v1724
  %v1935 = vpop.f32.mrb[0].mxu0
  %v1936 = vadd.f32 0.0, %v1935
  %v1937 = vpop.f32.mrb[0].mxu0
  %1938 = vmatprep.mubr.f32.mxu0 0.0
  %1939 = vmatmul.mubr.f32.gmra.mrb[0].mxu0 %v1727
  %v1940 = vpop.f32.mrb[0].mxu0
  %v1941 = vadd.f32 0.0, %v1940
  %v1942 = vpop.f32.mrb[0].mxu0
  %1943 = vmatprep.mubr.f32.mxu0 0.0
  %1944 = vmatmul.mubr.f32.gmra.mrb[0].mxu0 %v1730
  %v1945 = vpop.f32.mrb[0].mxu0
  %v1946 = vadd.f32 0.0, %v1945
  %v1947 = vpop.f32.mrb[0].mxu0
  %1948 = vmatprep.mubr.f32.mxu0 0.0
  %1949 = vmatmul.mubr.f32.gmra.mrb[0].mxu0 %v1733
  %v1950 = vpop.f32.mrb[0].mxu0
  %v1951 = vadd.f32 0.0, %v1950
  %v1952 = vpop.f32.mrb[0].mxu0
  %1953 = vmatprep.mubr.f32.mxu0 0.0
  %1954 = vmatmul.mubr.f32.gmra.mrb[0].mxu0 %v1736
  %v1955 = vpop.f32.mrb[0].mxu0
  %v1956 = vadd.f32 0.0, %v1955
  %v1957 = vpop.f32.mrb[0].mxu0
  %1958 = vmatprep.mubr.f32.mxu0 0.0
  %1959 = vmatmul.mubr.f32.gmra.mrb[0].mxu0 %v1739
  %v1960 = vpop.f32.mrb[0].mxu0
  %v1961 = vadd.f32 0.0, %v1960
  %v1962 = vpop.f32.mrb[0].mxu0
  %1963 = vmatprep.mubr.f32.mxu0 0.0
  %1964 = vmatmul.mubr.f32.gmra.mrb[0].mxu0 %v1742
  %v1965 = vpop.f32.mrb[0].mxu0
  %v1966 = vadd.f32 0.0, %v1965
  %v1967 = vpop.f32.mrb[0].mxu0
  %1968 = vdwg.mxu0
  %v1969 = vmul.f32 %v1811, %v1512
  %v1970 = vmul.f32 %v1816, %v1513
  %v1971 = vmul.f32 %v1821, %v1514
  %v1972 = vmul.f32 %v1826, %v1515
  %v1973 = vmul.f32 %v1831, %v1516
  %v1974 = vmul.f32 %v1836, %v1517
  %v1975 = vmul.f32 %v1841, %v1518
  %v1976 = vmul.f32 %v1846, %v1519
  %v1977 = vmul.f32 %v1851, %v1520
  %v1978 = vmul.f32 %v1856, %v1521
  %v1979 = vmul.f32 %v1861, %v1522
  %v1980 = vmul.f32 %v1866, %v1523
  %v1981 = vmul.f32 %v1871, %v1524
  %v1982 = vmul.f32 %v1876, %v1525
  %v1983 = vmul.f32 %v1881, %v1526
  %v1984 = vmul.f32 %v1886, %v1527
  %v1985 = vmul.f32 %v1891, %v1528
  %v1986 = vmul.f32 %v1896, %v1529
  %v1987 = vmul.f32 %v1901, %v1530
  %v1988 = vmul.f32 %v1906, %v1531
  %v1989 = vmul.f32 %v1911, %v1532
  %v1990 = vmul.f32 %v1916, %v1533
  %v1991 = vmul.f32 %v1921, %v1534
  %v1992 = vmul.f32 %v1926, %v1535
  %v1993 = vmul.f32 %v1931, %v1536
  %v1994 = vmul.f32 %v1936, %v1537
  %v1995 = vmul.f32 %v1941, %v1538
  %v1996 = vmul.f32 %v1946, %v1539
  %v1997 = vmul.f32 %v1951, %v1540
  %v1998 = vmul.f32 %v1956, %v1541
  %v1999 = vmul.f32 %v1961, %v1542
  %v2000 = vmul.f32 %v1966, %v1543
  %v2001 = vsel %vm359, %v1969, 0.0
  %2002 = vadd.xlane.f32.xlu0 %v2001
  %v2003 = vpop.xlane.xlu0 %2002
  %v2004 = vsel %vm359, %v1970, 0.0
  %2005 = vadd.xlane.f32.xlu0 %v2004
  %v2006 = vpop.xlane.xlu0 %2005
  %v2007 = vsel %vm359, %v1971, 0.0
  %2008 = vadd.xlane.f32.xlu0 %v2007
  %v2009 = vpop.xlane.xlu0 %2008
  %v2010 = vsel %vm359, %v1972, 0.0
  %2011 = vadd.xlane.f32.xlu0 %v2010
  %v2012 = vpop.xlane.xlu0 %2011
  %v2013 = vsel %vm359, %v1973, 0.0
  %2014 = vadd.xlane.f32.xlu0 %v2013
  %v2015 = vpop.xlane.xlu0 %2014
  %v2016 = vsel %vm359, %v1974, 0.0
  %2017 = vadd.xlane.f32.xlu0 %v2016
  %v2018 = vpop.xlane.xlu0 %2017
  %v2019 = vsel %vm359, %v1975, 0.0
  %2020 = vadd.xlane.f32.xlu0 %v2019
  %v2021 = vpop.xlane.xlu0 %2020
  %v2022 = vsel %vm359, %v1976, 0.0
  %2023 = vadd.xlane.f32.xlu0 %v2022
  %v2024 = vpop.xlane.xlu0 %2023
  %v2025 = vsel %vm359, %v1977, 0.0
  %2026 = vadd.xlane.f32.xlu0 %v2025
  %v2027 = vpop.xlane.xlu0 %2026
  %v2028 = vsel %vm359, %v1978, 0.0
  %2029 = vadd.xlane.f32.xlu0 %v2028
  %v2030 = vpop.xlane.xlu0 %2029
  %v2031 = vsel %vm359, %v1979, 0.0
  %2032 = vadd.xlane.f32.xlu0 %v2031
  %v2033 = vpop.xlane.xlu0 %2032
  %v2034 = vsel %vm359, %v1980, 0.0
  %2035 = vadd.xlane.f32.xlu0 %v2034
  %v2036 = vpop.xlane.xlu0 %2035
  %v2037 = vsel %vm359, %v1981, 0.0
  %2038 = vadd.xlane.f32.xlu0 %v2037
  %v2039 = vpop.xlane.xlu0 %2038
  %v2040 = vsel %vm359, %v1982, 0.0
  %2041 = vadd.xlane.f32.xlu0 %v2040
  %v2042 = vpop.xlane.xlu0 %2041
  %v2043 = vsel %vm359, %v1983, 0.0
  %2044 = vadd.xlane.f32.xlu0 %v2043
  %v2045 = vpop.xlane.xlu0 %2044
  %v2046 = vsel %vm359, %v1984, 0.0
  %2047 = vadd.xlane.f32.xlu0 %v2046
  %v2048 = vpop.xlane.xlu0 %2047
  %v2049 = vsel %vm359, %v1985, 0.0
  %2050 = vadd.xlane.f32.xlu0 %v2049
  %v2051 = vpop.xlane.xlu0 %2050
  %v2052 = vsel %vm359, %v1986, 0.0
  %2053 = vadd.xlane.f32.xlu0 %v2052
  %v2054 = vpop.xlane.xlu0 %2053
  %v2055 = vsel %vm359, %v1987, 0.0
  %2056 = vadd.xlane.f32.xlu0 %v2055
  %v2057 = vpop.xlane.xlu0 %2056
  %v2058 = vsel %vm359, %v1988, 0.0
  %2059 = vadd.xlane.f32.xlu0 %v2058
  %v2060 = vpop.xlane.xlu0 %2059
  %v2061 = vsel %vm359, %v1989, 0.0
  %2062 = vadd.xlane.f32.xlu0 %v2061
  %v2063 = vpop.xlane.xlu0 %2062
  %v2064 = vsel %vm359, %v1990, 0.0
  %2065 = vadd.xlane.f32.xlu0 %v2064
  %v2066 = vpop.xlane.xlu0 %2065
  %v2067 = vsel %vm359, %v1991, 0.0
  %2068 = vadd.xlane.f32.xlu0 %v2067
  %v2069 = vpop.xlane.xlu0 %2068
  %v2070 = vsel %vm359, %v1992, 0.0
  %2071 = vadd.xlane.f32.xlu0 %v2070
  %v2072 = vpop.xlane.xlu0 %2071
  %v2073 = vsel %vm359, %v1993, 0.0
  %2074 = vadd.xlane.f32.xlu0 %v2073
  %v2075 = vpop.xlane.xlu0 %2074
  %v2076 = vsel %vm359, %v1994, 0.0
  %2077 = vadd.xlane.f32.xlu0 %v2076
  %v2078 = vpop.xlane.xlu0 %2077
  %v2079 = vsel %vm359, %v1995, 0.0
  %2080 = vadd.xlane.f32.xlu0 %v2079
  %v2081 = vpop.xlane.xlu0 %2080
  %v2082 = vsel %vm359, %v1996, 0.0
  %2083 = vadd.xlane.f32.xlu0 %v2082
  %v2084 = vpop.xlane.xlu0 %2083
  %v2085 = vsel %vm359, %v1997, 0.0
  %2086 = vadd.xlane.f32.xlu0 %v2085
  %v2087 = vpop.xlane.xlu0 %2086
  %v2088 = vsel %vm359, %v1998, 0.0
  %2089 = vadd.xlane.f32.xlu0 %v2088
  %v2090 = vpop.xlane.xlu0 %2089
  %v2091 = vsel %vm359, %v1999, 0.0
  %2092 = vadd.xlane.f32.xlu0 %v2091
  %v2093 = vpop.xlane.xlu0 %2092
  %v2094 = vsel %vm359, %v2000, 0.0
  %2095 = vadd.xlane.f32.xlu0 %v2094
  %v2096 = vpop.xlane.xlu0 %2095
  %2097 = vst.msk [vmem:[#allocation2 + $0x20] sm:$0xff] %vm359, %v2003
  %2098 = vst.msk [vmem:[#allocation2 + $0x28] sm:$0xff] %vm359, %v2006
  %2099 = vst.msk [vmem:[#allocation2 + $0x30] sm:$0xff] %vm359, %v2009
  %2100 = vst.msk [vmem:[#allocation2 + $0x38] sm:$0xff] %vm359, %v2012
  %2101 = vst.msk [vmem:[#allocation2 + $0x40] sm:$0xff] %vm359, %v2015
  %2102 = vst.msk [vmem:[#allocation2 + $0x48] sm:$0xff] %vm359, %v2018
  %2103 = vst.msk [vmem:[#allocation2 + $0x50] sm:$0xff] %vm359, %v2021
  %2104 = vst.msk [vmem:[#allocation2 + $0x58] sm:$0xff] %vm359, %v2024
  %2105 = vst.msk [vmem:[#allocation2 + $0x60] sm:$0xff] %vm359, %v2027
  %2106 = vst.msk [vmem:[#allocation2 + $0x68] sm:$0xff] %vm359, %v2030
  %2107 = vst.msk [vmem:[#allocation2 + $0x70] sm:$0xff] %vm359, %v2033
  %2108 = vst.msk [vmem:[#allocation2 + $0x78] sm:$0xff] %vm359, %v2036
  %2109 = vst.msk [vmem:[#allocation2 + $0x80] sm:$0xff] %vm359, %v2039
  %2110 = vst.msk [vmem:[#allocation2 + $0x88] sm:$0xff] %vm359, %v2042
  %2111 = vst.msk [vmem:[#allocation2 + $0x90] sm:$0xff] %vm359, %v2045
  %2112 = vst.msk [vmem:[#allocation2 + $0x98] sm:$0xff] %vm359, %v2048
  %2113 = vst.msk [vmem:[#allocation2 + $0xa0] sm:$0xff] %vm359, %v2051
  %2114 = vst.msk [vmem:[#allocation2 + $0xa8] sm:$0xff] %vm359, %v2054
  %2115 = vst.msk [vmem:[#allocation2 + $0xb0] sm:$0xff] %vm359, %v2057
  %2116 = vst.msk [vmem:[#allocation2 + $0xb8] sm:$0xff] %vm359, %v2060
  %2117 = vst.msk [vmem:[#allocation2 + $0xc0] sm:$0xff] %vm359, %v2063
  %2118 = vst.msk [vmem:[#allocation2 + $0xc8] sm:$0xff] %vm359, %v2066
  %2119 = vst.msk [vmem:[#allocation2 + $0xd0] sm:$0xff] %vm359, %v2069
  %2120 = vst.msk [vmem:[#allocation2 + $0xd8] sm:$0xff] %vm359, %v2072
  %2121 = vst.msk [vmem:[#allocation2 + $0xe0] sm:$0xff] %vm359, %v2075
  %2122 = vst.msk [vmem:[#allocation2 + $0xe8] sm:$0xff] %vm359, %v2078
  %2123 = vst.msk [vmem:[#allocation2 + $0xf0] sm:$0xff] %vm359, %v2081
  %2124 = vst.msk [vmem:[#allocation2 + $0xf8] sm:$0xff] %vm359, %v2084
  %2125 = vst.msk [vmem:[#allocation2 + $0x100] sm:$0xff] %vm359, %v2087
  %2126 = vst.msk [vmem:[#allocation2 + $0x108] sm:$0xff] %vm359, %v2090
  %2127 = vst.msk [vmem:[#allocation2 + $0x110] sm:$0xff] %vm359, %v2093
  %2128 = vst.msk [vmem:[#allocation2 + $0x118] sm:$0xff] %vm359, %v2096
  %v2129 = vld [vmem:[%s35] sm:$0xff]
  %v2130 = vld [vmem:[%s35 + $0x8] sm:$0x1]
  %v2131 = vld [vmem:[#allocation2] sm:$0xff]
  %v2132 = vld [vmem:[#allocation2 + $0x8] sm:$0xff]
  %v2133 = vld [vmem:[#allocation2 + $0x10] sm:$0xff]
  %v2134 = vld [vmem:[#allocation2 + $0x18] sm:$0xff]
  %v2135 = vld [vmem:[#allocation2 + $0x20] sm:$0xff]
  %v2136 = vld [vmem:[#allocation2 + $0x28] sm:$0xff]
  %v2137 = vld [vmem:[#allocation2 + $0x30] sm:$0xff]
  %v2138 = vld [vmem:[#allocation2 + $0x38] sm:$0xff]
  %v2139 = vld [vmem:[#allocation2 + $0x40] sm:$0xff]
  %v2140 = vld [vmem:[#allocation2 + $0x48] sm:$0xff]
  %v2141 = vld [vmem:[#allocation2 + $0x50] sm:$0xff]
  %v2142 = vld [vmem:[#allocation2 + $0x58] sm:$0xff]
  %v2143 = vld [vmem:[#allocation2 + $0x60] sm:$0xff]
  %v2144 = vld [vmem:[#allocation2 + $0x68] sm:$0xff]
  %v2145 = vld [vmem:[#allocation2 + $0x70] sm:$0xff]
  %v2146 = vld [vmem:[#allocation2 + $0x78] sm:$0xff]
  %v2147 = vld [vmem:[#allocation2 + $0x80] sm:$0xff]
  %v2148 = vld [vmem:[#allocation2 + $0x88] sm:$0xff]
  %v2149 = vld [vmem:[#allocation2 + $0x90] sm:$0xff]
  %v2150 = vld [vmem:[#allocation2 + $0x98] sm:$0xff]
  %v2151 = vld [vmem:[#allocation2 + $0xa0] sm:$0xff]
  %v2152 = vld [vmem:[#allocation2 + $0xa8] sm:$0xff]
  %v2153 = vld [vmem:[#allocation2 + $0xb0] sm:$0xff]
  %v2154 = vld [vmem:[#allocation2 + $0xb8] sm:$0xff]
  %v2155 = vld [vmem:[#allocation2 + $0xc0] sm:$0xff]
  %v2156 = vld [vmem:[#allocation2 + $0xc8] sm:$0xff]
  %v2157 = vld [vmem:[#allocation2 + $0xd0] sm:$0xff]
  %v2158 = vld [vmem:[#allocation2 + $0xd8] sm:$0xff]
  %v2159 = vld [vmem:[#allocation2 + $0xe0] sm:$0xff]
  %v2160 = vld [vmem:[#allocation2 + $0xe8] sm:$0xff]
  %v2161 = vld [vmem:[#allocation2 + $0xf0] sm:$0xff]
  %v2162 = vld [vmem:[#allocation2 + $0xf8] sm:$0xff]
  %v2163 = vrot.slane %v2131, 7
  %v2164 = vrot.slane %v2132, 7
  %v2165 = vrot.slane %v2133, 7
  %v2166 = vrot.slane %v2134, 7
  %v2167 = vrot.slane %v2135, 7
  %v2168 = vrot.slane %v2136, 7
  %v2169 = vrot.slane %v2137, 7
  %v2170 = vrot.slane %v2138, 7
  %v2171 = vrot.slane %v2139, 7
  %v2172 = vrot.slane %v2140, 7
  %v2173 = vrot.slane %v2141, 7
  %v2174 = vrot.slane %v2142, 7
  %v2175 = vrot.slane %v2143, 7
  %v2176 = vrot.slane %v2144, 7
  %v2177 = vrot.slane %v2145, 7
  %v2178 = vrot.slane %v2146, 7
  %v2179 = vrot.slane %v2147, 7
  %v2180 = vrot.slane %v2148, 7
  %v2181 = vrot.slane %v2149, 7
  %v2182 = vrot.slane %v2150, 7
  %v2183 = vrot.slane %v2151, 7
  %v2184 = vrot.slane %v2152, 7
  %v2185 = vrot.slane %v2153, 7
  %v2186 = vrot.slane %v2154, 7
  %v2187 = vrot.slane %v2155, 7
  %v2188 = vrot.slane %v2156, 7
  %v2189 = vrot.slane %v2157, 7
  %v2190 = vrot.slane %v2158, 7
  %v2191 = vrot.slane %v2159, 7
  %v2192 = vrot.slane %v2160, 7
  %v2193 = vrot.slane %v2161, 7
  %v2194 = vrot.slane %v2162, 7
  %v2195 = vlaneseq
  %v2196 = vshrl.u32 %v2195, 7
  %vm2197 = vcmp.lt.s32.totalorder %v2196, 1
  %v2198 = vsel %vm2197, %v2193, %v2194
  %v2199 = vsel %vm2197, %v2192, %v2193
  %v2200 = vsel %vm2197, %v2191, %v2192
  %v2201 = vsel %vm2197, %v2190, %v2191
  %v2202 = vsel %vm2197, %v2189, %v2190
  %v2203 = vsel %vm2197, %v2188, %v2189
  %v2204 = vsel %vm2197, %v2187, %v2188
  %v2205 = vsel %vm2197, %v2186, %v2187
  %v2206 = vsel %vm2197, %v2185, %v2186
  %v2207 = vsel %vm2197, %v2184, %v2185
  %v2208 = vsel %vm2197, %v2183, %v2184
  %v2209 = vsel %vm2197, %v2182, %v2183
  %v2210 = vsel %vm2197, %v2181, %v2182
  %v2211 = vsel %vm2197, %v2180, %v2181
  %v2212 = vsel %vm2197, %v2179, %v2180
  %v2213 = vsel %vm2197, %v2178, %v2179
  %v2214 = vsel %vm2197, %v2177, %v2178
  %v2215 = vsel %vm2197, %v2176, %v2177
  %v2216 = vsel %vm2197, %v2175, %v2176
  %v2217 = vsel %vm2197, %v2174, %v2175
  %v2218 = vsel %vm2197, %v2173, %v2174
  %v2219 = vsel %vm2197, %v2172, %v2173
  %v2220 = vsel %vm2197, %v2171, %v2172
  %v2221 = vsel %vm2197, %v2170, %v2171
  %v2222 = vsel %vm2197, %v2169, %v2170
  %v2223 = vsel %vm2197, %v2168, %v2169
  %v2224 = vsel %vm2197, %v2167, %v2168
  %v2225 = vsel %vm2197, %v2166, %v2167
  %v2226 = vsel %vm2197, %v2165, %v2166
  %v2227 = vsel %vm2197, %v2164, %v2165
  %v2228 = vsel %vm2197, %v2163, %v2164
  %v2229 = vsel %vm2197, %v2194, %v2163
  %v2230 = vmul.f32 %v2229, %v1544
  %v2231 = vmul.f32 %v2228, %v1545
  %v2232 = vmul.f32 %v2227, %v1546
  %v2233 = vmul.f32 %v2226, %v1547
  %v2234 = vmul.f32 %v2225, %v1548
  %v2235 = vmul.f32 %v2224, %v1549
  %v2236 = vmul.f32 %v2223, %v1550
  %v2237 = vmul.f32 %v2222, %v1551
  %v2238 = vmul.f32 %v2221, %v1552
  %v2239 = vmul.f32 %v2220, %v1553
  %v2240 = vmul.f32 %v2219, %v1554
  %v2241 = vmul.f32 %v2218, %v1555
  %v2242 = vmul.f32 %v2217, %v1556
  %v2243 = vmul.f32 %v2216, %v1557
  %v2244 = vmul.f32 %v2215, %v1558
  %v2245 = vmul.f32 %v2214, %v1559
  %v2246 = vmul.f32 %v2213, %v1560
  %v2247 = vmul.f32 %v2212, %v1561
  %v2248 = vmul.f32 %v2211, %v1562
  %v2249 = vmul.f32 %v2210, %v1563
  %v2250 = vmul.f32 %v2209, %v1564
  %v2251 = vmul.f32 %v2208, %v1565
  %v2252 = vmul.f32 %v2207, %v1566
  %v2253 = vmul.f32 %v2206, %v1567
  %v2254 = vmul.f32 %v2205, %v1568
  %v2255 = vmul.f32 %v2204, %v1569
  %v2256 = vmul.f32 %v2203, %v1570
  %v2257 = vmul.f32 %v2202, %v1571
  %v2258 = vmul.f32 %v2201, %v1572
  %v2259 = vmul.f32 %v2200, %v1573
  %v2260 = vmul.f32 %v2199, %v1574
  %v2261 = vmul.f32 %v2198, %v1575
  %v2262 = vrot.slane %v2131, 1
  %v2263 = vrot.slane %v2132, 1
  %v2264 = vrot.slane %v2133, 1
  %v2265 = vrot.slane %v2134, 1
  %v2266 = vrot.slane %v2135, 1
  %v2267 = vrot.slane %v2136, 1
  %v2268 = vrot.slane %v2137, 1
  %v2269 = vrot.slane %v2138, 1
  %v2270 = vrot.slane %v2139, 1
  %v2271 = vrot.slane %v2140, 1
  %v2272 = vrot.slane %v2141, 1
  %v2273 = vrot.slane %v2142, 1
  %v2274 = vrot.slane %v2143, 1
  %v2275 = vrot.slane %v2144, 1
  %v2276 = vrot.slane %v2145, 1
  %v2277 = vrot.slane %v2146, 1
  %v2278 = vrot.slane %v2147, 1
  %v2279 = vrot.slane %v2148, 1
  %v2280 = vrot.slane %v2149, 1
  %v2281 = vrot.slane %v2150, 1
  %v2282 = vrot.slane %v2151, 1
  %v2283 = vrot.slane %v2152, 1
  %v2284 = vrot.slane %v2153, 1
  %v2285 = vrot.slane %v2154, 1
  %v2286 = vrot.slane %v2155, 1
  %v2287 = vrot.slane %v2156, 1
  %v2288 = vrot.slane %v2157, 1
  %v2289 = vrot.slane %v2158, 1
  %v2290 = vrot.slane %v2159, 1
  %v2291 = vrot.slane %v2160, 1
  %v2292 = vrot.slane %v2161, 1
  %v2293 = vrot.slane %v2162, 1
  %vm2294 = vcmp.lt.s32.totalorder %v2196, 7
  %v2295 = vsel %vm2294, %v2292, %v2293
  %v2296 = vsel %vm2294, %v2291, %v2292
  %v2297 = vsel %vm2294, %v2290, %v2291
  %v2298 = vsel %vm2294, %v2289, %v2290
  %v2299 = vsel %vm2294, %v2288, %v2289
  %v2300 = vsel %vm2294, %v2287, %v2288
  %v2301 = vsel %vm2294, %v2286, %v2287
  %v2302 = vsel %vm2294, %v2285, %v2286
  %v2303 = vsel %vm2294, %v2284, %v2285
  %v2304 = vsel %vm2294, %v2283, %v2284
  %v2305 = vsel %vm2294, %v2282, %v2283
  %v2306 = vsel %vm2294, %v2281, %v2282
  %v2307 = vsel %vm2294, %v2280, %v2281
  %v2308 = vsel %vm2294, %v2279, %v2280
  %v2309 = vsel %vm2294, %v2278, %v2279
  %v2310 = vsel %vm2294, %v2277, %v2278
  %v2311 = vsel %vm2294, %v2276, %v2277
  %v2312 = vsel %vm2294, %v2275, %v2276
  %v2313 = vsel %vm2294, %v2274, %v2275
  %v2314 = vsel %vm2294, %v2273, %v2274
  %v2315 = vsel %vm2294, %v2272, %v2273
  %v2316 = vsel %vm2294, %v2271, %v2272
  %v2317 = vsel %vm2294, %v2270, %v2271
  %v2318 = vsel %vm2294, %v2269, %v2270
  %v2319 = vsel %vm2294, %v2268, %v2269
  %v2320 = vsel %vm2294, %v2267, %v2268
  %v2321 = vsel %vm2294, %v2266, %v2267
  %v2322 = vsel %vm2294, %v2265, %v2266
  %v2323 = vsel %vm2294, %v2264, %v2265
  %v2324 = vsel %vm2294, %v2263, %v2264
  %v2325 = vsel %vm2294, %v2262, %v2263
  %v2326 = vsel %vm2294, %v2293, %v2262
  %v2327 = vmul.f32 %v2325, %v1576
  %v2328 = vmul.f32 %v2324, %v1577
  %v2329 = vmul.f32 %v2323, %v1578
  %v2330 = vmul.f32 %v2322, %v1579
  %v2331 = vmul.f32 %v2321, %v1580
  %v2332 = vmul.f32 %v2320, %v1581
  %v2333 = vmul.f32 %v2319, %v1582
  %v2334 = vmul.f32 %v2318, %v1583
  %v2335 = vmul.f32 %v2317, %v1584
  %v2336 = vmul.f32 %v2316, %v1585
  %v2337 = vmul.f32 %v2315, %v1586
  %v2338 = vmul.f32 %v2314, %v1587
  %v2339 = vmul.f32 %v2313, %v1588
  %v2340 = vmul.f32 %v2312, %v1589
  %v2341 = vmul.f32 %v2311, %v1590
  %v2342 = vmul.f32 %v2310, %v1591
  %v2343 = vmul.f32 %v2309, %v1592
  %v2344 = vmul.f32 %v2308, %v1593
  %v2345 = vmul.f32 %v2307, %v1594
  %v2346 = vmul.f32 %v2306, %v1595
  %v2347 = vmul.f32 %v2305, %v1596
  %v2348 = vmul.f32 %v2304, %v1597
  %v2349 = vmul.f32 %v2303, %v1598
  %v2350 = vmul.f32 %v2302, %v1599
  %v2351 = vmul.f32 %v2301, %v1600
  %v2352 = vmul.f32 %v2300, %v1601
  %v2353 = vmul.f32 %v2299, %v1602
  %v2354 = vmul.f32 %v2298, %v1603
  %v2355 = vmul.f32 %v2297, %v1604
  %v2356 = vmul.f32 %v2296, %v1605
  %v2357 = vmul.f32 %v2295, %v1606
  %v2358 = vmul.f32 %v2326, %v1607
  %v2359 = vld [vmem:[#allocation2 + $0x20] sm:$0xff]
  %v2360 = vld [vmem:[#allocation2 + $0x28] sm:$0xff]
  %v2361 = vld [vmem:[#allocation2 + $0x30] sm:$0xff]
  %v2362 = vld [vmem:[#allocation2 + $0x38] sm:$0xff]
  %v2363 = vld [vmem:[#allocation2 + $0x40] sm:$0xff]
  %v2364 = vld [vmem:[#allocation2 + $0x48] sm:$0xff]
  %v2365 = vld [vmem:[#allocation2 + $0x50] sm:$0xff]
  %v2366 = vld [vmem:[#allocation2 + $0x58] sm:$0xff]
  %v2367 = vld [vmem:[#allocation2 + $0x60] sm:$0xff]
  %v2368 = vld [vmem:[#allocation2 + $0x68] sm:$0xff]
  %v2369 = vld [vmem:[#allocation2 + $0x70] sm:$0xff]
  %v2370 = vld [vmem:[#allocation2 + $0x78] sm:$0xff]
  %v2371 = vld [vmem:[#allocation2 + $0x80] sm:$0xff]
  %v2372 = vld [vmem:[#allocation2 + $0x88] sm:$0xff]
  %v2373 = vld [vmem:[#allocation2 + $0x90] sm:$0xff]
  %v2374 = vld [vmem:[#allocation2 + $0x98] sm:$0xff]
  %v2375 = vld [vmem:[#allocation2 + $0xa0] sm:$0xff]
  %v2376 = vld [vmem:[#allocation2 + $0xa8] sm:$0xff]
  %v2377 = vld [vmem:[#allocation2 + $0xb0] sm:$0xff]
  %v2378 = vld [vmem:[#allocation2 + $0xb8] sm:$0xff]
  %v2379 = vld [vmem:[#allocation2 + $0xc0] sm:$0xff]
  %v2380 = vld [vmem:[#allocation2 + $0xc8] sm:$0xff]
  %v2381 = vld [vmem:[#allocation2 + $0xd0] sm:$0xff]
  %v2382 = vld [vmem:[#allocation2 + $0xd8] sm:$0xff]
  %v2383 = vld [vmem:[#allocation2 + $0xe0] sm:$0xff]
  %v2384 = vld [vmem:[#allocation2 + $0xe8] sm:$0xff]
  %v2385 = vld [vmem:[#allocation2 + $0xf0] sm:$0xff]
  %v2386 = vld [vmem:[#allocation2 + $0xf8] sm:$0xff]
  %v2387 = vld [vmem:[#allocation2 + $0x100] sm:$0xff]
  %v2388 = vld [vmem:[#allocation2 + $0x108] sm:$0xff]
  %v2389 = vld [vmem:[#allocation2 + $0x110] sm:$0xff]
  %v2390 = vld [vmem:[#allocation2 + $0x118] sm:$0xff]
  %v2391 = vrot.slane %v2359, 7
  %v2392 = vrot.slane %v2360, 7
  %v2393 = vrot.slane %v2361, 7
  %v2394 = vrot.slane %v2362, 7
  %v2395 = vrot.slane %v2363, 7
  %v2396 = vrot.slane %v2364, 7
  %v2397 = vrot.slane %v2365, 7
  %v2398 = vrot.slane %v2366, 7
  %v2399 = vrot.slane %v2367, 7
  %v2400 = vrot.slane %v2368, 7
  %v2401 = vrot.slane %v2369, 7
  %v2402 = vrot.slane %v2370, 7
  %v2403 = vrot.slane %v2371, 7
  %v2404 = vrot.slane %v2372, 7
  %v2405 = vrot.slane %v2373, 7
  %v2406 = vrot.slane %v2374, 7
  %v2407 = vrot.slane %v2375, 7
  %v2408 = vrot.slane %v2376, 7
  %v2409 = vrot.slane %v2377, 7
  %v2410 = vrot.slane %v2378, 7
  %v2411 = vrot.slane %v2379, 7
  %v2412 = vrot.slane %v2380, 7
  %v2413 = vrot.slane %v2381, 7
  %v2414 = vrot.slane %v2382, 7
  %v2415 = vrot.slane %v2383, 7
  %v2416 = vrot.slane %v2384, 7
  %v2417 = vrot.slane %v2385, 7
  %v2418 = vrot.slane %v2386, 7
  %v2419 = vrot.slane %v2387, 7
  %v2420 = vrot.slane %v2388, 7
  %v2421 = vrot.slane %v2389, 7
  %v2422 = vrot.slane %v2390, 7
  %v2423 = vsel %vm2197, %v2421, %v2422
  %v2424 = vsel %vm2197, %v2420, %v2421
  %v2425 = vsel %vm2197, %v2419, %v2420
  %v2426 = vsel %vm2197, %v2418, %v2419
  %v2427 = vsel %vm2197, %v2417, %v2418
  %v2428 = vsel %vm2197, %v2416, %v2417
  %v2429 = vsel %vm2197, %v2415, %v2416
  %v2430 = vsel %vm2197, %v2414, %v2415
  %v2431 = vsel %vm2197, %v2413, %v2414
  %v2432 = vsel %vm2197, %v2412, %v2413
  %v2433 = vsel %vm2197, %v2411, %v2412
  %v2434 = vsel %vm2197, %v2410, %v2411
  %v2435 = vsel %vm2197, %v2409, %v2410
  %v2436 = vsel %vm2197, %v2408, %v2409
  %v2437 = vsel %vm2197, %v2407, %v2408
  %v2438 = vsel %vm2197, %v2406, %v2407
  %v2439 = vsel %vm2197, %v2405, %v2406
  %v2440 = vsel %vm2197, %v2404, %v2405
  %v2441 = vsel %vm2197, %v2403, %v2404
  %v2442 = vsel %vm2197, %v2402, %v2403
  %v2443 = vsel %vm2197, %v2401, %v2402
  %v2444 = vsel %vm2197, %v2400, %v2401
  %v2445 = vsel %vm2197, %v2399, %v2400
  %v2446 = vsel %vm2197, %v2398, %v2399
  %v2447 = vsel %vm2197, %v2397, %v2398
  %v2448 = vsel %vm2197, %v2396, %v2397
  %v2449 = vsel %vm2197, %v2395, %v2396
  %v2450 = vsel %vm2197, %v2394, %v2395
  %v2451 = vsel %vm2197, %v2393, %v2394
  %v2452 = vsel %vm2197, %v2392, %v2393
  %v2453 = vsel %vm2197, %v2391, %v2392
  %v2454 = vsel %vm2197, %v2422, %v2391
  %v2455 = vmul.f32 %v2454, %v1544
  %v2456 = vmul.f32 %v2453, %v1545
  %v2457 = vmul.f32 %v2452, %v1546
  %v2458 = vmul.f32 %v2451, %v1547
  %v2459 = vmul.f32 %v2450, %v1548
  %v2460 = vmul.f32 %v2449, %v1549
  %v2461 = vmul.f32 %v2448, %v1550
  %v2462 = vmul.f32 %v2447, %v1551
  %v2463 = vmul.f32 %v2446, %v1552
  %v2464 = vmul.f32 %v2445, %v1553
  %v2465 = vmul.f32 %v2444, %v1554
  %v2466 = vmul.f32 %v2443, %v1555
  %v2467 = vmul.f32 %v2442, %v1556
  %v2468 = vmul.f32 %v2441, %v1557
  %v2469 = vmul.f32 %v2440, %v1558
  %v2470 = vmul.f32 %v2439, %v1559
  %v2471 = vmul.f32 %v2438, %v1560
  %v2472 = vmul.f32 %v2437, %v1561
  %v2473 = vmul.f32 %v2436, %v1562
  %v2474 = vmul.f32 %v2435, %v1563
  %v2475 = vmul.f32 %v2434, %v1564
  %v2476 = vmul.f32 %v2433, %v1565
  %v2477 = vmul.f32 %v2432, %v1566
  %v2478 = vmul.f32 %v2431, %v1567
  %v2479 = vmul.f32 %v2430, %v1568
  %v2480 = vmul.f32 %v2429, %v1569
  %v2481 = vmul.f32 %v2428, %v1570
  %v2482 = vmul.f32 %v2427, %v1571
  %v2483 = vmul.f32 %v2426, %v1572
  %v2484 = vmul.f32 %v2425, %v1573
  %v2485 = vmul.f32 %v2424, %v1574
  %v2486 = vmul.f32 %v2423, %v1575
  %v2487 = vrot.slane %v2359, 1
  %v2488 = vrot.slane %v2360, 1
  %v2489 = vrot.slane %v2361, 1
  %v2490 = vrot.slane %v2362, 1
  %v2491 = vrot.slane %v2363, 1
  %v2492 = vrot.slane %v2364, 1
  %v2493 = vrot.slane %v2365, 1
  %v2494 = vrot.slane %v2366, 1
  %v2495 = vrot.slane %v2367, 1
  %v2496 = vrot.slane %v2368, 1
  %v2497 = vrot.slane %v2369, 1
  %v2498 = vrot.slane %v2370, 1
  %v2499 = vrot.slane %v2371, 1
  %v2500 = vrot.slane %v2372, 1
  %v2501 = vrot.slane %v2373, 1
  %v2502 = vrot.slane %v2374, 1
  %v2503 = vrot.slane %v2375, 1
  %v2504 = vrot.slane %v2376, 1
  %v2505 = vrot.slane %v2377, 1
  %v2506 = vrot.slane %v2378, 1
  %v2507 = vrot.slane %v2379, 1
  %v2508 = vrot.slane %v2380, 1
  %v2509 = vrot.slane %v2381, 1
  %v2510 = vrot.slane %v2382, 1
  %v2511 = vrot.slane %v2383, 1
  %v2512 = vrot.slane %v2384, 1
  %v2513 = vrot.slane %v2385, 1
  %v2514 = vrot.slane %v2386, 1
  %v2515 = vrot.slane %v2387, 1
  %v2516 = vrot.slane %v2388, 1
  %v2517 = vrot.slane %v2389, 1
  %v2518 = vrot.slane %v2390, 1
  %v2519 = vsel %vm2294, %v2517, %v2518
  %v2520 = vsel %vm2294, %v2516, %v2517
  %v2521 = vsel %vm2294, %v2515, %v2516
  %v2522 = vsel %vm2294, %v2514, %v2515
  %v2523 = vsel %vm2294, %v2513, %v2514
  %v2524 = vsel %vm2294, %v2512, %v2513
  %v2525 = vsel %vm2294, %v2511, %v2512
  %v2526 = vsel %vm2294, %v2510, %v2511
  %v2527 = vsel %vm2294, %v2509, %v2510
  %v2528 = vsel %vm2294, %v2508, %v2509
  %v2529 = vsel %vm2294, %v2507, %v2508
  %v2530 = vsel %vm2294, %v2506, %v2507
  %v2531 = vsel %vm2294, %v2505, %v2506
  %v2532 = vsel %vm2294, %v2504, %v2505
  %v2533 = vsel %vm2294, %v2503, %v2504
  %v2534 = vsel %vm2294, %v2502, %v2503
  %v2535 = vsel %vm2294, %v2501, %v2502
  %v2536 = vsel %vm2294, %v2500, %v2501
  %v2537 = vsel %vm2294, %v2499, %v2500
  %v2538 = vsel %vm2294, %v2498, %v2499
  %v2539 = vsel %vm2294, %v2497, %v2498
  %v2540 = vsel %vm2294, %v2496, %v2497
  %v2541 = vsel %vm2294, %v2495, %v2496
  %v2542 = vsel %vm2294, %v2494, %v2495
  %v2543 = vsel %vm2294, %v2493, %v2494
  %v2544 = vsel %vm2294, %v2492, %v2493
  %v2545 = vsel %vm2294, %v2491, %v2492
  %v2546 = vsel %vm2294, %v2490, %v2491
  %v2547 = vsel %vm2294, %v2489, %v2490
  %v2548 = vsel %vm2294, %v2488, %v2489
  %v2549 = vsel %vm2294, %v2487, %v2488
  %v2550 = vsel %vm2294, %v2518, %v2487
  %v2551 = vmul.f32 %v2549, %v1576
  %v2552 = vmul.f32 %v2548, %v1577
  %v2553 = vmul.f32 %v2547, %v1578
  %v2554 = vmul.f32 %v2546, %v1579
  %v2555 = vmul.f32 %v2545, %v1580
  %v2556 = vmul.f32 %v2544, %v1581
  %v2557 = vmul.f32 %v2543, %v1582
  %v2558 = vmul.f32 %v2542, %v1583
  %v2559 = vmul.f32 %v2541, %v1584
  %v2560 = vmul.f32 %v2540, %v1585
  %v2561 = vmul.f32 %v2539, %v1586
  %v2562 = vmul.f32 %v2538, %v1587
  %v2563 = vmul.f32 %v2537, %v1588
  %v2564 = vmul.f32 %v2536, %v1589
  %v2565 = vmul.f32 %v2535, %v1590
  %v2566 = vmul.f32 %v2534, %v1591
  %v2567 = vmul.f32 %v2533, %v1592
  %v2568 = vmul.f32 %v2532, %v1593
  %v2569 = vmul.f32 %v2531, %v1594
  %v2570 = vmul.f32 %v2530, %v1595
  %v2571 = vmul.f32 %v2529, %v1596
  %v2572 = vmul.f32 %v2528, %v1597
  %v2573 = vmul.f32 %v2527, %v1598
  %v2574 = vmul.f32 %v2526, %v1599
  %v2575 = vmul.f32 %v2525, %v1600
  %v2576 = vmul.f32 %v2524, %v1601
  %v2577 = vmul.f32 %v2523, %v1602
  %v2578 = vmul.f32 %v2522, %v1603
  %v2579 = vmul.f32 %v2521, %v1604
  %v2580 = vmul.f32 %v2520, %v1605
  %v2581 = vmul.f32 %v2519, %v1606
  %v2582 = vmul.f32 %v2550, %v1607
  %v2583 = vld [vmem:[#allocation2 + $0x120] sm:$0xff]
  %v2584 = vld [vmem:[#allocation2 + $0x128] sm:$0xff]
  %v2585 = vld [vmem:[#allocation2 + $0x130] sm:$0xff]
  %v2586 = vld [vmem:[#allocation2 + $0x138] sm:$0xff]
  %v2587 = vrot.slane %v2583, 7
  %v2588 = vrot.slane %v2584, 7
  %v2589 = vrot.slane %v2585, 7
  %v2590 = vrot.slane %v2586, 7
  %v2591 = vsel %vm2197, %v2589, %v2590
  %v2592 = vsel %vm2197, %v2588, %v2589
  %v2593 = vsel %vm2197, %v2587, %v2588
  %v2594 = vsel %vm2197, %v2422, %v2587
  %v2595 = vsel %vm2197, %v2590, %v2395
  %v2596 = vmul.f32 %v2595, %v1544
  %v2597 = vmul.f32 %v2449, %v1545
  %v2598 = vmul.f32 %v2448, %v1546
  %v2599 = vmul.f32 %v2447, %v1547
  %v2600 = vmul.f32 %v2446, %v1548
  %v2601 = vmul.f32 %v2445, %v1549
  %v2602 = vmul.f32 %v2444, %v1550
  %v2603 = vmul.f32 %v2443, %v1551
  %v2604 = vmul.f32 %v2442, %v1552
  %v2605 = vmul.f32 %v2441, %v1553
  %v2606 = vmul.f32 %v2440, %v1554
  %v2607 = vmul.f32 %v2439, %v1555
  %v2608 = vmul.f32 %v2438, %v1556
  %v2609 = vmul.f32 %v2437, %v1557
  %v2610 = vmul.f32 %v2436, %v1558
  %v2611 = vmul.f32 %v2435, %v1559
  %v2612 = vmul.f32 %v2434, %v1560
  %v2613 = vmul.f32 %v2433, %v1561
  %v2614 = vmul.f32 %v2432, %v1562
  %v2615 = vmul.f32 %v2431, %v1563
  %v2616 = vmul.f32 %v2430, %v1564
  %v2617 = vmul.f32 %v2429, %v1565
  %v2618 = vmul.f32 %v2428, %v1566
  %v2619 = vmul.f32 %v2427, %v1567
  %v2620 = vmul.f32 %v2426, %v1568
  %v2621 = vmul.f32 %v2425, %v1569
  %v2622 = vmul.f32 %v2424, %v1570
  %v2623 = vmul.f32 %v2423, %v1571
  %v2624 = vmul.f32 %v2594, %v1572
  %v2625 = vmul.f32 %v2593, %v1573
  %v2626 = vmul.f32 %v2592, %v1574
  %v2627 = vmul.f32 %v2591, %v1575
  %v2628 = vrot.slane %v2583, 1
  %v2629 = vrot.slane %v2584, 1
  %v2630 = vrot.slane %v2585, 1
  %v2631 = vrot.slane %v2586, 1
  %v2632 = vsel %vm2294, %v2630, %v2631
  %v2633 = vsel %vm2294, %v2629, %v2630
  %v2634 = vsel %vm2294, %v2628, %v2629
  %v2635 = vsel %vm2294, %v2518, %v2628
  %v2636 = vsel %vm2294, %v2631, %v2491
  %v2637 = vmul.f32 %v2545, %v1576
  %v2638 = vmul.f32 %v2544, %v1577
  %v2639 = vmul.f32 %v2543, %v1578
  %v2640 = vmul.f32 %v2542, %v1579
  %v2641 = vmul.f32 %v2541, %v1580
  %v2642 = vmul.f32 %v2540, %v1581
  %v2643 = vmul.f32 %v2539, %v1582
  %v2644 = vmul.f32 %v2538, %v1583
  %v2645 = vmul.f32 %v2537, %v1584
  %v2646 = vmul.f32 %v2536, %v1585
  %v2647 = vmul.f32 %v2535, %v1586
  %v2648 = vmul.f32 %v2534, %v1587
  %v2649 = vmul.f32 %v2533, %v1588
  %v2650 = vmul.f32 %v2532, %v1589
  %v2651 = vmul.f32 %v2531, %v1590
  %v2652 = vmul.f32 %v2530, %v1591
  %v2653 = vmul.f32 %v2529, %v1592
  %v2654 = vmul.f32 %v2528, %v1593
  %v2655 = vmul.f32 %v2527, %v1594
  %v2656 = vmul.f32 %v2526, %v1595
  %v2657 = vmul.f32 %v2525, %v1596
  %v2658 = vmul.f32 %v2524, %v1597
  %v2659 = vmul.f32 %v2523, %v1598
  %v2660 = vmul.f32 %v2522, %v1599
  %v2661 = vmul.f32 %v2521, %v1600
  %v2662 = vmul.f32 %v2520, %v1601
  %v2663 = vmul.f32 %v2519, %v1602
  %v2664 = vmul.f32 %v2635, %v1603
  %v2665 = vmul.f32 %v2634, %v1604
  %v2666 = vmul.f32 %v2633, %v1605
  %v2667 = vmul.f32 %v2632, %v1606
  %v2668 = vmul.f32 %v2636, %v1607
  %v2669 = vlaneseq
  %v2670 = vshrl.u32 %v2669, 7
  %v2671 = vsub.s32 0, %v2670
  %v2672 = vrot.slane %v2129, %v2671
  %v2673 = vmul.f32 %v2230, %v2672
  %v2674 = vmul.f32 %v2231, %v2672
  %v2675 = vmul.f32 %v2232, %v2672
  %v2676 = vmul.f32 %v2233, %v2672
  %v2677 = vmul.f32 %v2234, %v2672
  %v2678 = vmul.f32 %v2235, %v2672
  %v2679 = vmul.f32 %v2236, %v2672
  %v2680 = vmul.f32 %v2237, %v2672
  %v2681 = vmul.f32 %v2238, %v2672
  %v2682 = vmul.f32 %v2239, %v2672
  %v2683 = vmul.f32 %v2240, %v2672
  %v2684 = vmul.f32 %v2241, %v2672
  %v2685 = vmul.f32 %v2242, %v2672
  %v2686 = vmul.f32 %v2243, %v2672
  %v2687 = vmul.f32 %v2244, %v2672
  %v2688 = vmul.f32 %v2245, %v2672
  %v2689 = vmul.f32 %v2246, %v2672
  %v2690 = vmul.f32 %v2247, %v2672
  %v2691 = vmul.f32 %v2248, %v2672
  %v2692 = vmul.f32 %v2249, %v2672
  %v2693 = vmul.f32 %v2250, %v2672
  %v2694 = vmul.f32 %v2251, %v2672
  %v2695 = vmul.f32 %v2252, %v2672
  %v2696 = vmul.f32 %v2253, %v2672
  %v2697 = vmul.f32 %v2254, %v2672
  %v2698 = vmul.f32 %v2255, %v2672
  %v2699 = vmul.f32 %v2256, %v2672
  %v2700 = vmul.f32 %v2257, %v2672
  %v2701 = vmul.f32 %v2258, %v2672
  %v2702 = vmul.f32 %v2259, %v2672
  %v2703 = vmul.f32 %v2260, %v2672
  %v2704 = vmul.f32 %v2261, %v2672
  %v2705 = vlaneseq
  %v2706 = vshrl.u32 %v2705, 7
  %v2707 = vsub.s32 1, %v2706
  %v2708 = vrot.slane %v2129, %v2707
  %v2709 = vmul.f32 %v2131, %v2708
  %v2710 = vmul.f32 %v2132, %v2708
  %v2711 = vmul.f32 %v2133, %v2708
  %v2712 = vmul.f32 %v2134, %v2708
  %v2713 = vmul.f32 %v2135, %v2708
  %v2714 = vmul.f32 %v2136, %v2708
  %v2715 = vmul.f32 %v2137, %v2708
  %v2716 = vmul.f32 %v2138, %v2708
  %v2717 = vmul.f32 %v2139, %v2708
  %v2718 = vmul.f32 %v2140, %v2708
  %v2719 = vmul.f32 %v2141, %v2708
  %v2720 = vmul.f32 %v2142, %v2708
  %v2721 = vmul.f32 %v2143, %v2708
  %v2722 = vmul.f32 %v2144, %v2708
  %v2723 = vmul.f32 %v2145, %v2708
  %v2724 = vmul.f32 %v2146, %v2708
  %v2725 = vmul.f32 %v2147, %v2708
  %v2726 = vmul.f32 %v2148, %v2708
  %v2727 = vmul.f32 %v2149, %v2708
  %v2728 = vmul.f32 %v2150, %v2708
  %v2729 = vmul.f32 %v2151, %v2708
  %v2730 = vmul.f32 %v2152, %v2708
  %v2731 = vmul.f32 %v2153, %v2708
  %v2732 = vmul.f32 %v2154, %v2708
  %v2733 = vmul.f32 %v2155, %v2708
  %v2734 = vmul.f32 %v2156, %v2708
  %v2735 = vmul.f32 %v2157, %v2708
  %v2736 = vmul.f32 %v2158, %v2708
  %v2737 = vmul.f32 %v2159, %v2708
  %v2738 = vmul.f32 %v2160, %v2708
  %v2739 = vmul.f32 %v2161, %v2708
  %v2740 = vmul.f32 %v2162, %v2708
  %v2741 = vadd.f32 %v2673, %v2709
  %v2742 = vadd.f32 %v2674, %v2710
  %v2743 = vadd.f32 %v2675, %v2711
  %v2744 = vadd.f32 %v2676, %v2712
  %v2745 = vadd.f32 %v2677, %v2713
  %v2746 = vadd.f32 %v2678, %v2714
  %v2747 = vadd.f32 %v2679, %v2715
  %v2748 = vadd.f32 %v2680, %v2716
  %v2749 = vadd.f32 %v2681, %v2717
  %v2750 = vadd.f32 %v2682, %v2718
  %v2751 = vadd.f32 %v2683, %v2719
  %v2752 = vadd.f32 %v2684, %v2720
  %v2753 = vadd.f32 %v2685, %v2721
  %v2754 = vadd.f32 %v2686, %v2722
  %v2755 = vadd.f32 %v2687, %v2723
  %v2756 = vadd.f32 %v2688, %v2724
  %v2757 = vadd.f32 %v2689, %v2725
  %v2758 = vadd.f32 %v2690, %v2726
  %v2759 = vadd.f32 %v2691, %v2727
  %v2760 = vadd.f32 %v2692, %v2728
  %v2761 = vadd.f32 %v2693, %v2729
  %v2762 = vadd.f32 %v2694, %v2730
  %v2763 = vadd.f32 %v2695, %v2731
  %v2764 = vadd.f32 %v2696, %v2732
  %v2765 = vadd.f32 %v2697, %v2733
  %v2766 = vadd.f32 %v2698, %v2734
  %v2767 = vadd.f32 %v2699, %v2735
  %v2768 = vadd.f32 %v2700, %v2736
  %v2769 = vadd.f32 %v2701, %v2737
  %v2770 = vadd.f32 %v2702, %v2738
  %v2771 = vadd.f32 %v2703, %v2739
  %v2772 = vadd.f32 %v2704, %v2740
  %v2773 = vlaneseq
  %v2774 = vshrl.u32 %v2773, 7
  %v2775 = vsub.s32 2, %v2774
  %v2776 = vrot.slane %v2129, %v2775
  %v2777 = vmul.f32 %v2327, %v2776
  %v2778 = vmul.f32 %v2328, %v2776
  %v2779 = vmul.f32 %v2329, %v2776
  %v2780 = vmul.f32 %v2330, %v2776
  %v2781 = vmul.f32 %v2331, %v2776
  %v2782 = vmul.f32 %v2332, %v2776
  %v2783 = vmul.f32 %v2333, %v2776
  %v2784 = vmul.f32 %v2334, %v2776
  %v2785 = vmul.f32 %v2335, %v2776
  %v2786 = vmul.f32 %v2336, %v2776
  %v2787 = vmul.f32 %v2337, %v2776
  %v2788 = vmul.f32 %v2338, %v2776
  %v2789 = vmul.f32 %v2339, %v2776
  %v2790 = vmul.f32 %v2340, %v2776
  %v2791 = vmul.f32 %v2341, %v2776
  %v2792 = vmul.f32 %v2342, %v2776
  %v2793 = vmul.f32 %v2343, %v2776
  %v2794 = vmul.f32 %v2344, %v2776
  %v2795 = vmul.f32 %v2345, %v2776
  %v2796 = vmul.f32 %v2346, %v2776
  %v2797 = vmul.f32 %v2347, %v2776
  %v2798 = vmul.f32 %v2348, %v2776
  %v2799 = vmul.f32 %v2349, %v2776
  %v2800 = vmul.f32 %v2350, %v2776
  %v2801 = vmul.f32 %v2351, %v2776
  %v2802 = vmul.f32 %v2352, %v2776
  %v2803 = vmul.f32 %v2353, %v2776
  %v2804 = vmul.f32 %v2354, %v2776
  %v2805 = vmul.f32 %v2355, %v2776
  %v2806 = vmul.f32 %v2356, %v2776
  %v2807 = vmul.f32 %v2357, %v2776
  %v2808 = vmul.f32 %v2358, %v2776
  %v2809 = vadd.f32 %v2741, %v2777
  %v2810 = vadd.f32 %v2742, %v2778
  %v2811 = vadd.f32 %v2743, %v2779
  %v2812 = vadd.f32 %v2744, %v2780
  %v2813 = vadd.f32 %v2745, %v2781
  %v2814 = vadd.f32 %v2746, %v2782
  %v2815 = vadd.f32 %v2747, %v2783
  %v2816 = vadd.f32 %v2748, %v2784
  %v2817 = vadd.f32 %v2749, %v2785
  %v2818 = vadd.f32 %v2750, %v2786
  %v2819 = vadd.f32 %v2751, %v2787
  %v2820 = vadd.f32 %v2752, %v2788
  %v2821 = vadd.f32 %v2753, %v2789
  %v2822 = vadd.f32 %v2754, %v2790
  %v2823 = vadd.f32 %v2755, %v2791
  %v2824 = vadd.f32 %v2756, %v2792
  %v2825 = vadd.f32 %v2757, %v2793
  %v2826 = vadd.f32 %v2758, %v2794
  %v2827 = vadd.f32 %v2759, %v2795
  %v2828 = vadd.f32 %v2760, %v2796
  %v2829 = vadd.f32 %v2761, %v2797
  %v2830 = vadd.f32 %v2762, %v2798
  %v2831 = vadd.f32 %v2763, %v2799
  %v2832 = vadd.f32 %v2764, %v2800
  %v2833 = vadd.f32 %v2765, %v2801
  %v2834 = vadd.f32 %v2766, %v2802
  %v2835 = vadd.f32 %v2767, %v2803
  %v2836 = vadd.f32 %v2768, %v2804
  %v2837 = vadd.f32 %v2769, %v2805
  %v2838 = vadd.f32 %v2770, %v2806
  %v2839 = vadd.f32 %v2771, %v2807
  %v2840 = vadd.f32 %v2772, %v2808
  %v2841 = vlaneseq
  %v2842 = vshrl.u32 %v2841, 7
  %v2843 = vsub.s32 3, %v2842
  %v2844 = vrot.slane %v2129, %v2843
  %v2845 = vmul.f32 %v2455, %v2844
  %v2846 = vmul.f32 %v2456, %v2844
  %v2847 = vmul.f32 %v2457, %v2844
  %v2848 = vmul.f32 %v2458, %v2844
  %v2849 = vmul.f32 %v2459, %v2844
  %v2850 = vmul.f32 %v2460, %v2844
  %v2851 = vmul.f32 %v2461, %v2844
  %v2852 = vmul.f32 %v2462, %v2844
  %v2853 = vmul.f32 %v2463, %v2844
  %v2854 = vmul.f32 %v2464, %v2844
  %v2855 = vmul.f32 %v2465, %v2844
  %v2856 = vmul.f32 %v2466, %v2844
  %v2857 = vmul.f32 %v2467, %v2844
  %v2858 = vmul.f32 %v2468, %v2844
  %v2859 = vmul.f32 %v2469, %v2844
  %v2860 = vmul.f32 %v2470, %v2844
  %v2861 = vmul.f32 %v2471, %v2844
  %v2862 = vmul.f32 %v2472, %v2844
  %v2863 = vmul.f32 %v2473, %v2844
  %v2864 = vmul.f32 %v2474, %v2844
  %v2865 = vmul.f32 %v2475, %v2844
  %v2866 = vmul.f32 %v2476, %v2844
  %v2867 = vmul.f32 %v2477, %v2844
  %v2868 = vmul.f32 %v2478, %v2844
  %v2869 = vmul.f32 %v2479, %v2844
  %v2870 = vmul.f32 %v2480, %v2844
  %v2871 = vmul.f32 %v2481, %v2844
  %v2872 = vmul.f32 %v2482, %v2844
  %v2873 = vmul.f32 %v2483, %v2844
  %v2874 = vmul.f32 %v2484, %v2844
  %v2875 = vmul.f32 %v2485, %v2844
  %v2876 = vmul.f32 %v2486, %v2844
  %v2877 = vadd.f32 %v2809, %v2845
  %v2878 = vadd.f32 %v2810, %v2846
  %v2879 = vadd.f32 %v2811, %v2847
  %v2880 = vadd.f32 %v2812, %v2848
  %v2881 = vadd.f32 %v2813, %v2849
  %v2882 = vadd.f32 %v2814, %v2850
  %v2883 = vadd.f32 %v2815, %v2851
  %v2884 = vadd.f32 %v2816, %v2852
  %v2885 = vadd.f32 %v2817, %v2853
  %v2886 = vadd.f32 %v2818, %v2854
  %v2887 = vadd.f32 %v2819, %v2855
  %v2888 = vadd.f32 %v2820, %v2856
  %v2889 = vadd.f32 %v2821, %v2857
  %v2890 = vadd.f32 %v2822, %v2858
  %v2891 = vadd.f32 %v2823, %v2859
  %v2892 = vadd.f32 %v2824, %v2860
  %v2893 = vadd.f32 %v2825, %v2861
  %v2894 = vadd.f32 %v2826, %v2862
  %v2895 = vadd.f32 %v2827, %v2863
  %v2896 = vadd.f32 %v2828, %v2864
  %v2897 = vadd.f32 %v2829, %v2865
  %v2898 = vadd.f32 %v2830, %v2866
  %v2899 = vadd.f32 %v2831, %v2867
  %v2900 = vadd.f32 %v2832, %v2868
  %v2901 = vadd.f32 %v2833, %v2869
  %v2902 = vadd.f32 %v2834, %v2870
  %v2903 = vadd.f32 %v2835, %v2871
  %v2904 = vadd.f32 %v2836, %v2872
  %v2905 = vadd.f32 %v2837, %v2873
  %v2906 = vadd.f32 %v2838, %v2874
  %v2907 = vadd.f32 %v2839, %v2875
  %v2908 = vadd.f32 %v2840, %v2876
  %v2909 = vlaneseq
  %v2910 = vshrl.u32 %v2909, 7
  %v2911 = vsub.s32 4, %v2910
  %v2912 = vrot.slane %v2129, %v2911
  %v2913 = vmul.f32 %v2359, %v2912
  %v2914 = vmul.f32 %v2360, %v2912
  %v2915 = vmul.f32 %v2361, %v2912
  %v2916 = vmul.f32 %v2362, %v2912
  %v2917 = vmul.f32 %v2363, %v2912
  %v2918 = vmul.f32 %v2364, %v2912
  %v2919 = vmul.f32 %v2365, %v2912
  %v2920 = vmul.f32 %v2366, %v2912
  %v2921 = vmul.f32 %v2367, %v2912
  %v2922 = vmul.f32 %v2368, %v2912
  %v2923 = vmul.f32 %v2369, %v2912
  %v2924 = vmul.f32 %v2370, %v2912
  %v2925 = vmul.f32 %v2371, %v2912
  %v2926 = vmul.f32 %v2372, %v2912
  %v2927 = vmul.f32 %v2373, %v2912
  %v2928 = vmul.f32 %v2374, %v2912
  %v2929 = vmul.f32 %v2375, %v2912
  %v2930 = vmul.f32 %v2376, %v2912
  %v2931 = vmul.f32 %v2377, %v2912
  %v2932 = vmul.f32 %v2378, %v2912
  %v2933 = vmul.f32 %v2379, %v2912
  %v2934 = vmul.f32 %v2380, %v2912
  %v2935 = vmul.f32 %v2381, %v2912
  %v2936 = vmul.f32 %v2382, %v2912
  %v2937 = vmul.f32 %v2383, %v2912
  %v2938 = vmul.f32 %v2384, %v2912
  %v2939 = vmul.f32 %v2385, %v2912
  %v2940 = vmul.f32 %v2386, %v2912
  %v2941 = vmul.f32 %v2387, %v2912
  %v2942 = vmul.f32 %v2388, %v2912
  %v2943 = vmul.f32 %v2389, %v2912
  %v2944 = vmul.f32 %v2390, %v2912
  %v2945 = vadd.f32 %v2877, %v2913
  %v2946 = vadd.f32 %v2878, %v2914
  %v2947 = vadd.f32 %v2879, %v2915
  %v2948 = vadd.f32 %v2880, %v2916
  %v2949 = vadd.f32 %v2881, %v2917
  %v2950 = vadd.f32 %v2882, %v2918
  %v2951 = vadd.f32 %v2883, %v2919
  %v2952 = vadd.f32 %v2884, %v2920
  %v2953 = vadd.f32 %v2885, %v2921
  %v2954 = vadd.f32 %v2886, %v2922
  %v2955 = vadd.f32 %v2887, %v2923
  %v2956 = vadd.f32 %v2888, %v2924
  %v2957 = vadd.f32 %v2889, %v2925
  %v2958 = vadd.f32 %v2890, %v2926
  %v2959 = vadd.f32 %v2891, %v2927
  %v2960 = vadd.f32 %v2892, %v2928
  %v2961 = vadd.f32 %v2893, %v2929
  %v2962 = vadd.f32 %v2894, %v2930
  %v2963 = vadd.f32 %v2895, %v2931
  %v2964 = vadd.f32 %v2896, %v2932
  %v2965 = vadd.f32 %v2897, %v2933
  %v2966 = vadd.f32 %v2898, %v2934
  %v2967 = vadd.f32 %v2899, %v2935
  %v2968 = vadd.f32 %v2900, %v2936
  %v2969 = vadd.f32 %v2901, %v2937
  %v2970 = vadd.f32 %v2902, %v2938
  %v2971 = vadd.f32 %v2903, %v2939
  %v2972 = vadd.f32 %v2904, %v2940
  %v2973 = vadd.f32 %v2905, %v2941
  %v2974 = vadd.f32 %v2906, %v2942
  %v2975 = vadd.f32 %v2907, %v2943
  %v2976 = vadd.f32 %v2908, %v2944
  %v2977 = vlaneseq
  %v2978 = vshrl.u32 %v2977, 7
  %v2979 = vsub.s32 5, %v2978
  %v2980 = vrot.slane %v2129, %v2979
  %v2981 = vmul.f32 %v2551, %v2980
  %v2982 = vmul.f32 %v2552, %v2980
  %v2983 = vmul.f32 %v2553, %v2980
  %v2984 = vmul.f32 %v2554, %v2980
  %v2985 = vmul.f32 %v2555, %v2980
  %v2986 = vmul.f32 %v2556, %v2980
  %v2987 = vmul.f32 %v2557, %v2980
  %v2988 = vmul.f32 %v2558, %v2980
  %v2989 = vmul.f32 %v2559, %v2980
  %v2990 = vmul.f32 %v2560, %v2980
  %v2991 = vmul.f32 %v2561, %v2980
  %v2992 = vmul.f32 %v2562, %v2980
  %v2993 = vmul.f32 %v2563, %v2980
  %v2994 = vmul.f32 %v2564, %v2980
  %v2995 = vmul.f32 %v2565, %v2980
  %v2996 = vmul.f32 %v2566, %v2980
  %v2997 = vmul.f32 %v2567, %v2980
  %v2998 = vmul.f32 %v2568, %v2980
  %v2999 = vmul.f32 %v2569, %v2980
  %v3000 = vmul.f32 %v2570, %v2980
  %v3001 = vmul.f32 %v2571, %v2980
  %v3002 = vmul.f32 %v2572, %v2980
  %v3003 = vmul.f32 %v2573, %v2980
  %v3004 = vmul.f32 %v2574, %v2980
  %v3005 = vmul.f32 %v2575, %v2980
  %v3006 = vmul.f32 %v2576, %v2980
  %v3007 = vmul.f32 %v2577, %v2980
  %v3008 = vmul.f32 %v2578, %v2980
  %v3009 = vmul.f32 %v2579, %v2980
  %v3010 = vmul.f32 %v2580, %v2980
  %v3011 = vmul.f32 %v2581, %v2980
  %v3012 = vmul.f32 %v2582, %v2980
  %v3013 = vadd.f32 %v2945, %v2981
  %v3014 = vadd.f32 %v2946, %v2982
  %v3015 = vadd.f32 %v2947, %v2983
  %v3016 = vadd.f32 %v2948, %v2984
  %v3017 = vadd.f32 %v2949, %v2985
  %v3018 = vadd.f32 %v2950, %v2986
  %v3019 = vadd.f32 %v2951, %v2987
  %v3020 = vadd.f32 %v2952, %v2988
  %v3021 = vadd.f32 %v2953, %v2989
  %v3022 = vadd.f32 %v2954, %v2990
  %v3023 = vadd.f32 %v2955, %v2991
  %v3024 = vadd.f32 %v2956, %v2992
  %v3025 = vadd.f32 %v2957, %v2993
  %v3026 = vadd.f32 %v2958, %v2994
  %v3027 = vadd.f32 %v2959, %v2995
  %v3028 = vadd.f32 %v2960, %v2996
  %v3029 = vadd.f32 %v2961, %v2997
  %v3030 = vadd.f32 %v2962, %v2998
  %v3031 = vadd.f32 %v2963, %v2999
  %v3032 = vadd.f32 %v2964, %v3000
  %v3033 = vadd.f32 %v2965, %v3001
  %v3034 = vadd.f32 %v2966, %v3002
  %v3035 = vadd.f32 %v2967, %v3003
  %v3036 = vadd.f32 %v2968, %v3004
  %v3037 = vadd.f32 %v2969, %v3005
  %v3038 = vadd.f32 %v2970, %v3006
  %v3039 = vadd.f32 %v2971, %v3007
  %v3040 = vadd.f32 %v2972, %v3008
  %v3041 = vadd.f32 %v2973, %v3009
  %v3042 = vadd.f32 %v2974, %v3010
  %v3043 = vadd.f32 %v2975, %v3011
  %v3044 = vadd.f32 %v2976, %v3012
  %v3045 = vlaneseq
  %v3046 = vshrl.u32 %v3045, 7
  %v3047 = vsub.s32 6, %v3046
  %v3048 = vrot.slane %v2129, %v3047
  %v3049 = vmul.f32 %v2596, %v3048
  %v3050 = vmul.f32 %v2597, %v3048
  %v3051 = vmul.f32 %v2598, %v3048
  %v3052 = vmul.f32 %v2599, %v3048
  %v3053 = vmul.f32 %v2600, %v3048
  %v3054 = vmul.f32 %v2601, %v3048
  %v3055 = vmul.f32 %v2602, %v3048
  %v3056 = vmul.f32 %v2603, %v3048
  %v3057 = vmul.f32 %v2604, %v3048
  %v3058 = vmul.f32 %v2605, %v3048
  %v3059 = vmul.f32 %v2606, %v3048
  %v3060 = vmul.f32 %v2607, %v3048
  %v3061 = vmul.f32 %v2608, %v3048
  %v3062 = vmul.f32 %v2609, %v3048
  %v3063 = vmul.f32 %v2610, %v3048
  %v3064 = vmul.f32 %v2611, %v3048
  %v3065 = vmul.f32 %v2612, %v3048
  %v3066 = vmul.f32 %v2613, %v3048
  %v3067 = vmul.f32 %v2614, %v3048
  %v3068 = vmul.f32 %v2615, %v3048
  %v3069 = vmul.f32 %v2616, %v3048
  %v3070 = vmul.f32 %v2617, %v3048
  %v3071 = vmul.f32 %v2618, %v3048
  %v3072 = vmul.f32 %v2619, %v3048
  %v3073 = vmul.f32 %v2620, %v3048
  %v3074 = vmul.f32 %v2621, %v3048
  %v3075 = vmul.f32 %v2622, %v3048
  %v3076 = vmul.f32 %v2623, %v3048
  %v3077 = vmul.f32 %v2624, %v3048
  %v3078 = vmul.f32 %v2625, %v3048
  %v3079 = vmul.f32 %v2626, %v3048
  %v3080 = vmul.f32 %v2627, %v3048
  %v3081 = vadd.f32 %v3013, %v3049
  %v3082 = vadd.f32 %v3014, %v3050
  %v3083 = vadd.f32 %v3015, %v3051
  %v3084 = vadd.f32 %v3016, %v3052
  %v3085 = vadd.f32 %v3017, %v3053
  %v3086 = vadd.f32 %v3018, %v3054
  %v3087 = vadd.f32 %v3019, %v3055
  %v3088 = vadd.f32 %v3020, %v3056
  %v3089 = vadd.f32 %v3021, %v3057
  %v3090 = vadd.f32 %v3022, %v3058
  %v3091 = vadd.f32 %v3023, %v3059
  %v3092 = vadd.f32 %v3024, %v3060
  %v3093 = vadd.f32 %v3025, %v3061
  %v3094 = vadd.f32 %v3026, %v3062
  %v3095 = vadd.f32 %v3027, %v3063
  %v3096 = vadd.f32 %v3028, %v3064
  %v3097 = vadd.f32 %v3029, %v3065
  %v3098 = vadd.f32 %v3030, %v3066
  %v3099 = vadd.f32 %v3031, %v3067
  %v3100 = vadd.f32 %v3032, %v3068
  %v3101 = vadd.f32 %v3033, %v3069
  %v3102 = vadd.f32 %v3034, %v3070
  %v3103 = vadd.f32 %v3035, %v3071
  %v3104 = vadd.f32 %v3036, %v3072
  %v3105 = vadd.f32 %v3037, %v3073
  %v3106 = vadd.f32 %v3038, %v3074
  %v3107 = vadd.f32 %v3039, %v3075
  %v3108 = vadd.f32 %v3040, %v3076
  %v3109 = vadd.f32 %v3041, %v3077
  %v3110 = vadd.f32 %v3042, %v3078
  %v3111 = vadd.f32 %v3043, %v3079
  %v3112 = vadd.f32 %v3044, %v3080
  %v3113 = vlaneseq
  %v3114 = vshrl.u32 %v3113, 7
  %v3115 = vsub.s32 7, %v3114
  %v3116 = vrot.slane %v2129, %v3115
  %v3117 = vmul.f32 %v2363, %v3116
  %v3118 = vmul.f32 %v2364, %v3116
  %v3119 = vmul.f32 %v2365, %v3116
  %v3120 = vmul.f32 %v2366, %v3116
  %v3121 = vmul.f32 %v2367, %v3116
  %v3122 = vmul.f32 %v2368, %v3116
  %v3123 = vmul.f32 %v2369, %v3116
  %v3124 = vmul.f32 %v2370, %v3116
  %v3125 = vmul.f32 %v2371, %v3116
  %v3126 = vmul.f32 %v2372, %v3116
  %v3127 = vmul.f32 %v2373, %v3116
  %v3128 = vmul.f32 %v2374, %v3116
  %v3129 = vmul.f32 %v2375, %v3116
  %v3130 = vmul.f32 %v2376, %v3116
  %v3131 = vmul.f32 %v2377, %v3116
  %v3132 = vmul.f32 %v2378, %v3116
  %v3133 = vmul.f32 %v2379, %v3116
  %v3134 = vmul.f32 %v2380, %v3116
  %v3135 = vmul.f32 %v2381, %v3116
  %v3136 = vmul.f32 %v2382, %v3116
  %v3137 = vmul.f32 %v2383, %v3116
  %v3138 = vmul.f32 %v2384, %v3116
  %v3139 = vmul.f32 %v2385, %v3116
  %v3140 = vmul.f32 %v2386, %v3116
  %v3141 = vmul.f32 %v2387, %v3116
  %v3142 = vmul.f32 %v2388, %v3116
  %v3143 = vmul.f32 %v2389, %v3116
  %v3144 = vmul.f32 %v2390, %v3116
  %v3145 = vmul.f32 %v2583, %v3116
  %v3146 = vmul.f32 %v2584, %v3116
  %v3147 = vmul.f32 %v2585, %v3116
  %v3148 = vmul.f32 %v2586, %v3116
  %v3149 = vadd.f32 %v3081, %v3117
  %v3150 = vadd.f32 %v3082, %v3118
  %v3151 = vadd.f32 %v3083, %v3119
  %v3152 = vadd.f32 %v3084, %v3120
  %v3153 = vadd.f32 %v3085, %v3121
  %v3154 = vadd.f32 %v3086, %v3122
  %v3155 = vadd.f32 %v3087, %v3123
  %v3156 = vadd.f32 %v3088, %v3124
  %v3157 = vadd.f32 %v3089, %v3125
  %v3158 = vadd.f32 %v3090, %v3126
  %v3159 = vadd.f32 %v3091, %v3127
  %v3160 = vadd.f32 %v3092, %v3128
  %v3161 = vadd.f32 %v3093, %v3129
  %v3162 = vadd.f32 %v3094, %v3130
  %v3163 = vadd.f32 %v3095, %v3131
  %v3164 = vadd.f32 %v3096, %v3132
  %v3165 = vadd.f32 %v3097, %v3133
  %v3166 = vadd.f32 %v3098, %v3134
  %v3167 = vadd.f32 %v3099, %v3135
  %v3168 = vadd.f32 %v3100, %v3136
  %v3169 = vadd.f32 %v3101, %v3137
  %v3170 = vadd.f32 %v3102, %v3138
  %v3171 = vadd.f32 %v3103, %v3139
  %v3172 = vadd.f32 %v3104, %v3140
  %v3173 = vadd.f32 %v3105, %v3141
  %v3174 = vadd.f32 %v3106, %v3142
  %v3175 = vadd.f32 %v3107, %v3143
  %v3176 = vadd.f32 %v3108, %v3144
  %v3177 = vadd.f32 %v3109, %v3145
  %v3178 = vadd.f32 %v3110, %v3146
  %v3179 = vadd.f32 %v3111, %v3147
  %v3180 = vadd.f32 %v3112, %v3148
  %v3181 = vlaneseq
  %v3182 = vshrl.u32 %v3181, 7
  %v3183 = vsub.s32 0, %v3182
  %v3184 = vrot.slane %v2130, %v3183
  %v3185 = vmul.f32 %v2637, %v3184
  %v3186 = vmul.f32 %v2638, %v3184
  %v3187 = vmul.f32 %v2639, %v3184
  %v3188 = vmul.f32 %v2640, %v3184
  %v3189 = vmul.f32 %v2641, %v3184
  %v3190 = vmul.f32 %v2642, %v3184
  %v3191 = vmul.f32 %v2643, %v3184
  %v3192 = vmul.f32 %v2644, %v3184
  %v3193 = vmul.f32 %v2645, %v3184
  %v3194 = vmul.f32 %v2646, %v3184
  %v3195 = vmul.f32 %v2647, %v3184
  %v3196 = vmul.f32 %v2648, %v3184
  %v3197 = vmul.f32 %v2649, %v3184
  %v3198 = vmul.f32 %v2650, %v3184
  %v3199 = vmul.f32 %v2651, %v3184
  %v3200 = vmul.f32 %v2652, %v3184
  %v3201 = vmul.f32 %v2653, %v3184
  %v3202 = vmul.f32 %v2654, %v3184
  %v3203 = vmul.f32 %v2655, %v3184
  %v3204 = vmul.f32 %v2656, %v3184
  %v3205 = vmul.f32 %v2657, %v3184
  %v3206 = vmul.f32 %v2658, %v3184
  %v3207 = vmul.f32 %v2659, %v3184
  %v3208 = vmul.f32 %v2660, %v3184
  %v3209 = vmul.f32 %v2661, %v3184
  %v3210 = vmul.f32 %v2662, %v3184
  %v3211 = vmul.f32 %v2663, %v3184
  %v3212 = vmul.f32 %v2664, %v3184
  %v3213 = vmul.f32 %v2665, %v3184
  %v3214 = vmul.f32 %v2666, %v3184
  %v3215 = vmul.f32 %v2667, %v3184
  %v3216 = vmul.f32 %v2668, %v3184
  %v3217 = vadd.f32 %v3149, %v3185
  %v3218 = vadd.f32 %v3150, %v3186
  %v3219 = vadd.f32 %v3151, %v3187
  %v3220 = vadd.f32 %v3152, %v3188
  %v3221 = vadd.f32 %v3153, %v3189
  %v3222 = vadd.f32 %v3154, %v3190
  %v3223 = vadd.f32 %v3155, %v3191
  %v3224 = vadd.f32 %v3156, %v3192
  %v3225 = vadd.f32 %v3157, %v3193
  %v3226 = vadd.f32 %v3158, %v3194
  %v3227 = vadd.f32 %v3159, %v3195
  %v3228 = vadd.f32 %v3160, %v3196
  %v3229 = vadd.f32 %v3161, %v3197
  %v3230 = vadd.f32 %v3162, %v3198
  %v3231 = vadd.f32 %v3163, %v3199
  %v3232 = vadd.f32 %v3164, %v3200
  %v3233 = vadd.f32 %v3165, %v3201
  %v3234 = vadd.f32 %v3166, %v3202
  %v3235 = vadd.f32 %v3167, %v3203
  %v3236 = vadd.f32 %v3168, %v3204
  %v3237 = vadd.f32 %v3169, %v3205
  %v3238 = vadd.f32 %v3170, %v3206
  %v3239 = vadd.f32 %v3171, %v3207
  %v3240 = vadd.f32 %v3172, %v3208
  %v3241 = vadd.f32 %v3173, %v3209
  %v3242 = vadd.f32 %v3174, %v3210
  %v3243 = vadd.f32 %v3175, %v3211
  %v3244 = vadd.f32 %v3176, %v3212
  %v3245 = vadd.f32 %v3177, %v3213
  %v3246 = vadd.f32 %v3178, %v3214
  %v3247 = vadd.f32 %v3179, %v3215
  %v3248 = vadd.f32 %v3180, %v3216
  %v3249 = vld [vmem:[%s37] sm:$0x1]
  %v3251 = vlaneseq
  %v3252 = vshrl.u32 %v3251, 7
  %v3253 = vsub.s32 0, %v3252
  %v3254 = vrot.slane %v3249, %v3253
  %v3256 = vadd.f32 %v3217, %v3254
  %v3257 = vadd.f32 %v3218, %v3254
  %v3258 = vadd.f32 %v3219, %v3254
  %v3259 = vadd.f32 %v3220, %v3254
  %v3260 = vadd.f32 %v3221, %v3254
  %v3261 = vadd.f32 %v3222, %v3254
  %v3262 = vadd.f32 %v3223, %v3254
  %v3263 = vadd.f32 %v3224, %v3254
  %v3264 = vadd.f32 %v3225, %v3254
  %v3265 = vadd.f32 %v3226, %v3254
  %v3266 = vadd.f32 %v3227, %v3254
  %v3267 = vadd.f32 %v3228, %v3254
  %v3268 = vadd.f32 %v3229, %v3254
  %v3269 = vadd.f32 %v3230, %v3254
  %v3270 = vadd.f32 %v3231, %v3254
  %v3271 = vadd.f32 %v3232, %v3254
  %v3272 = vadd.f32 %v3233, %v3254
  %v3273 = vadd.f32 %v3234, %v3254
  %v3274 = vadd.f32 %v3235, %v3254
  %v3275 = vadd.f32 %v3236, %v3254
  %v3276 = vadd.f32 %v3237, %v3254
  %v3277 = vadd.f32 %v3238, %v3254
  %v3278 = vadd.f32 %v3239, %v3254
  %v3279 = vadd.f32 %v3240, %v3254
  %v3280 = vadd.f32 %v3241, %v3254
  %v3281 = vadd.f32 %v3242, %v3254
  %v3282 = vadd.f32 %v3243, %v3254
  %v3283 = vadd.f32 %v3244, %v3254
  %v3284 = vadd.f32 %v3245, %v3254
  %v3285 = vadd.f32 %v3246, %v3254
  %v3286 = vadd.f32 %v3247, %v3254
  %v3287 = vadd.f32 %v3248, %v3254
  %3288 = vst.msk [vmem:[#allocation2 + $0x20] sm:$0xff] %vm359, %v3256
  %3289 = vst.msk [vmem:[#allocation2 + $0x28] sm:$0xff] %vm359, %v3257
  %3290 = vst.msk [vmem:[#allocation2 + $0x30] sm:$0xff] %vm359, %v3258
  %3291 = vst.msk [vmem:[#allocation2 + $0x38] sm:$0xff] %vm359, %v3259
  %3292 = vst.msk [vmem:[#allocation2 + $0x40] sm:$0xff] %vm359, %v3260
  %3293 = vst.msk [vmem:[#allocation2 + $0x48] sm:$0xff] %vm359, %v3261
  %3294 = vst.msk [vmem:[#allocation2 + $0x50] sm:$0xff] %vm359, %v3262
  %3295 = vst.msk [vmem:[#allocation2 + $0x58] sm:$0xff] %vm359, %v3263
  %3296 = vst.msk [vmem:[#allocation2 + $0x60] sm:$0xff] %vm359, %v3264
  %3297 = vst.msk [vmem:[#allocation2 + $0x68] sm:$0xff] %vm359, %v3265
  %3298 = vst.msk [vmem:[#allocation2 + $0x70] sm:$0xff] %vm359, %v3266
  %3299 = vst.msk [vmem:[#allocation2 + $0x78] sm:$0xff] %vm359, %v3267
  %3300 = vst.msk [vmem:[#allocation2 + $0x80] sm:$0xff] %vm359, %v3268
  %3301 = vst.msk [vmem:[#allocation2 + $0x88] sm:$0xff] %vm359, %v3269
  %3302 = vst.msk [vmem:[#allocation2 + $0x90] sm:$0xff] %vm359, %v3270
  %3303 = vst.msk [vmem:[#allocation2 + $0x98] sm:$0xff] %vm359, %v3271
  %3304 = vst.msk [vmem:[#allocation2 + $0xa0] sm:$0xff] %vm359, %v3272
  %3305 = vst.msk [vmem:[#allocation2 + $0xa8] sm:$0xff] %vm359, %v3273
  %3306 = vst.msk [vmem:[#allocation2 + $0xb0] sm:$0xff] %vm359, %v3274
  %3307 = vst.msk [vmem:[#allocation2 + $0xb8] sm:$0xff] %vm359, %v3275
  %3308 = vst.msk [vmem:[#allocation2 + $0xc0] sm:$0xff] %vm359, %v3276
  %3309 = vst.msk [vmem:[#allocation2 + $0xc8] sm:$0xff] %vm359, %v3277
  %3310 = vst.msk [vmem:[#allocation2 + $0xd0] sm:$0xff] %vm359, %v3278
  %3311 = vst.msk [vmem:[#allocation2 + $0xd8] sm:$0xff] %vm359, %v3279
  %3312 = vst.msk [vmem:[#allocation2 + $0xe0] sm:$0xff] %vm359, %v3280
  %3313 = vst.msk [vmem:[#allocation2 + $0xe8] sm:$0xff] %vm359, %v3281
  %3314 = vst.msk [vmem:[#allocation2 + $0xf0] sm:$0xff] %vm359, %v3282
  %3315 = vst.msk [vmem:[#allocation2 + $0xf8] sm:$0xff] %vm359, %v3283
  %3316 = vst.msk [vmem:[#allocation2 + $0x100] sm:$0xff] %vm359, %v3284
  %3317 = vst.msk [vmem:[#allocation2 + $0x108] sm:$0xff] %vm359, %v3285
  %3318 = vst.msk [vmem:[#allocation2 + $0x110] sm:$0xff] %vm359, %v3286
  %3319 = vst.msk [vmem:[#allocation2 + $0x118] sm:$0xff] %vm359, %v3287
  %v3320 = vld [vmem:[#allocation2] sm:$0xff]
  %v3321 = vld [vmem:[#allocation2 + $0x8] sm:$0xff]
  %v3322 = vld [vmem:[#allocation2 + $0x10] sm:$0xff]
  %v3323 = vld [vmem:[#allocation2 + $0x18] sm:$0xff]
  %v3324 = vld [vmem:[#allocation2 + $0x20] sm:$0xff]
  %v3325 = vld [vmem:[#allocation2 + $0x28] sm:$0xff]
  %v3326 = vld [vmem:[#allocation2 + $0x30] sm:$0xff]
  %v3327 = vld [vmem:[#allocation2 + $0x38] sm:$0xff]
  %v3328 = vld [vmem:[#allocation2 + $0x40] sm:$0xff]
  %v3329 = vld [vmem:[#allocation2 + $0x48] sm:$0xff]
  %v3330 = vld [vmem:[#allocation2 + $0x50] sm:$0xff]
  %v3331 = vld [vmem:[#allocation2 + $0x58] sm:$0xff]
  %v3332 = vld [vmem:[#allocation2 + $0x60] sm:$0xff]
  %v3333 = vld [vmem:[#allocation2 + $0x68] sm:$0xff]
  %v3334 = vld [vmem:[#allocation2 + $0x70] sm:$0xff]
  %v3335 = vld [vmem:[#allocation2 + $0x78] sm:$0xff]
  %v3336 = vld [vmem:[#allocation2 + $0x80] sm:$0xff]
  %v3337 = vld [vmem:[#allocation2 + $0x88] sm:$0xff]
  %v3338 = vld [vmem:[#allocation2 + $0x90] sm:$0xff]
  %v3339 = vld [vmem:[#allocation2 + $0x98] sm:$0xff]
  %v3340 = vld [vmem:[#allocation2 + $0xa0] sm:$0xff]
  %v3341 = vld [vmem:[#allocation2 + $0xa8] sm:$0xff]
  %v3342 = vld [vmem:[#allocation2 + $0xb0] sm:$0xff]
  %v3343 = vld [vmem:[#allocation2 + $0xb8] sm:$0xff]
  %v3344 = vld [vmem:[#allocation2 + $0xc0] sm:$0xff]
  %v3345 = vld [vmem:[#allocation2 + $0xc8] sm:$0xff]
  %v3346 = vld [vmem:[#allocation2 + $0xd0] sm:$0xff]
  %v3347 = vld [vmem:[#allocation2 + $0xd8] sm:$0xff]
  %v3348 = vld [vmem:[#allocation2 + $0xe0] sm:$0xff]
  %v3349 = vld [vmem:[#allocation2 + $0xe8] sm:$0xff]
  %v3350 = vld [vmem:[#allocation2 + $0xf0] sm:$0xff]
  %v3351 = vld [vmem:[#allocation2 + $0xf8] sm:$0xff]
  %v3352 = vrot.slane %v3320, 7
  %v3353 = vrot.slane %v3321, 7
  %v3354 = vrot.slane %v3322, 7
  %v3355 = vrot.slane %v3323, 7
  %v3356 = vrot.slane %v3324, 7
  %v3357 = vrot.slane %v3325, 7
  %v3358 = vrot.slane %v3326, 7
  %v3359 = vrot.slane %v3327, 7
  %v3360 = vrot.slane %v3328, 7
  %v3361 = vrot.slane %v3329, 7
  %v3362 = vrot.slane %v3330, 7
  %v3363 = vrot.slane %v3331, 7
  %v3364 = vrot.slane %v3332, 7
  %v3365 = vrot.slane %v3333, 7
  %v3366 = vrot.slane %v3334, 7
  %v3367 = vrot.slane %v3335, 7
  %v3368 = vrot.slane %v3336, 7
  %v3369 = vrot.slane %v3337, 7
  %v3370 = vrot.slane %v3338, 7
  %v3371 = vrot.slane %v3339, 7
  %v3372 = vrot.slane %v3340, 7
  %v3373 = vrot.slane %v3341, 7
  %v3374 = vrot.slane %v3342, 7
  %v3375 = vrot.slane %v3343, 7
  %v3376 = vrot.slane %v3344, 7
  %v3377 = vrot.slane %v3345, 7
  %v3378 = vrot.slane %v3346, 7
  %v3379 = vrot.slane %v3347, 7
  %v3380 = vrot.slane %v3348, 7
  %v3381 = vrot.slane %v3349, 7
  %v3382 = vrot.slane %v3350, 7
  %v3383 = vrot.slane %v3351, 7
  %v3384 = vsel %vm2197, %v3382, %v3383
  %v3385 = vsel %vm2197, %v3381, %v3382
  %v3386 = vsel %vm2197, %v3380, %v3381
  %v3387 = vsel %vm2197, %v3379, %v3380
  %v3388 = vsel %vm2197, %v3378, %v3379
  %v3389 = vsel %vm2197, %v3377, %v3378
  %v3390 = vsel %vm2197, %v3376, %v3377
  %v3391 = vsel %vm2197, %v3375, %v3376
  %v3392 = vsel %vm2197, %v3374, %v3375
  %v3393 = vsel %vm2197, %v3373, %v3374
  %v3394 = vsel %vm2197, %v3372, %v3373
  %v3395 = vsel %vm2197, %v3371, %v3372
  %v3396 = vsel %vm2197, %v3370, %v3371
  %v3397 = vsel %vm2197, %v3369, %v3370
  %v3398 = vsel %vm2197, %v3368, %v3369
  %v3399 = vsel %vm2197, %v3367, %v3368
  %v3400 = vsel %vm2197, %v3366, %v3367
  %v3401 = vsel %vm2197, %v3365, %v3366
  %v3402 = vsel %vm2197, %v3364, %v3365
  %v3403 = vsel %vm2197, %v3363, %v3364
  %v3404 = vsel %vm2197, %v3362, %v3363
  %v3405 = vsel %vm2197, %v3361, %v3362
  %v3406 = vsel %vm2197, %v3360, %v3361
  %v3407 = vsel %vm2197, %v3359, %v3360
  %v3408 = vsel %vm2197, %v3358, %v3359
  %v3409 = vsel %vm2197, %v3357, %v3358
  %v3410 = vsel %vm2197, %v3356, %v3357
  %v3411 = vsel %vm2197, %v3355, %v3356
  %v3412 = vsel %vm2197, %v3354, %v3355
  %v3413 = vsel %vm2197, %v3353, %v3354
  %v3414 = vsel %vm2197, %v3352, %v3353
  %v3415 = vsel %vm2197, %v3383, %v3352
  %v3416 = vmul.f32 %v3415, %v1544
  %v3417 = vmul.f32 %v3414, %v1545
  %v3418 = vmul.f32 %v3413, %v1546
  %v3419 = vmul.f32 %v3412, %v1547
  %v3420 = vmul.f32 %v3411, %v1548
  %v3421 = vmul.f32 %v3410, %v1549
  %v3422 = vmul.f32 %v3409, %v1550
  %v3423 = vmul.f32 %v3408, %v1551
  %v3424 = vmul.f32 %v3407, %v1552
  %v3425 = vmul.f32 %v3406, %v1553
  %v3426 = vmul.f32 %v3405, %v1554
  %v3427 = vmul.f32 %v3404, %v1555
  %v3428 = vmul.f32 %v3403, %v1556
  %v3429 = vmul.f32 %v3402, %v1557
  %v3430 = vmul.f32 %v3401, %v1558
  %v3431 = vmul.f32 %v3400, %v1559
  %v3432 = vmul.f32 %v3399, %v1560
  %v3433 = vmul.f32 %v3398, %v1561
  %v3434 = vmul.f32 %v3397, %v1562
  %v3435 = vmul.f32 %v3396, %v1563
  %v3436 = vmul.f32 %v3395, %v1564
  %v3437 = vmul.f32 %v3394, %v1565
  %v3438 = vmul.f32 %v3393, %v1566
  %v3439 = vmul.f32 %v3392, %v1567
  %v3440 = vmul.f32 %v3391, %v1568
  %v3441 = vmul.f32 %v3390, %v1569
  %v3442 = vmul.f32 %v3389, %v1570
  %v3443 = vmul.f32 %v3388, %v1571
  %v3444 = vmul.f32 %v3387, %v1572
  %v3445 = vmul.f32 %v3386, %v1573
  %v3446 = vmul.f32 %v3385, %v1574
  %v3447 = vmul.f32 %v3384, %v1575
  %v3448 = vrot.slane %v3320, 1
  %v3449 = vrot.slane %v3321, 1
  %v3450 = vrot.slane %v3322, 1
  %v3451 = vrot.slane %v3323, 1
  %v3452 = vrot.slane %v3324, 1
  %v3453 = vrot.slane %v3325, 1
  %v3454 = vrot.slane %v3326, 1
  %v3455 = vrot.slane %v3327, 1
  %v3456 = vrot.slane %v3328, 1
  %v3457 = vrot.slane %v3329, 1
  %v3458 = vrot.slane %v3330, 1
  %v3459 = vrot.slane %v3331, 1
  %v3460 = vrot.slane %v3332, 1
  %v3461 = vrot.slane %v3333, 1
  %v3462 = vrot.slane %v3334, 1
  %v3463 = vrot.slane %v3335, 1
  %v3464 = vrot.slane %v3336, 1
  %v3465 = vrot.slane %v3337, 1
  %v3466 = vrot.slane %v3338, 1
  %v3467 = vrot.slane %v3339, 1
  %v3468 = vrot.slane %v3340, 1
  %v3469 = vrot.slane %v3341, 1
  %v3470 = vrot.slane %v3342, 1
  %v3471 = vrot.slane %v3343, 1
  %v3472 = vrot.slane %v3344, 1
  %v3473 = vrot.slane %v3345, 1
  %v3474 = vrot.slane %v3346, 1
  %v3475 = vrot.slane %v3347, 1
  %v3476 = vrot.slane %v3348, 1
  %v3477 = vrot.slane %v3349, 1
  %v3478 = vrot.slane %v3350, 1
  %v3479 = vrot.slane %v3351, 1
  %v3480 = vsel %vm2294, %v3478, %v3479
  %v3481 = vsel %vm2294, %v3477, %v3478
  %v3482 = vsel %vm2294, %v3476, %v3477
  %v3483 = vsel %vm2294, %v3475, %v3476
  %v3484 = vsel %vm2294, %v3474, %v3475
  %v3485 = vsel %vm2294, %v3473, %v3474
  %v3486 = vsel %vm2294, %v3472, %v3473
  %v3487 = vsel %vm2294, %v3471, %v3472
  %v3488 = vsel %vm2294, %v3470, %v3471
  %v3489 = vsel %vm2294, %v3469, %v3470
  %v3490 = vsel %vm2294, %v3468, %v3469
  %v3491 = vsel %vm2294, %v3467, %v3468
  %v3492 = vsel %vm2294, %v3466, %v3467
  %v3493 = vsel %vm2294, %v3465, %v3466
  %v3494 = vsel %vm2294, %v3464, %v3465
  %v3495 = vsel %vm2294, %v3463, %v3464
  %v3496 = vsel %vm2294, %v3462, %v3463
  %v3497 = vsel %vm2294, %v3461, %v3462
  %v3498 = vsel %vm2294, %v3460, %v3461
  %v3499 = vsel %vm2294, %v3459, %v3460
  %v3500 = vsel %vm2294, %v3458, %v3459
  %v3501 = vsel %vm2294, %v3457, %v3458
  %v3502 = vsel %vm2294, %v3456, %v3457
  %v3503 = vsel %vm2294, %v3455, %v3456
  %v3504 = vsel %vm2294, %v3454, %v3455
  %v3505 = vsel %vm2294, %v3453, %v3454
  %v3506 = vsel %vm2294, %v3452, %v3453
  %v3507 = vsel %vm2294, %v3451, %v3452
  %v3508 = vsel %vm2294, %v3450, %v3451
  %v3509 = vsel %vm2294, %v3449, %v3450
  %v3510 = vsel %vm2294, %v3448, %v3449
  %v3511 = vsel %vm2294, %v3479, %v3448
  %v3512 = vmul.f32 %v3510, %v1576
  %v3513 = vmul.f32 %v3509, %v1577
  %v3514 = vmul.f32 %v3508, %v1578
  %v3515 = vmul.f32 %v3507, %v1579
  %v3516 = vmul.f32 %v3506, %v1580
  %v3517 = vmul.f32 %v3505, %v1581
  %v3518 = vmul.f32 %v3504, %v1582
  %v3519 = vmul.f32 %v3503, %v1583
  %v3520 = vmul.f32 %v3502, %v1584
  %v3521 = vmul.f32 %v3501, %v1585
  %v3522 = vmul.f32 %v3500, %v1586
  %v3523 = vmul.f32 %v3499, %v1587
  %v3524 = vmul.f32 %v3498, %v1588
  %v3525 = vmul.f32 %v3497, %v1589
  %v3526 = vmul.f32 %v3496, %v1590
  %v3527 = vmul.f32 %v3495, %v1591
  %v3528 = vmul.f32 %v3494, %v1592
  %v3529 = vmul.f32 %v3493, %v1593
  %v3530 = vmul.f32 %v3492, %v1594
  %v3531 = vmul.f32 %v3491, %v1595
  %v3532 = vmul.f32 %v3490, %v1596
  %v3533 = vmul.f32 %v3489, %v1597
  %v3534 = vmul.f32 %v3488, %v1598
  %v3535 = vmul.f32 %v3487, %v1599
  %v3536 = vmul.f32 %v3486, %v1600
  %v3537 = vmul.f32 %v3485, %v1601
  %v3538 = vmul.f32 %v3484, %v1602
  %v3539 = vmul.f32 %v3483, %v1603
  %v3540 = vmul.f32 %v3482, %v1604
  %v3541 = vmul.f32 %v3481, %v1605
  %v3542 = vmul.f32 %v3480, %v1606
  %v3543 = vmul.f32 %v3511, %v1607
  %v3544 = vld [vmem:[#allocation2 + $0x100] sm:$0xff]
  %v3545 = vld [vmem:[#allocation2 + $0x108] sm:$0xff]
  %v3546 = vld [vmem:[#allocation2 + $0x110] sm:$0xff]
  %v3547 = vld [vmem:[#allocation2 + $0x118] sm:$0xff]
  %v3548 = vrot.slane %v3544, 7
  %v3549 = vrot.slane %v3545, 7
  %v3550 = vrot.slane %v3546, 7
  %v3551 = vrot.slane %v3547, 7
  %v3552 = vsel %vm2197, %v3550, %v3551
  %v3553 = vsel %vm2197, %v3549, %v3550
  %v3554 = vsel %vm2197, %v3548, %v3549
  %v3555 = vsel %vm2197, %v3383, %v3548
  %v3556 = vsel %vm2197, %v3551, %v3356
  %v3557 = vmul.f32 %v3556, %v1544
  %v3558 = vmul.f32 %v3410, %v1545
  %v3559 = vmul.f32 %v3409, %v1546
  %v3560 = vmul.f32 %v3408, %v1547
  %v3561 = vmul.f32 %v3407, %v1548
  %v3562 = vmul.f32 %v3406, %v1549
  %v3563 = vmul.f32 %v3405, %v1550
  %v3564 = vmul.f32 %v3404, %v1551
  %v3565 = vmul.f32 %v3403, %v1552
  %v3566 = vmul.f32 %v3402, %v1553
  %v3567 = vmul.f32 %v3401, %v1554
  %v3568 = vmul.f32 %v3400, %v1555
  %v3569 = vmul.f32 %v3399, %v1556
  %v3570 = vmul.f32 %v3398, %v1557
  %v3571 = vmul.f32 %v3397, %v1558
  %v3572 = vmul.f32 %v3396, %v1559
  %v3573 = vmul.f32 %v3395, %v1560
  %v3574 = vmul.f32 %v3394, %v1561
  %v3575 = vmul.f32 %v3393, %v1562
  %v3576 = vmul.f32 %v3392, %v1563
  %v3577 = vmul.f32 %v3391, %v1564
  %v3578 = vmul.f32 %v3390, %v1565
  %v3579 = vmul.f32 %v3389, %v1566
  %v3580 = vmul.f32 %v3388, %v1567
  %v3581 = vmul.f32 %v3387, %v1568
  %v3582 = vmul.f32 %v3386, %v1569
  %v3583 = vmul.f32 %v3385, %v1570
  %v3584 = vmul.f32 %v3384, %v1571
  %v3585 = vmul.f32 %v3555, %v1572
  %v3586 = vmul.f32 %v3554, %v1573
  %v3587 = vmul.f32 %v3553, %v1574
  %v3588 = vmul.f32 %v3552, %v1575
  %v3589 = vrot.slane %v3544, 1
  %v3590 = vrot.slane %v3545, 1
  %v3591 = vrot.slane %v3546, 1
  %v3592 = vrot.slane %v3547, 1
  %v3593 = vsel %vm2294, %v3591, %v3592
  %v3594 = vsel %vm2294, %v3590, %v3591
  %v3595 = vsel %vm2294, %v3589, %v3590
  %v3596 = vsel %vm2294, %v3479, %v3589
  %v3597 = vsel %vm2294, %v3592, %v3452
  %v3598 = vmul.f32 %v3506, %v1576
  %v3599 = vmul.f32 %v3505, %v1577
  %v3600 = vmul.f32 %v3504, %v1578
  %v3601 = vmul.f32 %v3503, %v1579
  %v3602 = vmul.f32 %v3502, %v1580
  %v3603 = vmul.f32 %v3501, %v1581
  %v3604 = vmul.f32 %v3500, %v1582
  %v3605 = vmul.f32 %v3499, %v1583
  %v3606 = vmul.f32 %v3498, %v1584
  %v3607 = vmul.f32 %v3497, %v1585
  %v3608 = vmul.f32 %v3496, %v1586
  %v3609 = vmul.f32 %v3495, %v1587
  %v3610 = vmul.f32 %v3494, %v1588
  %v3611 = vmul.f32 %v3493, %v1589
  %v3612 = vmul.f32 %v3492, %v1590
  %v3613 = vmul.f32 %v3491, %v1591
  %v3614 = vmul.f32 %v3490, %v1592
  %v3615 = vmul.f32 %v3489, %v1593
  %v3616 = vmul.f32 %v3488, %v1594
  %v3617 = vmul.f32 %v3487, %v1595
  %v3618 = vmul.f32 %v3486, %v1596
  %v3619 = vmul.f32 %v3485, %v1597
  %v3620 = vmul.f32 %v3484, %v1598
  %v3621 = vmul.f32 %v3483, %v1599
  %v3622 = vmul.f32 %v3482, %v1600
  %v3623 = vmul.f32 %v3481, %v1601
  %v3624 = vmul.f32 %v3480, %v1602
  %v3625 = vmul.f32 %v3596, %v1603
  %v3626 = vmul.f32 %v3595, %v1604
  %v3627 = vmul.f32 %v3594, %v1605
  %v3628 = vmul.f32 %v3593, %v1606
  %v3629 = vmul.f32 %v3597, %v1607
  %v3630 = vld [vmem:[#allocation2 + $0x120] sm:$0xff]
  %v3631 = vld [vmem:[#allocation2 + $0x128] sm:$0xff]
  %v3632 = vld [vmem:[#allocation2 + $0x130] sm:$0xff]
  %v3633 = vld [vmem:[#allocation2 + $0x138] sm:$0xff]
  %v3634 = vrot.slane %v3630, 7
  %v3635 = vrot.slane %v3631, 7
  %v3636 = vrot.slane %v3632, 7
  %v3637 = vrot.slane %v3633, 7
  %v3638 = vsel %vm2197, %v3636, %v3637
  %v3639 = vsel %vm2197, %v3635, %v3636
  %v3640 = vsel %vm2197, %v3634, %v3635
  %v3641 = vsel %vm2197, %v3551, %v3634
  %v3642 = vsel %vm2197, %v3637, %v3360
  %v3643 = vmul.f32 %v3642, %v1544
  %v3644 = vmul.f32 %v3406, %v1545
  %v3645 = vmul.f32 %v3405, %v1546
  %v3646 = vmul.f32 %v3404, %v1547
  %v3647 = vmul.f32 %v3403, %v1548
  %v3648 = vmul.f32 %v3402, %v1549
  %v3649 = vmul.f32 %v3401, %v1550
  %v3650 = vmul.f32 %v3400, %v1551
  %v3651 = vmul.f32 %v3399, %v1552
  %v3652 = vmul.f32 %v3398, %v1553
  %v3653 = vmul.f32 %v3397, %v1554
  %v3654 = vmul.f32 %v3396, %v1555
  %v3655 = vmul.f32 %v3395, %v1556
  %v3656 = vmul.f32 %v3394, %v1557
  %v3657 = vmul.f32 %v3393, %v1558
  %v3658 = vmul.f32 %v3392, %v1559
  %v3659 = vmul.f32 %v3391, %v1560
  %v3660 = vmul.f32 %v3390, %v1561
  %v3661 = vmul.f32 %v3389, %v1562
  %v3662 = vmul.f32 %v3388, %v1563
  %v3663 = vmul.f32 %v3387, %v1564
  %v3664 = vmul.f32 %v3386, %v1565
  %v3665 = vmul.f32 %v3385, %v1566
  %v3666 = vmul.f32 %v3384, %v1567
  %v3667 = vmul.f32 %v3555, %v1568
  %v3668 = vmul.f32 %v3554, %v1569
  %v3669 = vmul.f32 %v3553, %v1570
  %v3670 = vmul.f32 %v3552, %v1571
  %v3671 = vmul.f32 %v3641, %v1572
  %v3672 = vmul.f32 %v3640, %v1573
  %v3673 = vmul.f32 %v3639, %v1574
  %v3674 = vmul.f32 %v3638, %v1575
  %v3675 = vrot.slane %v3630, 1
  %v3676 = vrot.slane %v3631, 1
  %v3677 = vrot.slane %v3632, 1
  %v3678 = vrot.slane %v3633, 1
  %v3679 = vsel %vm2294, %v3677, %v3678
  %v3680 = vsel %vm2294, %v3676, %v3677
  %v3681 = vsel %vm2294, %v3675, %v3676
  %v3682 = vsel %vm2294, %v3592, %v3675
  %v3683 = vsel %vm2294, %v3678, %v3456
  %v3684 = vmul.f32 %v3502, %v1576
  %v3685 = vmul.f32 %v3501, %v1577
  %v3686 = vmul.f32 %v3500, %v1578
  %v3687 = vmul.f32 %v3499, %v1579
  %v3688 = vmul.f32 %v3498, %v1580
  %v3689 = vmul.f32 %v3497, %v1581
  %v3690 = vmul.f32 %v3496, %v1582
  %v3691 = vmul.f32 %v3495, %v1583
  %v3692 = vmul.f32 %v3494, %v1584
  %v3693 = vmul.f32 %v3493, %v1585
  %v3694 = vmul.f32 %v3492, %v1586
  %v3695 = vmul.f32 %v3491, %v1587
  %v3696 = vmul.f32 %v3490, %v1588
  %v3697 = vmul.f32 %v3489, %v1589
  %v3698 = vmul.f32 %v3488, %v1590
  %v3699 = vmul.f32 %v3487, %v1591
  %v3700 = vmul.f32 %v3486, %v1592
  %v3701 = vmul.f32 %v3485, %v1593
  %v3702 = vmul.f32 %v3484, %v1594
  %v3703 = vmul.f32 %v3483, %v1595
  %v3704 = vmul.f32 %v3482, %v1596
  %v3705 = vmul.f32 %v3481, %v1597
  %v3706 = vmul.f32 %v3480, %v1598
  %v3707 = vmul.f32 %v3596, %v1599
  %v3708 = vmul.f32 %v3595, %v1600
  %v3709 = vmul.f32 %v3594, %v1601
  %v3710 = vmul.f32 %v3593, %v1602
  %v3711 = vmul.f32 %v3682, %v1603
  %v3712 = vmul.f32 %v3681, %v1604
  %v3713 = vmul.f32 %v3680, %v1605
  %v3714 = vmul.f32 %v3679, %v1606
  %v3715 = vmul.f32 %v3683, %v1607
  %v3716 = vld [vmem:[%s39] sm:$0xff]
  %v3717 = vld [vmem:[%s39 + $0x8] sm:$0xff]
  %v3718 = vld [vmem:[%s39 + $0x10] sm:$0xff]
  %v3719 = vld [vmem:[%s39 + $0x18] sm:$0xff]
  %s3720 = scalar_lea.vmem %s39, 32
  %v3721 = vld [vmem:[%s3720] sm:$0xff]
  %v3722 = vld [vmem:[%s3720 + $0x8] sm:$0xff]
  %v3723 = vld [vmem:[%s3720 + $0x10] sm:$0xff]
  %v3724 = vld [vmem:[%s3720 + $0x18] sm:$0xff]
  %v3726 = vsel %vm359, %v3320, 0
  %v3729 = vsel %vm359, %v3321, 0
  %v3732 = vsel %vm359, %v3322, 0
  %v3735 = vsel %vm359, %v3323, 0
  %v3738 = vsel %vm359, %v3324, 0
  %v3741 = vsel %vm359, %v3325, 0
  %v3744 = vsel %vm359, %v3326, 0
  %v3747 = vsel %vm359, %v3327, 0
  %v3750 = vsel %vm359, %v3328, 0
  %v3753 = vsel %vm359, %v3329, 0
  %v3756 = vsel %vm359, %v3330, 0
  %v3759 = vsel %vm359, %v3331, 0
  %v3762 = vsel %vm359, %v3332, 0
  %v3765 = vsel %vm359, %v3333, 0
  %v3768 = vsel %vm359, %v3334, 0
  %v3771 = vsel %vm359, %v3335, 0
  %v3774 = vsel %vm359, %v3336, 0
  %v3777 = vsel %vm359, %v3337, 0
  %v3780 = vsel %vm359, %v3338, 0
  %v3783 = vsel %vm359, %v3339, 0
  %v3786 = vsel %vm359, %v3340, 0
  %v3789 = vsel %vm359, %v3341, 0
  %v3792 = vsel %vm359, %v3342, 0
  %v3795 = vsel %vm359, %v3343, 0
  %v3798 = vsel %vm359, %v3344, 0
  %v3801 = vsel %vm359, %v3345, 0
  %v3804 = vsel %vm359, %v3346, 0
  %v3807 = vsel %vm359, %v3347, 0
  %v3810 = vsel %vm359, %v3348, 0
  %v3813 = vsel %vm359, %v3349, 0
  %v3816 = vsel %vm359, %v3350, 0
  %v3819 = vsel %vm359, %v3351, 0
  %3821 = vmatprep.subr.mxu0 0.0
  %3822 = vmatpush1.msra.mxu0 %v3721
  %3823 = vmatprep.subr.mxu0 0.0
  %3824 = vmatpush1.msra.mxu0 %v3722
  %3825 = vmatprep.subr.mxu0 0.0
  %3826 = vmatpush1.msra.mxu0 %v3723
  %3827 = vmatprep.subr.mxu0 0.0
  %3828 = vmatpush1.msra.mxu0 %v3724
  %3829 = vmatprep.subr.mxu0 0.0
  %3830 = vmatpush1.msra.mxu0 0.0
  %3831 = vmatprep.subr.mxu0 0.0
  %3832 = vmatpush1.msra.mxu0 0.0
  %3833 = vmatprep.subr.mxu0 0.0
  %3834 = vmatpush1.msra.mxu0 0.0
  %3835 = vmatprep.subr.mxu0 0.0
  %3836 = vmatpush1.msra.mxu0 0.0
  %3837 = vmatprep.subr.mxu0 0.0
  %3838 = vmatpush1.msra.mxu0 0.0
  %3839 = vmatprep.subr.mxu0 0.0
  %3840 = vmatpush1.msra.mxu0 0.0
  %3841 = vmatprep.subr.mxu0 0.0
  %3842 = vmatpush1.msra.mxu0 0.0
  %3843 = vmatprep.subr.mxu0 0.0
  %3844 = vmatpush1.msra.mxu0 0.0
  %3845 = vmatprep.subr.mxu0 0.0
  %3846 = vmatpush1.msra.mxu0 0.0
  %3847 = vmatprep.subr.mxu0 0.0
  %3848 = vmatpush1.msra.mxu0 0.0
  %3849 = vmatprep.subr.mxu0 0.0
  %3850 = vmatpush1.msra.mxu0 0.0
  %3851 = vmatprep.subr.mxu0 0.0
  %3852 = vmatpush1.msra.mxu0 0.0
  %3853 = vmatprep.subr.mxu0 0.0
  %3854 = vmatpush1.msra.mxu0 0.0
  %3855 = vmatprep.subr.mxu0 0.0
  %3856 = vmatpush1.msra.mxu0 0.0
  %3857 = vmatprep.subr.mxu0 0.0
  %3858 = vmatpush1.msra.mxu0 0.0
  %3859 = vmatprep.subr.mxu0 0.0
  %3860 = vmatpush1.msra.mxu0 0.0
  %3861 = vmatprep.subr.mxu0 0.0
  %3862 = vmatpush1.msra.mxu0 0.0
  %3863 = vmatprep.subr.mxu0 0.0
  %3864 = vmatpush1.msra.mxu0 0.0
  %3865 = vmatprep.subr.mxu0 0.0
  %3866 = vmatpush1.msra.mxu0 0.0
  %3867 = vmatprep.subr.mxu0 0.0
  %3868 = vmatpush1.msra.mxu0 0.0
  %3869 = vmatprep.subr.mxu0 0.0
  %3870 = vmatpush1.msra.mxu0 0.0
  %3871 = vmatprep.subr.mxu0 0.0
  %3872 = vmatpush1.msra.mxu0 0.0
  %3873 = vmatprep.subr.mxu0 0.0
  %3874 = vmatpush1.msra.mxu0 0.0
  %3875 = vmatprep.subr.mxu0 0.0
  %3876 = vmatpush1.msra.mxu0 0.0
  %3877 = vmatprep.subr.mxu0 0.0
  %3878 = vmatpush1.msra.mxu0 0.0
  %3879 = vmatprep.subr.mxu0 0.0
  %3880 = vmatpush1.msra.mxu0 0.0
  %3881 = vmatprep.subr.mxu0 0.0
  %3882 = vmatpush1.msra.mxu0 0.0
  %3883 = vmatprep.subr.mxu0 0.0
  %3884 = vmatpush1.msra.mxu0 0.0
  %3885 = vmatprep.mubr.f32.mxu0 0.0
  %3886 = vmatmul.mubr.f32.gmra.mrb[0].mxu0 %v3726
  %v3887 = vpop.f32.mrb[0].mxu0
  %v3888 = vadd.f32 0.0, %v3887
  %v3889 = vpop.f32.mrb[0].mxu0
  %3890 = vmatprep.mubr.f32.mxu0 0.0
  %3891 = vmatmul.mubr.f32.gmra.mrb[0].mxu0 %v3729
  %v3892 = vpop.f32.mrb[0].mxu0
  %v3893 = vadd.f32 0.0, %v3892
  %v3894 = vpop.f32.mrb[0].mxu0
  %3895 = vmatprep.mubr.f32.mxu0 0.0
  %3896 = vmatmul.mubr.f32.gmra.mrb[0].mxu0 %v3732
  %v3897 = vpop.f32.mrb[0].mxu0
  %v3898 = vadd.f32 0.0, %v3897
  %v3899 = vpop.f32.mrb[0].mxu0
  %3900 = vmatprep.mubr.f32.mxu0 0.0
  %3901 = vmatmul.mubr.f32.gmra.mrb[0].mxu0 %v3735
  %v3902 = vpop.f32.mrb[0].mxu0
  %v3903 = vadd.f32 0.0, %v3902
  %v3904 = vpop.f32.mrb[0].mxu0
  %3905 = vmatprep.mubr.f32.mxu0 0.0
  %3906 = vmatmul.mubr.f32.gmra.mrb[0].mxu0 %v3738
  %v3907 = vpop.f32.mrb[0].mxu0
  %v3908 = vadd.f32 0.0, %v3907
  %v3909 = vpop.f32.mrb[0].mxu0
  %3910 = vmatprep.mubr.f32.mxu0 0.0
  %3911 = vmatmul.mubr.f32.gmra.mrb[0].mxu0 %v3741
  %v3912 = vpop.f32.mrb[0].mxu0
  %v3913 = vadd.f32 0.0, %v3912
  %v3914 = vpop.f32.mrb[0].mxu0
  %3915 = vmatprep.mubr.f32.mxu0 0.0
  %3916 = vmatmul.mubr.f32.gmra.mrb[0].mxu0 %v3744
  %v3917 = vpop.f32.mrb[0].mxu0
  %v3918 = vadd.f32 0.0, %v3917
  %v3919 = vpop.f32.mrb[0].mxu0
  %3920 = vmatprep.mubr.f32.mxu0 0.0
  %3921 = vmatmul.mubr.f32.gmra.mrb[0].mxu0 %v3747
  %v3922 = vpop.f32.mrb[0].mxu0
  %v3923 = vadd.f32 0.0, %v3922
  %v3924 = vpop.f32.mrb[0].mxu0
  %3925 = vmatprep.mubr.f32.mxu0 0.0
  %3926 = vmatmul.mubr.f32.gmra.mrb[0].mxu0 %v3750
  %v3927 = vpop.f32.mrb[0].mxu0
  %v3928 = vadd.f32 0.0, %v3927
  %v3929 = vpop.f32.mrb[0].mxu0
  %3930 = vmatprep.mubr.f32.mxu0 0.0
  %3931 = vmatmul.mubr.f32.gmra.mrb[0].mxu0 %v3753
  %v3932 = vpop.f32.mrb[0].mxu0
  %v3933 = vadd.f32 0.0, %v3932
  %v3934 = vpop.f32.mrb[0].mxu0
  %3935 = vmatprep.mubr.f32.mxu0 0.0
  %3936 = vmatmul.mubr.f32.gmra.mrb[0].mxu0 %v3756
  %v3937 = vpop.f32.mrb[0].mxu0
  %v3938 = vadd.f32 0.0, %v3937
  %v3939 = vpop.f32.mrb[0].mxu0
  %3940 = vmatprep.mubr.f32.mxu0 0.0
  %3941 = vmatmul.mubr.f32.gmra.mrb[0].mxu0 %v3759
  %v3942 = vpop.f32.mrb[0].mxu0
  %v3943 = vadd.f32 0.0, %v3942
  %v3944 = vpop.f32.mrb[0].mxu0
  %3945 = vmatprep.mubr.f32.mxu0 0.0
  %3946 = vmatmul.mubr.f32.gmra.mrb[0].mxu0 %v3762
  %v3947 = vpop.f32.mrb[0].mxu0
  %v3948 = vadd.f32 0.0, %v3947
  %v3949 = vpop.f32.mrb[0].mxu0
  %3950 = vmatprep.mubr.f32.mxu0 0.0
  %3951 = vmatmul.mubr.f32.gmra.mrb[0].mxu0 %v3765
  %v3952 = vpop.f32.mrb[0].mxu0
  %v3953 = vadd.f32 0.0, %v3952
  %v3954 = vpop.f32.mrb[0].mxu0
  %3955 = vmatprep.mubr.f32.mxu0 0.0
  %3956 = vmatmul.mubr.f32.gmra.mrb[0].mxu0 %v3768
  %v3957 = vpop.f32.mrb[0].mxu0
  %v3958 = vadd.f32 0.0, %v3957
  %v3959 = vpop.f32.mrb[0].mxu0
  %3960 = vmatprep.mubr.f32.mxu0 0.0
  %3961 = vmatmul.mubr.f32.gmra.mrb[0].mxu0 %v3771
  %v3962 = vpop.f32.mrb[0].mxu0
  %v3963 = vadd.f32 0.0, %v3962
  %v3964 = vpop.f32.mrb[0].mxu0
  %3965 = vmatprep.mubr.f32.mxu0 0.0
  %3966 = vmatmul.mubr.f32.gmra.mrb[0].mxu0 %v3774
  %v3967 = vpop.f32.mrb[0].mxu0
  %v3968 = vadd.f32 0.0, %v3967
  %v3969 = vpop.f32.mrb[0].mxu0
  %3970 = vmatprep.mubr.f32.mxu0 0.0
  %3971 = vmatmul.mubr.f32.gmra.mrb[0].mxu0 %v3777
  %v3972 = vpop.f32.mrb[0].mxu0
  %v3973 = vadd.f32 0.0, %v3972
  %v3974 = vpop.f32.mrb[0].mxu0
  %3975 = vmatprep.mubr.f32.mxu0 0.0
  %3976 = vmatmul.mubr.f32.gmra.mrb[0].mxu0 %v3780
  %v3977 = vpop.f32.mrb[0].mxu0
  %v3978 = vadd.f32 0.0, %v3977
  %v3979 = vpop.f32.mrb[0].mxu0
  %3980 = vmatprep.mubr.f32.mxu0 0.0
  %3981 = vmatmul.mubr.f32.gmra.mrb[0].mxu0 %v3783
  %v3982 = vpop.f32.mrb[0].mxu0
  %v3983 = vadd.f32 0.0, %v3982
  %v3984 = vpop.f32.mrb[0].mxu0
  %3985 = vmatprep.mubr.f32.mxu0 0.0
  %3986 = vmatmul.mubr.f32.gmra.mrb[0].mxu0 %v3786
  %v3987 = vpop.f32.mrb[0].mxu0
  %v3988 = vadd.f32 0.0, %v3987
  %v3989 = vpop.f32.mrb[0].mxu0
  %3990 = vmatprep.mubr.f32.mxu0 0.0
  %3991 = vmatmul.mubr.f32.gmra.mrb[0].mxu0 %v3789
  %v3992 = vpop.f32.mrb[0].mxu0
  %v3993 = vadd.f32 0.0, %v3992
  %v3994 = vpop.f32.mrb[0].mxu0
  %3995 = vmatprep.mubr.f32.mxu0 0.0
  %3996 = vmatmul.mubr.f32.gmra.mrb[0].mxu0 %v3792
  %v3997 = vpop.f32.mrb[0].mxu0
  %v3998 = vadd.f32 0.0, %v3997
  %v3999 = vpop.f32.mrb[0].mxu0
  %4000 = vmatprep.mubr.f32.mxu0 0.0
  %4001 = vmatmul.mubr.f32.gmra.mrb[0].mxu0 %v3795
  %v4002 = vpop.f32.mrb[0].mxu0
  %v4003 = vadd.f32 0.0, %v4002
  %v4004 = vpop.f32.mrb[0].mxu0
  %4005 = vmatprep.mubr.f32.mxu0 0.0
  %4006 = vmatmul.mubr.f32.gmra.mrb[0].mxu0 %v3798
  %v4007 = vpop.f32.mrb[0].mxu0
  %v4008 = vadd.f32 0.0, %v4007
  %v4009 = vpop.f32.mrb[0].mxu0
  %4010 = vmatprep.mubr.f32.mxu0 0.0
  %4011 = vmatmul.mubr.f32.gmra.mrb[0].mxu0 %v3801
  %v4012 = vpop.f32.mrb[0].mxu0
  %v4013 = vadd.f32 0.0, %v4012
  %v4014 = vpop.f32.mrb[0].mxu0
  %4015 = vmatprep.mubr.f32.mxu0 0.0
  %4016 = vmatmul.mubr.f32.gmra.mrb[0].mxu0 %v3804
  %v4017 = vpop.f32.mrb[0].mxu0
  %v4018 = vadd.f32 0.0, %v4017
  %v4019 = vpop.f32.mrb[0].mxu0
  %4020 = vmatprep.mubr.f32.mxu0 0.0
  %4021 = vmatmul.mubr.f32.gmra.mrb[0].mxu0 %v3807
  %v4022 = vpop.f32.mrb[0].mxu0
  %v4023 = vadd.f32 0.0, %v4022
  %v4024 = vpop.f32.mrb[0].mxu0
  %4025 = vmatprep.mubr.f32.mxu0 0.0
  %4026 = vmatmul.mubr.f32.gmra.mrb[0].mxu0 %v3810
  %v4027 = vpop.f32.mrb[0].mxu0
  %v4028 = vadd.f32 0.0, %v4027
  %v4029 = vpop.f32.mrb[0].mxu0
  %4030 = vmatprep.mubr.f32.mxu0 0.0
  %4031 = vmatmul.mubr.f32.gmra.mrb[0].mxu0 %v3813
  %v4032 = vpop.f32.mrb[0].mxu0
  %v4033 = vadd.f32 0.0, %v4032
  %v4034 = vpop.f32.mrb[0].mxu0
  %4035 = vmatprep.mubr.f32.mxu0 0.0
  %4036 = vmatmul.mubr.f32.gmra.mrb[0].mxu0 %v3816
  %v4037 = vpop.f32.mrb[0].mxu0
  %v4038 = vadd.f32 0.0, %v4037
  %v4039 = vpop.f32.mrb[0].mxu0
  %4040 = vmatprep.mubr.f32.mxu0 0.0
  %4041 = vmatmul.mubr.f32.gmra.mrb[0].mxu0 %v3819
  %v4042 = vpop.f32.mrb[0].mxu0
  %v4043 = vadd.f32 0.0, %v4042
  %v4044 = vpop.f32.mrb[0].mxu0
  %4045 = vdwg.mxu0
  %v4047 = vsel %vm359, %v3416, 0
  %v4050 = vsel %vm359, %v3417, 0
  %v4053 = vsel %vm359, %v3418, 0
  %v4056 = vsel %vm359, %v3419, 0
  %v4059 = vsel %vm359, %v3420, 0
  %v4062 = vsel %vm359, %v3421, 0
  %v4065 = vsel %vm359, %v3422, 0
  %v4068 = vsel %vm359, %v3423, 0
  %v4071 = vsel %vm359, %v3424, 0
  %v4074 = vsel %vm359, %v3425, 0
  %v4077 = vsel %vm359, %v3426, 0
  %v4080 = vsel %vm359, %v3427, 0
  %v4083 = vsel %vm359, %v3428, 0
  %v4086 = vsel %vm359, %v3429, 0
  %v4089 = vsel %vm359, %v3430, 0
  %v4092 = vsel %vm359, %v3431, 0
  %v4095 = vsel %vm359, %v3432, 0
  %v4098 = vsel %vm359, %v3433, 0
  %v4101 = vsel %vm359, %v3434, 0
  %v4104 = vsel %vm359, %v3435, 0
  %v4107 = vsel %vm359, %v3436, 0
  %v4110 = vsel %vm359, %v3437, 0
  %v4113 = vsel %vm359, %v3438, 0
  %v4116 = vsel %vm359, %v3439, 0
  %v4119 = vsel %vm359, %v3440, 0
  %v4122 = vsel %vm359, %v3441, 0
  %v4125 = vsel %vm359, %v3442, 0
  %v4128 = vsel %vm359, %v3443, 0
  %v4131 = vsel %vm359, %v3444, 0
  %v4134 = vsel %vm359, %v3445, 0
  %v4137 = vsel %vm359, %v3446, 0
  %v4140 = vsel %vm359, %v3447, 0
  %4142 = vmatprep.subr.mxu0 0.0
  %4143 = vmatpush1.msra.mxu0 %v3716
  %4144 = vmatprep.subr.mxu0 0.0
  %4145 = vmatpush1.msra.mxu0 %v3717
  %4146 = vmatprep.subr.mxu0 0.0
  %4147 = vmatpush1.msra.mxu0 %v3718
  %4148 = vmatprep.subr.mxu0 0.0
  %4149 = vmatpush1.msra.mxu0 %v3719
  %4150 = vmatprep.subr.mxu0 0.0
  %4151 = vmatpush1.msra.mxu0 0.0
  %4152 = vmatprep.subr.mxu0 0.0
  %4153 = vmatpush1.msra.mxu0 0.0
  %4154 = vmatprep.subr.mxu0 0.0
  %4155 = vmatpush1.msra.mxu0 0.0
  %4156 = vmatprep.subr.mxu0 0.0
  %4157 = vmatpush1.msra.mxu0 0.0
  %4158 = vmatprep.subr.mxu0 0.0
  %4159 = vmatpush1.msra.mxu0 0.0
  %4160 = vmatprep.subr.mxu0 0.0
  %4161 = vmatpush1.msra.mxu0 0.0
  %4162 = vmatprep.subr.mxu0 0.0
  %4163 = vmatpush1.msra.mxu0 0.0
  %4164 = vmatprep.subr.mxu0 0.0
  %4165 = vmatpush1.msra.mxu0 0.0
  %4166 = vmatprep.subr.mxu0 0.0
  %4167 = vmatpush1.msra.mxu0 0.0
  %4168 = vmatprep.subr.mxu0 0.0
  %4169 = vmatpush1.msra.mxu0 0.0
  %4170 = vmatprep.subr.mxu0 0.0
  %4171 = vmatpush1.msra.mxu0 0.0
  %4172 = vmatprep.subr.mxu0 0.0
  %4173 = vmatpush1.msra.mxu0 0.0
  %4174 = vmatprep.subr.mxu0 0.0
  %4175 = vmatpush1.msra.mxu0 0.0
  %4176 = vmatprep.subr.mxu0 0.0
  %4177 = vmatpush1.msra.mxu0 0.0
  %4178 = vmatprep.subr.mxu0 0.0
  %4179 = vmatpush1.msra.mxu0 0.0
  %4180 = vmatprep.subr.mxu0 0.0
  %4181 = vmatpush1.msra.mxu0 0.0
  %4182 = vmatprep.subr.mxu0 0.0
  %4183 = vmatpush1.msra.mxu0 0.0
  %4184 = vmatprep.subr.mxu0 0.0
  %4185 = vmatpush1.msra.mxu0 0.0
  %4186 = vmatprep.subr.mxu0 0.0
  %4187 = vmatpush1.msra.mxu0 0.0
  %4188 = vmatprep.subr.mxu0 0.0
  %4189 = vmatpush1.msra.mxu0 0.0
  %4190 = vmatprep.subr.mxu0 0.0
  %4191 = vmatpush1.msra.mxu0 0.0
  %4192 = vmatprep.subr.mxu0 0.0
  %4193 = vmatpush1.msra.mxu0 0.0
  %4194 = vmatprep.subr.mxu0 0.0
  %4195 = vmatpush1.msra.mxu0 0.0
  %4196 = vmatprep.subr.mxu0 0.0
  %4197 = vmatpush1.msra.mxu0 0.0
  %4198 = vmatprep.subr.mxu0 0.0
  %4199 = vmatpush1.msra.mxu0 0.0
  %4200 = vmatprep.subr.mxu0 0.0
  %4201 = vmatpush1.msra.mxu0 0.0
  %4202 = vmatprep.subr.mxu0 0.0
  %4203 = vmatpush1.msra.mxu0 0.0
  %4204 = vmatprep.subr.mxu0 0.0
  %4205 = vmatpush1.msra.mxu0 0.0
  %4206 = vmatprep.mubr.f32.mxu0 0.0
  %4207 = vmatmul.mubr.f32.gmra.mrb[0].mxu0 %v4047
  %v4208 = vpop.f32.mrb[0].mxu0
  %v4209 = vadd.f32 %v3888, %v4208
  %v4210 = vpop.f32.mrb[0].mxu0
  %4211 = vmatprep.mubr.f32.mxu0 0.0
  %4212 = vmatmul.mubr.f32.gmra.mrb[0].mxu0 %v4050
  %v4213 = vpop.f32.mrb[0].mxu0
  %v4214 = vadd.f32 %v3893, %v4213
  %v4215 = vpop.f32.mrb[0].mxu0
  %4216 = vmatprep.mubr.f32.mxu0 0.0
  %4217 = vmatmul.mubr.f32.gmra.mrb[0].mxu0 %v4053
  %v4218 = vpop.f32.mrb[0].mxu0
  %v4219 = vadd.f32 %v3898, %v4218
  %v4220 = vpop.f32.mrb[0].mxu0
  %4221 = vmatprep.mubr.f32.mxu0 0.0
  %4222 = vmatmul.mubr.f32.gmra.mrb[0].mxu0 %v4056
  %v4223 = vpop.f32.mrb[0].mxu0
  %v4224 = vadd.f32 %v3903, %v4223
  %v4225 = vpop.f32.mrb[0].mxu0
  %4226 = vmatprep.mubr.f32.mxu0 0.0
  %4227 = vmatmul.mubr.f32.gmra.mrb[0].mxu0 %v4059
  %v4228 = vpop.f32.mrb[0].mxu0
  %v4229 = vadd.f32 %v3908, %v4228
  %v4230 = vpop.f32.mrb[0].mxu0
  %4231 = vmatprep.mubr.f32.mxu0 0.0
  %4232 = vmatmul.mubr.f32.gmra.mrb[0].mxu0 %v4062
  %v4233 = vpop.f32.mrb[0].mxu0
  %v4234 = vadd.f32 %v3913, %v4233
  %v4235 = vpop.f32.mrb[0].mxu0
  %4236 = vmatprep.mubr.f32.mxu0 0.0
  %4237 = vmatmul.mubr.f32.gmra.mrb[0].mxu0 %v4065
  %v4238 = vpop.f32.mrb[0].mxu0
  %v4239 = vadd.f32 %v3918, %v4238
  %v4240 = vpop.f32.mrb[0].mxu0
  %4241 = vmatprep.mubr.f32.mxu0 0.0
  %4242 = vmatmul.mubr.f32.gmra.mrb[0].mxu0 %v4068
  %v4243 = vpop.f32.mrb[0].mxu0
  %v4244 = vadd.f32 %v3923, %v4243
  %v4245 = vpop.f32.mrb[0].mxu0
  %4246 = vmatprep.mubr.f32.mxu0 0.0
  %4247 = vmatmul.mubr.f32.gmra.mrb[0].mxu0 %v4071
  %v4248 = vpop.f32.mrb[0].mxu0
  %v4249 = vadd.f32 %v3928, %v4248
  %v4250 = vpop.f32.mrb[0].mxu0
  %4251 = vmatprep.mubr.f32.mxu0 0.0
  %4252 = vmatmul.mubr.f32.gmra.mrb[0].mxu0 %v4074
  %v4253 = vpop.f32.mrb[0].mxu0
  %v4254 = vadd.f32 %v3933, %v4253
  %v4255 = vpop.f32.mrb[0].mxu0
  %4256 = vmatprep.mubr.f32.mxu0 0.0
  %4257 = vmatmul.mubr.f32.gmra.mrb[0].mxu0 %v4077
  %v4258 = vpop.f32.mrb[0].mxu0
  %v4259 = vadd.f32 %v3938, %v4258
  %v4260 = vpop.f32.mrb[0].mxu0
  %4261 = vmatprep.mubr.f32.mxu0 0.0
  %4262 = vmatmul.mubr.f32.gmra.mrb[0].mxu0 %v4080
  %v4263 = vpop.f32.mrb[0].mxu0
  %v4264 = vadd.f32 %v3943, %v4263
  %v4265 = vpop.f32.mrb[0].mxu0
  %4266 = vmatprep.mubr.f32.mxu0 0.0
  %4267 = vmatmul.mubr.f32.gmra.mrb[0].mxu0 %v4083
  %v4268 = vpop.f32.mrb[0].mxu0
  %v4269 = vadd.f32 %v3948, %v4268
  %v4270 = vpop.f32.mrb[0].mxu0
  %4271 = vmatprep.mubr.f32.mxu0 0.0
  %4272 = vmatmul.mubr.f32.gmra.mrb[0].mxu0 %v4086
  %v4273 = vpop.f32.mrb[0].mxu0
  %v4274 = vadd.f32 %v3953, %v4273
  %v4275 = vpop.f32.mrb[0].mxu0
  %4276 = vmatprep.mubr.f32.mxu0 0.0
  %4277 = vmatmul.mubr.f32.gmra.mrb[0].mxu0 %v4089
  %v4278 = vpop.f32.mrb[0].mxu0
  %v4279 = vadd.f32 %v3958, %v4278
  %v4280 = vpop.f32.mrb[0].mxu0
  %4281 = vmatprep.mubr.f32.mxu0 0.0
  %4282 = vmatmul.mubr.f32.gmra.mrb[0].mxu0 %v4092
  %v4283 = vpop.f32.mrb[0].mxu0
  %v4284 = vadd.f32 %v3963, %v4283
  %v4285 = vpop.f32.mrb[0].mxu0
  %4286 = vmatprep.mubr.f32.mxu0 0.0
  %4287 = vmatmul.mubr.f32.gmra.mrb[0].mxu0 %v4095
  %v4288 = vpop.f32.mrb[0].mxu0
  %v4289 = vadd.f32 %v3968, %v4288
  %v4290 = vpop.f32.mrb[0].mxu0
  %4291 = vmatprep.mubr.f32.mxu0 0.0
  %4292 = vmatmul.mubr.f32.gmra.mrb[0].mxu0 %v4098
  %v4293 = vpop.f32.mrb[0].mxu0
  %v4294 = vadd.f32 %v3973, %v4293
  %v4295 = vpop.f32.mrb[0].mxu0
  %4296 = vmatprep.mubr.f32.mxu0 0.0
  %4297 = vmatmul.mubr.f32.gmra.mrb[0].mxu0 %v4101
  %v4298 = vpop.f32.mrb[0].mxu0
  %v4299 = vadd.f32 %v3978, %v4298
  %v4300 = vpop.f32.mrb[0].mxu0
  %4301 = vmatprep.mubr.f32.mxu0 0.0
  %4302 = vmatmul.mubr.f32.gmra.mrb[0].mxu0 %v4104
  %v4303 = vpop.f32.mrb[0].mxu0
  %v4304 = vadd.f32 %v3983, %v4303
  %v4305 = vpop.f32.mrb[0].mxu0
  %4306 = vmatprep.mubr.f32.mxu0 0.0
  %4307 = vmatmul.mubr.f32.gmra.mrb[0].mxu0 %v4107
  %v4308 = vpop.f32.mrb[0].mxu0
  %v4309 = vadd.f32 %v3988, %v4308
  %v4310 = vpop.f32.mrb[0].mxu0
  %4311 = vmatprep.mubr.f32.mxu0 0.0
  %4312 = vmatmul.mubr.f32.gmra.mrb[0].mxu0 %v4110
  %v4313 = vpop.f32.mrb[0].mxu0
  %v4314 = vadd.f32 %v3993, %v4313
  %v4315 = vpop.f32.mrb[0].mxu0
  %4316 = vmatprep.mubr.f32.mxu0 0.0
  %4317 = vmatmul.mubr.f32.gmra.mrb[0].mxu0 %v4113
  %v4318 = vpop.f32.mrb[0].mxu0
  %v4319 = vadd.f32 %v3998, %v4318
  %v4320 = vpop.f32.mrb[0].mxu0
  %4321 = vmatprep.mubr.f32.mxu0 0.0
  %4322 = vmatmul.mubr.f32.gmra.mrb[0].mxu0 %v4116
  %v4323 = vpop.f32.mrb[0].mxu0
  %v4324 = vadd.f32 %v4003, %v4323
  %v4325 = vpop.f32.mrb[0].mxu0
  %4326 = vmatprep.mubr.f32.mxu0 0.0
  %4327 = vmatmul.mubr.f32.gmra.mrb[0].mxu0 %v4119
  %v4328 = vpop.f32.mrb[0].mxu0
  %v4329 = vadd.f32 %v4008, %v4328
  %v4330 = vpop.f32.mrb[0].mxu0
  %4331 = vmatprep.mubr.f32.mxu0 0.0
  %4332 = vmatmul.mubr.f32.gmra.mrb[0].mxu0 %v4122
  %v4333 = vpop.f32.mrb[0].mxu0
  %v4334 = vadd.f32 %v4013, %v4333
  %v4335 = vpop.f32.mrb[0].mxu0
  %4336 = vmatprep.mubr.f32.mxu0 0.0
  %4337 = vmatmul.mubr.f32.gmra.mrb[0].mxu0 %v4125
  %v4338 = vpop.f32.mrb[0].mxu0
  %v4339 = vadd.f32 %v4018, %v4338
  %v4340 = vpop.f32.mrb[0].mxu0
  %4341 = vmatprep.mubr.f32.mxu0 0.0
  %4342 = vmatmul.mubr.f32.gmra.mrb[0].mxu0 %v4128
  %v4343 = vpop.f32.mrb[0].mxu0
  %v4344 = vadd.f32 %v4023, %v4343
  %v4345 = vpop.f32.mrb[0].mxu0
  %4346 = vmatprep.mubr.f32.mxu0 0.0
  %4347 = vmatmul.mubr.f32.gmra.mrb[0].mxu0 %v4131
  %v4348 = vpop.f32.mrb[0].mxu0
  %v4349 = vadd.f32 %v4028, %v4348
  %v4350 = vpop.f32.mrb[0].mxu0
  %4351 = vmatprep.mubr.f32.mxu0 0.0
  %4352 = vmatmul.mubr.f32.gmra.mrb[0].mxu0 %v4134
  %v4353 = vpop.f32.mrb[0].mxu0
  %v4354 = vadd.f32 %v4033, %v4353
  %v4355 = vpop.f32.mrb[0].mxu0
  %4356 = vmatprep.mubr.f32.mxu0 0.0
  %4357 = vmatmul.mubr.f32.gmra.mrb[0].mxu0 %v4137
  %v4358 = vpop.f32.mrb[0].mxu0
  %v4359 = vadd.f32 %v4038, %v4358
  %v4360 = vpop.f32.mrb[0].mxu0
  %4361 = vmatprep.mubr.f32.mxu0 0.0
  %4362 = vmatmul.mubr.f32.gmra.mrb[0].mxu0 %v4140
  %v4363 = vpop.f32.mrb[0].mxu0
  %v4364 = vadd.f32 %v4043, %v4363
  %v4365 = vpop.f32.mrb[0].mxu0
  %4366 = vdwg.mxu0
  %s4367 = scalar_lea.vmem %s39, 64
  %v4368 = vld [vmem:[%s4367] sm:$0xff]
  %v4369 = vld [vmem:[%s4367 + $0x8] sm:$0xff]
  %v4370 = vld [vmem:[%s4367 + $0x10] sm:$0xff]
  %v4371 = vld [vmem:[%s4367 + $0x18] sm:$0xff]
  %v4373 = vsel %vm359, %v3512, 0
  %v4376 = vsel %vm359, %v3513, 0
  %v4379 = vsel %vm359, %v3514, 0
  %v4382 = vsel %vm359, %v3515, 0
  %v4385 = vsel %vm359, %v3516, 0
  %v4388 = vsel %vm359, %v3517, 0
  %v4391 = vsel %vm359, %v3518, 0
  %v4394 = vsel %vm359, %v3519, 0
  %v4397 = vsel %vm359, %v3520, 0
  %v4400 = vsel %vm359, %v3521, 0
  %v4403 = vsel %vm359, %v3522, 0
  %v4406 = vsel %vm359, %v3523, 0
  %v4409 = vsel %vm359, %v3524, 0
  %v4412 = vsel %vm359, %v3525, 0
  %v4415 = vsel %vm359, %v3526, 0
  %v4418 = vsel %vm359, %v3527, 0
  %v4421 = vsel %vm359, %v3528, 0
  %v4424 = vsel %vm359, %v3529, 0
  %v4427 = vsel %vm359, %v3530, 0
  %v4430 = vsel %vm359, %v3531, 0
  %v4433 = vsel %vm359, %v3532, 0
  %v4436 = vsel %vm359, %v3533, 0
  %v4439 = vsel %vm359, %v3534, 0
  %v4442 = vsel %vm359, %v3535, 0
  %v4445 = vsel %vm359, %v3536, 0
  %v4448 = vsel %vm359, %v3537, 0
  %v4451 = vsel %vm359, %v3538, 0
  %v4454 = vsel %vm359, %v3539, 0
  %v4457 = vsel %vm359, %v3540, 0
  %v4460 = vsel %vm359, %v3541, 0
  %v4463 = vsel %vm359, %v3542, 0
  %v4466 = vsel %vm359, %v3543, 0
  %4468 = vmatprep.subr.mxu0 0.0
  %4469 = vmatpush1.msra.mxu0 %v4368
  %4470 = vmatprep.subr.mxu0 0.0
  %4471 = vmatpush1.msra.mxu0 %v4369
  %4472 = vmatprep.subr.mxu0 0.0
  %4473 = vmatpush1.msra.mxu0 %v4370
  %4474 = vmatprep.subr.mxu0 0.0
  %4475 = vmatpush1.msra.mxu0 %v4371
  %4476 = vmatprep.subr.mxu0 0.0
  %4477 = vmatpush1.msra.mxu0 0.0
  %4478 = vmatprep.subr.mxu0 0.0
  %4479 = vmatpush1.msra.mxu0 0.0
  %4480 = vmatprep.subr.mxu0 0.0
  %4481 = vmatpush1.msra.mxu0 0.0
  %4482 = vmatprep.subr.mxu0 0.0
  %4483 = vmatpush1.msra.mxu0 0.0
  %4484 = vmatprep.subr.mxu0 0.0
  %4485 = vmatpush1.msra.mxu0 0.0
  %4486 = vmatprep.subr.mxu0 0.0
  %4487 = vmatpush1.msra.mxu0 0.0
  %4488 = vmatprep.subr.mxu0 0.0
  %4489 = vmatpush1.msra.mxu0 0.0
  %4490 = vmatprep.subr.mxu0 0.0
  %4491 = vmatpush1.msra.mxu0 0.0
  %4492 = vmatprep.subr.mxu0 0.0
  %4493 = vmatpush1.msra.mxu0 0.0
  %4494 = vmatprep.subr.mxu0 0.0
  %4495 = vmatpush1.msra.mxu0 0.0
  %4496 = vmatprep.subr.mxu0 0.0
  %4497 = vmatpush1.msra.mxu0 0.0
  %4498 = vmatprep.subr.mxu0 0.0
  %4499 = vmatpush1.msra.mxu0 0.0
  %4500 = vmatprep.subr.mxu0 0.0
  %4501 = vmatpush1.msra.mxu0 0.0
  %4502 = vmatprep.subr.mxu0 0.0
  %4503 = vmatpush1.msra.mxu0 0.0
  %4504 = vmatprep.subr.mxu0 0.0
  %4505 = vmatpush1.msra.mxu0 0.0
  %4506 = vmatprep.subr.mxu0 0.0
  %4507 = vmatpush1.msra.mxu0 0.0
  %4508 = vmatprep.subr.mxu0 0.0
  %4509 = vmatpush1.msra.mxu0 0.0
  %4510 = vmatprep.subr.mxu0 0.0
  %4511 = vmatpush1.msra.mxu0 0.0
  %4512 = vmatprep.subr.mxu0 0.0
  %4513 = vmatpush1.msra.mxu0 0.0
  %4514 = vmatprep.subr.mxu0 0.0
  %4515 = vmatpush1.msra.mxu0 0.0
  %4516 = vmatprep.subr.mxu0 0.0
  %4517 = vmatpush1.msra.mxu0 0.0
  %4518 = vmatprep.subr.mxu0 0.0
  %4519 = vmatpush1.msra.mxu0 0.0
  %4520 = vmatprep.subr.mxu0 0.0
  %4521 = vmatpush1.msra.mxu0 0.0
  %4522 = vmatprep.subr.mxu0 0.0
  %4523 = vmatpush1.msra.mxu0 0.0
  %4524 = vmatprep.subr.mxu0 0.0
  %4525 = vmatpush1.msra.mxu0 0.0
  %4526 = vmatprep.subr.mxu0 0.0
  %4527 = vmatpush1.msra.mxu0 0.0
  %4528 = vmatprep.subr.mxu0 0.0
  %4529 = vmatpush1.msra.mxu0 0.0
  %4530 = vmatprep.subr.mxu0 0.0
  %4531 = vmatpush1.msra.mxu0 0.0
  %4532 = vmatprep.mubr.f32.mxu0 0.0
  %4533 = vmatmul.mubr.f32.gmra.mrb[0].mxu0 %v4373
  %v4534 = vpop.f32.mrb[0].mxu0
  %v4535 = vadd.f32 0.0, %v4534
  %v4536 = vpop.f32.mrb[0].mxu0
  %4537 = vmatprep.mubr.f32.mxu0 0.0
  %4538 = vmatmul.mubr.f32.gmra.mrb[0].mxu0 %v4376
  %v4539 = vpop.f32.mrb[0].mxu0
  %v4540 = vadd.f32 0.0, %v4539
  %v4541 = vpop.f32.mrb[0].mxu0
  %4542 = vmatprep.mubr.f32.mxu0 0.0
  %4543 = vmatmul.mubr.f32.gmra.mrb[0].mxu0 %v4379
  %v4544 = vpop.f32.mrb[0].mxu0
  %v4545 = vadd.f32 0.0, %v4544
  %v4546 = vpop.f32.mrb[0].mxu0
  %4547 = vmatprep.mubr.f32.mxu0 0.0
  %4548 = vmatmul.mubr.f32.gmra.mrb[0].mxu0 %v4382
  %v4549 = vpop.f32.mrb[0].mxu0
  %v4550 = vadd.f32 0.0, %v4549
  %v4551 = vpop.f32.mrb[0].mxu0
  %4552 = vmatprep.mubr.f32.mxu0 0.0
  %4553 = vmatmul.mubr.f32.gmra.mrb[0].mxu0 %v4385
  %v4554 = vpop.f32.mrb[0].mxu0
  %v4555 = vadd.f32 0.0, %v4554
  %v4556 = vpop.f32.mrb[0].mxu0
  %4557 = vmatprep.mubr.f32.mxu0 0.0
  %4558 = vmatmul.mubr.f32.gmra.mrb[0].mxu0 %v4388
  %v4559 = vpop.f32.mrb[0].mxu0
  %v4560 = vadd.f32 0.0, %v4559
  %v4561 = vpop.f32.mrb[0].mxu0
  %4562 = vmatprep.mubr.f32.mxu0 0.0
  %4563 = vmatmul.mubr.f32.gmra.mrb[0].mxu0 %v4391
  %v4564 = vpop.f32.mrb[0].mxu0
  %v4565 = vadd.f32 0.0, %v4564
  %v4566 = vpop.f32.mrb[0].mxu0
  %4567 = vmatprep.mubr.f32.mxu0 0.0
  %4568 = vmatmul.mubr.f32.gmra.mrb[0].mxu0 %v4394
  %v4569 = vpop.f32.mrb[0].mxu0
  %v4570 = vadd.f32 0.0, %v4569
  %v4571 = vpop.f32.mrb[0].mxu0
  %4572 = vmatprep.mubr.f32.mxu0 0.0
  %4573 = vmatmul.mubr.f32.gmra.mrb[0].mxu0 %v4397
  %v4574 = vpop.f32.mrb[0].mxu0
  %v4575 = vadd.f32 0.0, %v4574
  %v4576 = vpop.f32.mrb[0].mxu0
  %4577 = vmatprep.mubr.f32.mxu0 0.0
  %4578 = vmatmul.mubr.f32.gmra.mrb[0].mxu0 %v4400
  %v4579 = vpop.f32.mrb[0].mxu0
  %v4580 = vadd.f32 0.0, %v4579
  %v4581 = vpop.f32.mrb[0].mxu0
  %4582 = vmatprep.mubr.f32.mxu0 0.0
  %4583 = vmatmul.mubr.f32.gmra.mrb[0].mxu0 %v4403
  %v4584 = vpop.f32.mrb[0].mxu0
  %v4585 = vadd.f32 0.0, %v4584
  %v4586 = vpop.f32.mrb[0].mxu0
  %4587 = vmatprep.mubr.f32.mxu0 0.0
  %4588 = vmatmul.mubr.f32.gmra.mrb[0].mxu0 %v4406
  %v4589 = vpop.f32.mrb[0].mxu0
  %v4590 = vadd.f32 0.0, %v4589
  %v4591 = vpop.f32.mrb[0].mxu0
  %4592 = vmatprep.mubr.f32.mxu0 0.0
  %4593 = vmatmul.mubr.f32.gmra.mrb[0].mxu0 %v4409
  %v4594 = vpop.f32.mrb[0].mxu0
  %v4595 = vadd.f32 0.0, %v4594
  %v4596 = vpop.f32.mrb[0].mxu0
  %4597 = vmatprep.mubr.f32.mxu0 0.0
  %4598 = vmatmul.mubr.f32.gmra.mrb[0].mxu0 %v4412
  %v4599 = vpop.f32.mrb[0].mxu0
  %v4600 = vadd.f32 0.0, %v4599
  %v4601 = vpop.f32.mrb[0].mxu0
  %4602 = vmatprep.mubr.f32.mxu0 0.0
  %4603 = vmatmul.mubr.f32.gmra.mrb[0].mxu0 %v4415
  %v4604 = vpop.f32.mrb[0].mxu0
  %v4605 = vadd.f32 0.0, %v4604
  %v4606 = vpop.f32.mrb[0].mxu0
  %4607 = vmatprep.mubr.f32.mxu0 0.0
  %4608 = vmatmul.mubr.f32.gmra.mrb[0].mxu0 %v4418
  %v4609 = vpop.f32.mrb[0].mxu0
  %v4610 = vadd.f32 0.0, %v4609
  %v4611 = vpop.f32.mrb[0].mxu0
  %4612 = vmatprep.mubr.f32.mxu0 0.0
  %4613 = vmatmul.mubr.f32.gmra.mrb[0].mxu0 %v4421
  %v4614 = vpop.f32.mrb[0].mxu0
  %v4615 = vadd.f32 0.0, %v4614
  %v4616 = vpop.f32.mrb[0].mxu0
  %4617 = vmatprep.mubr.f32.mxu0 0.0
  %4618 = vmatmul.mubr.f32.gmra.mrb[0].mxu0 %v4424
  %v4619 = vpop.f32.mrb[0].mxu0
  %v4620 = vadd.f32 0.0, %v4619
  %v4621 = vpop.f32.mrb[0].mxu0
  %4622 = vmatprep.mubr.f32.mxu0 0.0
  %4623 = vmatmul.mubr.f32.gmra.mrb[0].mxu0 %v4427
  %v4624 = vpop.f32.mrb[0].mxu0
  %v4625 = vadd.f32 0.0, %v4624
  %v4626 = vpop.f32.mrb[0].mxu0
  %4627 = vmatprep.mubr.f32.mxu0 0.0
  %4628 = vmatmul.mubr.f32.gmra.mrb[0].mxu0 %v4430
  %v4629 = vpop.f32.mrb[0].mxu0
  %v4630 = vadd.f32 0.0, %v4629
  %v4631 = vpop.f32.mrb[0].mxu0
  %4632 = vmatprep.mubr.f32.mxu0 0.0
  %4633 = vmatmul.mubr.f32.gmra.mrb[0].mxu0 %v4433
  %v4634 = vpop.f32.mrb[0].mxu0
  %v4635 = vadd.f32 0.0, %v4634
  %v4636 = vpop.f32.mrb[0].mxu0
  %4637 = vmatprep.mubr.f32.mxu0 0.0
  %4638 = vmatmul.mubr.f32.gmra.mrb[0].mxu0 %v4436
  %v4639 = vpop.f32.mrb[0].mxu0
  %v4640 = vadd.f32 0.0, %v4639
  %v4641 = vpop.f32.mrb[0].mxu0
  %4642 = vmatprep.mubr.f32.mxu0 0.0
  %4643 = vmatmul.mubr.f32.gmra.mrb[0].mxu0 %v4439
  %v4644 = vpop.f32.mrb[0].mxu0
  %v4645 = vadd.f32 0.0, %v4644
  %v4646 = vpop.f32.mrb[0].mxu0
  %4647 = vmatprep.mubr.f32.mxu0 0.0
  %4648 = vmatmul.mubr.f32.gmra.mrb[0].mxu0 %v4442
  %v4649 = vpop.f32.mrb[0].mxu0
  %v4650 = vadd.f32 0.0, %v4649
  %v4651 = vpop.f32.mrb[0].mxu0
  %4652 = vmatprep.mubr.f32.mxu0 0.0
  %4653 = vmatmul.mubr.f32.gmra.mrb[0].mxu0 %v4445
  %v4654 = vpop.f32.mrb[0].mxu0
  %v4655 = vadd.f32 0.0, %v4654
  %v4656 = vpop.f32.mrb[0].mxu0
  %4657 = vmatprep.mubr.f32.mxu0 0.0
  %4658 = vmatmul.mubr.f32.gmra.mrb[0].mxu0 %v4448
  %v4659 = vpop.f32.mrb[0].mxu0
  %v4660 = vadd.f32 0.0, %v4659
  %v4661 = vpop.f32.mrb[0].mxu0
  %4662 = vmatprep.mubr.f32.mxu0 0.0
  %4663 = vmatmul.mubr.f32.gmra.mrb[0].mxu0 %v4451
  %v4664 = vpop.f32.mrb[0].mxu0
  %v4665 = vadd.f32 0.0, %v4664
  %v4666 = vpop.f32.mrb[0].mxu0
  %4667 = vmatprep.mubr.f32.mxu0 0.0
  %4668 = vmatmul.mubr.f32.gmra.mrb[0].mxu0 %v4454
  %v4669 = vpop.f32.mrb[0].mxu0
  %v4670 = vadd.f32 0.0, %v4669
  %v4671 = vpop.f32.mrb[0].mxu0
  %4672 = vmatprep.mubr.f32.mxu0 0.0
  %4673 = vmatmul.mubr.f32.gmra.mrb[0].mxu0 %v4457
  %v4674 = vpop.f32.mrb[0].mxu0
  %v4675 = vadd.f32 0.0, %v4674
  %v4676 = vpop.f32.mrb[0].mxu0
  %4677 = vmatprep.mubr.f32.mxu0 0.0
  %4678 = vmatmul.mubr.f32.gmra.mrb[0].mxu0 %v4460
  %v4679 = vpop.f32.mrb[0].mxu0
  %v4680 = vadd.f32 0.0, %v4679
  %v4681 = vpop.f32.mrb[0].mxu0
  %4682 = vmatprep.mubr.f32.mxu0 0.0
  %4683 = vmatmul.mubr.f32.gmra.mrb[0].mxu0 %v4463
  %v4684 = vpop.f32.mrb[0].mxu0
  %v4685 = vadd.f32 0.0, %v4684
  %v4686 = vpop.f32.mrb[0].mxu0
  %4687 = vmatprep.mubr.f32.mxu0 0.0
  %4688 = vmatmul.mubr.f32.gmra.mrb[0].mxu0 %v4466
  %v4689 = vpop.f32.mrb[0].mxu0
  %v4690 = vadd.f32 0.0, %v4689
  %v4691 = vpop.f32.mrb[0].mxu0
  %4692 = vdwg.mxu0
  %v4693 = vadd.f32 %v4209, %v4535
  %v4694 = vadd.f32 %v4214, %v4540
  %v4695 = vadd.f32 %v4219, %v4545
  %v4696 = vadd.f32 %v4224, %v4550
  %v4697 = vadd.f32 %v4229, %v4555
  %v4698 = vadd.f32 %v4234, %v4560
  %v4699 = vadd.f32 %v4239, %v4565
  %v4700 = vadd.f32 %v4244, %v4570
  %v4701 = vadd.f32 %v4249, %v4575
  %v4702 = vadd.f32 %v4254, %v4580
  %v4703 = vadd.f32 %v4259, %v4585
  %v4704 = vadd.f32 %v4264, %v4590
  %v4705 = vadd.f32 %v4269, %v4595
  %v4706 = vadd.f32 %v4274, %v4600
  %v4707 = vadd.f32 %v4279, %v4605
  %v4708 = vadd.f32 %v4284, %v4610
  %v4709 = vadd.f32 %v4289, %v4615
  %v4710 = vadd.f32 %v4294, %v4620
  %v4711 = vadd.f32 %v4299, %v4625
  %v4712 = vadd.f32 %v4304, %v4630
  %v4713 = vadd.f32 %v4309, %v4635
  %v4714 = vadd.f32 %v4314, %v4640
  %v4715 = vadd.f32 %v4319, %v4645
  %v4716 = vadd.f32 %v4324, %v4650
  %v4717 = vadd.f32 %v4329, %v4655
  %v4718 = vadd.f32 %v4334, %v4660
  %v4719 = vadd.f32 %v4339, %v4665
  %v4720 = vadd.f32 %v4344, %v4670
  %v4721 = vadd.f32 %v4349, %v4675
  %v4722 = vadd.f32 %v4354, %v4680
  %v4723 = vadd.f32 %v4359, %v4685
  %v4724 = vadd.f32 %v4364, %v4690
  %s4725 = scalar_lea.vmem %s39, 96
  %v4726 = vld [vmem:[%s4725] sm:$0xff]
  %v4727 = vld [vmem:[%s4725 + $0x8] sm:$0xff]
  %v4728 = vld [vmem:[%s4725 + $0x10] sm:$0xff]
  %v4729 = vld [vmem:[%s4725 + $0x18] sm:$0xff]
  %v4731 = vsel %vm359, %v3557, 0
  %v4734 = vsel %vm359, %v3558, 0
  %v4737 = vsel %vm359, %v3559, 0
  %v4740 = vsel %vm359, %v3560, 0
  %v4743 = vsel %vm359, %v3561, 0
  %v4746 = vsel %vm359, %v3562, 0
  %v4749 = vsel %vm359, %v3563, 0
  %v4752 = vsel %vm359, %v3564, 0
  %v4755 = vsel %vm359, %v3565, 0
  %v4758 = vsel %vm359, %v3566, 0
  %v4761 = vsel %vm359, %v3567, 0
  %v4764 = vsel %vm359, %v3568, 0
  %v4767 = vsel %vm359, %v3569, 0
  %v4770 = vsel %vm359, %v3570, 0
  %v4773 = vsel %vm359, %v3571, 0
  %v4776 = vsel %vm359, %v3572, 0
  %v4779 = vsel %vm359, %v3573, 0
  %v4782 = vsel %vm359, %v3574, 0
  %v4785 = vsel %vm359, %v3575, 0
  %v4788 = vsel %vm359, %v3576, 0
  %v4791 = vsel %vm359, %v3577, 0
  %v4794 = vsel %vm359, %v3578, 0
  %v4797 = vsel %vm359, %v3579, 0
  %v4800 = vsel %vm359, %v3580, 0
  %v4803 = vsel %vm359, %v3581, 0
  %v4806 = vsel %vm359, %v3582, 0
  %v4809 = vsel %vm359, %v3583, 0
  %v4812 = vsel %vm359, %v3584, 0
  %v4815 = vsel %vm359, %v3585, 0
  %v4818 = vsel %vm359, %v3586, 0
  %v4821 = vsel %vm359, %v3587, 0
  %v4824 = vsel %vm359, %v3588, 0
  %4826 = vmatprep.subr.mxu0 0.0
  %4827 = vmatpush1.msra.mxu0 %v4726
  %4828 = vmatprep.subr.mxu0 0.0
  %4829 = vmatpush1.msra.mxu0 %v4727
  %4830 = vmatprep.subr.mxu0 0.0
  %4831 = vmatpush1.msra.mxu0 %v4728
  %4832 = vmatprep.subr.mxu0 0.0
  %4833 = vmatpush1.msra.mxu0 %v4729
  %4834 = vmatprep.subr.mxu0 0.0
  %4835 = vmatpush1.msra.mxu0 0.0
  %4836 = vmatprep.subr.mxu0 0.0
  %4837 = vmatpush1.msra.mxu0 0.0
  %4838 = vmatprep.subr.mxu0 0.0
  %4839 = vmatpush1.msra.mxu0 0.0
  %4840 = vmatprep.subr.mxu0 0.0
  %4841 = vmatpush1.msra.mxu0 0.0
  %4842 = vmatprep.subr.mxu0 0.0
  %4843 = vmatpush1.msra.mxu0 0.0
  %4844 = vmatprep.subr.mxu0 0.0
  %4845 = vmatpush1.msra.mxu0 0.0
  %4846 = vmatprep.subr.mxu0 0.0
  %4847 = vmatpush1.msra.mxu0 0.0
  %4848 = vmatprep.subr.mxu0 0.0
  %4849 = vmatpush1.msra.mxu0 0.0
  %4850 = vmatprep.subr.mxu0 0.0
  %4851 = vmatpush1.msra.mxu0 0.0
  %4852 = vmatprep.subr.mxu0 0.0
  %4853 = vmatpush1.msra.mxu0 0.0
  %4854 = vmatprep.subr.mxu0 0.0
  %4855 = vmatpush1.msra.mxu0 0.0
  %4856 = vmatprep.subr.mxu0 0.0
  %4857 = vmatpush1.msra.mxu0 0.0
  %4858 = vmatprep.subr.mxu0 0.0
  %4859 = vmatpush1.msra.mxu0 0.0
  %4860 = vmatprep.subr.mxu0 0.0
  %4861 = vmatpush1.msra.mxu0 0.0
  %4862 = vmatprep.subr.mxu0 0.0
  %4863 = vmatpush1.msra.mxu0 0.0
  %4864 = vmatprep.subr.mxu0 0.0
  %4865 = vmatpush1.msra.mxu0 0.0
  %4866 = vmatprep.subr.mxu0 0.0
  %4867 = vmatpush1.msra.mxu0 0.0
  %4868 = vmatprep.subr.mxu0 0.0
  %4869 = vmatpush1.msra.mxu0 0.0
  %4870 = vmatprep.subr.mxu0 0.0
  %4871 = vmatpush1.msra.mxu0 0.0
  %4872 = vmatprep.subr.mxu0 0.0
  %4873 = vmatpush1.msra.mxu0 0.0
  %4874 = vmatprep.subr.mxu0 0.0
  %4875 = vmatpush1.msra.mxu0 0.0
  %4876 = vmatprep.subr.mxu0 0.0
  %4877 = vmatpush1.msra.mxu0 0.0
  %4878 = vmatprep.subr.mxu0 0.0
  %4879 = vmatpush1.msra.mxu0 0.0
  %4880 = vmatprep.subr.mxu0 0.0
  %4881 = vmatpush1.msra.mxu0 0.0
  %4882 = vmatprep.subr.mxu0 0.0
  %4883 = vmatpush1.msra.mxu0 0.0
  %4884 = vmatprep.subr.mxu0 0.0
  %4885 = vmatpush1.msra.mxu0 0.0
  %4886 = vmatprep.subr.mxu0 0.0
  %4887 = vmatpush1.msra.mxu0 0.0
  %4888 = vmatprep.subr.mxu0 0.0
  %4889 = vmatpush1.msra.mxu0 0.0
  %4890 = vmatprep.mubr.f32.mxu0 0.0
  %4891 = vmatmul.mubr.f32.gmra.mrb[0].mxu0 %v4731
  %v4892 = vpop.f32.mrb[0].mxu0
  %v4893 = vadd.f32 0.0, %v4892
  %v4894 = vpop.f32.mrb[0].mxu0
  %4895 = vmatprep.mubr.f32.mxu0 0.0
  %4896 = vmatmul.mubr.f32.gmra.mrb[0].mxu0 %v4734
  %v4897 = vpop.f32.mrb[0].mxu0
  %v4898 = vadd.f32 0.0, %v4897
  %v4899 = vpop.f32.mrb[0].mxu0
  %4900 = vmatprep.mubr.f32.mxu0 0.0
  %4901 = vmatmul.mubr.f32.gmra.mrb[0].mxu0 %v4737
  %v4902 = vpop.f32.mrb[0].mxu0
  %v4903 = vadd.f32 0.0, %v4902
  %v4904 = vpop.f32.mrb[0].mxu0
  %4905 = vmatprep.mubr.f32.mxu0 0.0
  %4906 = vmatmul.mubr.f32.gmra.mrb[0].mxu0 %v4740
  %v4907 = vpop.f32.mrb[0].mxu0
  %v4908 = vadd.f32 0.0, %v4907
  %v4909 = vpop.f32.mrb[0].mxu0
  %4910 = vmatprep.mubr.f32.mxu0 0.0
  %4911 = vmatmul.mubr.f32.gmra.mrb[0].mxu0 %v4743
  %v4912 = vpop.f32.mrb[0].mxu0
  %v4913 = vadd.f32 0.0, %v4912
  %v4914 = vpop.f32.mrb[0].mxu0
  %4915 = vmatprep.mubr.f32.mxu0 0.0
  %4916 = vmatmul.mubr.f32.gmra.mrb[0].mxu0 %v4746
  %v4917 = vpop.f32.mrb[0].mxu0
  %v4918 = vadd.f32 0.0, %v4917
  %v4919 = vpop.f32.mrb[0].mxu0
  %4920 = vmatprep.mubr.f32.mxu0 0.0
  %4921 = vmatmul.mubr.f32.gmra.mrb[0].mxu0 %v4749
  %v4922 = vpop.f32.mrb[0].mxu0
  %v4923 = vadd.f32 0.0, %v4922
  %v4924 = vpop.f32.mrb[0].mxu0
  %4925 = vmatprep.mubr.f32.mxu0 0.0
  %4926 = vmatmul.mubr.f32.gmra.mrb[0].mxu0 %v4752
  %v4927 = vpop.f32.mrb[0].mxu0
  %v4928 = vadd.f32 0.0, %v4927
  %v4929 = vpop.f32.mrb[0].mxu0
  %4930 = vmatprep.mubr.f32.mxu0 0.0
  %4931 = vmatmul.mubr.f32.gmra.mrb[0].mxu0 %v4755
  %v4932 = vpop.f32.mrb[0].mxu0
  %v4933 = vadd.f32 0.0, %v4932
  %v4934 = vpop.f32.mrb[0].mxu0
  %4935 = vmatprep.mubr.f32.mxu0 0.0
  %4936 = vmatmul.mubr.f32.gmra.mrb[0].mxu0 %v4758
  %v4937 = vpop.f32.mrb[0].mxu0
  %v4938 = vadd.f32 0.0, %v4937
  %v4939 = vpop.f32.mrb[0].mxu0
  %4940 = vmatprep.mubr.f32.mxu0 0.0
  %4941 = vmatmul.mubr.f32.gmra.mrb[0].mxu0 %v4761
  %v4942 = vpop.f32.mrb[0].mxu0
  %v4943 = vadd.f32 0.0, %v4942
  %v4944 = vpop.f32.mrb[0].mxu0
  %4945 = vmatprep.mubr.f32.mxu0 0.0
  %4946 = vmatmul.mubr.f32.gmra.mrb[0].mxu0 %v4764
  %v4947 = vpop.f32.mrb[0].mxu0
  %v4948 = vadd.f32 0.0, %v4947
  %v4949 = vpop.f32.mrb[0].mxu0
  %4950 = vmatprep.mubr.f32.mxu0 0.0
  %4951 = vmatmul.mubr.f32.gmra.mrb[0].mxu0 %v4767
  %v4952 = vpop.f32.mrb[0].mxu0
  %v4953 = vadd.f32 0.0, %v4952
  %v4954 = vpop.f32.mrb[0].mxu0
  %4955 = vmatprep.mubr.f32.mxu0 0.0
  %4956 = vmatmul.mubr.f32.gmra.mrb[0].mxu0 %v4770
  %v4957 = vpop.f32.mrb[0].mxu0
  %v4958 = vadd.f32 0.0, %v4957
  %v4959 = vpop.f32.mrb[0].mxu0
  %4960 = vmatprep.mubr.f32.mxu0 0.0
  %4961 = vmatmul.mubr.f32.gmra.mrb[0].mxu0 %v4773
  %v4962 = vpop.f32.mrb[0].mxu0
  %v4963 = vadd.f32 0.0, %v4962
  %v4964 = vpop.f32.mrb[0].mxu0
  %4965 = vmatprep.mubr.f32.mxu0 0.0
  %4966 = vmatmul.mubr.f32.gmra.mrb[0].mxu0 %v4776
  %v4967 = vpop.f32.mrb[0].mxu0
  %v4968 = vadd.f32 0.0, %v4967
  %v4969 = vpop.f32.mrb[0].mxu0
  %4970 = vmatprep.mubr.f32.mxu0 0.0
  %4971 = vmatmul.mubr.f32.gmra.mrb[0].mxu0 %v4779
  %v4972 = vpop.f32.mrb[0].mxu0
  %v4973 = vadd.f32 0.0, %v4972
  %v4974 = vpop.f32.mrb[0].mxu0
  %4975 = vmatprep.mubr.f32.mxu0 0.0
  %4976 = vmatmul.mubr.f32.gmra.mrb[0].mxu0 %v4782
  %v4977 = vpop.f32.mrb[0].mxu0
  %v4978 = vadd.f32 0.0, %v4977
  %v4979 = vpop.f32.mrb[0].mxu0
  %4980 = vmatprep.mubr.f32.mxu0 0.0
  %4981 = vmatmul.mubr.f32.gmra.mrb[0].mxu0 %v4785
  %v4982 = vpop.f32.mrb[0].mxu0
  %v4983 = vadd.f32 0.0, %v4982
  %v4984 = vpop.f32.mrb[0].mxu0
  %4985 = vmatprep.mubr.f32.mxu0 0.0
  %4986 = vmatmul.mubr.f32.gmra.mrb[0].mxu0 %v4788
  %v4987 = vpop.f32.mrb[0].mxu0
  %v4988 = vadd.f32 0.0, %v4987
  %v4989 = vpop.f32.mrb[0].mxu0
  %4990 = vmatprep.mubr.f32.mxu0 0.0
  %4991 = vmatmul.mubr.f32.gmra.mrb[0].mxu0 %v4791
  %v4992 = vpop.f32.mrb[0].mxu0
  %v4993 = vadd.f32 0.0, %v4992
  %v4994 = vpop.f32.mrb[0].mxu0
  %4995 = vmatprep.mubr.f32.mxu0 0.0
  %4996 = vmatmul.mubr.f32.gmra.mrb[0].mxu0 %v4794
  %v4997 = vpop.f32.mrb[0].mxu0
  %v4998 = vadd.f32 0.0, %v4997
  %v4999 = vpop.f32.mrb[0].mxu0
  %5000 = vmatprep.mubr.f32.mxu0 0.0
  %5001 = vmatmul.mubr.f32.gmra.mrb[0].mxu0 %v4797
  %v5002 = vpop.f32.mrb[0].mxu0
  %v5003 = vadd.f32 0.0, %v5002
  %v5004 = vpop.f32.mrb[0].mxu0
  %5005 = vmatprep.mubr.f32.mxu0 0.0
  %5006 = vmatmul.mubr.f32.gmra.mrb[0].mxu0 %v4800
  %v5007 = vpop.f32.mrb[0].mxu0
  %v5008 = vadd.f32 0.0, %v5007
  %v5009 = vpop.f32.mrb[0].mxu0
  %5010 = vmatprep.mubr.f32.mxu0 0.0
  %5011 = vmatmul.mubr.f32.gmra.mrb[0].mxu0 %v4803
  %v5012 = vpop.f32.mrb[0].mxu0
  %v5013 = vadd.f32 0.0, %v5012
  %v5014 = vpop.f32.mrb[0].mxu0
  %5015 = vmatprep.mubr.f32.mxu0 0.0
  %5016 = vmatmul.mubr.f32.gmra.mrb[0].mxu0 %v4806
  %v5017 = vpop.f32.mrb[0].mxu0
  %v5018 = vadd.f32 0.0, %v5017
  %v5019 = vpop.f32.mrb[0].mxu0
  %5020 = vmatprep.mubr.f32.mxu0 0.0
  %5021 = vmatmul.mubr.f32.gmra.mrb[0].mxu0 %v4809
  %v5022 = vpop.f32.mrb[0].mxu0
  %v5023 = vadd.f32 0.0, %v5022
  %v5024 = vpop.f32.mrb[0].mxu0
  %5025 = vmatprep.mubr.f32.mxu0 0.0
  %5026 = vmatmul.mubr.f32.gmra.mrb[0].mxu0 %v4812
  %v5027 = vpop.f32.mrb[0].mxu0
  %v5028 = vadd.f32 0.0, %v5027
  %v5029 = vpop.f32.mrb[0].mxu0
  %5030 = vmatprep.mubr.f32.mxu0 0.0
  %5031 = vmatmul.mubr.f32.gmra.mrb[0].mxu0 %v4815
  %v5032 = vpop.f32.mrb[0].mxu0
  %v5033 = vadd.f32 0.0, %v5032
  %v5034 = vpop.f32.mrb[0].mxu0
  %5035 = vmatprep.mubr.f32.mxu0 0.0
  %5036 = vmatmul.mubr.f32.gmra.mrb[0].mxu0 %v4818
  %v5037 = vpop.f32.mrb[0].mxu0
  %v5038 = vadd.f32 0.0, %v5037
  %v5039 = vpop.f32.mrb[0].mxu0
  %5040 = vmatprep.mubr.f32.mxu0 0.0
  %5041 = vmatmul.mubr.f32.gmra.mrb[0].mxu0 %v4821
  %v5042 = vpop.f32.mrb[0].mxu0
  %v5043 = vadd.f32 0.0, %v5042
  %v5044 = vpop.f32.mrb[0].mxu0
  %5045 = vmatprep.mubr.f32.mxu0 0.0
  %5046 = vmatmul.mubr.f32.gmra.mrb[0].mxu0 %v4824
  %v5047 = vpop.f32.mrb[0].mxu0
  %v5048 = vadd.f32 0.0, %v5047
  %v5049 = vpop.f32.mrb[0].mxu0
  %5050 = vdwg.mxu0
  %v5051 = vadd.f32 %v4693, %v4893
  %v5052 = vadd.f32 %v4694, %v4898
  %v5053 = vadd.f32 %v4695, %v4903
  %v5054 = vadd.f32 %v4696, %v4908
  %v5055 = vadd.f32 %v4697, %v4913
  %v5056 = vadd.f32 %v4698, %v4918
  %v5057 = vadd.f32 %v4699, %v4923
  %v5058 = vadd.f32 %v4700, %v4928
  %v5059 = vadd.f32 %v4701, %v4933
  %v5060 = vadd.f32 %v4702, %v4938
  %v5061 = vadd.f32 %v4703, %v4943
  %v5062 = vadd.f32 %v4704, %v4948
  %v5063 = vadd.f32 %v4705, %v4953
  %v5064 = vadd.f32 %v4706, %v4958
  %v5065 = vadd.f32 %v4707, %v4963
  %v5066 = vadd.f32 %v4708, %v4968
  %v5067 = vadd.f32 %v4709, %v4973
  %v5068 = vadd.f32 %v4710, %v4978
  %v5069 = vadd.f32 %v4711, %v4983
  %v5070 = vadd.f32 %v4712, %v4988
  %v5071 = vadd.f32 %v4713, %v4993
  %v5072 = vadd.f32 %v4714, %v4998
  %v5073 = vadd.f32 %v4715, %v5003
  %v5074 = vadd.f32 %v4716, %v5008
  %v5075 = vadd.f32 %v4717, %v5013
  %v5076 = vadd.f32 %v4718, %v5018
  %v5077 = vadd.f32 %v4719, %v5023
  %v5078 = vadd.f32 %v4720, %v5028
  %v5079 = vadd.f32 %v4721, %v5033
  %v5080 = vadd.f32 %v4722, %v5038
  %v5081 = vadd.f32 %v4723, %v5043
  %v5082 = vadd.f32 %v4724, %v5048
  %s5083 = scalar_lea.vmem %s39, 128
  %v5084 = vld [vmem:[%s5083] sm:$0xff]
  %v5085 = vld [vmem:[%s5083 + $0x8] sm:$0xff]
  %v5086 = vld [vmem:[%s5083 + $0x10] sm:$0xff]
  %v5087 = vld [vmem:[%s5083 + $0x18] sm:$0xff]
  %v5089 = vsel %vm359, %v3544, 0
  %v5092 = vsel %vm359, %v3545, 0
  %v5095 = vsel %vm359, %v3546, 0
  %v5098 = vsel %vm359, %v3547, 0
  %5100 = vmatprep.subr.mxu0 0.0
  %5101 = vmatpush1.msra.mxu0 %v5084
  %5102 = vmatprep.subr.mxu0 0.0
  %5103 = vmatpush1.msra.mxu0 %v5085
  %5104 = vmatprep.subr.mxu0 0.0
  %5105 = vmatpush1.msra.mxu0 %v5086
  %5106 = vmatprep.subr.mxu0 0.0
  %5107 = vmatpush1.msra.mxu0 %v5087
  %5108 = vmatprep.subr.mxu0 0.0
  %5109 = vmatpush1.msra.mxu0 0.0
  %5110 = vmatprep.subr.mxu0 0.0
  %5111 = vmatpush1.msra.mxu0 0.0
  %5112 = vmatprep.subr.mxu0 0.0
  %5113 = vmatpush1.msra.mxu0 0.0
  %5114 = vmatprep.subr.mxu0 0.0
  %5115 = vmatpush1.msra.mxu0 0.0
  %5116 = vmatprep.subr.mxu0 0.0
  %5117 = vmatpush1.msra.mxu0 0.0
  %5118 = vmatprep.subr.mxu0 0.0
  %5119 = vmatpush1.msra.mxu0 0.0
  %5120 = vmatprep.subr.mxu0 0.0
  %5121 = vmatpush1.msra.mxu0 0.0
  %5122 = vmatprep.subr.mxu0 0.0
  %5123 = vmatpush1.msra.mxu0 0.0
  %5124 = vmatprep.subr.mxu0 0.0
  %5125 = vmatpush1.msra.mxu0 0.0
  %5126 = vmatprep.subr.mxu0 0.0
  %5127 = vmatpush1.msra.mxu0 0.0
  %5128 = vmatprep.subr.mxu0 0.0
  %5129 = vmatpush1.msra.mxu0 0.0
  %5130 = vmatprep.subr.mxu0 0.0
  %5131 = vmatpush1.msra.mxu0 0.0
  %5132 = vmatprep.subr.mxu0 0.0
  %5133 = vmatpush1.msra.mxu0 0.0
  %5134 = vmatprep.subr.mxu0 0.0
  %5135 = vmatpush1.msra.mxu0 0.0
  %5136 = vmatprep.subr.mxu0 0.0
  %5137 = vmatpush1.msra.mxu0 0.0
  %5138 = vmatprep.subr.mxu0 0.0
  %5139 = vmatpush1.msra.mxu0 0.0
  %5140 = vmatprep.subr.mxu0 0.0
  %5141 = vmatpush1.msra.mxu0 0.0
  %5142 = vmatprep.subr.mxu0 0.0
  %5143 = vmatpush1.msra.mxu0 0.0
  %5144 = vmatprep.subr.mxu0 0.0
  %5145 = vmatpush1.msra.mxu0 0.0
  %5146 = vmatprep.subr.mxu0 0.0
  %5147 = vmatpush1.msra.mxu0 0.0
  %5148 = vmatprep.subr.mxu0 0.0
  %5149 = vmatpush1.msra.mxu0 0.0
  %5150 = vmatprep.subr.mxu0 0.0
  %5151 = vmatpush1.msra.mxu0 0.0
  %5152 = vmatprep.subr.mxu0 0.0
  %5153 = vmatpush1.msra.mxu0 0.0
  %5154 = vmatprep.subr.mxu0 0.0
  %5155 = vmatpush1.msra.mxu0 0.0
  %5156 = vmatprep.subr.mxu0 0.0
  %5157 = vmatpush1.msra.mxu0 0.0
  %5158 = vmatprep.subr.mxu0 0.0
  %5159 = vmatpush1.msra.mxu0 0.0
  %5160 = vmatprep.subr.mxu0 0.0
  %5161 = vmatpush1.msra.mxu0 0.0
  %5162 = vmatprep.subr.mxu0 0.0
  %5163 = vmatpush1.msra.mxu0 0.0
  %5164 = vmatprep.mubr.f32.mxu0 0.0
  %5165 = vmatmul.mubr.f32.gmra.mrb[0].mxu0 %v3738
  %v5166 = vpop.f32.mrb[0].mxu0
  %v5167 = vadd.f32 0.0, %v5166
  %v5168 = vpop.f32.mrb[0].mxu0
  %5169 = vmatprep.mubr.f32.mxu0 0.0
  %5170 = vmatmul.mubr.f32.gmra.mrb[0].mxu0 %v3741
  %v5171 = vpop.f32.mrb[0].mxu0
  %v5172 = vadd.f32 0.0, %v5171
  %v5173 = vpop.f32.mrb[0].mxu0
  %5174 = vmatprep.mubr.f32.mxu0 0.0
  %5175 = vmatmul.mubr.f32.gmra.mrb[0].mxu0 %v3744
  %v5176 = vpop.f32.mrb[0].mxu0
  %v5177 = vadd.f32 0.0, %v5176
  %v5178 = vpop.f32.mrb[0].mxu0
  %5179 = vmatprep.mubr.f32.mxu0 0.0
  %5180 = vmatmul.mubr.f32.gmra.mrb[0].mxu0 %v3747
  %v5181 = vpop.f32.mrb[0].mxu0
  %v5182 = vadd.f32 0.0, %v5181
  %v5183 = vpop.f32.mrb[0].mxu0
  %5184 = vmatprep.mubr.f32.mxu0 0.0
  %5185 = vmatmul.mubr.f32.gmra.mrb[0].mxu0 %v3750
  %v5186 = vpop.f32.mrb[0].mxu0
  %v5187 = vadd.f32 0.0, %v5186
  %v5188 = vpop.f32.mrb[0].mxu0
  %5189 = vmatprep.mubr.f32.mxu0 0.0
  %5190 = vmatmul.mubr.f32.gmra.mrb[0].mxu0 %v3753
  %v5191 = vpop.f32.mrb[0].mxu0
  %v5192 = vadd.f32 0.0, %v5191
  %v5193 = vpop.f32.mrb[0].mxu0
  %5194 = vmatprep.mubr.f32.mxu0 0.0
  %5195 = vmatmul.mubr.f32.gmra.mrb[0].mxu0 %v3756
  %v5196 = vpop.f32.mrb[0].mxu0
  %v5197 = vadd.f32 0.0, %v5196
  %v5198 = vpop.f32.mrb[0].mxu0
  %5199 = vmatprep.mubr.f32.mxu0 0.0
  %5200 = vmatmul.mubr.f32.gmra.mrb[0].mxu0 %v3759
  %v5201 = vpop.f32.mrb[0].mxu0
  %v5202 = vadd.f32 0.0, %v5201
  %v5203 = vpop.f32.mrb[0].mxu0
  %5204 = vmatprep.mubr.f32.mxu0 0.0
  %5205 = vmatmul.mubr.f32.gmra.mrb[0].mxu0 %v3762
  %v5206 = vpop.f32.mrb[0].mxu0
  %v5207 = vadd.f32 0.0, %v5206
  %v5208 = vpop.f32.mrb[0].mxu0
  %5209 = vmatprep.mubr.f32.mxu0 0.0
  %5210 = vmatmul.mubr.f32.gmra.mrb[0].mxu0 %v3765
  %v5211 = vpop.f32.mrb[0].mxu0
  %v5212 = vadd.f32 0.0, %v5211
  %v5213 = vpop.f32.mrb[0].mxu0
  %5214 = vmatprep.mubr.f32.mxu0 0.0
  %5215 = vmatmul.mubr.f32.gmra.mrb[0].mxu0 %v3768
  %v5216 = vpop.f32.mrb[0].mxu0
  %v5217 = vadd.f32 0.0, %v5216
  %v5218 = vpop.f32.mrb[0].mxu0
  %5219 = vmatprep.mubr.f32.mxu0 0.0
  %5220 = vmatmul.mubr.f32.gmra.mrb[0].mxu0 %v3771
  %v5221 = vpop.f32.mrb[0].mxu0
  %v5222 = vadd.f32 0.0, %v5221
  %v5223 = vpop.f32.mrb[0].mxu0
  %5224 = vmatprep.mubr.f32.mxu0 0.0
  %5225 = vmatmul.mubr.f32.gmra.mrb[0].mxu0 %v3774
  %v5226 = vpop.f32.mrb[0].mxu0
  %v5227 = vadd.f32 0.0, %v5226
  %v5228 = vpop.f32.mrb[0].mxu0
  %5229 = vmatprep.mubr.f32.mxu0 0.0
  %5230 = vmatmul.mubr.f32.gmra.mrb[0].mxu0 %v3777
  %v5231 = vpop.f32.mrb[0].mxu0
  %v5232 = vadd.f32 0.0, %v5231
  %v5233 = vpop.f32.mrb[0].mxu0
  %5234 = vmatprep.mubr.f32.mxu0 0.0
  %5235 = vmatmul.mubr.f32.gmra.mrb[0].mxu0 %v3780
  %v5236 = vpop.f32.mrb[0].mxu0
  %v5237 = vadd.f32 0.0, %v5236
  %v5238 = vpop.f32.mrb[0].mxu0
  %5239 = vmatprep.mubr.f32.mxu0 0.0
  %5240 = vmatmul.mubr.f32.gmra.mrb[0].mxu0 %v3783
  %v5241 = vpop.f32.mrb[0].mxu0
  %v5242 = vadd.f32 0.0, %v5241
  %v5243 = vpop.f32.mrb[0].mxu0
  %5244 = vmatprep.mubr.f32.mxu0 0.0
  %5245 = vmatmul.mubr.f32.gmra.mrb[0].mxu0 %v3786
  %v5246 = vpop.f32.mrb[0].mxu0
  %v5247 = vadd.f32 0.0, %v5246
  %v5248 = vpop.f32.mrb[0].mxu0
  %5249 = vmatprep.mubr.f32.mxu0 0.0
  %5250 = vmatmul.mubr.f32.gmra.mrb[0].mxu0 %v3789
  %v5251 = vpop.f32.mrb[0].mxu0
  %v5252 = vadd.f32 0.0, %v5251
  %v5253 = vpop.f32.mrb[0].mxu0
  %5254 = vmatprep.mubr.f32.mxu0 0.0
  %5255 = vmatmul.mubr.f32.gmra.mrb[0].mxu0 %v3792
  %v5256 = vpop.f32.mrb[0].mxu0
  %v5257 = vadd.f32 0.0, %v5256
  %v5258 = vpop.f32.mrb[0].mxu0
  %5259 = vmatprep.mubr.f32.mxu0 0.0
  %5260 = vmatmul.mubr.f32.gmra.mrb[0].mxu0 %v3795
  %v5261 = vpop.f32.mrb[0].mxu0
  %v5262 = vadd.f32 0.0, %v5261
  %v5263 = vpop.f32.mrb[0].mxu0
  %5264 = vmatprep.mubr.f32.mxu0 0.0
  %5265 = vmatmul.mubr.f32.gmra.mrb[0].mxu0 %v3798
  %v5266 = vpop.f32.mrb[0].mxu0
  %v5267 = vadd.f32 0.0, %v5266
  %v5268 = vpop.f32.mrb[0].mxu0
  %5269 = vmatprep.mubr.f32.mxu0 0.0
  %5270 = vmatmul.mubr.f32.gmra.mrb[0].mxu0 %v3801
  %v5271 = vpop.f32.mrb[0].mxu0
  %v5272 = vadd.f32 0.0, %v5271
  %v5273 = vpop.f32.mrb[0].mxu0
  %5274 = vmatprep.mubr.f32.mxu0 0.0
  %5275 = vmatmul.mubr.f32.gmra.mrb[0].mxu0 %v3804
  %v5276 = vpop.f32.mrb[0].mxu0
  %v5277 = vadd.f32 0.0, %v5276
  %v5278 = vpop.f32.mrb[0].mxu0
  %5279 = vmatprep.mubr.f32.mxu0 0.0
  %5280 = vmatmul.mubr.f32.gmra.mrb[0].mxu0 %v3807
  %v5281 = vpop.f32.mrb[0].mxu0
  %v5282 = vadd.f32 0.0, %v5281
  %v5283 = vpop.f32.mrb[0].mxu0
  %5284 = vmatprep.mubr.f32.mxu0 0.0
  %5285 = vmatmul.mubr.f32.gmra.mrb[0].mxu0 %v3810
  %v5286 = vpop.f32.mrb[0].mxu0
  %v5287 = vadd.f32 0.0, %v5286
  %v5288 = vpop.f32.mrb[0].mxu0
  %5289 = vmatprep.mubr.f32.mxu0 0.0
  %5290 = vmatmul.mubr.f32.gmra.mrb[0].mxu0 %v3813
  %v5291 = vpop.f32.mrb[0].mxu0
  %v5292 = vadd.f32 0.0, %v5291
  %v5293 = vpop.f32.mrb[0].mxu0
  %5294 = vmatprep.mubr.f32.mxu0 0.0
  %5295 = vmatmul.mubr.f32.gmra.mrb[0].mxu0 %v3816
  %v5296 = vpop.f32.mrb[0].mxu0
  %v5297 = vadd.f32 0.0, %v5296
  %v5298 = vpop.f32.mrb[0].mxu0
  %5299 = vmatprep.mubr.f32.mxu0 0.0
  %5300 = vmatmul.mubr.f32.gmra.mrb[0].mxu0 %v3819
  %v5301 = vpop.f32.mrb[0].mxu0
  %v5302 = vadd.f32 0.0, %v5301
  %v5303 = vpop.f32.mrb[0].mxu0
  %5304 = vmatprep.mubr.f32.mxu0 0.0
  %5305 = vmatmul.mubr.f32.gmra.mrb[0].mxu0 %v5089
  %v5306 = vpop.f32.mrb[0].mxu0
  %v5307 = vadd.f32 0.0, %v5306
  %v5308 = vpop.f32.mrb[0].mxu0
  %5309 = vmatprep.mubr.f32.mxu0 0.0
  %5310 = vmatmul.mubr.f32.gmra.mrb[0].mxu0 %v5092
  %v5311 = vpop.f32.mrb[0].mxu0
  %v5312 = vadd.f32 0.0, %v5311
  %v5313 = vpop.f32.mrb[0].mxu0
  %5314 = vmatprep.mubr.f32.mxu0 0.0
  %5315 = vmatmul.mubr.f32.gmra.mrb[0].mxu0 %v5095
  %v5316 = vpop.f32.mrb[0].mxu0
  %v5317 = vadd.f32 0.0, %v5316
  %v5318 = vpop.f32.mrb[0].mxu0
  %5319 = vmatprep.mubr.f32.mxu0 0.0
  %5320 = vmatmul.mubr.f32.gmra.mrb[0].mxu0 %v5098
  %v5321 = vpop.f32.mrb[0].mxu0
  %v5322 = vadd.f32 0.0, %v5321
  %v5323 = vpop.f32.mrb[0].mxu0
  %5324 = vdwg.mxu0
  %v5325 = vadd.f32 %v5051, %v5167
  %v5326 = vadd.f32 %v5052, %v5172
  %v5327 = vadd.f32 %v5053, %v5177
  %v5328 = vadd.f32 %v5054, %v5182
  %v5329 = vadd.f32 %v5055, %v5187
  %v5330 = vadd.f32 %v5056, %v5192
  %v5331 = vadd.f32 %v5057, %v5197
  %v5332 = vadd.f32 %v5058, %v5202
  %v5333 = vadd.f32 %v5059, %v5207
  %v5334 = vadd.f32 %v5060, %v5212
  %v5335 = vadd.f32 %v5061, %v5217
  %v5336 = vadd.f32 %v5062, %v5222
  %v5337 = vadd.f32 %v5063, %v5227
  %v5338 = vadd.f32 %v5064, %v5232
  %v5339 = vadd.f32 %v5065, %v5237
  %v5340 = vadd.f32 %v5066, %v5242
  %v5341 = vadd.f32 %v5067, %v5247
  %v5342 = vadd.f32 %v5068, %v5252
  %v5343 = vadd.f32 %v5069, %v5257
  %v5344 = vadd.f32 %v5070, %v5262
  %v5345 = vadd.f32 %v5071, %v5267
  %v5346 = vadd.f32 %v5072, %v5272
  %v5347 = vadd.f32 %v5073, %v5277
  %v5348 = vadd.f32 %v5074, %v5282
  %v5349 = vadd.f32 %v5075, %v5287
  %v5350 = vadd.f32 %v5076, %v5292
  %v5351 = vadd.f32 %v5077, %v5297
  %v5352 = vadd.f32 %v5078, %v5302
  %v5353 = vadd.f32 %v5079, %v5307
  %v5354 = vadd.f32 %v5080, %v5312
  %v5355 = vadd.f32 %v5081, %v5317
  %v5356 = vadd.f32 %v5082, %v5322
  %s5357 = scalar_lea.vmem %s39, 160
  %v5358 = vld [vmem:[%s5357] sm:$0xff]
  %v5359 = vld [vmem:[%s5357 + $0x8] sm:$0xff]
  %v5360 = vld [vmem:[%s5357 + $0x10] sm:$0xff]
  %v5361 = vld [vmem:[%s5357 + $0x18] sm:$0xff]
  %v5363 = vsel %vm359, %v3598, 0
  %v5366 = vsel %vm359, %v3599, 0
  %v5369 = vsel %vm359, %v3600, 0
  %v5372 = vsel %vm359, %v3601, 0
  %v5375 = vsel %vm359, %v3602, 0
  %v5378 = vsel %vm359, %v3603, 0
  %v5381 = vsel %vm359, %v3604, 0
  %v5384 = vsel %vm359, %v3605, 0
  %v5387 = vsel %vm359, %v3606, 0
  %v5390 = vsel %vm359, %v3607, 0
  %v5393 = vsel %vm359, %v3608, 0
  %v5396 = vsel %vm359, %v3609, 0
  %v5399 = vsel %vm359, %v3610, 0
  %v5402 = vsel %vm359, %v3611, 0
  %v5405 = vsel %vm359, %v3612, 0
  %v5408 = vsel %vm359, %v3613, 0
  %v5411 = vsel %vm359, %v3614, 0
  %v5414 = vsel %vm359, %v3615, 0
  %v5417 = vsel %vm359, %v3616, 0
  %v5420 = vsel %vm359, %v3617, 0
  %v5423 = vsel %vm359, %v3618, 0
  %v5426 = vsel %vm359, %v3619, 0
  %v5429 = vsel %vm359, %v3620, 0
  %v5432 = vsel %vm359, %v3621, 0
  %v5435 = vsel %vm359, %v3622, 0
  %v5438 = vsel %vm359, %v3623, 0
  %v5441 = vsel %vm359, %v3624, 0
  %v5444 = vsel %vm359, %v3625, 0
  %v5447 = vsel %vm359, %v3626, 0
  %v5450 = vsel %vm359, %v3627, 0
  %v5453 = vsel %vm359, %v3628, 0
  %v5456 = vsel %vm359, %v3629, 0
  %5458 = vmatprep.subr.mxu0 0.0
  %5459 = vmatpush1.msra.mxu0 %v5358
  %5460 = vmatprep.subr.mxu0 0.0
  %5461 = vmatpush1.msra.mxu0 %v5359
  %5462 = vmatprep.subr.mxu0 0.0
  %5463 = vmatpush1.msra.mxu0 %v5360
  %5464 = vmatprep.subr.mxu0 0.0
  %5465 = vmatpush1.msra.mxu0 %v5361
  %5466 = vmatprep.subr.mxu0 0.0
  %5467 = vmatpush1.msra.mxu0 0.0
  %5468 = vmatprep.subr.mxu0 0.0
  %5469 = vmatpush1.msra.mxu0 0.0
  %5470 = vmatprep.subr.mxu0 0.0
  %5471 = vmatpush1.msra.mxu0 0.0
  %5472 = vmatprep.subr.mxu0 0.0
  %5473 = vmatpush1.msra.mxu0 0.0
  %5474 = vmatprep.subr.mxu0 0.0
  %5475 = vmatpush1.msra.mxu0 0.0
  %5476 = vmatprep.subr.mxu0 0.0
  %5477 = vmatpush1.msra.mxu0 0.0
  %5478 = vmatprep.subr.mxu0 0.0
  %5479 = vmatpush1.msra.mxu0 0.0
  %5480 = vmatprep.subr.mxu0 0.0
  %5481 = vmatpush1.msra.mxu0 0.0
  %5482 = vmatprep.subr.mxu0 0.0
  %5483 = vmatpush1.msra.mxu0 0.0
  %5484 = vmatprep.subr.mxu0 0.0
  %5485 = vmatpush1.msra.mxu0 0.0
  %5486 = vmatprep.subr.mxu0 0.0
  %5487 = vmatpush1.msra.mxu0 0.0
  %5488 = vmatprep.subr.mxu0 0.0
  %5489 = vmatpush1.msra.mxu0 0.0
  %5490 = vmatprep.subr.mxu0 0.0
  %5491 = vmatpush1.msra.mxu0 0.0
  %5492 = vmatprep.subr.mxu0 0.0
  %5493 = vmatpush1.msra.mxu0 0.0
  %5494 = vmatprep.subr.mxu0 0.0
  %5495 = vmatpush1.msra.mxu0 0.0
  %5496 = vmatprep.subr.mxu0 0.0
  %5497 = vmatpush1.msra.mxu0 0.0
  %5498 = vmatprep.subr.mxu0 0.0
  %5499 = vmatpush1.msra.mxu0 0.0
  %5500 = vmatprep.subr.mxu0 0.0
  %5501 = vmatpush1.msra.mxu0 0.0
  %5502 = vmatprep.subr.mxu0 0.0
  %5503 = vmatpush1.msra.mxu0 0.0
  %5504 = vmatprep.subr.mxu0 0.0
  %5505 = vmatpush1.msra.mxu0 0.0
  %5506 = vmatprep.subr.mxu0 0.0
  %5507 = vmatpush1.msra.mxu0 0.0
  %5508 = vmatprep.subr.mxu0 0.0
  %5509 = vmatpush1.msra.mxu0 0.0
  %5510 = vmatprep.subr.mxu0 0.0
  %5511 = vmatpush1.msra.mxu0 0.0
  %5512 = vmatprep.subr.mxu0 0.0
  %5513 = vmatpush1.msra.mxu0 0.0
  %5514 = vmatprep.subr.mxu0 0.0
  %5515 = vmatpush1.msra.mxu0 0.0
  %5516 = vmatprep.subr.mxu0 0.0
  %5517 = vmatpush1.msra.mxu0 0.0
  %5518 = vmatprep.subr.mxu0 0.0
  %5519 = vmatpush1.msra.mxu0 0.0
  %5520 = vmatprep.subr.mxu0 0.0
  %5521 = vmatpush1.msra.mxu0 0.0
  %5522 = vmatprep.mubr.f32.mxu0 0.0
  %5523 = vmatmul.mubr.f32.gmra.mrb[0].mxu0 %v5363
  %v5524 = vpop.f32.mrb[0].mxu0
  %v5525 = vadd.f32 0.0, %v5524
  %v5526 = vpop.f32.mrb[0].mxu0
  %5527 = vmatprep.mubr.f32.mxu0 0.0
  %5528 = vmatmul.mubr.f32.gmra.mrb[0].mxu0 %v5366
  %v5529 = vpop.f32.mrb[0].mxu0
  %v5530 = vadd.f32 0.0, %v5529
  %v5531 = vpop.f32.mrb[0].mxu0
  %5532 = vmatprep.mubr.f32.mxu0 0.0
  %5533 = vmatmul.mubr.f32.gmra.mrb[0].mxu0 %v5369
  %v5534 = vpop.f32.mrb[0].mxu0
  %v5535 = vadd.f32 0.0, %v5534
  %v5536 = vpop.f32.mrb[0].mxu0
  %5537 = vmatprep.mubr.f32.mxu0 0.0
  %5538 = vmatmul.mubr.f32.gmra.mrb[0].mxu0 %v5372
  %v5539 = vpop.f32.mrb[0].mxu0
  %v5540 = vadd.f32 0.0, %v5539
  %v5541 = vpop.f32.mrb[0].mxu0
  %5542 = vmatprep.mubr.f32.mxu0 0.0
  %5543 = vmatmul.mubr.f32.gmra.mrb[0].mxu0 %v5375
  %v5544 = vpop.f32.mrb[0].mxu0
  %v5545 = vadd.f32 0.0, %v5544
  %v5546 = vpop.f32.mrb[0].mxu0
  %5547 = vmatprep.mubr.f32.mxu0 0.0
  %5548 = vmatmul.mubr.f32.gmra.mrb[0].mxu0 %v5378
  %v5549 = vpop.f32.mrb[0].mxu0
  %v5550 = vadd.f32 0.0, %v5549
  %v5551 = vpop.f32.mrb[0].mxu0
  %5552 = vmatprep.mubr.f32.mxu0 0.0
  %5553 = vmatmul.mubr.f32.gmra.mrb[0].mxu0 %v5381
  %v5554 = vpop.f32.mrb[0].mxu0
  %v5555 = vadd.f32 0.0, %v5554
  %v5556 = vpop.f32.mrb[0].mxu0
  %5557 = vmatprep.mubr.f32.mxu0 0.0
  %5558 = vmatmul.mubr.f32.gmra.mrb[0].mxu0 %v5384
  %v5559 = vpop.f32.mrb[0].mxu0
  %v5560 = vadd.f32 0.0, %v5559
  %v5561 = vpop.f32.mrb[0].mxu0
  %5562 = vmatprep.mubr.f32.mxu0 0.0
  %5563 = vmatmul.mubr.f32.gmra.mrb[0].mxu0 %v5387
  %v5564 = vpop.f32.mrb[0].mxu0
  %v5565 = vadd.f32 0.0, %v5564
  %v5566 = vpop.f32.mrb[0].mxu0
  %5567 = vmatprep.mubr.f32.mxu0 0.0
  %5568 = vmatmul.mubr.f32.gmra.mrb[0].mxu0 %v5390
  %v5569 = vpop.f32.mrb[0].mxu0
  %v5570 = vadd.f32 0.0, %v5569
  %v5571 = vpop.f32.mrb[0].mxu0
  %5572 = vmatprep.mubr.f32.mxu0 0.0
  %5573 = vmatmul.mubr.f32.gmra.mrb[0].mxu0 %v5393
  %v5574 = vpop.f32.mrb[0].mxu0
  %v5575 = vadd.f32 0.0, %v5574
  %v5576 = vpop.f32.mrb[0].mxu0
  %5577 = vmatprep.mubr.f32.mxu0 0.0
  %5578 = vmatmul.mubr.f32.gmra.mrb[0].mxu0 %v5396
  %v5579 = vpop.f32.mrb[0].mxu0
  %v5580 = vadd.f32 0.0, %v5579
  %v5581 = vpop.f32.mrb[0].mxu0
  %5582 = vmatprep.mubr.f32.mxu0 0.0
  %5583 = vmatmul.mubr.f32.gmra.mrb[0].mxu0 %v5399
  %v5584 = vpop.f32.mrb[0].mxu0
  %v5585 = vadd.f32 0.0, %v5584
  %v5586 = vpop.f32.mrb[0].mxu0
  %5587 = vmatprep.mubr.f32.mxu0 0.0
  %5588 = vmatmul.mubr.f32.gmra.mrb[0].mxu0 %v5402
  %v5589 = vpop.f32.mrb[0].mxu0
  %v5590 = vadd.f32 0.0, %v5589
  %v5591 = vpop.f32.mrb[0].mxu0
  %5592 = vmatprep.mubr.f32.mxu0 0.0
  %5593 = vmatmul.mubr.f32.gmra.mrb[0].mxu0 %v5405
  %v5594 = vpop.f32.mrb[0].mxu0
  %v5595 = vadd.f32 0.0, %v5594
  %v5596 = vpop.f32.mrb[0].mxu0
  %5597 = vmatprep.mubr.f32.mxu0 0.0
  %5598 = vmatmul.mubr.f32.gmra.mrb[0].mxu0 %v5408
  %v5599 = vpop.f32.mrb[0].mxu0
  %v5600 = vadd.f32 0.0, %v5599
  %v5601 = vpop.f32.mrb[0].mxu0
  %5602 = vmatprep.mubr.f32.mxu0 0.0
  %5603 = vmatmul.mubr.f32.gmra.mrb[0].mxu0 %v5411
  %v5604 = vpop.f32.mrb[0].mxu0
  %v5605 = vadd.f32 0.0, %v5604
  %v5606 = vpop.f32.mrb[0].mxu0
  %5607 = vmatprep.mubr.f32.mxu0 0.0
  %5608 = vmatmul.mubr.f32.gmra.mrb[0].mxu0 %v5414
  %v5609 = vpop.f32.mrb[0].mxu0
  %v5610 = vadd.f32 0.0, %v5609
  %v5611 = vpop.f32.mrb[0].mxu0
  %5612 = vmatprep.mubr.f32.mxu0 0.0
  %5613 = vmatmul.mubr.f32.gmra.mrb[0].mxu0 %v5417
  %v5614 = vpop.f32.mrb[0].mxu0
  %v5615 = vadd.f32 0.0, %v5614
  %v5616 = vpop.f32.mrb[0].mxu0
  %5617 = vmatprep.mubr.f32.mxu0 0.0
  %5618 = vmatmul.mubr.f32.gmra.mrb[0].mxu0 %v5420
  %v5619 = vpop.f32.mrb[0].mxu0
  %v5620 = vadd.f32 0.0, %v5619
  %v5621 = vpop.f32.mrb[0].mxu0
  %5622 = vmatprep.mubr.f32.mxu0 0.0
  %5623 = vmatmul.mubr.f32.gmra.mrb[0].mxu0 %v5423
  %v5624 = vpop.f32.mrb[0].mxu0
  %v5625 = vadd.f32 0.0, %v5624
  %v5626 = vpop.f32.mrb[0].mxu0
  %5627 = vmatprep.mubr.f32.mxu0 0.0
  %5628 = vmatmul.mubr.f32.gmra.mrb[0].mxu0 %v5426
  %v5629 = vpop.f32.mrb[0].mxu0
  %v5630 = vadd.f32 0.0, %v5629
  %v5631 = vpop.f32.mrb[0].mxu0
  %5632 = vmatprep.mubr.f32.mxu0 0.0
  %5633 = vmatmul.mubr.f32.gmra.mrb[0].mxu0 %v5429
  %v5634 = vpop.f32.mrb[0].mxu0
  %v5635 = vadd.f32 0.0, %v5634
  %v5636 = vpop.f32.mrb[0].mxu0
  %5637 = vmatprep.mubr.f32.mxu0 0.0
  %5638 = vmatmul.mubr.f32.gmra.mrb[0].mxu0 %v5432
  %v5639 = vpop.f32.mrb[0].mxu0
  %v5640 = vadd.f32 0.0, %v5639
  %v5641 = vpop.f32.mrb[0].mxu0
  %5642 = vmatprep.mubr.f32.mxu0 0.0
  %5643 = vmatmul.mubr.f32.gmra.mrb[0].mxu0 %v5435
  %v5644 = vpop.f32.mrb[0].mxu0
  %v5645 = vadd.f32 0.0, %v5644
  %v5646 = vpop.f32.mrb[0].mxu0
  %5647 = vmatprep.mubr.f32.mxu0 0.0
  %5648 = vmatmul.mubr.f32.gmra.mrb[0].mxu0 %v5438
  %v5649 = vpop.f32.mrb[0].mxu0
  %v5650 = vadd.f32 0.0, %v5649
  %v5651 = vpop.f32.mrb[0].mxu0
  %5652 = vmatprep.mubr.f32.mxu0 0.0
  %5653 = vmatmul.mubr.f32.gmra.mrb[0].mxu0 %v5441
  %v5654 = vpop.f32.mrb[0].mxu0
  %v5655 = vadd.f32 0.0, %v5654
  %v5656 = vpop.f32.mrb[0].mxu0
  %5657 = vmatprep.mubr.f32.mxu0 0.0
  %5658 = vmatmul.mubr.f32.gmra.mrb[0].mxu0 %v5444
  %v5659 = vpop.f32.mrb[0].mxu0
  %v5660 = vadd.f32 0.0, %v5659
  %v5661 = vpop.f32.mrb[0].mxu0
  %5662 = vmatprep.mubr.f32.mxu0 0.0
  %5663 = vmatmul.mubr.f32.gmra.mrb[0].mxu0 %v5447
  %v5664 = vpop.f32.mrb[0].mxu0
  %v5665 = vadd.f32 0.0, %v5664
  %v5666 = vpop.f32.mrb[0].mxu0
  %5667 = vmatprep.mubr.f32.mxu0 0.0
  %5668 = vmatmul.mubr.f32.gmra.mrb[0].mxu0 %v5450
  %v5669 = vpop.f32.mrb[0].mxu0
  %v5670 = vadd.f32 0.0, %v5669
  %v5671 = vpop.f32.mrb[0].mxu0
  %5672 = vmatprep.mubr.f32.mxu0 0.0
  %5673 = vmatmul.mubr.f32.gmra.mrb[0].mxu0 %v5453
  %v5674 = vpop.f32.mrb[0].mxu0
  %v5675 = vadd.f32 0.0, %v5674
  %v5676 = vpop.f32.mrb[0].mxu0
  %5677 = vmatprep.mubr.f32.mxu0 0.0
  %5678 = vmatmul.mubr.f32.gmra.mrb[0].mxu0 %v5456
  %v5679 = vpop.f32.mrb[0].mxu0
  %v5680 = vadd.f32 0.0, %v5679
  %v5681 = vpop.f32.mrb[0].mxu0
  %5682 = vdwg.mxu0
  %v5683 = vadd.f32 %v5325, %v5525
  %v5684 = vadd.f32 %v5326, %v5530
  %v5685 = vadd.f32 %v5327, %v5535
  %v5686 = vadd.f32 %v5328, %v5540
  %v5687 = vadd.f32 %v5329, %v5545
  %v5688 = vadd.f32 %v5330, %v5550
  %v5689 = vadd.f32 %v5331, %v5555
  %v5690 = vadd.f32 %v5332, %v5560
  %v5691 = vadd.f32 %v5333, %v5565
  %v5692 = vadd.f32 %v5334, %v5570
  %v5693 = vadd.f32 %v5335, %v5575
  %v5694 = vadd.f32 %v5336, %v5580
  %v5695 = vadd.f32 %v5337, %v5585
  %v5696 = vadd.f32 %v5338, %v5590
  %v5697 = vadd.f32 %v5339, %v5595
  %v5698 = vadd.f32 %v5340, %v5600
  %v5699 = vadd.f32 %v5341, %v5605
  %v5700 = vadd.f32 %v5342, %v5610
  %v5701 = vadd.f32 %v5343, %v5615
  %v5702 = vadd.f32 %v5344, %v5620
  %v5703 = vadd.f32 %v5345, %v5625
  %v5704 = vadd.f32 %v5346, %v5630
  %v5705 = vadd.f32 %v5347, %v5635
  %v5706 = vadd.f32 %v5348, %v5640
  %v5707 = vadd.f32 %v5349, %v5645
  %v5708 = vadd.f32 %v5350, %v5650
  %v5709 = vadd.f32 %v5351, %v5655
  %v5710 = vadd.f32 %v5352, %v5660
  %v5711 = vadd.f32 %v5353, %v5665
  %v5712 = vadd.f32 %v5354, %v5670
  %v5713 = vadd.f32 %v5355, %v5675
  %v5714 = vadd.f32 %v5356, %v5680
  %s5715 = scalar_lea.vmem %s39, 192
  %v5716 = vld [vmem:[%s5715] sm:$0xff]
  %v5717 = vld [vmem:[%s5715 + $0x8] sm:$0xff]
  %v5718 = vld [vmem:[%s5715 + $0x10] sm:$0xff]
  %v5719 = vld [vmem:[%s5715 + $0x18] sm:$0xff]
  %v5721 = vsel %vm359, %v3643, 0
  %v5724 = vsel %vm359, %v3644, 0
  %v5727 = vsel %vm359, %v3645, 0
  %v5730 = vsel %vm359, %v3646, 0
  %v5733 = vsel %vm359, %v3647, 0
  %v5736 = vsel %vm359, %v3648, 0
  %v5739 = vsel %vm359, %v3649, 0
  %v5742 = vsel %vm359, %v3650, 0
  %v5745 = vsel %vm359, %v3651, 0
  %v5748 = vsel %vm359, %v3652, 0
  %v5751 = vsel %vm359, %v3653, 0
  %v5754 = vsel %vm359, %v3654, 0
  %v5757 = vsel %vm359, %v3655, 0
  %v5760 = vsel %vm359, %v3656, 0
  %v5763 = vsel %vm359, %v3657, 0
  %v5766 = vsel %vm359, %v3658, 0
  %v5769 = vsel %vm359, %v3659, 0
  %v5772 = vsel %vm359, %v3660, 0
  %v5775 = vsel %vm359, %v3661, 0
  %v5778 = vsel %vm359, %v3662, 0
  %v5781 = vsel %vm359, %v3663, 0
  %v5784 = vsel %vm359, %v3664, 0
  %v5787 = vsel %vm359, %v3665, 0
  %v5790 = vsel %vm359, %v3666, 0
  %v5793 = vsel %vm359, %v3667, 0
  %v5796 = vsel %vm359, %v3668, 0
  %v5799 = vsel %vm359, %v3669, 0
  %v5802 = vsel %vm359, %v3670, 0
  %v5805 = vsel %vm359, %v3671, 0
  %v5808 = vsel %vm359, %v3672, 0
  %v5811 = vsel %vm359, %v3673, 0
  %v5814 = vsel %vm359, %v3674, 0
  %5816 = vmatprep.subr.mxu0 0.0
  %5817 = vmatpush1.msra.mxu0 %v5716
  %5818 = vmatprep.subr.mxu0 0.0
  %5819 = vmatpush1.msra.mxu0 %v5717
  %5820 = vmatprep.subr.mxu0 0.0
  %5821 = vmatpush1.msra.mxu0 %v5718
  %5822 = vmatprep.subr.mxu0 0.0
  %5823 = vmatpush1.msra.mxu0 %v5719
  %5824 = vmatprep.subr.mxu0 0.0
  %5825 = vmatpush1.msra.mxu0 0.0
  %5826 = vmatprep.subr.mxu0 0.0
  %5827 = vmatpush1.msra.mxu0 0.0
  %5828 = vmatprep.subr.mxu0 0.0
  %5829 = vmatpush1.msra.mxu0 0.0
  %5830 = vmatprep.subr.mxu0 0.0
  %5831 = vmatpush1.msra.mxu0 0.0
  %5832 = vmatprep.subr.mxu0 0.0
  %5833 = vmatpush1.msra.mxu0 0.0
  %5834 = vmatprep.subr.mxu0 0.0
  %5835 = vmatpush1.msra.mxu0 0.0
  %5836 = vmatprep.subr.mxu0 0.0
  %5837 = vmatpush1.msra.mxu0 0.0
  %5838 = vmatprep.subr.mxu0 0.0
  %5839 = vmatpush1.msra.mxu0 0.0
  %5840 = vmatprep.subr.mxu0 0.0
  %5841 = vmatpush1.msra.mxu0 0.0
  %5842 = vmatprep.subr.mxu0 0.0
  %5843 = vmatpush1.msra.mxu0 0.0
  %5844 = vmatprep.subr.mxu0 0.0
  %5845 = vmatpush1.msra.mxu0 0.0
  %5846 = vmatprep.subr.mxu0 0.0
  %5847 = vmatpush1.msra.mxu0 0.0
  %5848 = vmatprep.subr.mxu0 0.0
  %5849 = vmatpush1.msra.mxu0 0.0
  %5850 = vmatprep.subr.mxu0 0.0
  %5851 = vmatpush1.msra.mxu0 0.0
  %5852 = vmatprep.subr.mxu0 0.0
  %5853 = vmatpush1.msra.mxu0 0.0
  %5854 = vmatprep.subr.mxu0 0.0
  %5855 = vmatpush1.msra.mxu0 0.0
  %5856 = vmatprep.subr.mxu0 0.0
  %5857 = vmatpush1.msra.mxu0 0.0
  %5858 = vmatprep.subr.mxu0 0.0
  %5859 = vmatpush1.msra.mxu0 0.0
  %5860 = vmatprep.subr.mxu0 0.0
  %5861 = vmatpush1.msra.mxu0 0.0
  %5862 = vmatprep.subr.mxu0 0.0
  %5863 = vmatpush1.msra.mxu0 0.0
  %5864 = vmatprep.subr.mxu0 0.0
  %5865 = vmatpush1.msra.mxu0 0.0
  %5866 = vmatprep.subr.mxu0 0.0
  %5867 = vmatpush1.msra.mxu0 0.0
  %5868 = vmatprep.subr.mxu0 0.0
  %5869 = vmatpush1.msra.mxu0 0.0
  %5870 = vmatprep.subr.mxu0 0.0
  %5871 = vmatpush1.msra.mxu0 0.0
  %5872 = vmatprep.subr.mxu0 0.0
  %5873 = vmatpush1.msra.mxu0 0.0
  %5874 = vmatprep.subr.mxu0 0.0
  %5875 = vmatpush1.msra.mxu0 0.0
  %5876 = vmatprep.subr.mxu0 0.0
  %5877 = vmatpush1.msra.mxu0 0.0
  %5878 = vmatprep.subr.mxu0 0.0
  %5879 = vmatpush1.msra.mxu0 0.0
  %5880 = vmatprep.mubr.f32.mxu0 0.0
  %5881 = vmatmul.mubr.f32.gmra.mrb[0].mxu0 %v5721
  %v5882 = vpop.f32.mrb[0].mxu0
  %v5883 = vadd.f32 0.0, %v5882
  %v5884 = vpop.f32.mrb[0].mxu0
  %5885 = vmatprep.mubr.f32.mxu0 0.0
  %5886 = vmatmul.mubr.f32.gmra.mrb[0].mxu0 %v5724
  %v5887 = vpop.f32.mrb[0].mxu0
  %v5888 = vadd.f32 0.0, %v5887
  %v5889 = vpop.f32.mrb[0].mxu0
  %5890 = vmatprep.mubr.f32.mxu0 0.0
  %5891 = vmatmul.mubr.f32.gmra.mrb[0].mxu0 %v5727
  %v5892 = vpop.f32.mrb[0].mxu0
  %v5893 = vadd.f32 0.0, %v5892
  %v5894 = vpop.f32.mrb[0].mxu0
  %5895 = vmatprep.mubr.f32.mxu0 0.0
  %5896 = vmatmul.mubr.f32.gmra.mrb[0].mxu0 %v5730
  %v5897 = vpop.f32.mrb[0].mxu0
  %v5898 = vadd.f32 0.0, %v5897
  %v5899 = vpop.f32.mrb[0].mxu0
  %5900 = vmatprep.mubr.f32.mxu0 0.0
  %5901 = vmatmul.mubr.f32.gmra.mrb[0].mxu0 %v5733
  %v5902 = vpop.f32.mrb[0].mxu0
  %v5903 = vadd.f32 0.0, %v5902
  %v5904 = vpop.f32.mrb[0].mxu0
  %5905 = vmatprep.mubr.f32.mxu0 0.0
  %5906 = vmatmul.mubr.f32.gmra.mrb[0].mxu0 %v5736
  %v5907 = vpop.f32.mrb[0].mxu0
  %v5908 = vadd.f32 0.0, %v5907
  %v5909 = vpop.f32.mrb[0].mxu0
  %5910 = vmatprep.mubr.f32.mxu0 0.0
  %5911 = vmatmul.mubr.f32.gmra.mrb[0].mxu0 %v5739
  %v5912 = vpop.f32.mrb[0].mxu0
  %v5913 = vadd.f32 0.0, %v5912
  %v5914 = vpop.f32.mrb[0].mxu0
  %5915 = vmatprep.mubr.f32.mxu0 0.0
  %5916 = vmatmul.mubr.f32.gmra.mrb[0].mxu0 %v5742
  %v5917 = vpop.f32.mrb[0].mxu0
  %v5918 = vadd.f32 0.0, %v5917
  %v5919 = vpop.f32.mrb[0].mxu0
  %5920 = vmatprep.mubr.f32.mxu0 0.0
  %5921 = vmatmul.mubr.f32.gmra.mrb[0].mxu0 %v5745
  %v5922 = vpop.f32.mrb[0].mxu0
  %v5923 = vadd.f32 0.0, %v5922
  %v5924 = vpop.f32.mrb[0].mxu0
  %5925 = vmatprep.mubr.f32.mxu0 0.0
  %5926 = vmatmul.mubr.f32.gmra.mrb[0].mxu0 %v5748
  %v5927 = vpop.f32.mrb[0].mxu0
  %v5928 = vadd.f32 0.0, %v5927
  %v5929 = vpop.f32.mrb[0].mxu0
  %5930 = vmatprep.mubr.f32.mxu0 0.0
  %5931 = vmatmul.mubr.f32.gmra.mrb[0].mxu0 %v5751
  %v5932 = vpop.f32.mrb[0].mxu0
  %v5933 = vadd.f32 0.0, %v5932
  %v5934 = vpop.f32.mrb[0].mxu0
  %5935 = vmatprep.mubr.f32.mxu0 0.0
  %5936 = vmatmul.mubr.f32.gmra.mrb[0].mxu0 %v5754
  %v5937 = vpop.f32.mrb[0].mxu0
  %v5938 = vadd.f32 0.0, %v5937
  %v5939 = vpop.f32.mrb[0].mxu0
  %5940 = vmatprep.mubr.f32.mxu0 0.0
  %5941 = vmatmul.mubr.f32.gmra.mrb[0].mxu0 %v5757
  %v5942 = vpop.f32.mrb[0].mxu0
  %v5943 = vadd.f32 0.0, %v5942
  %v5944 = vpop.f32.mrb[0].mxu0
  %5945 = vmatprep.mubr.f32.mxu0 0.0
  %5946 = vmatmul.mubr.f32.gmra.mrb[0].mxu0 %v5760
  %v5947 = vpop.f32.mrb[0].mxu0
  %v5948 = vadd.f32 0.0, %v5947
  %v5949 = vpop.f32.mrb[0].mxu0
  %5950 = vmatprep.mubr.f32.mxu0 0.0
  %5951 = vmatmul.mubr.f32.gmra.mrb[0].mxu0 %v5763
  %v5952 = vpop.f32.mrb[0].mxu0
  %v5953 = vadd.f32 0.0, %v5952
  %v5954 = vpop.f32.mrb[0].mxu0
  %5955 = vmatprep.mubr.f32.mxu0 0.0
  %5956 = vmatmul.mubr.f32.gmra.mrb[0].mxu0 %v5766
  %v5957 = vpop.f32.mrb[0].mxu0
  %v5958 = vadd.f32 0.0, %v5957
  %v5959 = vpop.f32.mrb[0].mxu0
  %5960 = vmatprep.mubr.f32.mxu0 0.0
  %5961 = vmatmul.mubr.f32.gmra.mrb[0].mxu0 %v5769
  %v5962 = vpop.f32.mrb[0].mxu0
  %v5963 = vadd.f32 0.0, %v5962
  %v5964 = vpop.f32.mrb[0].mxu0
  %5965 = vmatprep.mubr.f32.mxu0 0.0
  %5966 = vmatmul.mubr.f32.gmra.mrb[0].mxu0 %v5772
  %v5967 = vpop.f32.mrb[0].mxu0
  %v5968 = vadd.f32 0.0, %v5967
  %v5969 = vpop.f32.mrb[0].mxu0
  %5970 = vmatprep.mubr.f32.mxu0 0.0
  %5971 = vmatmul.mubr.f32.gmra.mrb[0].mxu0 %v5775
  %v5972 = vpop.f32.mrb[0].mxu0
  %v5973 = vadd.f32 0.0, %v5972
  %v5974 = vpop.f32.mrb[0].mxu0
  %5975 = vmatprep.mubr.f32.mxu0 0.0
  %5976 = vmatmul.mubr.f32.gmra.mrb[0].mxu0 %v5778
  %v5977 = vpop.f32.mrb[0].mxu0
  %v5978 = vadd.f32 0.0, %v5977
  %v5979 = vpop.f32.mrb[0].mxu0
  %5980 = vmatprep.mubr.f32.mxu0 0.0
  %5981 = vmatmul.mubr.f32.gmra.mrb[0].mxu0 %v5781
  %v5982 = vpop.f32.mrb[0].mxu0
  %v5983 = vadd.f32 0.0, %v5982
  %v5984 = vpop.f32.mrb[0].mxu0
  %5985 = vmatprep.mubr.f32.mxu0 0.0
  %5986 = vmatmul.mubr.f32.gmra.mrb[0].mxu0 %v5784
  %v5987 = vpop.f32.mrb[0].mxu0
  %v5988 = vadd.f32 0.0, %v5987
  %v5989 = vpop.f32.mrb[0].mxu0
  %5990 = vmatprep.mubr.f32.mxu0 0.0
  %5991 = vmatmul.mubr.f32.gmra.mrb[0].mxu0 %v5787
  %v5992 = vpop.f32.mrb[0].mxu0
  %v5993 = vadd.f32 0.0, %v5992
  %v5994 = vpop.f32.mrb[0].mxu0
  %5995 = vmatprep.mubr.f32.mxu0 0.0
  %5996 = vmatmul.mubr.f32.gmra.mrb[0].mxu0 %v5790
  %v5997 = vpop.f32.mrb[0].mxu0
  %v5998 = vadd.f32 0.0, %v5997
  %v5999 = vpop.f32.mrb[0].mxu0
  %6000 = vmatprep.mubr.f32.mxu0 0.0
  %6001 = vmatmul.mubr.f32.gmra.mrb[0].mxu0 %v5793
  %v6002 = vpop.f32.mrb[0].mxu0
  %v6003 = vadd.f32 0.0, %v6002
  %v6004 = vpop.f32.mrb[0].mxu0
  %6005 = vmatprep.mubr.f32.mxu0 0.0
  %6006 = vmatmul.mubr.f32.gmra.mrb[0].mxu0 %v5796
  %v6007 = vpop.f32.mrb[0].mxu0
  %v6008 = vadd.f32 0.0, %v6007
  %v6009 = vpop.f32.mrb[0].mxu0
  %6010 = vmatprep.mubr.f32.mxu0 0.0
  %6011 = vmatmul.mubr.f32.gmra.mrb[0].mxu0 %v5799
  %v6012 = vpop.f32.mrb[0].mxu0
  %v6013 = vadd.f32 0.0, %v6012
  %v6014 = vpop.f32.mrb[0].mxu0
  %6015 = vmatprep.mubr.f32.mxu0 0.0
  %6016 = vmatmul.mubr.f32.gmra.mrb[0].mxu0 %v5802
  %v6017 = vpop.f32.mrb[0].mxu0
  %v6018 = vadd.f32 0.0, %v6017
  %v6019 = vpop.f32.mrb[0].mxu0
  %6020 = vmatprep.mubr.f32.mxu0 0.0
  %6021 = vmatmul.mubr.f32.gmra.mrb[0].mxu0 %v5805
  %v6022 = vpop.f32.mrb[0].mxu0
  %v6023 = vadd.f32 0.0, %v6022
  %v6024 = vpop.f32.mrb[0].mxu0
  %6025 = vmatprep.mubr.f32.mxu0 0.0
  %6026 = vmatmul.mubr.f32.gmra.mrb[0].mxu0 %v5808
  %v6027 = vpop.f32.mrb[0].mxu0
  %v6028 = vadd.f32 0.0, %v6027
  %v6029 = vpop.f32.mrb[0].mxu0
  %6030 = vmatprep.mubr.f32.mxu0 0.0
  %6031 = vmatmul.mubr.f32.gmra.mrb[0].mxu0 %v5811
  %v6032 = vpop.f32.mrb[0].mxu0
  %v6033 = vadd.f32 0.0, %v6032
  %v6034 = vpop.f32.mrb[0].mxu0
  %6035 = vmatprep.mubr.f32.mxu0 0.0
  %6036 = vmatmul.mubr.f32.gmra.mrb[0].mxu0 %v5814
  %v6037 = vpop.f32.mrb[0].mxu0
  %v6038 = vadd.f32 0.0, %v6037
  %v6039 = vpop.f32.mrb[0].mxu0
  %6040 = vdwg.mxu0
  %v6041 = vadd.f32 %v5683, %v5883
  %v6042 = vadd.f32 %v5684, %v5888
  %v6043 = vadd.f32 %v5685, %v5893
  %v6044 = vadd.f32 %v5686, %v5898
  %v6045 = vadd.f32 %v5687, %v5903
  %v6046 = vadd.f32 %v5688, %v5908
  %v6047 = vadd.f32 %v5689, %v5913
  %v6048 = vadd.f32 %v5690, %v5918
  %v6049 = vadd.f32 %v5691, %v5923
  %v6050 = vadd.f32 %v5692, %v5928
  %v6051 = vadd.f32 %v5693, %v5933
  %v6052 = vadd.f32 %v5694, %v5938
  %v6053 = vadd.f32 %v5695, %v5943
  %v6054 = vadd.f32 %v5696, %v5948
  %v6055 = vadd.f32 %v5697, %v5953
  %v6056 = vadd.f32 %v5698, %v5958
  %v6057 = vadd.f32 %v5699, %v5963
  %v6058 = vadd.f32 %v5700, %v5968
  %v6059 = vadd.f32 %v5701, %v5973
  %v6060 = vadd.f32 %v5702, %v5978
  %v6061 = vadd.f32 %v5703, %v5983
  %v6062 = vadd.f32 %v5704, %v5988
  %v6063 = vadd.f32 %v5705, %v5993
  %v6064 = vadd.f32 %v5706, %v5998
  %v6065 = vadd.f32 %v5707, %v6003
  %v6066 = vadd.f32 %v5708, %v6008
  %v6067 = vadd.f32 %v5709, %v6013
  %v6068 = vadd.f32 %v5710, %v6018
  %v6069 = vadd.f32 %v5711, %v6023
  %v6070 = vadd.f32 %v5712, %v6028
  %v6071 = vadd.f32 %v5713, %v6033
  %v6072 = vadd.f32 %v5714, %v6038
  %s6073 = scalar_lea.vmem %s39, 224
  %v6074 = vld [vmem:[%s6073] sm:$0xff]
  %v6075 = vld [vmem:[%s6073 + $0x8] sm:$0xff]
  %v6076 = vld [vmem:[%s6073 + $0x10] sm:$0xff]
  %v6077 = vld [vmem:[%s6073 + $0x18] sm:$0xff]
  %v6079 = vsel %vm359, %v3630, 0
  %v6082 = vsel %vm359, %v3631, 0
  %v6085 = vsel %vm359, %v3632, 0
  %v6088 = vsel %vm359, %v3633, 0
  %6090 = vmatprep.subr.mxu0 0.0
  %6091 = vmatpush1.msra.mxu0 %v6074
  %6092 = vmatprep.subr.mxu0 0.0
  %6093 = vmatpush1.msra.mxu0 %v6075
  %6094 = vmatprep.subr.mxu0 0.0
  %6095 = vmatpush1.msra.mxu0 %v6076
  %6096 = vmatprep.subr.mxu0 0.0
  %6097 = vmatpush1.msra.mxu0 %v6077
  %6098 = vmatprep.subr.mxu0 0.0
  %6099 = vmatpush1.msra.mxu0 0.0
  %6100 = vmatprep.subr.mxu0 0.0
  %6101 = vmatpush1.msra.mxu0 0.0
  %6102 = vmatprep.subr.mxu0 0.0
  %6103 = vmatpush1.msra.mxu0 0.0
  %6104 = vmatprep.subr.mxu0 0.0
  %6105 = vmatpush1.msra.mxu0 0.0
  %6106 = vmatprep.subr.mxu0 0.0
  %6107 = vmatpush1.msra.mxu0 0.0
  %6108 = vmatprep.subr.mxu0 0.0
  %6109 = vmatpush1.msra.mxu0 0.0
  %6110 = vmatprep.subr.mxu0 0.0
  %6111 = vmatpush1.msra.mxu0 0.0
  %6112 = vmatprep.subr.mxu0 0.0
  %6113 = vmatpush1.msra.mxu0 0.0
  %6114 = vmatprep.subr.mxu0 0.0
  %6115 = vmatpush1.msra.mxu0 0.0
  %6116 = vmatprep.subr.mxu0 0.0
  %6117 = vmatpush1.msra.mxu0 0.0
  %6118 = vmatprep.subr.mxu0 0.0
  %6119 = vmatpush1.msra.mxu0 0.0
  %6120 = vmatprep.subr.mxu0 0.0
  %6121 = vmatpush1.msra.mxu0 0.0
  %6122 = vmatprep.subr.mxu0 0.0
  %6123 = vmatpush1.msra.mxu0 0.0
  %6124 = vmatprep.subr.mxu0 0.0
  %6125 = vmatpush1.msra.mxu0 0.0
  %6126 = vmatprep.subr.mxu0 0.0
  %6127 = vmatpush1.msra.mxu0 0.0
  %6128 = vmatprep.subr.mxu0 0.0
  %6129 = vmatpush1.msra.mxu0 0.0
  %6130 = vmatprep.subr.mxu0 0.0
  %6131 = vmatpush1.msra.mxu0 0.0
  %6132 = vmatprep.subr.mxu0 0.0
  %6133 = vmatpush1.msra.mxu0 0.0
  %6134 = vmatprep.subr.mxu0 0.0
  %6135 = vmatpush1.msra.mxu0 0.0
  %6136 = vmatprep.subr.mxu0 0.0
  %6137 = vmatpush1.msra.mxu0 0.0
  %6138 = vmatprep.subr.mxu0 0.0
  %6139 = vmatpush1.msra.mxu0 0.0
  %6140 = vmatprep.subr.mxu0 0.0
  %6141 = vmatpush1.msra.mxu0 0.0
  %6142 = vmatprep.subr.mxu0 0.0
  %6143 = vmatpush1.msra.mxu0 0.0
  %6144 = vmatprep.subr.mxu0 0.0
  %6145 = vmatpush1.msra.mxu0 0.0
  %6146 = vmatprep.subr.mxu0 0.0
  %6147 = vmatpush1.msra.mxu0 0.0
  %6148 = vmatprep.subr.mxu0 0.0
  %6149 = vmatpush1.msra.mxu0 0.0
  %6150 = vmatprep.subr.mxu0 0.0
  %6151 = vmatpush1.msra.mxu0 0.0
  %6152 = vmatprep.subr.mxu0 0.0
  %6153 = vmatpush1.msra.mxu0 0.0
  %6154 = vmatprep.mubr.f32.mxu0 0.0
  %6155 = vmatmul.mubr.f32.gmra.mrb[0].mxu0 %v3750
  %v6156 = vpop.f32.mrb[0].mxu0
  %v6157 = vadd.f32 0.0, %v6156
  %v6158 = vpop.f32.mrb[0].mxu0
  %6159 = vmatprep.mubr.f32.mxu0 0.0
  %6160 = vmatmul.mubr.f32.gmra.mrb[0].mxu0 %v3753
  %v6161 = vpop.f32.mrb[0].mxu0
  %v6162 = vadd.f32 0.0, %v6161
  %v6163 = vpop.f32.mrb[0].mxu0
  %6164 = vmatprep.mubr.f32.mxu0 0.0
  %6165 = vmatmul.mubr.f32.gmra.mrb[0].mxu0 %v3756
  %v6166 = vpop.f32.mrb[0].mxu0
  %v6167 = vadd.f32 0.0, %v6166
  %v6168 = vpop.f32.mrb[0].mxu0
  %6169 = vmatprep.mubr.f32.mxu0 0.0
  %6170 = vmatmul.mubr.f32.gmra.mrb[0].mxu0 %v3759
  %v6171 = vpop.f32.mrb[0].mxu0
  %v6172 = vadd.f32 0.0, %v6171
  %v6173 = vpop.f32.mrb[0].mxu0
  %6174 = vmatprep.mubr.f32.mxu0 0.0
  %6175 = vmatmul.mubr.f32.gmra.mrb[0].mxu0 %v3762
  %v6176 = vpop.f32.mrb[0].mxu0
  %v6177 = vadd.f32 0.0, %v6176
  %v6178 = vpop.f32.mrb[0].mxu0
  %6179 = vmatprep.mubr.f32.mxu0 0.0
  %6180 = vmatmul.mubr.f32.gmra.mrb[0].mxu0 %v3765
  %v6181 = vpop.f32.mrb[0].mxu0
  %v6182 = vadd.f32 0.0, %v6181
  %v6183 = vpop.f32.mrb[0].mxu0
  %6184 = vmatprep.mubr.f32.mxu0 0.0
  %6185 = vmatmul.mubr.f32.gmra.mrb[0].mxu0 %v3768
  %v6186 = vpop.f32.mrb[0].mxu0
  %v6187 = vadd.f32 0.0, %v6186
  %v6188 = vpop.f32.mrb[0].mxu0
  %6189 = vmatprep.mubr.f32.mxu0 0.0
  %6190 = vmatmul.mubr.f32.gmra.mrb[0].mxu0 %v3771
  %v6191 = vpop.f32.mrb[0].mxu0
  %v6192 = vadd.f32 0.0, %v6191
  %v6193 = vpop.f32.mrb[0].mxu0
  %6194 = vmatprep.mubr.f32.mxu0 0.0
  %6195 = vmatmul.mubr.f32.gmra.mrb[0].mxu0 %v3774
  %v6196 = vpop.f32.mrb[0].mxu0
  %v6197 = vadd.f32 0.0, %v6196
  %v6198 = vpop.f32.mrb[0].mxu0
  %6199 = vmatprep.mubr.f32.mxu0 0.0
  %6200 = vmatmul.mubr.f32.gmra.mrb[0].mxu0 %v3777
  %v6201 = vpop.f32.mrb[0].mxu0
  %v6202 = vadd.f32 0.0, %v6201
  %v6203 = vpop.f32.mrb[0].mxu0
  %6204 = vmatprep.mubr.f32.mxu0 0.0
  %6205 = vmatmul.mubr.f32.gmra.mrb[0].mxu0 %v3780
  %v6206 = vpop.f32.mrb[0].mxu0
  %v6207 = vadd.f32 0.0, %v6206
  %v6208 = vpop.f32.mrb[0].mxu0
  %6209 = vmatprep.mubr.f32.mxu0 0.0
  %6210 = vmatmul.mubr.f32.gmra.mrb[0].mxu0 %v3783
  %v6211 = vpop.f32.mrb[0].mxu0
  %v6212 = vadd.f32 0.0, %v6211
  %v6213 = vpop.f32.mrb[0].mxu0
  %6214 = vmatprep.mubr.f32.mxu0 0.0
  %6215 = vmatmul.mubr.f32.gmra.mrb[0].mxu0 %v3786
  %v6216 = vpop.f32.mrb[0].mxu0
  %v6217 = vadd.f32 0.0, %v6216
  %v6218 = vpop.f32.mrb[0].mxu0
  %6219 = vmatprep.mubr.f32.mxu0 0.0
  %6220 = vmatmul.mubr.f32.gmra.mrb[0].mxu0 %v3789
  %v6221 = vpop.f32.mrb[0].mxu0
  %v6222 = vadd.f32 0.0, %v6221
  %v6223 = vpop.f32.mrb[0].mxu0
  %6224 = vmatprep.mubr.f32.mxu0 0.0
  %6225 = vmatmul.mubr.f32.gmra.mrb[0].mxu0 %v3792
  %v6226 = vpop.f32.mrb[0].mxu0
  %v6227 = vadd.f32 0.0, %v6226
  %v6228 = vpop.f32.mrb[0].mxu0
  %6229 = vmatprep.mubr.f32.mxu0 0.0
  %6230 = vmatmul.mubr.f32.gmra.mrb[0].mxu0 %v3795
  %v6231 = vpop.f32.mrb[0].mxu0
  %v6232 = vadd.f32 0.0, %v6231
  %v6233 = vpop.f32.mrb[0].mxu0
  %6234 = vmatprep.mubr.f32.mxu0 0.0
  %6235 = vmatmul.mubr.f32.gmra.mrb[0].mxu0 %v3798
  %v6236 = vpop.f32.mrb[0].mxu0
  %v6237 = vadd.f32 0.0, %v6236
  %v6238 = vpop.f32.mrb[0].mxu0
  %6239 = vmatprep.mubr.f32.mxu0 0.0
  %6240 = vmatmul.mubr.f32.gmra.mrb[0].mxu0 %v3801
  %v6241 = vpop.f32.mrb[0].mxu0
  %v6242 = vadd.f32 0.0, %v6241
  %v6243 = vpop.f32.mrb[0].mxu0
  %6244 = vmatprep.mubr.f32.mxu0 0.0
  %6245 = vmatmul.mubr.f32.gmra.mrb[0].mxu0 %v3804
  %v6246 = vpop.f32.mrb[0].mxu0
  %v6247 = vadd.f32 0.0, %v6246
  %v6248 = vpop.f32.mrb[0].mxu0
  %6249 = vmatprep.mubr.f32.mxu0 0.0
  %6250 = vmatmul.mubr.f32.gmra.mrb[0].mxu0 %v3807
  %v6251 = vpop.f32.mrb[0].mxu0
  %v6252 = vadd.f32 0.0, %v6251
  %v6253 = vpop.f32.mrb[0].mxu0
  %6254 = vmatprep.mubr.f32.mxu0 0.0
  %6255 = vmatmul.mubr.f32.gmra.mrb[0].mxu0 %v3810
  %v6256 = vpop.f32.mrb[0].mxu0
  %v6257 = vadd.f32 0.0, %v6256
  %v6258 = vpop.f32.mrb[0].mxu0
  %6259 = vmatprep.mubr.f32.mxu0 0.0
  %6260 = vmatmul.mubr.f32.gmra.mrb[0].mxu0 %v3813
  %v6261 = vpop.f32.mrb[0].mxu0
  %v6262 = vadd.f32 0.0, %v6261
  %v6263 = vpop.f32.mrb[0].mxu0
  %6264 = vmatprep.mubr.f32.mxu0 0.0
  %6265 = vmatmul.mubr.f32.gmra.mrb[0].mxu0 %v3816
  %v6266 = vpop.f32.mrb[0].mxu0
  %v6267 = vadd.f32 0.0, %v6266
  %v6268 = vpop.f32.mrb[0].mxu0
  %6269 = vmatprep.mubr.f32.mxu0 0.0
  %6270 = vmatmul.mubr.f32.gmra.mrb[0].mxu0 %v3819
  %v6271 = vpop.f32.mrb[0].mxu0
  %v6272 = vadd.f32 0.0, %v6271
  %v6273 = vpop.f32.mrb[0].mxu0
  %6274 = vmatprep.mubr.f32.mxu0 0.0
  %6275 = vmatmul.mubr.f32.gmra.mrb[0].mxu0 %v5089
  %v6276 = vpop.f32.mrb[0].mxu0
  %v6277 = vadd.f32 0.0, %v6276
  %v6278 = vpop.f32.mrb[0].mxu0
  %6279 = vmatprep.mubr.f32.mxu0 0.0
  %6280 = vmatmul.mubr.f32.gmra.mrb[0].mxu0 %v5092
  %v6281 = vpop.f32.mrb[0].mxu0
  %v6282 = vadd.f32 0.0, %v6281
  %v6283 = vpop.f32.mrb[0].mxu0
  %6284 = vmatprep.mubr.f32.mxu0 0.0
  %6285 = vmatmul.mubr.f32.gmra.mrb[0].mxu0 %v5095
  %v6286 = vpop.f32.mrb[0].mxu0
  %v6287 = vadd.f32 0.0, %v6286
  %v6288 = vpop.f32.mrb[0].mxu0
  %6289 = vmatprep.mubr.f32.mxu0 0.0
  %6290 = vmatmul.mubr.f32.gmra.mrb[0].mxu0 %v5098
  %v6291 = vpop.f32.mrb[0].mxu0
  %v6292 = vadd.f32 0.0, %v6291
  %v6293 = vpop.f32.mrb[0].mxu0
  %6294 = vmatprep.mubr.f32.mxu0 0.0
  %6295 = vmatmul.mubr.f32.gmra.mrb[0].mxu0 %v6079
  %v6296 = vpop.f32.mrb[0].mxu0
  %v6297 = vadd.f32 0.0, %v6296
  %v6298 = vpop.f32.mrb[0].mxu0
  %6299 = vmatprep.mubr.f32.mxu0 0.0
  %6300 = vmatmul.mubr.f32.gmra.mrb[0].mxu0 %v6082
  %v6301 = vpop.f32.mrb[0].mxu0
  %v6302 = vadd.f32 0.0, %v6301
  %v6303 = vpop.f32.mrb[0].mxu0
  %6304 = vmatprep.mubr.f32.mxu0 0.0
  %6305 = vmatmul.mubr.f32.gmra.mrb[0].mxu0 %v6085
  %v6306 = vpop.f32.mrb[0].mxu0
  %v6307 = vadd.f32 0.0, %v6306
  %v6308 = vpop.f32.mrb[0].mxu0
  %6309 = vmatprep.mubr.f32.mxu0 0.0
  %6310 = vmatmul.mubr.f32.gmra.mrb[0].mxu0 %v6088
  %v6311 = vpop.f32.mrb[0].mxu0
  %v6312 = vadd.f32 0.0, %v6311
  %v6313 = vpop.f32.mrb[0].mxu0
  %6314 = vdwg.mxu0
  %v6315 = vadd.f32 %v6041, %v6157
  %v6316 = vadd.f32 %v6042, %v6162
  %v6317 = vadd.f32 %v6043, %v6167
  %v6318 = vadd.f32 %v6044, %v6172
  %v6319 = vadd.f32 %v6045, %v6177
  %v6320 = vadd.f32 %v6046, %v6182
  %v6321 = vadd.f32 %v6047, %v6187
  %v6322 = vadd.f32 %v6048, %v6192
  %v6323 = vadd.f32 %v6049, %v6197
  %v6324 = vadd.f32 %v6050, %v6202
  %v6325 = vadd.f32 %v6051, %v6207
  %v6326 = vadd.f32 %v6052, %v6212
  %v6327 = vadd.f32 %v6053, %v6217
  %v6328 = vadd.f32 %v6054, %v6222
  %v6329 = vadd.f32 %v6055, %v6227
  %v6330 = vadd.f32 %v6056, %v6232
  %v6331 = vadd.f32 %v6057, %v6237
  %v6332 = vadd.f32 %v6058, %v6242
  %v6333 = vadd.f32 %v6059, %v6247
  %v6334 = vadd.f32 %v6060, %v6252
  %v6335 = vadd.f32 %v6061, %v6257
  %v6336 = vadd.f32 %v6062, %v6262
  %v6337 = vadd.f32 %v6063, %v6267
  %v6338 = vadd.f32 %v6064, %v6272
  %v6339 = vadd.f32 %v6065, %v6277
  %v6340 = vadd.f32 %v6066, %v6282
  %v6341 = vadd.f32 %v6067, %v6287
  %v6342 = vadd.f32 %v6068, %v6292
  %v6343 = vadd.f32 %v6069, %v6297
  %v6344 = vadd.f32 %v6070, %v6302
  %v6345 = vadd.f32 %v6071, %v6307
  %v6346 = vadd.f32 %v6072, %v6312
  %s6347 = scalar_lea.vmem %s39, 256
  %v6348 = vld [vmem:[%s6347] sm:$0xff]
  %v6349 = vld [vmem:[%s6347 + $0x8] sm:$0xff]
  %v6350 = vld [vmem:[%s6347 + $0x10] sm:$0xff]
  %v6351 = vld [vmem:[%s6347 + $0x18] sm:$0xff]
  %v6353 = vsel %vm359, %v3684, 0
  %v6356 = vsel %vm359, %v3685, 0
  %v6359 = vsel %vm359, %v3686, 0
  %v6362 = vsel %vm359, %v3687, 0
  %v6365 = vsel %vm359, %v3688, 0
  %v6368 = vsel %vm359, %v3689, 0
  %v6371 = vsel %vm359, %v3690, 0
  %v6374 = vsel %vm359, %v3691, 0
  %v6377 = vsel %vm359, %v3692, 0
  %v6380 = vsel %vm359, %v3693, 0
  %v6383 = vsel %vm359, %v3694, 0
  %v6386 = vsel %vm359, %v3695, 0
  %v6389 = vsel %vm359, %v3696, 0
  %v6392 = vsel %vm359, %v3697, 0
  %v6395 = vsel %vm359, %v3698, 0
  %v6398 = vsel %vm359, %v3699, 0
  %v6401 = vsel %vm359, %v3700, 0
  %v6404 = vsel %vm359, %v3701, 0
  %v6407 = vsel %vm359, %v3702, 0
  %v6410 = vsel %vm359, %v3703, 0
  %v6413 = vsel %vm359, %v3704, 0
  %v6416 = vsel %vm359, %v3705, 0
  %v6419 = vsel %vm359, %v3706, 0
  %v6422 = vsel %vm359, %v3707, 0
  %v6425 = vsel %vm359, %v3708, 0
  %v6428 = vsel %vm359, %v3709, 0
  %v6431 = vsel %vm359, %v3710, 0
  %v6434 = vsel %vm359, %v3711, 0
  %v6437 = vsel %vm359, %v3712, 0
  %v6440 = vsel %vm359, %v3713, 0
  %v6443 = vsel %vm359, %v3714, 0
  %v6446 = vsel %vm359, %v3715, 0
  %6448 = vmatprep.subr.mxu0 0.0
  %6449 = vmatpush1.msra.mxu0 %v6348
  %6450 = vmatprep.subr.mxu0 0.0
  %6451 = vmatpush1.msra.mxu0 %v6349
  %6452 = vmatprep.subr.mxu0 0.0
  %6453 = vmatpush1.msra.mxu0 %v6350
  %6454 = vmatprep.subr.mxu0 0.0
  %6455 = vmatpush1.msra.mxu0 %v6351
  %6456 = vmatprep.subr.mxu0 0.0
  %6457 = vmatpush1.msra.mxu0 0.0
  %6458 = vmatprep.subr.mxu0 0.0
  %6459 = vmatpush1.msra.mxu0 0.0
  %6460 = vmatprep.subr.mxu0 0.0
  %6461 = vmatpush1.msra.mxu0 0.0
  %6462 = vmatprep.subr.mxu0 0.0
  %6463 = vmatpush1.msra.mxu0 0.0
  %6464 = vmatprep.subr.mxu0 0.0
  %6465 = vmatpush1.msra.mxu0 0.0
  %6466 = vmatprep.subr.mxu0 0.0
  %6467 = vmatpush1.msra.mxu0 0.0
  %6468 = vmatprep.subr.mxu0 0.0
  %6469 = vmatpush1.msra.mxu0 0.0
  %6470 = vmatprep.subr.mxu0 0.0
  %6471 = vmatpush1.msra.mxu0 0.0
  %6472 = vmatprep.subr.mxu0 0.0
  %6473 = vmatpush1.msra.mxu0 0.0
  %6474 = vmatprep.subr.mxu0 0.0
  %6475 = vmatpush1.msra.mxu0 0.0
  %6476 = vmatprep.subr.mxu0 0.0
  %6477 = vmatpush1.msra.mxu0 0.0
  %6478 = vmatprep.subr.mxu0 0.0
  %6479 = vmatpush1.msra.mxu0 0.0
  %6480 = vmatprep.subr.mxu0 0.0
  %6481 = vmatpush1.msra.mxu0 0.0
  %6482 = vmatprep.subr.mxu0 0.0
  %6483 = vmatpush1.msra.mxu0 0.0
  %6484 = vmatprep.subr.mxu0 0.0
  %6485 = vmatpush1.msra.mxu0 0.0
  %6486 = vmatprep.subr.mxu0 0.0
  %6487 = vmatpush1.msra.mxu0 0.0
  %6488 = vmatprep.subr.mxu0 0.0
  %6489 = vmatpush1.msra.mxu0 0.0
  %6490 = vmatprep.subr.mxu0 0.0
  %6491 = vmatpush1.msra.mxu0 0.0
  %6492 = vmatprep.subr.mxu0 0.0
  %6493 = vmatpush1.msra.mxu0 0.0
  %6494 = vmatprep.subr.mxu0 0.0
  %6495 = vmatpush1.msra.mxu0 0.0
  %6496 = vmatprep.subr.mxu0 0.0
  %6497 = vmatpush1.msra.mxu0 0.0
  %6498 = vmatprep.subr.mxu0 0.0
  %6499 = vmatpush1.msra.mxu0 0.0
  %6500 = vmatprep.subr.mxu0 0.0
  %6501 = vmatpush1.msra.mxu0 0.0
  %6502 = vmatprep.subr.mxu0 0.0
  %6503 = vmatpush1.msra.mxu0 0.0
  %6504 = vmatprep.subr.mxu0 0.0
  %6505 = vmatpush1.msra.mxu0 0.0
  %6506 = vmatprep.subr.mxu0 0.0
  %6507 = vmatpush1.msra.mxu0 0.0
  %6508 = vmatprep.subr.mxu0 0.0
  %6509 = vmatpush1.msra.mxu0 0.0
  %6510 = vmatprep.subr.mxu0 0.0
  %6511 = vmatpush1.msra.mxu0 0.0
  %6512 = vmatprep.mubr.f32.mxu0 0.0
  %6513 = vmatmul.mubr.f32.gmra.mrb[0].mxu0 %v6353
  %v6514 = vpop.f32.mrb[0].mxu0
  %v6515 = vadd.f32 0.0, %v6514
  %v6516 = vpop.f32.mrb[0].mxu0
  %6517 = vmatprep.mubr.f32.mxu0 0.0
  %6518 = vmatmul.mubr.f32.gmra.mrb[0].mxu0 %v6356
  %v6519 = vpop.f32.mrb[0].mxu0
  %v6520 = vadd.f32 0.0, %v6519
  %v6521 = vpop.f32.mrb[0].mxu0
  %6522 = vmatprep.mubr.f32.mxu0 0.0
  %6523 = vmatmul.mubr.f32.gmra.mrb[0].mxu0 %v6359
  %v6524 = vpop.f32.mrb[0].mxu0
  %v6525 = vadd.f32 0.0, %v6524
  %v6526 = vpop.f32.mrb[0].mxu0
  %6527 = vmatprep.mubr.f32.mxu0 0.0
  %6528 = vmatmul.mubr.f32.gmra.mrb[0].mxu0 %v6362
  %v6529 = vpop.f32.mrb[0].mxu0
  %v6530 = vadd.f32 0.0, %v6529
  %v6531 = vpop.f32.mrb[0].mxu0
  %6532 = vmatprep.mubr.f32.mxu0 0.0
  %6533 = vmatmul.mubr.f32.gmra.mrb[0].mxu0 %v6365
  %v6534 = vpop.f32.mrb[0].mxu0
  %v6535 = vadd.f32 0.0, %v6534
  %v6536 = vpop.f32.mrb[0].mxu0
  %6537 = vmatprep.mubr.f32.mxu0 0.0
  %6538 = vmatmul.mubr.f32.gmra.mrb[0].mxu0 %v6368
  %v6539 = vpop.f32.mrb[0].mxu0
  %v6540 = vadd.f32 0.0, %v6539
  %v6541 = vpop.f32.mrb[0].mxu0
  %6542 = vmatprep.mubr.f32.mxu0 0.0
  %6543 = vmatmul.mubr.f32.gmra.mrb[0].mxu0 %v6371
  %v6544 = vpop.f32.mrb[0].mxu0
  %v6545 = vadd.f32 0.0, %v6544
  %v6546 = vpop.f32.mrb[0].mxu0
  %6547 = vmatprep.mubr.f32.mxu0 0.0
  %6548 = vmatmul.mubr.f32.gmra.mrb[0].mxu0 %v6374
  %v6549 = vpop.f32.mrb[0].mxu0
  %v6550 = vadd.f32 0.0, %v6549
  %v6551 = vpop.f32.mrb[0].mxu0
  %6552 = vmatprep.mubr.f32.mxu0 0.0
  %6553 = vmatmul.mubr.f32.gmra.mrb[0].mxu0 %v6377
  %v6554 = vpop.f32.mrb[0].mxu0
  %v6555 = vadd.f32 0.0, %v6554
  %v6556 = vpop.f32.mrb[0].mxu0
  %6557 = vmatprep.mubr.f32.mxu0 0.0
  %6558 = vmatmul.mubr.f32.gmra.mrb[0].mxu0 %v6380
  %v6559 = vpop.f32.mrb[0].mxu0
  %v6560 = vadd.f32 0.0, %v6559
  %v6561 = vpop.f32.mrb[0].mxu0
  %6562 = vmatprep.mubr.f32.mxu0 0.0
  %6563 = vmatmul.mubr.f32.gmra.mrb[0].mxu0 %v6383
  %v6564 = vpop.f32.mrb[0].mxu0
  %v6565 = vadd.f32 0.0, %v6564
  %v6566 = vpop.f32.mrb[0].mxu0
  %6567 = vmatprep.mubr.f32.mxu0 0.0
  %6568 = vmatmul.mubr.f32.gmra.mrb[0].mxu0 %v6386
  %v6569 = vpop.f32.mrb[0].mxu0
  %v6570 = vadd.f32 0.0, %v6569
  %v6571 = vpop.f32.mrb[0].mxu0
  %6572 = vmatprep.mubr.f32.mxu0 0.0
  %6573 = vmatmul.mubr.f32.gmra.mrb[0].mxu0 %v6389
  %v6574 = vpop.f32.mrb[0].mxu0
  %v6575 = vadd.f32 0.0, %v6574
  %v6576 = vpop.f32.mrb[0].mxu0
  %6577 = vmatprep.mubr.f32.mxu0 0.0
  %6578 = vmatmul.mubr.f32.gmra.mrb[0].mxu0 %v6392
  %v6579 = vpop.f32.mrb[0].mxu0
  %v6580 = vadd.f32 0.0, %v6579
  %v6581 = vpop.f32.mrb[0].mxu0
  %6582 = vmatprep.mubr.f32.mxu0 0.0
  %6583 = vmatmul.mubr.f32.gmra.mrb[0].mxu0 %v6395
  %v6584 = vpop.f32.mrb[0].mxu0
  %v6585 = vadd.f32 0.0, %v6584
  %v6586 = vpop.f32.mrb[0].mxu0
  %6587 = vmatprep.mubr.f32.mxu0 0.0
  %6588 = vmatmul.mubr.f32.gmra.mrb[0].mxu0 %v6398
  %v6589 = vpop.f32.mrb[0].mxu0
  %v6590 = vadd.f32 0.0, %v6589
  %v6591 = vpop.f32.mrb[0].mxu0
  %6592 = vmatprep.mubr.f32.mxu0 0.0
  %6593 = vmatmul.mubr.f32.gmra.mrb[0].mxu0 %v6401
  %v6594 = vpop.f32.mrb[0].mxu0
  %v6595 = vadd.f32 0.0, %v6594
  %v6596 = vpop.f32.mrb[0].mxu0
  %6597 = vmatprep.mubr.f32.mxu0 0.0
  %6598 = vmatmul.mubr.f32.gmra.mrb[0].mxu0 %v6404
  %v6599 = vpop.f32.mrb[0].mxu0
  %v6600 = vadd.f32 0.0, %v6599
  %v6601 = vpop.f32.mrb[0].mxu0
  %6602 = vmatprep.mubr.f32.mxu0 0.0
  %6603 = vmatmul.mubr.f32.gmra.mrb[0].mxu0 %v6407
  %v6604 = vpop.f32.mrb[0].mxu0
  %v6605 = vadd.f32 0.0, %v6604
  %v6606 = vpop.f32.mrb[0].mxu0
  %6607 = vmatprep.mubr.f32.mxu0 0.0
  %6608 = vmatmul.mubr.f32.gmra.mrb[0].mxu0 %v6410
  %v6609 = vpop.f32.mrb[0].mxu0
  %v6610 = vadd.f32 0.0, %v6609
  %v6611 = vpop.f32.mrb[0].mxu0
  %6612 = vmatprep.mubr.f32.mxu0 0.0
  %6613 = vmatmul.mubr.f32.gmra.mrb[0].mxu0 %v6413
  %v6614 = vpop.f32.mrb[0].mxu0
  %v6615 = vadd.f32 0.0, %v6614
  %v6616 = vpop.f32.mrb[0].mxu0
  %6617 = vmatprep.mubr.f32.mxu0 0.0
  %6618 = vmatmul.mubr.f32.gmra.mrb[0].mxu0 %v6416
  %v6619 = vpop.f32.mrb[0].mxu0
  %v6620 = vadd.f32 0.0, %v6619
  %v6621 = vpop.f32.mrb[0].mxu0
  %6622 = vmatprep.mubr.f32.mxu0 0.0
  %6623 = vmatmul.mubr.f32.gmra.mrb[0].mxu0 %v6419
  %v6624 = vpop.f32.mrb[0].mxu0
  %v6625 = vadd.f32 0.0, %v6624
  %v6626 = vpop.f32.mrb[0].mxu0
  %6627 = vmatprep.mubr.f32.mxu0 0.0
  %6628 = vmatmul.mubr.f32.gmra.mrb[0].mxu0 %v6422
  %v6629 = vpop.f32.mrb[0].mxu0
  %v6630 = vadd.f32 0.0, %v6629
  %v6631 = vpop.f32.mrb[0].mxu0
  %6632 = vmatprep.mubr.f32.mxu0 0.0
  %6633 = vmatmul.mubr.f32.gmra.mrb[0].mxu0 %v6425
  %v6634 = vpop.f32.mrb[0].mxu0
  %v6635 = vadd.f32 0.0, %v6634
  %v6636 = vpop.f32.mrb[0].mxu0
  %6637 = vmatprep.mubr.f32.mxu0 0.0
  %6638 = vmatmul.mubr.f32.gmra.mrb[0].mxu0 %v6428
  %v6639 = vpop.f32.mrb[0].mxu0
  %v6640 = vadd.f32 0.0, %v6639
  %v6641 = vpop.f32.mrb[0].mxu0
  %6642 = vmatprep.mubr.f32.mxu0 0.0
  %6643 = vmatmul.mubr.f32.gmra.mrb[0].mxu0 %v6431
  %v6644 = vpop.f32.mrb[0].mxu0
  %v6645 = vadd.f32 0.0, %v6644
  %v6646 = vpop.f32.mrb[0].mxu0
  %6647 = vmatprep.mubr.f32.mxu0 0.0
  %6648 = vmatmul.mubr.f32.gmra.mrb[0].mxu0 %v6434
  %v6649 = vpop.f32.mrb[0].mxu0
  %v6650 = vadd.f32 0.0, %v6649
  %v6651 = vpop.f32.mrb[0].mxu0
  %6652 = vmatprep.mubr.f32.mxu0 0.0
  %6653 = vmatmul.mubr.f32.gmra.mrb[0].mxu0 %v6437
  %v6654 = vpop.f32.mrb[0].mxu0
  %v6655 = vadd.f32 0.0, %v6654
  %v6656 = vpop.f32.mrb[0].mxu0
  %6657 = vmatprep.mubr.f32.mxu0 0.0
  %6658 = vmatmul.mubr.f32.gmra.mrb[0].mxu0 %v6440
  %v6659 = vpop.f32.mrb[0].mxu0
  %v6660 = vadd.f32 0.0, %v6659
  %v6661 = vpop.f32.mrb[0].mxu0
  %6662 = vmatprep.mubr.f32.mxu0 0.0
  %6663 = vmatmul.mubr.f32.gmra.mrb[0].mxu0 %v6443
  %v6664 = vpop.f32.mrb[0].mxu0
  %v6665 = vadd.f32 0.0, %v6664
  %v6666 = vpop.f32.mrb[0].mxu0
  %6667 = vmatprep.mubr.f32.mxu0 0.0
  %6668 = vmatmul.mubr.f32.gmra.mrb[0].mxu0 %v6446
  %v6669 = vpop.f32.mrb[0].mxu0
  %v6670 = vadd.f32 0.0, %v6669
  %v6671 = vpop.f32.mrb[0].mxu0
  %6672 = vdwg.mxu0
  %v6673 = vadd.f32 %v6315, %v6515
  %v6674 = vadd.f32 %v6316, %v6520
  %v6675 = vadd.f32 %v6317, %v6525
  %v6676 = vadd.f32 %v6318, %v6530
  %v6677 = vadd.f32 %v6319, %v6535
  %v6678 = vadd.f32 %v6320, %v6540
  %v6679 = vadd.f32 %v6321, %v6545
  %v6680 = vadd.f32 %v6322, %v6550
  %v6681 = vadd.f32 %v6323, %v6555
  %v6682 = vadd.f32 %v6324, %v6560
  %v6683 = vadd.f32 %v6325, %v6565
  %v6684 = vadd.f32 %v6326, %v6570
  %v6685 = vadd.f32 %v6327, %v6575
  %v6686 = vadd.f32 %v6328, %v6580
  %v6687 = vadd.f32 %v6329, %v6585
  %v6688 = vadd.f32 %v6330, %v6590
  %v6689 = vadd.f32 %v6331, %v6595
  %v6690 = vadd.f32 %v6332, %v6600
  %v6691 = vadd.f32 %v6333, %v6605
  %v6692 = vadd.f32 %v6334, %v6610
  %v6693 = vadd.f32 %v6335, %v6615
  %v6694 = vadd.f32 %v6336, %v6620
  %v6695 = vadd.f32 %v6337, %v6625
  %v6696 = vadd.f32 %v6338, %v6630
  %v6697 = vadd.f32 %v6339, %v6635
  %v6698 = vadd.f32 %v6340, %v6640
  %v6699 = vadd.f32 %v6341, %v6645
  %v6700 = vadd.f32 %v6342, %v6650
  %v6701 = vadd.f32 %v6343, %v6655
  %v6702 = vadd.f32 %v6344, %v6660
  %v6703 = vadd.f32 %v6345, %v6665
  %v6704 = vadd.f32 %v6346, %v6670
  %v6705 = vld [vmem:[%s41] sm:$0x1]
  %v6707 = vlaneseq
  %v6708 = vshrl.u32 %v6707, 7
  %v6709 = vsub.s32 0, %v6708
  %v6710 = vrot.slane %v6705, %v6709
  %v6712 = vadd.f32 %v6673, %v6710
  %v6713 = vadd.f32 %v6674, %v6710
  %v6714 = vadd.f32 %v6675, %v6710
  %v6715 = vadd.f32 %v6676, %v6710
  %v6716 = vadd.f32 %v6677, %v6710
  %v6717 = vadd.f32 %v6678, %v6710
  %v6718 = vadd.f32 %v6679, %v6710
  %v6719 = vadd.f32 %v6680, %v6710
  %v6720 = vadd.f32 %v6681, %v6710
  %v6721 = vadd.f32 %v6682, %v6710
  %v6722 = vadd.f32 %v6683, %v6710
  %v6723 = vadd.f32 %v6684, %v6710
  %v6724 = vadd.f32 %v6685, %v6710
  %v6725 = vadd.f32 %v6686, %v6710
  %v6726 = vadd.f32 %v6687, %v6710
  %v6727 = vadd.f32 %v6688, %v6710
  %v6728 = vadd.f32 %v6689, %v6710
  %v6729 = vadd.f32 %v6690, %v6710
  %v6730 = vadd.f32 %v6691, %v6710
  %v6731 = vadd.f32 %v6692, %v6710
  %v6732 = vadd.f32 %v6693, %v6710
  %v6733 = vadd.f32 %v6694, %v6710
  %v6734 = vadd.f32 %v6695, %v6710
  %v6735 = vadd.f32 %v6696, %v6710
  %v6736 = vadd.f32 %v6697, %v6710
  %v6737 = vadd.f32 %v6698, %v6710
  %v6738 = vadd.f32 %v6699, %v6710
  %v6739 = vadd.f32 %v6700, %v6710
  %v6740 = vadd.f32 %v6701, %v6710
  %v6741 = vadd.f32 %v6702, %v6710
  %v6742 = vadd.f32 %v6703, %v6710
  %v6743 = vadd.f32 %v6704, %v6710
  %6744 = vst.msk [vmem:[#allocation2 + $0x20] sm:$0xff] %vm359, %v6712
  %6745 = vst.msk [vmem:[#allocation2 + $0x28] sm:$0xff] %vm359, %v6713
  %6746 = vst.msk [vmem:[#allocation2 + $0x30] sm:$0xff] %vm359, %v6714
  %6747 = vst.msk [vmem:[#allocation2 + $0x38] sm:$0xff] %vm359, %v6715
  %6748 = vst.msk [vmem:[#allocation2 + $0x40] sm:$0xff] %vm359, %v6716
  %6749 = vst.msk [vmem:[#allocation2 + $0x48] sm:$0xff] %vm359, %v6717
  %6750 = vst.msk [vmem:[#allocation2 + $0x50] sm:$0xff] %vm359, %v6718
  %6751 = vst.msk [vmem:[#allocation2 + $0x58] sm:$0xff] %vm359, %v6719
  %6752 = vst.msk [vmem:[#allocation2 + $0x60] sm:$0xff] %vm359, %v6720
  %6753 = vst.msk [vmem:[#allocation2 + $0x68] sm:$0xff] %vm359, %v6721
  %6754 = vst.msk [vmem:[#allocation2 + $0x70] sm:$0xff] %vm359, %v6722
  %6755 = vst.msk [vmem:[#allocation2 + $0x78] sm:$0xff] %vm359, %v6723
  %6756 = vst.msk [vmem:[#allocation2 + $0x80] sm:$0xff] %vm359, %v6724
  %6757 = vst.msk [vmem:[#allocation2 + $0x88] sm:$0xff] %vm359, %v6725
  %6758 = vst.msk [vmem:[#allocation2 + $0x90] sm:$0xff] %vm359, %v6726
  %6759 = vst.msk [vmem:[#allocation2 + $0x98] sm:$0xff] %vm359, %v6727
  %6760 = vst.msk [vmem:[#allocation2 + $0xa0] sm:$0xff] %vm359, %v6728
  %6761 = vst.msk [vmem:[#allocation2 + $0xa8] sm:$0xff] %vm359, %v6729
  %6762 = vst.msk [vmem:[#allocation2 + $0xb0] sm:$0xff] %vm359, %v6730
  %6763 = vst.msk [vmem:[#allocation2 + $0xb8] sm:$0xff] %vm359, %v6731
  %6764 = vst.msk [vmem:[#allocation2 + $0xc0] sm:$0xff] %vm359, %v6732
  %6765 = vst.msk [vmem:[#allocation2 + $0xc8] sm:$0xff] %vm359, %v6733
  %6766 = vst.msk [vmem:[#allocation2 + $0xd0] sm:$0xff] %vm359, %v6734
  %6767 = vst.msk [vmem:[#allocation2 + $0xd8] sm:$0xff] %vm359, %v6735
  %6768 = vst.msk [vmem:[#allocation2 + $0xe0] sm:$0xff] %vm359, %v6736
  %6769 = vst.msk [vmem:[#allocation2 + $0xe8] sm:$0xff] %vm359, %v6737
  %6770 = vst.msk [vmem:[#allocation2 + $0xf0] sm:$0xff] %vm359, %v6738
  %6771 = vst.msk [vmem:[#allocation2 + $0xf8] sm:$0xff] %vm359, %v6739
  %6772 = vst.msk [vmem:[#allocation2 + $0x100] sm:$0xff] %vm359, %v6740
  %6773 = vst.msk [vmem:[#allocation2 + $0x108] sm:$0xff] %vm359, %v6741
  %6774 = vst.msk [vmem:[#allocation2 + $0x110] sm:$0xff] %vm359, %v6742
  %6775 = vst.msk [vmem:[#allocation2 + $0x118] sm:$0xff] %vm359, %v6743
  %v6776 = vld [vmem:[%s43] sm:$0xff]
  %v6777 = vld [vmem:[%s43 + $0x8] sm:$0x1]
  %v6778 = vld [vmem:[#allocation2] sm:$0xff]
  %v6779 = vld [vmem:[#allocation2 + $0x8] sm:$0xff]
  %v6780 = vld [vmem:[#allocation2 + $0x10] sm:$0xff]
  %v6781 = vld [vmem:[#allocation2 + $0x18] sm:$0xff]
  %v6782 = vld [vmem:[#allocation2 + $0x20] sm:$0xff]
  %v6783 = vld [vmem:[#allocation2 + $0x28] sm:$0xff]
  %v6784 = vld [vmem:[#allocation2 + $0x30] sm:$0xff]
  %v6785 = vld [vmem:[#allocation2 + $0x38] sm:$0xff]
  %v6786 = vld [vmem:[#allocation2 + $0x40] sm:$0xff]
  %v6787 = vld [vmem:[#allocation2 + $0x48] sm:$0xff]
  %v6788 = vld [vmem:[#allocation2 + $0x50] sm:$0xff]
  %v6789 = vld [vmem:[#allocation2 + $0x58] sm:$0xff]
  %v6790 = vld [vmem:[#allocation2 + $0x60] sm:$0xff]
  %v6791 = vld [vmem:[#allocation2 + $0x68] sm:$0xff]
  %v6792 = vld [vmem:[#allocation2 + $0x70] sm:$0xff]
  %v6793 = vld [vmem:[#allocation2 + $0x78] sm:$0xff]
  %v6794 = vld [vmem:[#allocation2 + $0x80] sm:$0xff]
  %v6795 = vld [vmem:[#allocation2 + $0x88] sm:$0xff]
  %v6796 = vld [vmem:[#allocation2 + $0x90] sm:$0xff]
  %v6797 = vld [vmem:[#allocation2 + $0x98] sm:$0xff]
  %v6798 = vld [vmem:[#allocation2 + $0xa0] sm:$0xff]
  %v6799 = vld [vmem:[#allocation2 + $0xa8] sm:$0xff]
  %v6800 = vld [vmem:[#allocation2 + $0xb0] sm:$0xff]
  %v6801 = vld [vmem:[#allocation2 + $0xb8] sm:$0xff]
  %v6802 = vld [vmem:[#allocation2 + $0xc0] sm:$0xff]
  %v6803 = vld [vmem:[#allocation2 + $0xc8] sm:$0xff]
  %v6804 = vld [vmem:[#allocation2 + $0xd0] sm:$0xff]
  %v6805 = vld [vmem:[#allocation2 + $0xd8] sm:$0xff]
  %v6806 = vld [vmem:[#allocation2 + $0xe0] sm:$0xff]
  %v6807 = vld [vmem:[#allocation2 + $0xe8] sm:$0xff]
  %v6808 = vld [vmem:[#allocation2 + $0xf0] sm:$0xff]
  %v6809 = vld [vmem:[#allocation2 + $0xf8] sm:$0xff]
  %v6810 = vrot.slane %v6778, 7
  %v6811 = vrot.slane %v6779, 7
  %v6812 = vrot.slane %v6780, 7
  %v6813 = vrot.slane %v6781, 7
  %v6814 = vrot.slane %v6782, 7
  %v6815 = vrot.slane %v6783, 7
  %v6816 = vrot.slane %v6784, 7
  %v6817 = vrot.slane %v6785, 7
  %v6818 = vrot.slane %v6786, 7
  %v6819 = vrot.slane %v6787, 7
  %v6820 = vrot.slane %v6788, 7
  %v6821 = vrot.slane %v6789, 7
  %v6822 = vrot.slane %v6790, 7
  %v6823 = vrot.slane %v6791, 7
  %v6824 = vrot.slane %v6792, 7
  %v6825 = vrot.slane %v6793, 7
  %v6826 = vrot.slane %v6794, 7
  %v6827 = vrot.slane %v6795, 7
  %v6828 = vrot.slane %v6796, 7
  %v6829 = vrot.slane %v6797, 7
  %v6830 = vrot.slane %v6798, 7
  %v6831 = vrot.slane %v6799, 7
  %v6832 = vrot.slane %v6800, 7
  %v6833 = vrot.slane %v6801, 7
  %v6834 = vrot.slane %v6802, 7
  %v6835 = vrot.slane %v6803, 7
  %v6836 = vrot.slane %v6804, 7
  %v6837 = vrot.slane %v6805, 7
  %v6838 = vrot.slane %v6806, 7
  %v6839 = vrot.slane %v6807, 7
  %v6840 = vrot.slane %v6808, 7
  %v6841 = vrot.slane %v6809, 7
  %v6842 = vsel %vm2197, %v6840, %v6841
  %v6843 = vsel %vm2197, %v6839, %v6840
  %v6844 = vsel %vm2197, %v6838, %v6839
  %v6845 = vsel %vm2197, %v6837, %v6838
  %v6846 = vsel %vm2197, %v6836, %v6837
  %v6847 = vsel %vm2197, %v6835, %v6836
  %v6848 = vsel %vm2197, %v6834, %v6835
  %v6849 = vsel %vm2197, %v6833, %v6834
  %v6850 = vsel %vm2197, %v6832, %v6833
  %v6851 = vsel %vm2197, %v6831, %v6832
  %v6852 = vsel %vm2197, %v6830, %v6831
  %v6853 = vsel %vm2197, %v6829, %v6830
  %v6854 = vsel %vm2197, %v6828, %v6829
  %v6855 = vsel %vm2197, %v6827, %v6828
  %v6856 = vsel %vm2197, %v6826, %v6827
  %v6857 = vsel %vm2197, %v6825, %v6826
  %v6858 = vsel %vm2197, %v6824, %v6825
  %v6859 = vsel %vm2197, %v6823, %v6824
  %v6860 = vsel %vm2197, %v6822, %v6823
  %v6861 = vsel %vm2197, %v6821, %v6822
  %v6862 = vsel %vm2197, %v6820, %v6821
  %v6863 = vsel %vm2197, %v6819, %v6820
  %v6864 = vsel %vm2197, %v6818, %v6819
  %v6865 = vsel %vm2197, %v6817, %v6818
  %v6866 = vsel %vm2197, %v6816, %v6817
  %v6867 = vsel %vm2197, %v6815, %v6816
  %v6868 = vsel %vm2197, %v6814, %v6815
  %v6869 = vsel %vm2197, %v6813, %v6814
  %v6870 = vsel %vm2197, %v6812, %v6813
  %v6871 = vsel %vm2197, %v6811, %v6812
  %v6872 = vsel %vm2197, %v6810, %v6811
  %v6873 = vsel %vm2197, %v6841, %v6810
  %v6874 = vmul.f32 %v6873, %v1544
  %v6875 = vmul.f32 %v6872, %v1545
  %v6876 = vmul.f32 %v6871, %v1546
  %v6877 = vmul.f32 %v6870, %v1547
  %v6878 = vmul.f32 %v6869, %v1548
  %v6879 = vmul.f32 %v6868, %v1549
  %v6880 = vmul.f32 %v6867, %v1550
  %v6881 = vmul.f32 %v6866, %v1551
  %v6882 = vmul.f32 %v6865, %v1552
  %v6883 = vmul.f32 %v6864, %v1553
  %v6884 = vmul.f32 %v6863, %v1554
  %v6885 = vmul.f32 %v6862, %v1555
  %v6886 = vmul.f32 %v6861, %v1556
  %v6887 = vmul.f32 %v6860, %v1557
  %v6888 = vmul.f32 %v6859, %v1558
  %v6889 = vmul.f32 %v6858, %v1559
  %v6890 = vmul.f32 %v6857, %v1560
  %v6891 = vmul.f32 %v6856, %v1561
  %v6892 = vmul.f32 %v6855, %v1562
  %v6893 = vmul.f32 %v6854, %v1563
  %v6894 = vmul.f32 %v6853, %v1564
  %v6895 = vmul.f32 %v6852, %v1565
  %v6896 = vmul.f32 %v6851, %v1566
  %v6897 = vmul.f32 %v6850, %v1567
  %v6898 = vmul.f32 %v6849, %v1568
  %v6899 = vmul.f32 %v6848, %v1569
  %v6900 = vmul.f32 %v6847, %v1570
  %v6901 = vmul.f32 %v6846, %v1571
  %v6902 = vmul.f32 %v6845, %v1572
  %v6903 = vmul.f32 %v6844, %v1573
  %v6904 = vmul.f32 %v6843, %v1574
  %v6905 = vmul.f32 %v6842, %v1575
  %v6906 = vrot.slane %v6778, 1
  %v6907 = vrot.slane %v6779, 1
  %v6908 = vrot.slane %v6780, 1
  %v6909 = vrot.slane %v6781, 1
  %v6910 = vrot.slane %v6782, 1
  %v6911 = vrot.slane %v6783, 1
  %v6912 = vrot.slane %v6784, 1
  %v6913 = vrot.slane %v6785, 1
  %v6914 = vrot.slane %v6786, 1
  %v6915 = vrot.slane %v6787, 1
  %v6916 = vrot.slane %v6788, 1
  %v6917 = vrot.slane %v6789, 1
  %v6918 = vrot.slane %v6790, 1
  %v6919 = vrot.slane %v6791, 1
  %v6920 = vrot.slane %v6792, 1
  %v6921 = vrot.slane %v6793, 1
  %v6922 = vrot.slane %v6794, 1
  %v6923 = vrot.slane %v6795, 1
  %v6924 = vrot.slane %v6796, 1
  %v6925 = vrot.slane %v6797, 1
  %v6926 = vrot.slane %v6798, 1
  %v6927 = vrot.slane %v6799, 1
  %v6928 = vrot.slane %v6800, 1
  %v6929 = vrot.slane %v6801, 1
  %v6930 = vrot.slane %v6802, 1
  %v6931 = vrot.slane %v6803, 1
  %v6932 = vrot.slane %v6804, 1
  %v6933 = vrot.slane %v6805, 1
  %v6934 = vrot.slane %v6806, 1
  %v6935 = vrot.slane %v6807, 1
  %v6936 = vrot.slane %v6808, 1
  %v6937 = vrot.slane %v6809, 1
  %v6938 = vsel %vm2294, %v6936, %v6937
  %v6939 = vsel %vm2294, %v6935, %v6936
  %v6940 = vsel %vm2294, %v6934, %v6935
  %v6941 = vsel %vm2294, %v6933, %v6934
  %v6942 = vsel %vm2294, %v6932, %v6933
  %v6943 = vsel %vm2294, %v6931, %v6932
  %v6944 = vsel %vm2294, %v6930, %v6931
  %v6945 = vsel %vm2294, %v6929, %v6930
  %v6946 = vsel %vm2294, %v6928, %v6929
  %v6947 = vsel %vm2294, %v6927, %v6928
  %v6948 = vsel %vm2294, %v6926, %v6927
  %v6949 = vsel %vm2294, %v6925, %v6926
  %v6950 = vsel %vm2294, %v6924, %v6925
  %v6951 = vsel %vm2294, %v6923, %v6924
  %v6952 = vsel %vm2294, %v6922, %v6923
  %v6953 = vsel %vm2294, %v6921, %v6922
  %v6954 = vsel %vm2294, %v6920, %v6921
  %v6955 = vsel %vm2294, %v6919, %v6920
  %v6956 = vsel %vm2294, %v6918, %v6919
  %v6957 = vsel %vm2294, %v6917, %v6918
  %v6958 = vsel %vm2294, %v6916, %v6917
  %v6959 = vsel %vm2294, %v6915, %v6916
  %v6960 = vsel %vm2294, %v6914, %v6915
  %v6961 = vsel %vm2294, %v6913, %v6914
  %v6962 = vsel %vm2294, %v6912, %v6913
  %v6963 = vsel %vm2294, %v6911, %v6912
  %v6964 = vsel %vm2294, %v6910, %v6911
  %v6965 = vsel %vm2294, %v6909, %v6910
  %v6966 = vsel %vm2294, %v6908, %v6909
  %v6967 = vsel %vm2294, %v6907, %v6908
  %v6968 = vsel %vm2294, %v6906, %v6907
  %v6969 = vsel %vm2294, %v6937, %v6906
  %v6970 = vmul.f32 %v6968, %v1576
  %v6971 = vmul.f32 %v6967, %v1577
  %v6972 = vmul.f32 %v6966, %v1578
  %v6973 = vmul.f32 %v6965, %v1579
  %v6974 = vmul.f32 %v6964, %v1580
  %v6975 = vmul.f32 %v6963, %v1581
  %v6976 = vmul.f32 %v6962, %v1582
  %v6977 = vmul.f32 %v6961, %v1583
  %v6978 = vmul.f32 %v6960, %v1584
  %v6979 = vmul.f32 %v6959, %v1585
  %v6980 = vmul.f32 %v6958, %v1586
  %v6981 = vmul.f32 %v6957, %v1587
  %v6982 = vmul.f32 %v6956, %v1588
  %v6983 = vmul.f32 %v6955, %v1589
  %v6984 = vmul.f32 %v6954, %v1590
  %v6985 = vmul.f32 %v6953, %v1591
  %v6986 = vmul.f32 %v6952, %v1592
  %v6987 = vmul.f32 %v6951, %v1593
  %v6988 = vmul.f32 %v6950, %v1594
  %v6989 = vmul.f32 %v6949, %v1595
  %v6990 = vmul.f32 %v6948, %v1596
  %v6991 = vmul.f32 %v6947, %v1597
  %v6992 = vmul.f32 %v6946, %v1598
  %v6993 = vmul.f32 %v6945, %v1599
  %v6994 = vmul.f32 %v6944, %v1600
  %v6995 = vmul.f32 %v6943, %v1601
  %v6996 = vmul.f32 %v6942, %v1602
  %v6997 = vmul.f32 %v6941, %v1603
  %v6998 = vmul.f32 %v6940, %v1604
  %v6999 = vmul.f32 %v6939, %v1605
  %v7000 = vmul.f32 %v6938, %v1606
  %v7001 = vmul.f32 %v6969, %v1607
  %v7002 = vld [vmem:[#allocation2 + $0x100] sm:$0xff]
  %v7003 = vld [vmem:[#allocation2 + $0x108] sm:$0xff]
  %v7004 = vld [vmem:[#allocation2 + $0x110] sm:$0xff]
  %v7005 = vld [vmem:[#allocation2 + $0x118] sm:$0xff]
  %v7006 = vrot.slane %v7002, 7
  %v7007 = vrot.slane %v7003, 7
  %v7008 = vrot.slane %v7004, 7
  %v7009 = vrot.slane %v7005, 7
  %v7010 = vsel %vm2197, %v7008, %v7009
  %v7011 = vsel %vm2197, %v7007, %v7008
  %v7012 = vsel %vm2197, %v7006, %v7007
  %v7013 = vsel %vm2197, %v6841, %v7006
  %v7014 = vsel %vm2197, %v7009, %v6814
  %v7015 = vmul.f32 %v7014, %v1544
  %v7016 = vmul.f32 %v6868, %v1545
  %v7017 = vmul.f32 %v6867, %v1546
  %v7018 = vmul.f32 %v6866, %v1547
  %v7019 = vmul.f32 %v6865, %v1548
  %v7020 = vmul.f32 %v6864, %v1549
  %v7021 = vmul.f32 %v6863, %v1550
  %v7022 = vmul.f32 %v6862, %v1551
  %v7023 = vmul.f32 %v6861, %v1552
  %v7024 = vmul.f32 %v6860, %v1553
  %v7025 = vmul.f32 %v6859, %v1554
  %v7026 = vmul.f32 %v6858, %v1555
  %v7027 = vmul.f32 %v6857, %v1556
  %v7028 = vmul.f32 %v6856, %v1557
  %v7029 = vmul.f32 %v6855, %v1558
  %v7030 = vmul.f32 %v6854, %v1559
  %v7031 = vmul.f32 %v6853, %v1560
  %v7032 = vmul.f32 %v6852, %v1561
  %v7033 = vmul.f32 %v6851, %v1562
  %v7034 = vmul.f32 %v6850, %v1563
  %v7035 = vmul.f32 %v6849, %v1564
  %v7036 = vmul.f32 %v6848, %v1565
  %v7037 = vmul.f32 %v6847, %v1566
  %v7038 = vmul.f32 %v6846, %v1567
  %v7039 = vmul.f32 %v6845, %v1568
  %v7040 = vmul.f32 %v6844, %v1569
  %v7041 = vmul.f32 %v6843, %v1570
  %v7042 = vmul.f32 %v6842, %v1571
  %v7043 = vmul.f32 %v7013, %v1572
  %v7044 = vmul.f32 %v7012, %v1573
  %v7045 = vmul.f32 %v7011, %v1574
  %v7046 = vmul.f32 %v7010, %v1575
  %v7047 = vrot.slane %v7002, 1
  %v7048 = vrot.slane %v7003, 1
  %v7049 = vrot.slane %v7004, 1
  %v7050 = vrot.slane %v7005, 1
  %v7051 = vsel %vm2294, %v7049, %v7050
  %v7052 = vsel %vm2294, %v7048, %v7049
  %v7053 = vsel %vm2294, %v7047, %v7048
  %v7054 = vsel %vm2294, %v6937, %v7047
  %v7055 = vsel %vm2294, %v7050, %v6910
  %v7056 = vmul.f32 %v6964, %v1576
  %v7057 = vmul.f32 %v6963, %v1577
  %v7058 = vmul.f32 %v6962, %v1578
  %v7059 = vmul.f32 %v6961, %v1579
  %v7060 = vmul.f32 %v6960, %v1580
  %v7061 = vmul.f32 %v6959, %v1581
  %v7062 = vmul.f32 %v6958, %v1582
  %v7063 = vmul.f32 %v6957, %v1583
  %v7064 = vmul.f32 %v6956, %v1584
  %v7065 = vmul.f32 %v6955, %v1585
  %v7066 = vmul.f32 %v6954, %v1586
  %v7067 = vmul.f32 %v6953, %v1587
  %v7068 = vmul.f32 %v6952, %v1588
  %v7069 = vmul.f32 %v6951, %v1589
  %v7070 = vmul.f32 %v6950, %v1590
  %v7071 = vmul.f32 %v6949, %v1591
  %v7072 = vmul.f32 %v6948, %v1592
  %v7073 = vmul.f32 %v6947, %v1593
  %v7074 = vmul.f32 %v6946, %v1594
  %v7075 = vmul.f32 %v6945, %v1595
  %v7076 = vmul.f32 %v6944, %v1596
  %v7077 = vmul.f32 %v6943, %v1597
  %v7078 = vmul.f32 %v6942, %v1598
  %v7079 = vmul.f32 %v6941, %v1599
  %v7080 = vmul.f32 %v6940, %v1600
  %v7081 = vmul.f32 %v6939, %v1601
  %v7082 = vmul.f32 %v6938, %v1602
  %v7083 = vmul.f32 %v7054, %v1603
  %v7084 = vmul.f32 %v7053, %v1604
  %v7085 = vmul.f32 %v7052, %v1605
  %v7086 = vmul.f32 %v7051, %v1606
  %v7087 = vmul.f32 %v7055, %v1607
  %v7088 = vld [vmem:[#allocation2 + $0x120] sm:$0xff]
  %v7089 = vld [vmem:[#allocation2 + $0x128] sm:$0xff]
  %v7090 = vld [vmem:[#allocation2 + $0x130] sm:$0xff]
  %v7091 = vld [vmem:[#allocation2 + $0x138] sm:$0xff]
  %v7092 = vrot.slane %v7088, 7
  %v7093 = vrot.slane %v7089, 7
  %v7094 = vrot.slane %v7090, 7
  %v7095 = vrot.slane %v7091, 7
  %v7096 = vsel %vm2197, %v7094, %v7095
  %v7097 = vsel %vm2197, %v7093, %v7094
  %v7098 = vsel %vm2197, %v7092, %v7093
  %v7099 = vsel %vm2197, %v7009, %v7092
  %v7100 = vsel %vm2197, %v7095, %v6818
  %v7101 = vmul.f32 %v7100, %v1544
  %v7102 = vmul.f32 %v6864, %v1545
  %v7103 = vmul.f32 %v6863, %v1546
  %v7104 = vmul.f32 %v6862, %v1547
  %v7105 = vmul.f32 %v6861, %v1548
  %v7106 = vmul.f32 %v6860, %v1549
  %v7107 = vmul.f32 %v6859, %v1550
  %v7108 = vmul.f32 %v6858, %v1551
  %v7109 = vmul.f32 %v6857, %v1552
  %v7110 = vmul.f32 %v6856, %v1553
  %v7111 = vmul.f32 %v6855, %v1554
  %v7112 = vmul.f32 %v6854, %v1555
  %v7113 = vmul.f32 %v6853, %v1556
  %v7114 = vmul.f32 %v6852, %v1557
  %v7115 = vmul.f32 %v6851, %v1558
  %v7116 = vmul.f32 %v6850, %v1559
  %v7117 = vmul.f32 %v6849, %v1560
  %v7118 = vmul.f32 %v6848, %v1561
  %v7119 = vmul.f32 %v6847, %v1562
  %v7120 = vmul.f32 %v6846, %v1563
  %v7121 = vmul.f32 %v6845, %v1564
  %v7122 = vmul.f32 %v6844, %v1565
  %v7123 = vmul.f32 %v6843, %v1566
  %v7124 = vmul.f32 %v6842, %v1567
  %v7125 = vmul.f32 %v7013, %v1568
  %v7126 = vmul.f32 %v7012, %v1569
  %v7127 = vmul.f32 %v7011, %v1570
  %v7128 = vmul.f32 %v7010, %v1571
  %v7129 = vmul.f32 %v7099, %v1572
  %v7130 = vmul.f32 %v7098, %v1573
  %v7131 = vmul.f32 %v7097, %v1574
  %v7132 = vmul.f32 %v7096, %v1575
  %v7133 = vrot.slane %v7088, 1
  %v7134 = vrot.slane %v7089, 1
  %v7135 = vrot.slane %v7090, 1
  %v7136 = vrot.slane %v7091, 1
  %v7137 = vsel %vm2294, %v7135, %v7136
  %v7138 = vsel %vm2294, %v7134, %v7135
  %v7139 = vsel %vm2294, %v7133, %v7134
  %v7140 = vsel %vm2294, %v7050, %v7133
  %v7141 = vsel %vm2294, %v7136, %v6914
  %v7142 = vmul.f32 %v6960, %v1576
  %v7143 = vmul.f32 %v6959, %v1577
  %v7144 = vmul.f32 %v6958, %v1578
  %v7145 = vmul.f32 %v6957, %v1579
  %v7146 = vmul.f32 %v6956, %v1580
  %v7147 = vmul.f32 %v6955, %v1581
  %v7148 = vmul.f32 %v6954, %v1582
  %v7149 = vmul.f32 %v6953, %v1583
  %v7150 = vmul.f32 %v6952, %v1584
  %v7151 = vmul.f32 %v6951, %v1585
  %v7152 = vmul.f32 %v6950, %v1586
  %v7153 = vmul.f32 %v6949, %v1587
  %v7154 = vmul.f32 %v6948, %v1588
  %v7155 = vmul.f32 %v6947, %v1589
  %v7156 = vmul.f32 %v6946, %v1590
  %v7157 = vmul.f32 %v6945, %v1591
  %v7158 = vmul.f32 %v6944, %v1592
  %v7159 = vmul.f32 %v6943, %v1593
  %v7160 = vmul.f32 %v6942, %v1594
  %v7161 = vmul.f32 %v6941, %v1595
  %v7162 = vmul.f32 %v6940, %v1596
  %v7163 = vmul.f32 %v6939, %v1597
  %v7164 = vmul.f32 %v6938, %v1598
  %v7165 = vmul.f32 %v7054, %v1599
  %v7166 = vmul.f32 %v7053, %v1600
  %v7167 = vmul.f32 %v7052, %v1601
  %v7168 = vmul.f32 %v7051, %v1602
  %v7169 = vmul.f32 %v7140, %v1603
  %v7170 = vmul.f32 %v7139, %v1604
  %v7171 = vmul.f32 %v7138, %v1605
  %v7172 = vmul.f32 %v7137, %v1606
  %v7173 = vmul.f32 %v7141, %v1607
  %v7174 = vlaneseq
  %v7175 = vshrl.u32 %v7174, 7
  %v7176 = vsub.s32 0, %v7175
  %v7177 = vrot.slane %v6776, %v7176
  %v7178 = vmul.f32 %v6874, %v7177
  %v7179 = vmul.f32 %v6875, %v7177
  %v7180 = vmul.f32 %v6876, %v7177
  %v7181 = vmul.f32 %v6877, %v7177
  %v7182 = vmul.f32 %v6878, %v7177
  %v7183 = vmul.f32 %v6879, %v7177
  %v7184 = vmul.f32 %v6880, %v7177
  %v7185 = vmul.f32 %v6881, %v7177
  %v7186 = vmul.f32 %v6882, %v7177
  %v7187 = vmul.f32 %v6883, %v7177
  %v7188 = vmul.f32 %v6884, %v7177
  %v7189 = vmul.f32 %v6885, %v7177
  %v7190 = vmul.f32 %v6886, %v7177
  %v7191 = vmul.f32 %v6887, %v7177
  %v7192 = vmul.f32 %v6888, %v7177
  %v7193 = vmul.f32 %v6889, %v7177
  %v7194 = vmul.f32 %v6890, %v7177
  %v7195 = vmul.f32 %v6891, %v7177
  %v7196 = vmul.f32 %v6892, %v7177
  %v7197 = vmul.f32 %v6893, %v7177
  %v7198 = vmul.f32 %v6894, %v7177
  %v7199 = vmul.f32 %v6895, %v7177
  %v7200 = vmul.f32 %v6896, %v7177
  %v7201 = vmul.f32 %v6897, %v7177
  %v7202 = vmul.f32 %v6898, %v7177
  %v7203 = vmul.f32 %v6899, %v7177
  %v7204 = vmul.f32 %v6900, %v7177
  %v7205 = vmul.f32 %v6901, %v7177
  %v7206 = vmul.f32 %v6902, %v7177
  %v7207 = vmul.f32 %v6903, %v7177
  %v7208 = vmul.f32 %v6904, %v7177
  %v7209 = vmul.f32 %v6905, %v7177
  %v7210 = vlaneseq
  %v7211 = vshrl.u32 %v7210, 7
  %v7212 = vsub.s32 1, %v7211
  %v7213 = vrot.slane %v6776, %v7212
  %v7214 = vmul.f32 %v6778, %v7213
  %v7215 = vmul.f32 %v6779, %v7213
  %v7216 = vmul.f32 %v6780, %v7213
  %v7217 = vmul.f32 %v6781, %v7213
  %v7218 = vmul.f32 %v6782, %v7213
  %v7219 = vmul.f32 %v6783, %v7213
  %v7220 = vmul.f32 %v6784, %v7213
  %v7221 = vmul.f32 %v6785, %v7213
  %v7222 = vmul.f32 %v6786, %v7213
  %v7223 = vmul.f32 %v6787, %v7213
  %v7224 = vmul.f32 %v6788, %v7213
  %v7225 = vmul.f32 %v6789, %v7213
  %v7226 = vmul.f32 %v6790, %v7213
  %v7227 = vmul.f32 %v6791, %v7213
  %v7228 = vmul.f32 %v6792, %v7213
  %v7229 = vmul.f32 %v6793, %v7213
  %v7230 = vmul.f32 %v6794, %v7213
  %v7231 = vmul.f32 %v6795, %v7213
  %v7232 = vmul.f32 %v6796, %v7213
  %v7233 = vmul.f32 %v6797, %v7213
  %v7234 = vmul.f32 %v6798, %v7213
  %v7235 = vmul.f32 %v6799, %v7213
  %v7236 = vmul.f32 %v6800, %v7213
  %v7237 = vmul.f32 %v6801, %v7213
  %v7238 = vmul.f32 %v6802, %v7213
  %v7239 = vmul.f32 %v6803, %v7213
  %v7240 = vmul.f32 %v6804, %v7213
  %v7241 = vmul.f32 %v6805, %v7213
  %v7242 = vmul.f32 %v6806, %v7213
  %v7243 = vmul.f32 %v6807, %v7213
  %v7244 = vmul.f32 %v6808, %v7213
  %v7245 = vmul.f32 %v6809, %v7213
  %v7246 = vadd.f32 %v7178, %v7214
  %v7247 = vadd.f32 %v7179, %v7215
  %v7248 = vadd.f32 %v7180, %v7216
  %v7249 = vadd.f32 %v7181, %v7217
  %v7250 = vadd.f32 %v7182, %v7218
  %v7251 = vadd.f32 %v7183, %v7219
  %v7252 = vadd.f32 %v7184, %v7220
  %v7253 = vadd.f32 %v7185, %v7221
  %v7254 = vadd.f32 %v7186, %v7222
  %v7255 = vadd.f32 %v7187, %v7223
  %v7256 = vadd.f32 %v7188, %v7224
  %v7257 = vadd.f32 %v7189, %v7225
  %v7258 = vadd.f32 %v7190, %v7226
  %v7259 = vadd.f32 %v7191, %v7227
  %v7260 = vadd.f32 %v7192, %v7228
  %v7261 = vadd.f32 %v7193, %v7229
  %v7262 = vadd.f32 %v7194, %v7230
  %v7263 = vadd.f32 %v7195, %v7231
  %v7264 = vadd.f32 %v7196, %v7232
  %v7265 = vadd.f32 %v7197, %v7233
  %v7266 = vadd.f32 %v7198, %v7234
  %v7267 = vadd.f32 %v7199, %v7235
  %v7268 = vadd.f32 %v7200, %v7236
  %v7269 = vadd.f32 %v7201, %v7237
  %v7270 = vadd.f32 %v7202, %v7238
  %v7271 = vadd.f32 %v7203, %v7239
  %v7272 = vadd.f32 %v7204, %v7240
  %v7273 = vadd.f32 %v7205, %v7241
  %v7274 = vadd.f32 %v7206, %v7242
  %v7275 = vadd.f32 %v7207, %v7243
  %v7276 = vadd.f32 %v7208, %v7244
  %v7277 = vadd.f32 %v7209, %v7245
  %v7278 = vlaneseq
  %v7279 = vshrl.u32 %v7278, 7
  %v7280 = vsub.s32 2, %v7279
  %v7281 = vrot.slane %v6776, %v7280
  %v7282 = vmul.f32 %v6970, %v7281
  %v7283 = vmul.f32 %v6971, %v7281
  %v7284 = vmul.f32 %v6972, %v7281
  %v7285 = vmul.f32 %v6973, %v7281
  %v7286 = vmul.f32 %v6974, %v7281
  %v7287 = vmul.f32 %v6975, %v7281
  %v7288 = vmul.f32 %v6976, %v7281
  %v7289 = vmul.f32 %v6977, %v7281
  %v7290 = vmul.f32 %v6978, %v7281
  %v7291 = vmul.f32 %v6979, %v7281
  %v7292 = vmul.f32 %v6980, %v7281
  %v7293 = vmul.f32 %v6981, %v7281
  %v7294 = vmul.f32 %v6982, %v7281
  %v7295 = vmul.f32 %v6983, %v7281
  %v7296 = vmul.f32 %v6984, %v7281
  %v7297 = vmul.f32 %v6985, %v7281
  %v7298 = vmul.f32 %v6986, %v7281
  %v7299 = vmul.f32 %v6987, %v7281
  %v7300 = vmul.f32 %v6988, %v7281
  %v7301 = vmul.f32 %v6989, %v7281
  %v7302 = vmul.f32 %v6990, %v7281
  %v7303 = vmul.f32 %v6991, %v7281
  %v7304 = vmul.f32 %v6992, %v7281
  %v7305 = vmul.f32 %v6993, %v7281
  %v7306 = vmul.f32 %v6994, %v7281
  %v7307 = vmul.f32 %v6995, %v7281
  %v7308 = vmul.f32 %v6996, %v7281
  %v7309 = vmul.f32 %v6997, %v7281
  %v7310 = vmul.f32 %v6998, %v7281
  %v7311 = vmul.f32 %v6999, %v7281
  %v7312 = vmul.f32 %v7000, %v7281
  %v7313 = vmul.f32 %v7001, %v7281
  %v7314 = vadd.f32 %v7246, %v7282
  %v7315 = vadd.f32 %v7247, %v7283
  %v7316 = vadd.f32 %v7248, %v7284
  %v7317 = vadd.f32 %v7249, %v7285
  %v7318 = vadd.f32 %v7250, %v7286
  %v7319 = vadd.f32 %v7251, %v7287
  %v7320 = vadd.f32 %v7252, %v7288
  %v7321 = vadd.f32 %v7253, %v7289
  %v7322 = vadd.f32 %v7254, %v7290
  %v7323 = vadd.f32 %v7255, %v7291
  %v7324 = vadd.f32 %v7256, %v7292
  %v7325 = vadd.f32 %v7257, %v7293
  %v7326 = vadd.f32 %v7258, %v7294
  %v7327 = vadd.f32 %v7259, %v7295
  %v7328 = vadd.f32 %v7260, %v7296
  %v7329 = vadd.f32 %v7261, %v7297
  %v7330 = vadd.f32 %v7262, %v7298
  %v7331 = vadd.f32 %v7263, %v7299
  %v7332 = vadd.f32 %v7264, %v7300
  %v7333 = vadd.f32 %v7265, %v7301
  %v7334 = vadd.f32 %v7266, %v7302
  %v7335 = vadd.f32 %v7267, %v7303
  %v7336 = vadd.f32 %v7268, %v7304
  %v7337 = vadd.f32 %v7269, %v7305
  %v7338 = vadd.f32 %v7270, %v7306
  %v7339 = vadd.f32 %v7271, %v7307
  %v7340 = vadd.f32 %v7272, %v7308
  %v7341 = vadd.f32 %v7273, %v7309
  %v7342 = vadd.f32 %v7274, %v7310
  %v7343 = vadd.f32 %v7275, %v7311
  %v7344 = vadd.f32 %v7276, %v7312
  %v7345 = vadd.f32 %v7277, %v7313
  %v7346 = vlaneseq
  %v7347 = vshrl.u32 %v7346, 7
  %v7348 = vsub.s32 3, %v7347
  %v7349 = vrot.slane %v6776, %v7348
  %v7350 = vmul.f32 %v7015, %v7349
  %v7351 = vmul.f32 %v7016, %v7349
  %v7352 = vmul.f32 %v7017, %v7349
  %v7353 = vmul.f32 %v7018, %v7349
  %v7354 = vmul.f32 %v7019, %v7349
  %v7355 = vmul.f32 %v7020, %v7349
  %v7356 = vmul.f32 %v7021, %v7349
  %v7357 = vmul.f32 %v7022, %v7349
  %v7358 = vmul.f32 %v7023, %v7349
  %v7359 = vmul.f32 %v7024, %v7349
  %v7360 = vmul.f32 %v7025, %v7349
  %v7361 = vmul.f32 %v7026, %v7349
  %v7362 = vmul.f32 %v7027, %v7349
  %v7363 = vmul.f32 %v7028, %v7349
  %v7364 = vmul.f32 %v7029, %v7349
  %v7365 = vmul.f32 %v7030, %v7349
  %v7366 = vmul.f32 %v7031, %v7349
  %v7367 = vmul.f32 %v7032, %v7349
  %v7368 = vmul.f32 %v7033, %v7349
  %v7369 = vmul.f32 %v7034, %v7349
  %v7370 = vmul.f32 %v7035, %v7349
  %v7371 = vmul.f32 %v7036, %v7349
  %v7372 = vmul.f32 %v7037, %v7349
  %v7373 = vmul.f32 %v7038, %v7349
  %v7374 = vmul.f32 %v7039, %v7349
  %v7375 = vmul.f32 %v7040, %v7349
  %v7376 = vmul.f32 %v7041, %v7349
  %v7377 = vmul.f32 %v7042, %v7349
  %v7378 = vmul.f32 %v7043, %v7349
  %v7379 = vmul.f32 %v7044, %v7349
  %v7380 = vmul.f32 %v7045, %v7349
  %v7381 = vmul.f32 %v7046, %v7349
  %v7382 = vadd.f32 %v7314, %v7350
  %v7383 = vadd.f32 %v7315, %v7351
  %v7384 = vadd.f32 %v7316, %v7352
  %v7385 = vadd.f32 %v7317, %v7353
  %v7386 = vadd.f32 %v7318, %v7354
  %v7387 = vadd.f32 %v7319, %v7355
  %v7388 = vadd.f32 %v7320, %v7356
  %v7389 = vadd.f32 %v7321, %v7357
  %v7390 = vadd.f32 %v7322, %v7358
  %v7391 = vadd.f32 %v7323, %v7359
  %v7392 = vadd.f32 %v7324, %v7360
  %v7393 = vadd.f32 %v7325, %v7361
  %v7394 = vadd.f32 %v7326, %v7362
  %v7395 = vadd.f32 %v7327, %v7363
  %v7396 = vadd.f32 %v7328, %v7364
  %v7397 = vadd.f32 %v7329, %v7365
  %v7398 = vadd.f32 %v7330, %v7366
  %v7399 = vadd.f32 %v7331, %v7367
  %v7400 = vadd.f32 %v7332, %v7368
  %v7401 = vadd.f32 %v7333, %v7369
  %v7402 = vadd.f32 %v7334, %v7370
  %v7403 = vadd.f32 %v7335, %v7371
  %v7404 = vadd.f32 %v7336, %v7372
  %v7405 = vadd.f32 %v7337, %v7373
  %v7406 = vadd.f32 %v7338, %v7374
  %v7407 = vadd.f32 %v7339, %v7375
  %v7408 = vadd.f32 %v7340, %v7376
  %v7409 = vadd.f32 %v7341, %v7377
  %v7410 = vadd.f32 %v7342, %v7378
  %v7411 = vadd.f32 %v7343, %v7379
  %v7412 = vadd.f32 %v7344, %v7380
  %v7413 = vadd.f32 %v7345, %v7381
  %v7414 = vlaneseq
  %v7415 = vshrl.u32 %v7414, 7
  %v7416 = vsub.s32 4, %v7415
  %v7417 = vrot.slane %v6776, %v7416
  %v7418 = vmul.f32 %v6782, %v7417
  %v7419 = vmul.f32 %v6783, %v7417
  %v7420 = vmul.f32 %v6784, %v7417
  %v7421 = vmul.f32 %v6785, %v7417
  %v7422 = vmul.f32 %v6786, %v7417
  %v7423 = vmul.f32 %v6787, %v7417
  %v7424 = vmul.f32 %v6788, %v7417
  %v7425 = vmul.f32 %v6789, %v7417
  %v7426 = vmul.f32 %v6790, %v7417
  %v7427 = vmul.f32 %v6791, %v7417
  %v7428 = vmul.f32 %v6792, %v7417
  %v7429 = vmul.f32 %v6793, %v7417
  %v7430 = vmul.f32 %v6794, %v7417
  %v7431 = vmul.f32 %v6795, %v7417
  %v7432 = vmul.f32 %v6796, %v7417
  %v7433 = vmul.f32 %v6797, %v7417
  %v7434 = vmul.f32 %v6798, %v7417
  %v7435 = vmul.f32 %v6799, %v7417
  %v7436 = vmul.f32 %v6800, %v7417
  %v7437 = vmul.f32 %v6801, %v7417
  %v7438 = vmul.f32 %v6802, %v7417
  %v7439 = vmul.f32 %v6803, %v7417
  %v7440 = vmul.f32 %v6804, %v7417
  %v7441 = vmul.f32 %v6805, %v7417
  %v7442 = vmul.f32 %v6806, %v7417
  %v7443 = vmul.f32 %v6807, %v7417
  %v7444 = vmul.f32 %v6808, %v7417
  %v7445 = vmul.f32 %v6809, %v7417
  %v7446 = vmul.f32 %v7002, %v7417
  %v7447 = vmul.f32 %v7003, %v7417
  %v7448 = vmul.f32 %v7004, %v7417
  %v7449 = vmul.f32 %v7005, %v7417
  %v7450 = vadd.f32 %v7382, %v7418
  %v7451 = vadd.f32 %v7383, %v7419
  %v7452 = vadd.f32 %v7384, %v7420
  %v7453 = vadd.f32 %v7385, %v7421
  %v7454 = vadd.f32 %v7386, %v7422
  %v7455 = vadd.f32 %v7387, %v7423
  %v7456 = vadd.f32 %v7388, %v7424
  %v7457 = vadd.f32 %v7389, %v7425
  %v7458 = vadd.f32 %v7390, %v7426
  %v7459 = vadd.f32 %v7391, %v7427
  %v7460 = vadd.f32 %v7392, %v7428
  %v7461 = vadd.f32 %v7393, %v7429
  %v7462 = vadd.f32 %v7394, %v7430
  %v7463 = vadd.f32 %v7395, %v7431
  %v7464 = vadd.f32 %v7396, %v7432
  %v7465 = vadd.f32 %v7397, %v7433
  %v7466 = vadd.f32 %v7398, %v7434
  %v7467 = vadd.f32 %v7399, %v7435
  %v7468 = vadd.f32 %v7400, %v7436
  %v7469 = vadd.f32 %v7401, %v7437
  %v7470 = vadd.f32 %v7402, %v7438
  %v7471 = vadd.f32 %v7403, %v7439
  %v7472 = vadd.f32 %v7404, %v7440
  %v7473 = vadd.f32 %v7405, %v7441
  %v7474 = vadd.f32 %v7406, %v7442
  %v7475 = vadd.f32 %v7407, %v7443
  %v7476 = vadd.f32 %v7408, %v7444
  %v7477 = vadd.f32 %v7409, %v7445
  %v7478 = vadd.f32 %v7410, %v7446
  %v7479 = vadd.f32 %v7411, %v7447
  %v7480 = vadd.f32 %v7412, %v7448
  %v7481 = vadd.f32 %v7413, %v7449
  %v7482 = vlaneseq
  %v7483 = vshrl.u32 %v7482, 7
  %v7484 = vsub.s32 5, %v7483
  %v7485 = vrot.slane %v6776, %v7484
  %v7486 = vmul.f32 %v7056, %v7485
  %v7487 = vmul.f32 %v7057, %v7485
  %v7488 = vmul.f32 %v7058, %v7485
  %v7489 = vmul.f32 %v7059, %v7485
  %v7490 = vmul.f32 %v7060, %v7485
  %v7491 = vmul.f32 %v7061, %v7485
  %v7492 = vmul.f32 %v7062, %v7485
  %v7493 = vmul.f32 %v7063, %v7485
  %v7494 = vmul.f32 %v7064, %v7485
  %v7495 = vmul.f32 %v7065, %v7485
  %v7496 = vmul.f32 %v7066, %v7485
  %v7497 = vmul.f32 %v7067, %v7485
  %v7498 = vmul.f32 %v7068, %v7485
  %v7499 = vmul.f32 %v7069, %v7485
  %v7500 = vmul.f32 %v7070, %v7485
  %v7501 = vmul.f32 %v7071, %v7485
  %v7502 = vmul.f32 %v7072, %v7485
  %v7503 = vmul.f32 %v7073, %v7485
  %v7504 = vmul.f32 %v7074, %v7485
  %v7505 = vmul.f32 %v7075, %v7485
  %v7506 = vmul.f32 %v7076, %v7485
  %v7507 = vmul.f32 %v7077, %v7485
  %v7508 = vmul.f32 %v7078, %v7485
  %v7509 = vmul.f32 %v7079, %v7485
  %v7510 = vmul.f32 %v7080, %v7485
  %v7511 = vmul.f32 %v7081, %v7485
  %v7512 = vmul.f32 %v7082, %v7485
  %v7513 = vmul.f32 %v7083, %v7485
  %v7514 = vmul.f32 %v7084, %v7485
  %v7515 = vmul.f32 %v7085, %v7485
  %v7516 = vmul.f32 %v7086, %v7485
  %v7517 = vmul.f32 %v7087, %v7485
  %v7518 = vadd.f32 %v7450, %v7486
  %v7519 = vadd.f32 %v7451, %v7487
  %v7520 = vadd.f32 %v7452, %v7488
  %v7521 = vadd.f32 %v7453, %v7489
  %v7522 = vadd.f32 %v7454, %v7490
  %v7523 = vadd.f32 %v7455, %v7491
  %v7524 = vadd.f32 %v7456, %v7492
  %v7525 = vadd.f32 %v7457, %v7493
  %v7526 = vadd.f32 %v7458, %v7494
  %v7527 = vadd.f32 %v7459, %v7495
  %v7528 = vadd.f32 %v7460, %v7496
  %v7529 = vadd.f32 %v7461, %v7497
  %v7530 = vadd.f32 %v7462, %v7498
  %v7531 = vadd.f32 %v7463, %v7499
  %v7532 = vadd.f32 %v7464, %v7500
  %v7533 = vadd.f32 %v7465, %v7501
  %v7534 = vadd.f32 %v7466, %v7502
  %v7535 = vadd.f32 %v7467, %v7503
  %v7536 = vadd.f32 %v7468, %v7504
  %v7537 = vadd.f32 %v7469, %v7505
  %v7538 = vadd.f32 %v7470, %v7506
  %v7539 = vadd.f32 %v7471, %v7507
  %v7540 = vadd.f32 %v7472, %v7508
  %v7541 = vadd.f32 %v7473, %v7509
  %v7542 = vadd.f32 %v7474, %v7510
  %v7543 = vadd.f32 %v7475, %v7511
  %v7544 = vadd.f32 %v7476, %v7512
  %v7545 = vadd.f32 %v7477, %v7513
  %v7546 = vadd.f32 %v7478, %v7514
  %v7547 = vadd.f32 %v7479, %v7515
  %v7548 = vadd.f32 %v7480, %v7516
  %v7549 = vadd.f32 %v7481, %v7517
  %v7550 = vlaneseq
  %v7551 = vshrl.u32 %v7550, 7
  %v7552 = vsub.s32 6, %v7551
  %v7553 = vrot.slane %v6776, %v7552
  %v7554 = vmul.f32 %v7101, %v7553
  %v7555 = vmul.f32 %v7102, %v7553
  %v7556 = vmul.f32 %v7103, %v7553
  %v7557 = vmul.f32 %v7104, %v7553
  %v7558 = vmul.f32 %v7105, %v7553
  %v7559 = vmul.f32 %v7106, %v7553
  %v7560 = vmul.f32 %v7107, %v7553
  %v7561 = vmul.f32 %v7108, %v7553
  %v7562 = vmul.f32 %v7109, %v7553
  %v7563 = vmul.f32 %v7110, %v7553
  %v7564 = vmul.f32 %v7111, %v7553
  %v7565 = vmul.f32 %v7112, %v7553
  %v7566 = vmul.f32 %v7113, %v7553
  %v7567 = vmul.f32 %v7114, %v7553
  %v7568 = vmul.f32 %v7115, %v7553
  %v7569 = vmul.f32 %v7116, %v7553
  %v7570 = vmul.f32 %v7117, %v7553
  %v7571 = vmul.f32 %v7118, %v7553
  %v7572 = vmul.f32 %v7119, %v7553
  %v7573 = vmul.f32 %v7120, %v7553
  %v7574 = vmul.f32 %v7121, %v7553
  %v7575 = vmul.f32 %v7122, %v7553
  %v7576 = vmul.f32 %v7123, %v7553
  %v7577 = vmul.f32 %v7124, %v7553
  %v7578 = vmul.f32 %v7125, %v7553
  %v7579 = vmul.f32 %v7126, %v7553
  %v7580 = vmul.f32 %v7127, %v7553
  %v7581 = vmul.f32 %v7128, %v7553
  %v7582 = vmul.f32 %v7129, %v7553
  %v7583 = vmul.f32 %v7130, %v7553
  %v7584 = vmul.f32 %v7131, %v7553
  %v7585 = vmul.f32 %v7132, %v7553
  %v7586 = vadd.f32 %v7518, %v7554
  %v7587 = vadd.f32 %v7519, %v7555
  %v7588 = vadd.f32 %v7520, %v7556
  %v7589 = vadd.f32 %v7521, %v7557
  %v7590 = vadd.f32 %v7522, %v7558
  %v7591 = vadd.f32 %v7523, %v7559
  %v7592 = vadd.f32 %v7524, %v7560
  %v7593 = vadd.f32 %v7525, %v7561
  %v7594 = vadd.f32 %v7526, %v7562
  %v7595 = vadd.f32 %v7527, %v7563
  %v7596 = vadd.f32 %v7528, %v7564
  %v7597 = vadd.f32 %v7529, %v7565
  %v7598 = vadd.f32 %v7530, %v7566
  %v7599 = vadd.f32 %v7531, %v7567
  %v7600 = vadd.f32 %v7532, %v7568
  %v7601 = vadd.f32 %v7533, %v7569
  %v7602 = vadd.f32 %v7534, %v7570
  %v7603 = vadd.f32 %v7535, %v7571
  %v7604 = vadd.f32 %v7536, %v7572
  %v7605 = vadd.f32 %v7537, %v7573
  %v7606 = vadd.f32 %v7538, %v7574
  %v7607 = vadd.f32 %v7539, %v7575
  %v7608 = vadd.f32 %v7540, %v7576
  %v7609 = vadd.f32 %v7541, %v7577
  %v7610 = vadd.f32 %v7542, %v7578
  %v7611 = vadd.f32 %v7543, %v7579
  %v7612 = vadd.f32 %v7544, %v7580
  %v7613 = vadd.f32 %v7545, %v7581
  %v7614 = vadd.f32 %v7546, %v7582
  %v7615 = vadd.f32 %v7547, %v7583
  %v7616 = vadd.f32 %v7548, %v7584
  %v7617 = vadd.f32 %v7549, %v7585
  %v7618 = vlaneseq
  %v7619 = vshrl.u32 %v7618, 7
  %v7620 = vsub.s32 7, %v7619
  %v7621 = vrot.slane %v6776, %v7620
  %v7622 = vmul.f32 %v6786, %v7621
  %v7623 = vmul.f32 %v6787, %v7621
  %v7624 = vmul.f32 %v6788, %v7621
  %v7625 = vmul.f32 %v6789, %v7621
  %v7626 = vmul.f32 %v6790, %v7621
  %v7627 = vmul.f32 %v6791, %v7621
  %v7628 = vmul.f32 %v6792, %v7621
  %v7629 = vmul.f32 %v6793, %v7621
  %v7630 = vmul.f32 %v6794, %v7621
  %v7631 = vmul.f32 %v6795, %v7621
  %v7632 = vmul.f32 %v6796, %v7621
  %v7633 = vmul.f32 %v6797, %v7621
  %v7634 = vmul.f32 %v6798, %v7621
  %v7635 = vmul.f32 %v6799, %v7621
  %v7636 = vmul.f32 %v6800, %v7621
  %v7637 = vmul.f32 %v6801, %v7621
  %v7638 = vmul.f32 %v6802, %v7621
  %v7639 = vmul.f32 %v6803, %v7621
  %v7640 = vmul.f32 %v6804, %v7621
  %v7641 = vmul.f32 %v6805, %v7621
  %v7642 = vmul.f32 %v6806, %v7621
  %v7643 = vmul.f32 %v6807, %v7621
  %v7644 = vmul.f32 %v6808, %v7621
  %v7645 = vmul.f32 %v6809, %v7621
  %v7646 = vmul.f32 %v7002, %v7621
  %v7647 = vmul.f32 %v7003, %v7621
  %v7648 = vmul.f32 %v7004, %v7621
  %v7649 = vmul.f32 %v7005, %v7621
  %v7650 = vmul.f32 %v7088, %v7621
  %v7651 = vmul.f32 %v7089, %v7621
  %v7652 = vmul.f32 %v7090, %v7621
  %v7653 = vmul.f32 %v7091, %v7621
  %v7654 = vadd.f32 %v7586, %v7622
  %v7655 = vadd.f32 %v7587, %v7623
  %v7656 = vadd.f32 %v7588, %v7624
  %v7657 = vadd.f32 %v7589, %v7625
  %v7658 = vadd.f32 %v7590, %v7626
  %v7659 = vadd.f32 %v7591, %v7627
  %v7660 = vadd.f32 %v7592, %v7628
  %v7661 = vadd.f32 %v7593, %v7629
  %v7662 = vadd.f32 %v7594, %v7630
  %v7663 = vadd.f32 %v7595, %v7631
  %v7664 = vadd.f32 %v7596, %v7632
  %v7665 = vadd.f32 %v7597, %v7633
  %v7666 = vadd.f32 %v7598, %v7634
  %v7667 = vadd.f32 %v7599, %v7635
  %v7668 = vadd.f32 %v7600, %v7636
  %v7669 = vadd.f32 %v7601, %v7637
  %v7670 = vadd.f32 %v7602, %v7638
  %v7671 = vadd.f32 %v7603, %v7639
  %v7672 = vadd.f32 %v7604, %v7640
  %v7673 = vadd.f32 %v7605, %v7641
  %v7674 = vadd.f32 %v7606, %v7642
  %v7675 = vadd.f32 %v7607, %v7643
  %v7676 = vadd.f32 %v7608, %v7644
  %v7677 = vadd.f32 %v7609, %v7645
  %v7678 = vadd.f32 %v7610, %v7646
  %v7679 = vadd.f32 %v7611, %v7647
  %v7680 = vadd.f32 %v7612, %v7648
  %v7681 = vadd.f32 %v7613, %v7649
  %v7682 = vadd.f32 %v7614, %v7650
  %v7683 = vadd.f32 %v7615, %v7651
  %v7684 = vadd.f32 %v7616, %v7652
  %v7685 = vadd.f32 %v7617, %v7653
  %v7686 = vlaneseq
  %v7687 = vshrl.u32 %v7686, 7
  %v7688 = vsub.s32 0, %v7687
  %v7689 = vrot.slane %v6777, %v7688
  %v7690 = vmul.f32 %v7142, %v7689
  %v7691 = vmul.f32 %v7143, %v7689
  %v7692 = vmul.f32 %v7144, %v7689
  %v7693 = vmul.f32 %v7145, %v7689
  %v7694 = vmul.f32 %v7146, %v7689
  %v7695 = vmul.f32 %v7147, %v7689
  %v7696 = vmul.f32 %v7148, %v7689
  %v7697 = vmul.f32 %v7149, %v7689
  %v7698 = vmul.f32 %v7150, %v7689
  %v7699 = vmul.f32 %v7151, %v7689
  %v7700 = vmul.f32 %v7152, %v7689
  %v7701 = vmul.f32 %v7153, %v7689
  %v7702 = vmul.f32 %v7154, %v7689
  %v7703 = vmul.f32 %v7155, %v7689
  %v7704 = vmul.f32 %v7156, %v7689
  %v7705 = vmul.f32 %v7157, %v7689
  %v7706 = vmul.f32 %v7158, %v7689
  %v7707 = vmul.f32 %v7159, %v7689
  %v7708 = vmul.f32 %v7160, %v7689
  %v7709 = vmul.f32 %v7161, %v7689
  %v7710 = vmul.f32 %v7162, %v7689
  %v7711 = vmul.f32 %v7163, %v7689
  %v7712 = vmul.f32 %v7164, %v7689
  %v7713 = vmul.f32 %v7165, %v7689
  %v7714 = vmul.f32 %v7166, %v7689
  %v7715 = vmul.f32 %v7167, %v7689
  %v7716 = vmul.f32 %v7168, %v7689
  %v7717 = vmul.f32 %v7169, %v7689
  %v7718 = vmul.f32 %v7170, %v7689
  %v7719 = vmul.f32 %v7171, %v7689
  %v7720 = vmul.f32 %v7172, %v7689
  %v7721 = vmul.f32 %v7173, %v7689
  %v7722 = vadd.f32 %v7654, %v7690
  %v7723 = vadd.f32 %v7655, %v7691
  %v7724 = vadd.f32 %v7656, %v7692
  %v7725 = vadd.f32 %v7657, %v7693
  %v7726 = vadd.f32 %v7658, %v7694
  %v7727 = vadd.f32 %v7659, %v7695
  %v7728 = vadd.f32 %v7660, %v7696
  %v7729 = vadd.f32 %v7661, %v7697
  %v7730 = vadd.f32 %v7662, %v7698
  %v7731 = vadd.f32 %v7663, %v7699
  %v7732 = vadd.f32 %v7664, %v7700
  %v7733 = vadd.f32 %v7665, %v7701
  %v7734 = vadd.f32 %v7666, %v7702
  %v7735 = vadd.f32 %v7667, %v7703
  %v7736 = vadd.f32 %v7668, %v7704
  %v7737 = vadd.f32 %v7669, %v7705
  %v7738 = vadd.f32 %v7670, %v7706
  %v7739 = vadd.f32 %v7671, %v7707
  %v7740 = vadd.f32 %v7672, %v7708
  %v7741 = vadd.f32 %v7673, %v7709
  %v7742 = vadd.f32 %v7674, %v7710
  %v7743 = vadd.f32 %v7675, %v7711
  %v7744 = vadd.f32 %v7676, %v7712
  %v7745 = vadd.f32 %v7677, %v7713
  %v7746 = vadd.f32 %v7678, %v7714
  %v7747 = vadd.f32 %v7679, %v7715
  %v7748 = vadd.f32 %v7680, %v7716
  %v7749 = vadd.f32 %v7681, %v7717
  %v7750 = vadd.f32 %v7682, %v7718
  %v7751 = vadd.f32 %v7683, %v7719
  %v7752 = vadd.f32 %v7684, %v7720
  %v7753 = vadd.f32 %v7685, %v7721
  %v7754 = vsel %vm359, %v7722, 0.0
  %7755 = vadd.xlane.f32.xlu0 %v7754
  %v7756 = vpop.xlane.xlu0 %7755
  %v7757 = vsel %vm359, %v7723, 0.0
  %7758 = vadd.xlane.f32.xlu0 %v7757
  %v7759 = vpop.xlane.xlu0 %7758
  %v7760 = vsel %vm359, %v7724, 0.0
  %7761 = vadd.xlane.f32.xlu0 %v7760
  %v7762 = vpop.xlane.xlu0 %7761
  %v7763 = vsel %vm359, %v7725, 0.0
  %7764 = vadd.xlane.f32.xlu0 %v7763
  %v7765 = vpop.xlane.xlu0 %7764
  %v7766 = vsel %vm359, %v7726, 0.0
  %7767 = vadd.xlane.f32.xlu0 %v7766
  %v7768 = vpop.xlane.xlu0 %7767
  %v7769 = vsel %vm359, %v7727, 0.0
  %7770 = vadd.xlane.f32.xlu0 %v7769
  %v7771 = vpop.xlane.xlu0 %7770
  %v7772 = vsel %vm359, %v7728, 0.0
  %7773 = vadd.xlane.f32.xlu0 %v7772
  %v7774 = vpop.xlane.xlu0 %7773
  %v7775 = vsel %vm359, %v7729, 0.0
  %7776 = vadd.xlane.f32.xlu0 %v7775
  %v7777 = vpop.xlane.xlu0 %7776
  %v7778 = vsel %vm359, %v7730, 0.0
  %7779 = vadd.xlane.f32.xlu0 %v7778
  %v7780 = vpop.xlane.xlu0 %7779
  %v7781 = vsel %vm359, %v7731, 0.0
  %7782 = vadd.xlane.f32.xlu0 %v7781
  %v7783 = vpop.xlane.xlu0 %7782
  %v7784 = vsel %vm359, %v7732, 0.0
  %7785 = vadd.xlane.f32.xlu0 %v7784
  %v7786 = vpop.xlane.xlu0 %7785
  %v7787 = vsel %vm359, %v7733, 0.0
  %7788 = vadd.xlane.f32.xlu0 %v7787
  %v7789 = vpop.xlane.xlu0 %7788
  %v7790 = vsel %vm359, %v7734, 0.0
  %7791 = vadd.xlane.f32.xlu0 %v7790
  %v7792 = vpop.xlane.xlu0 %7791
  %v7793 = vsel %vm359, %v7735, 0.0
  %7794 = vadd.xlane.f32.xlu0 %v7793
  %v7795 = vpop.xlane.xlu0 %7794
  %v7796 = vsel %vm359, %v7736, 0.0
  %7797 = vadd.xlane.f32.xlu0 %v7796
  %v7798 = vpop.xlane.xlu0 %7797
  %v7799 = vsel %vm359, %v7737, 0.0
  %7800 = vadd.xlane.f32.xlu0 %v7799
  %v7801 = vpop.xlane.xlu0 %7800
  %v7802 = vsel %vm359, %v7738, 0.0
  %7803 = vadd.xlane.f32.xlu0 %v7802
  %v7804 = vpop.xlane.xlu0 %7803
  %v7805 = vsel %vm359, %v7739, 0.0
  %7806 = vadd.xlane.f32.xlu0 %v7805
  %v7807 = vpop.xlane.xlu0 %7806
  %v7808 = vsel %vm359, %v7740, 0.0
  %7809 = vadd.xlane.f32.xlu0 %v7808
  %v7810 = vpop.xlane.xlu0 %7809
  %v7811 = vsel %vm359, %v7741, 0.0
  %7812 = vadd.xlane.f32.xlu0 %v7811
  %v7813 = vpop.xlane.xlu0 %7812
  %v7814 = vsel %vm359, %v7742, 0.0
  %7815 = vadd.xlane.f32.xlu0 %v7814
  %v7816 = vpop.xlane.xlu0 %7815
  %v7817 = vsel %vm359, %v7743, 0.0
  %7818 = vadd.xlane.f32.xlu0 %v7817
  %v7819 = vpop.xlane.xlu0 %7818
  %v7820 = vsel %vm359, %v7744, 0.0
  %7821 = vadd.xlane.f32.xlu0 %v7820
  %v7822 = vpop.xlane.xlu0 %7821
  %v7823 = vsel %vm359, %v7745, 0.0
  %7824 = vadd.xlane.f32.xlu0 %v7823
  %v7825 = vpop.xlane.xlu0 %7824
  %v7826 = vsel %vm359, %v7746, 0.0
  %7827 = vadd.xlane.f32.xlu0 %v7826
  %v7828 = vpop.xlane.xlu0 %7827
  %v7829 = vsel %vm359, %v7747, 0.0
  %7830 = vadd.xlane.f32.xlu0 %v7829
  %v7831 = vpop.xlane.xlu0 %7830
  %v7832 = vsel %vm359, %v7748, 0.0
  %7833 = vadd.xlane.f32.xlu0 %v7832
  %v7834 = vpop.xlane.xlu0 %7833
  %v7835 = vsel %vm359, %v7749, 0.0
  %7836 = vadd.xlane.f32.xlu0 %v7835
  %v7837 = vpop.xlane.xlu0 %7836
  %v7838 = vsel %vm359, %v7750, 0.0
  %7839 = vadd.xlane.f32.xlu0 %v7838
  %v7840 = vpop.xlane.xlu0 %7839
  %v7841 = vsel %vm359, %v7751, 0.0
  %7842 = vadd.xlane.f32.xlu0 %v7841
  %v7843 = vpop.xlane.xlu0 %7842
  %v7844 = vsel %vm359, %v7752, 0.0
  %7845 = vadd.xlane.f32.xlu0 %v7844
  %v7846 = vpop.xlane.xlu0 %7845
  %v7847 = vsel %vm359, %v7753, 0.0
  %7848 = vadd.xlane.f32.xlu0 %v7847
  %v7849 = vpop.xlane.xlu0 %7848
  %v7850 = vld [vmem:[#allocation4] sm:$0x1]
  %v7852 = vlaneseq
  %v7853 = vshrl.u32 %v7852, 7
  %v7854 = vsub.s32 0, %v7853
  %v7855 = vrot.slane %v7850, %v7854
  %v7857 = vadd.f32 %v7756, %v7855
  %v7858 = vadd.f32 %v7759, %v7855
  %v7859 = vadd.f32 %v7762, %v7855
  %v7860 = vadd.f32 %v7765, %v7855
  %v7861 = vadd.f32 %v7768, %v7855
  %v7862 = vadd.f32 %v7771, %v7855
  %v7863 = vadd.f32 %v7774, %v7855
  %v7864 = vadd.f32 %v7777, %v7855
  %v7865 = vadd.f32 %v7780, %v7855
  %v7866 = vadd.f32 %v7783, %v7855
  %v7867 = vadd.f32 %v7786, %v7855
  %v7868 = vadd.f32 %v7789, %v7855
  %v7869 = vadd.f32 %v7792, %v7855
  %v7870 = vadd.f32 %v7795, %v7855
  %v7871 = vadd.f32 %v7798, %v7855
  %v7872 = vadd.f32 %v7801, %v7855
  %v7873 = vadd.f32 %v7804, %v7855
  %v7874 = vadd.f32 %v7807, %v7855
  %v7875 = vadd.f32 %v7810, %v7855
  %v7876 = vadd.f32 %v7813, %v7855
  %v7877 = vadd.f32 %v7816, %v7855
  %v7878 = vadd.f32 %v7819, %v7855
  %v7879 = vadd.f32 %v7822, %v7855
  %v7880 = vadd.f32 %v7825, %v7855
  %v7881 = vadd.f32 %v7828, %v7855
  %v7882 = vadd.f32 %v7831, %v7855
  %v7883 = vadd.f32 %v7834, %v7855
  %v7884 = vadd.f32 %v7837, %v7855
  %v7885 = vadd.f32 %v7840, %v7855
  %v7886 = vadd.f32 %v7843, %v7855
  %v7887 = vadd.f32 %v7846, %v7855
  %v7888 = vadd.f32 %v7849, %v7855
  %v7889 = vld [vmem:[%s55] sm:$0xff]
  %v7890 = vld [vmem:[%s55 + $0x8] sm:$0xff]
  %7892 = vset.pattern.permute.xlu0 0
  %7893 = vperm.xlu0 %7892, %v7857
  %v7894 = vpop.permute.xlu0 %7893
  %7897 = vset.pattern.permute.xlu0 0
  %7898 = vperm.xlu0 %7897, %v7858
  %v7899 = vpop.permute.xlu0 %7898
  %7902 = vset.pattern.permute.xlu0 0
  %7903 = vperm.xlu0 %7902, %v7859
  %v7904 = vpop.permute.xlu0 %7903
  %7907 = vset.pattern.permute.xlu0 0
  %7908 = vperm.xlu0 %7907, %v7860
  %v7909 = vpop.permute.xlu0 %7908
  %7912 = vset.pattern.permute.xlu0 0
  %7913 = vperm.xlu0 %7912, %v7861
  %v7914 = vpop.permute.xlu0 %7913
  %7917 = vset.pattern.permute.xlu0 0
  %7918 = vperm.xlu0 %7917, %v7862
  %v7919 = vpop.permute.xlu0 %7918
  %7922 = vset.pattern.permute.xlu0 0
  %7923 = vperm.xlu0 %7922, %v7863
  %v7924 = vpop.permute.xlu0 %7923
  %7927 = vset.pattern.permute.xlu0 0
  %7928 = vperm.xlu0 %7927, %v7864
  %v7929 = vpop.permute.xlu0 %7928
  %7932 = vset.pattern.permute.xlu0 0
  %7933 = vperm.xlu0 %7932, %v7865
  %v7934 = vpop.permute.xlu0 %7933
  %7937 = vset.pattern.permute.xlu0 0
  %7938 = vperm.xlu0 %7937, %v7866
  %v7939 = vpop.permute.xlu0 %7938
  %7942 = vset.pattern.permute.xlu0 0
  %7943 = vperm.xlu0 %7942, %v7867
  %v7944 = vpop.permute.xlu0 %7943
  %7947 = vset.pattern.permute.xlu0 0
  %7948 = vperm.xlu0 %7947, %v7868
  %v7949 = vpop.permute.xlu0 %7948
  %7952 = vset.pattern.permute.xlu0 0
  %7953 = vperm.xlu0 %7952, %v7869
  %v7954 = vpop.permute.xlu0 %7953
  %7957 = vset.pattern.permute.xlu0 0
  %7958 = vperm.xlu0 %7957, %v7870
  %v7959 = vpop.permute.xlu0 %7958
  %7962 = vset.pattern.permute.xlu0 0
  %7963 = vperm.xlu0 %7962, %v7871
  %v7964 = vpop.permute.xlu0 %7963
  %7967 = vset.pattern.permute.xlu0 0
  %7968 = vperm.xlu0 %7967, %v7872
  %v7969 = vpop.permute.xlu0 %7968
  %7972 = vset.pattern.permute.xlu0 0
  %7973 = vperm.xlu0 %7972, %v7873
  %v7974 = vpop.permute.xlu0 %7973
  %7977 = vset.pattern.permute.xlu0 0
  %7978 = vperm.xlu0 %7977, %v7874
  %v7979 = vpop.permute.xlu0 %7978
  %7982 = vset.pattern.permute.xlu0 0
  %7983 = vperm.xlu0 %7982, %v7875
  %v7984 = vpop.permute.xlu0 %7983
  %7987 = vset.pattern.permute.xlu0 0
  %7988 = vperm.xlu0 %7987, %v7876
  %v7989 = vpop.permute.xlu0 %7988
  %7992 = vset.pattern.permute.xlu0 0
  %7993 = vperm.xlu0 %7992, %v7877
  %v7994 = vpop.permute.xlu0 %7993
  %7997 = vset.pattern.permute.xlu0 0
  %7998 = vperm.xlu0 %7997, %v7878
  %v7999 = vpop.permute.xlu0 %7998
  %8002 = vset.pattern.permute.xlu0 0
  %8003 = vperm.xlu0 %8002, %v7879
  %v8004 = vpop.permute.xlu0 %8003
  %8007 = vset.pattern.permute.xlu0 0
  %8008 = vperm.xlu0 %8007, %v7880
  %v8009 = vpop.permute.xlu0 %8008
  %8012 = vset.pattern.permute.xlu0 0
  %8013 = vperm.xlu0 %8012, %v7881
  %v8014 = vpop.permute.xlu0 %8013
  %8017 = vset.pattern.permute.xlu0 0
  %8018 = vperm.xlu0 %8017, %v7882
  %v8019 = vpop.permute.xlu0 %8018
  %8022 = vset.pattern.permute.xlu0 0
  %8023 = vperm.xlu0 %8022, %v7883
  %v8024 = vpop.permute.xlu0 %8023
  %8027 = vset.pattern.permute.xlu0 0
  %8028 = vperm.xlu0 %8027, %v7884
  %v8029 = vpop.permute.xlu0 %8028
  %8032 = vset.pattern.permute.xlu0 0
  %8033 = vperm.xlu0 %8032, %v7885
  %v8034 = vpop.permute.xlu0 %8033
  %8037 = vset.pattern.permute.xlu0 0
  %8038 = vperm.xlu0 %8037, %v7886
  %v8039 = vpop.permute.xlu0 %8038
  %8042 = vset.pattern.permute.xlu0 0
  %8043 = vperm.xlu0 %8042, %v7887
  %v8044 = vpop.permute.xlu0 %8043
  %8047 = vset.pattern.permute.xlu0 0
  %8048 = vperm.xlu0 %8047, %v7888
  %v8049 = vpop.permute.xlu0 %8048
  %v8051 = vmul.f32 %v7894, %v1512
  %v8052 = vmul.f32 %v7899, %v1513
  %v8053 = vmul.f32 %v7904, %v1514
  %v8054 = vmul.f32 %v7909, %v1515
  %v8055 = vmul.f32 %v7914, %v1516
  %v8056 = vmul.f32 %v7919, %v1517
  %v8057 = vmul.f32 %v7924, %v1518
  %v8058 = vmul.f32 %v7929, %v1519
  %v8059 = vmul.f32 %v7934, %v1520
  %v8060 = vmul.f32 %v7939, %v1521
  %v8061 = vmul.f32 %v7944, %v1522
  %v8062 = vmul.f32 %v7949, %v1523
  %v8063 = vmul.f32 %v7954, %v1524
  %v8064 = vmul.f32 %v7959, %v1525
  %v8065 = vmul.f32 %v7964, %v1526
  %v8066 = vmul.f32 %v7969, %v1527
  %v8067 = vmul.f32 %v7974, %v1528
  %v8068 = vmul.f32 %v7979, %v1529
  %v8069 = vmul.f32 %v7984, %v1530
  %v8070 = vmul.f32 %v7989, %v1531
  %v8071 = vmul.f32 %v7994, %v1532
  %v8072 = vmul.f32 %v7999, %v1533
  %v8073 = vmul.f32 %v8004, %v1534
  %v8074 = vmul.f32 %v8009, %v1535
  %v8075 = vmul.f32 %v8014, %v1536
  %v8076 = vmul.f32 %v8019, %v1537
  %v8077 = vmul.f32 %v8024, %v1538
  %v8078 = vmul.f32 %v8029, %v1539
  %v8079 = vmul.f32 %v8034, %v1540
  %v8080 = vmul.f32 %v8039, %v1541
  %v8081 = vmul.f32 %v8044, %v1542
  %v8082 = vmul.f32 %v8049, %v1543
  %8083 = vmatprep.subr.mxu0 0.0
  %8084 = vmatpush1.msra.mxu0 %v8051
  %8085 = vmatprep.subr.mxu0 0.0
  %8086 = vmatpush1.msra.mxu0 %v8052
  %8087 = vmatprep.subr.mxu0 0.0
  %8088 = vmatpush1.msra.mxu0 %v8053
  %8089 = vmatprep.subr.mxu0 0.0
  %8090 = vmatpush1.msra.mxu0 %v8054
  %8091 = vmatprep.subr.mxu0 0.0
  %8092 = vmatpush1.msra.mxu0 %v8055
  %8093 = vmatprep.subr.mxu0 0.0
  %8094 = vmatpush1.msra.mxu0 %v8056
  %8095 = vmatprep.subr.mxu0 0.0
  %8096 = vmatpush1.msra.mxu0 %v8057
  %8097 = vmatprep.subr.mxu0 0.0
  %8098 = vmatpush1.msra.mxu0 %v8058
  %8099 = vmatprep.subr.mxu0 0.0
  %8100 = vmatpush1.msra.mxu0 %v8059
  %8101 = vmatprep.subr.mxu0 0.0
  %8102 = vmatpush1.msra.mxu0 %v8060
  %8103 = vmatprep.subr.mxu0 0.0
  %8104 = vmatpush1.msra.mxu0 %v8061
  %8105 = vmatprep.subr.mxu0 0.0
  %8106 = vmatpush1.msra.mxu0 %v8062
  %8107 = vmatprep.subr.mxu0 0.0
  %8108 = vmatpush1.msra.mxu0 %v8063
  %8109 = vmatprep.subr.mxu0 0.0
  %8110 = vmatpush1.msra.mxu0 %v8064
  %8111 = vmatprep.subr.mxu0 0.0
  %8112 = vmatpush1.msra.mxu0 %v8065
  %8113 = vmatprep.subr.mxu0 0.0
  %8114 = vmatpush1.msra.mxu0 %v8066
  %8115 = vmatprep.subr.mxu0 0.0
  %8116 = vmatpush1.msra.mxu0 %v8067
  %8117 = vmatprep.subr.mxu0 0.0
  %8118 = vmatpush1.msra.mxu0 %v8068
  %8119 = vmatprep.subr.mxu0 0.0
  %8120 = vmatpush1.msra.mxu0 %v8069
  %8121 = vmatprep.subr.mxu0 0.0
  %8122 = vmatpush1.msra.mxu0 %v8070
  %8123 = vmatprep.subr.mxu0 0.0
  %8124 = vmatpush1.msra.mxu0 %v8071
  %8125 = vmatprep.subr.mxu0 0.0
  %8126 = vmatpush1.msra.mxu0 %v8072
  %8127 = vmatprep.subr.mxu0 0.0
  %8128 = vmatpush1.msra.mxu0 %v8073
  %8129 = vmatprep.subr.mxu0 0.0
  %8130 = vmatpush1.msra.mxu0 %v8074
  %8131 = vmatprep.subr.mxu0 0.0
  %8132 = vmatpush1.msra.mxu0 %v8075
  %8133 = vmatprep.subr.mxu0 0.0
  %8134 = vmatpush1.msra.mxu0 %v8076
  %8135 = vmatprep.subr.mxu0 0.0
  %8136 = vmatpush1.msra.mxu0 %v8077
  %8137 = vmatprep.subr.mxu0 0.0
  %8138 = vmatpush1.msra.mxu0 %v8078
  %8139 = vmatprep.subr.mxu0 0.0
  %8140 = vmatpush1.msra.mxu0 %v8079
  %8141 = vmatprep.subr.mxu0 0.0
  %8142 = vmatpush1.msra.mxu0 %v8080
  %8143 = vmatprep.subr.mxu0 0.0
  %8144 = vmatpush1.msra.mxu0 %v8081
  %8145 = vmatprep.subr.mxu0 0.0
  %8146 = vmatpush1.msra.mxu0 %v8082
  %8147 = vmatprep.mubr.f32.mxu0 %v7890
  %8148 = vmatmul.mubr.f32.gmra.mrb[0].mxu0 %v7889
  %v8149 = vpop.f32.mrb[0].mxu0
  %v8150 = vadd.f32 %v1511, %v8149
  %v8151 = vpop.f32.mrb[0].mxu0
  %8152 = vdwg.mxu0
  %v8153 = vld [vmem:[%s9] sm:$0xff]
  %v8154 = vld [vmem:[%s9 + $0x8] sm:$0xff]
  %v8155 = vld [vmem:[%s9 + $0x10] sm:$0xff]
  %v8156 = vld [vmem:[%s9 + $0x18] sm:$0xff]
  %v8157 = vld [vmem:[%s11] sm:$0x1]
  %v8159 = vlaneseq
  %v8160 = vshrl.u32 %v8159, 7
  %v8161 = vsub.s32 0, %v8160
  %v8162 = vrot.slane %v8157, %v8161
  %v8165 = vsel %vm359, %v8150, 0
  %8167 = vmatprep.subr.mxu0 0.0
  %8168 = vmatpush1.msra.mxu0 %v8153
  %8169 = vmatprep.subr.mxu0 0.0
  %8170 = vmatpush1.msra.mxu0 %v8154
  %8171 = vmatprep.subr.mxu0 0.0
  %8172 = vmatpush1.msra.mxu0 %v8155
  %8173 = vmatprep.subr.mxu0 0.0
  %8174 = vmatpush1.msra.mxu0 %v8156
  %8175 = vmatprep.subr.mxu0 0.0
  %8176 = vmatpush1.msra.mxu0 0.0
  %8177 = vmatprep.subr.mxu0 0.0
  %8178 = vmatpush1.msra.mxu0 0.0
  %8179 = vmatprep.subr.mxu0 0.0
  %8180 = vmatpush1.msra.mxu0 0.0
  %8181 = vmatprep.subr.mxu0 0.0
  %8182 = vmatpush1.msra.mxu0 0.0
  %8183 = vmatprep.subr.mxu0 0.0
  %8184 = vmatpush1.msra.mxu0 0.0
  %8185 = vmatprep.subr.mxu0 0.0
  %8186 = vmatpush1.msra.mxu0 0.0
  %8187 = vmatprep.subr.mxu0 0.0
  %8188 = vmatpush1.msra.mxu0 0.0
  %8189 = vmatprep.subr.mxu0 0.0
  %8190 = vmatpush1.msra.mxu0 0.0
  %8191 = vmatprep.subr.mxu0 0.0
  %8192 = vmatpush1.msra.mxu0 0.0
  %8193 = vmatprep.subr.mxu0 0.0
  %8194 = vmatpush1.msra.mxu0 0.0
  %8195 = vmatprep.subr.mxu0 0.0
  %8196 = vmatpush1.msra.mxu0 0.0
  %8197 = vmatprep.subr.mxu0 0.0
  %8198 = vmatpush1.msra.mxu0 0.0
  %8199 = vmatprep.subr.mxu0 0.0
  %8200 = vmatpush1.msra.mxu0 0.0
  %8201 = vmatprep.subr.mxu0 0.0
  %8202 = vmatpush1.msra.mxu0 0.0
  %8203 = vmatprep.subr.mxu0 0.0
  %8204 = vmatpush1.msra.mxu0 0.0
  %8205 = vmatprep.subr.mxu0 0.0
  %8206 = vmatpush1.msra.mxu0 0.0
  %8207 = vmatprep.subr.mxu0 0.0
  %8208 = vmatpush1.msra.mxu0 0.0
  %8209 = vmatprep.subr.mxu0 0.0
  %8210 = vmatpush1.msra.mxu0 0.0
  %8211 = vmatprep.subr.mxu0 0.0
  %8212 = vmatpush1.msra.mxu0 0.0
  %8213 = vmatprep.subr.mxu0 0.0
  %8214 = vmatpush1.msra.mxu0 0.0
  %8215 = vmatprep.subr.mxu0 0.0
  %8216 = vmatpush1.msra.mxu0 0.0
  %8217 = vmatprep.subr.mxu0 0.0
  %8218 = vmatpush1.msra.mxu0 0.0
  %8219 = vmatprep.subr.mxu0 0.0
  %8220 = vmatpush1.msra.mxu0 0.0
  %8221 = vmatprep.subr.mxu0 0.0
  %8222 = vmatpush1.msra.mxu0 0.0
  %8223 = vmatprep.subr.mxu0 0.0
  %8224 = vmatpush1.msra.mxu0 0.0
  %8225 = vmatprep.subr.mxu0 0.0
  %8226 = vmatpush1.msra.mxu0 0.0
  %8227 = vmatprep.subr.mxu0 0.0
  %8228 = vmatpush1.msra.mxu0 0.0
  %8229 = vmatprep.subr.mxu0 0.0
  %8230 = vmatpush1.msra.mxu0 0.0
  %8231 = vmatprep.mubr.f32.mxu0 0.0
  %8232 = vmatmul.mubr.f32.gmra.mrb[0].mxu0 %v8165
  %v8233 = vpop.f32.mrb[0].mxu0
  %v8234 = vadd.f32 %v8162, %v8233
  %v8235 = vpop.f32.mrb[0].mxu0
  %8236 = vdwg.mxu0
  %8237 = vmatprep.subr.mxu0 0.0
  %8238 = vmatpush1.msra.mxu0 %v8234
  %8239 = vmatprep.subr.mxu0 0.0
  %8240 = vmatpush1.msra.mxu0 0.0
  %8241 = vmatprep.subr.mxu0 0.0
  %8242 = vmatpush1.msra.mxu0 0.0
  %8243 = vmatprep.subr.mxu0 0.0
  %8244 = vmatpush1.msra.mxu0 0.0
  %8245 = vmatprep.subr.mxu0 0.0
  %8246 = vmatpush1.msra.mxu0 0.0
  %8247 = vmatprep.subr.mxu0 0.0
  %8248 = vmatpush1.msra.mxu0 0.0
  %8249 = vmatprep.subr.mxu0 0.0
  %8250 = vmatpush1.msra.mxu0 0.0
  %8251 = vmatprep.subr.mxu0 0.0
  %8252 = vmatpush1.msra.mxu0 0.0
  %8253 = vmatprep.subr.mxu0 0.0
  %8254 = vmatpush1.msra.mxu0 0.0
  %8255 = vmatprep.subr.mxu0 0.0
  %8256 = vmatpush1.msra.mxu0 0.0
  %8257 = vmatprep.subr.mxu0 0.0
  %8258 = vmatpush1.msra.mxu0 0.0
  %8259 = vmatprep.subr.mxu0 0.0
  %8260 = vmatpush1.msra.mxu0 0.0
  %8261 = vmatprep.subr.mxu0 0.0
  %8262 = vmatpush1.msra.mxu0 0.0
  %8263 = vmatprep.subr.mxu0 0.0
  %8264 = vmatpush1.msra.mxu0 0.0
  %8265 = vmatprep.subr.mxu0 0.0
  %8266 = vmatpush1.msra.mxu0 0.0
  %8267 = vmatprep.subr.mxu0 0.0
  %8268 = vmatpush1.msra.mxu0 0.0
  %8269 = vmatprep.subr.mxu0 0.0
  %8270 = vmatpush1.msra.mxu0 0.0
  %8271 = vmatprep.subr.mxu0 0.0
  %8272 = vmatpush1.msra.mxu0 0.0
  %8273 = vmatprep.subr.mxu0 0.0
  %8274 = vmatpush1.msra.mxu0 0.0
  %8275 = vmatprep.subr.mxu0 0.0
  %8276 = vmatpush1.msra.mxu0 0.0
  %8277 = vmatprep.subr.mxu0 0.0
  %8278 = vmatpush1.msra.mxu0 0.0
  %8279 = vmatprep.subr.mxu0 0.0
  %8280 = vmatpush1.msra.mxu0 0.0
  %8281 = vmatprep.subr.mxu0 0.0
  %8282 = vmatpush1.msra.mxu0 0.0
  %8283 = vmatprep.subr.mxu0 0.0
  %8284 = vmatpush1.msra.mxu0 0.0
  %8285 = vmatprep.subr.mxu0 0.0
  %8286 = vmatpush1.msra.mxu0 0.0
  %8287 = vmatprep.subr.mxu0 0.0
  %8288 = vmatpush1.msra.mxu0 0.0
  %8289 = vmatprep.subr.mxu0 0.0
  %8290 = vmatpush1.msra.mxu0 0.0
  %8291 = vmatprep.subr.mxu0 0.0
  %8292 = vmatpush1.msra.mxu0 0.0
  %8293 = vmatprep.subr.mxu0 0.0
  %8294 = vmatpush1.msra.mxu0 0.0
  %8295 = vmatprep.subr.mxu0 0.0
  %8296 = vmatpush1.msra.mxu0 0.0
  %8297 = vmatprep.subr.mxu0 0.0
  %8298 = vmatpush1.msra.mxu0 0.0
  %8299 = vmatprep.subr.mxu0 0.0
  %8300 = vmatpush1.msra.mxu0 0.0
  %8301 = vmatprep.mubr.f32.mxu0 0.0
  %8302 = vmatmul.mubr.f32.gmra.mrb[0].mxu0 %v832
  %v8303 = vpop.f32.mrb[0].mxu0
  %v8304 = vadd.f32 0.0, %v8303
  %v8305 = vpop.f32.mrb[0].mxu0
  %8306 = vdwg.mxu0
  %v8307 = vld [vmem:[%s23] sm:$0xff]
  %v8308 = vld [vmem:[%s23 + $0x8] sm:$0xff]
  %v8309 = vld [vmem:[%s23 + $0x10] sm:$0xff]
  %v8310 = vld [vmem:[%s23 + $0x18] sm:$0xff]
  %v8311 = vld [vmem:[%s25] sm:$0xff]
  %v8312 = vld [vmem:[%s25 + $0x8] sm:$0xff]
  %v8313 = vld [vmem:[%s25 + $0x10] sm:$0xff]
  %v8314 = vld [vmem:[%s25 + $0x18] sm:$0xff]
  %v8316 = vsel %vm359, %v8234, 0
  %8318 = vmatprep.subr.mxu0 0.0
  %8319 = vmatpush1.msra.mxu0 %v8311
  %8320 = vmatprep.subr.mxu0 0.0
  %8321 = vmatpush1.msra.mxu0 %v8312
  %8322 = vmatprep.subr.mxu0 0.0
  %8323 = vmatpush1.msra.mxu0 %v8313
  %8324 = vmatprep.subr.mxu0 0.0
  %8325 = vmatpush1.msra.mxu0 %v8314
  %8326 = vmatprep.subr.mxu0 0.0
  %8327 = vmatpush1.msra.mxu0 0.0
  %8328 = vmatprep.subr.mxu0 0.0
  %8329 = vmatpush1.msra.mxu0 0.0
  %8330 = vmatprep.subr.mxu0 0.0
  %8331 = vmatpush1.msra.mxu0 0.0
  %8332 = vmatprep.subr.mxu0 0.0
  %8333 = vmatpush1.msra.mxu0 0.0
  %8334 = vmatprep.subr.mxu0 0.0
  %8335 = vmatpush1.msra.mxu0 0.0
  %8336 = vmatprep.subr.mxu0 0.0
  %8337 = vmatpush1.msra.mxu0 0.0
  %8338 = vmatprep.subr.mxu0 0.0
  %8339 = vmatpush1.msra.mxu0 0.0
  %8340 = vmatprep.subr.mxu0 0.0
  %8341 = vmatpush1.msra.mxu0 0.0
  %8342 = vmatprep.subr.mxu0 0.0
  %8343 = vmatpush1.msra.mxu0 0.0
  %8344 = vmatprep.subr.mxu0 0.0
  %8345 = vmatpush1.msra.mxu0 0.0
  %8346 = vmatprep.subr.mxu0 0.0
  %8347 = vmatpush1.msra.mxu0 0.0
  %8348 = vmatprep.subr.mxu0 0.0
  %8349 = vmatpush1.msra.mxu0 0.0
  %8350 = vmatprep.subr.mxu0 0.0
  %8351 = vmatpush1.msra.mxu0 0.0
  %8352 = vmatprep.subr.mxu0 0.0
  %8353 = vmatpush1.msra.mxu0 0.0
  %8354 = vmatprep.subr.mxu0 0.0
  %8355 = vmatpush1.msra.mxu0 0.0
  %8356 = vmatprep.subr.mxu0 0.0
  %8357 = vmatpush1.msra.mxu0 0.0
  %8358 = vmatprep.subr.mxu0 0.0
  %8359 = vmatpush1.msra.mxu0 0.0
  %8360 = vmatprep.subr.mxu0 0.0
  %8361 = vmatpush1.msra.mxu0 0.0
  %8362 = vmatprep.subr.mxu0 0.0
  %8363 = vmatpush1.msra.mxu0 0.0
  %8364 = vmatprep.subr.mxu0 0.0
  %8365 = vmatpush1.msra.mxu0 0.0
  %8366 = vmatprep.subr.mxu0 0.0
  %8367 = vmatpush1.msra.mxu0 0.0
  %8368 = vmatprep.subr.mxu0 0.0
  %8369 = vmatpush1.msra.mxu0 0.0
  %8370 = vmatprep.subr.mxu0 0.0
  %8371 = vmatpush1.msra.mxu0 0.0
  %8372 = vmatprep.subr.mxu0 0.0
  %8373 = vmatpush1.msra.mxu0 0.0
  %8374 = vmatprep.subr.mxu0 0.0
  %8375 = vmatpush1.msra.mxu0 0.0
  %8376 = vmatprep.subr.mxu0 0.0
  %8377 = vmatpush1.msra.mxu0 0.0
  %8378 = vmatprep.subr.mxu0 0.0
  %8379 = vmatpush1.msra.mxu0 0.0
  %8380 = vmatprep.subr.mxu0 0.0
  %8381 = vmatpush1.msra.mxu0 0.0
  %8382 = vmatprep.mubr.f32.mxu0 0.0
  %8383 = vmatmul.mubr.f32.gmra.mrb[0].mxu0 %v8316
  %v8384 = vpop.f32.mrb[0].mxu0
  %v8385 = vadd.f32 0.0, %v8384
  %v8386 = vpop.f32.mrb[0].mxu0
  %8387 = vdwg.mxu0
  %v8389 = vsel %vm359, %v8304, 0
  %8391 = vmatprep.subr.mxu0 0.0
  %8392 = vmatpush1.msra.mxu0 %v8307
  %8393 = vmatprep.subr.mxu0 0.0
  %8394 = vmatpush1.msra.mxu0 %v8308
  %8395 = vmatprep.subr.mxu0 0.0
  %8396 = vmatpush1.msra.mxu0 %v8309
  %8397 = vmatprep.subr.mxu0 0.0
  %8398 = vmatpush1.msra.mxu0 %v8310
  %8399 = vmatprep.subr.mxu0 0.0
  %8400 = vmatpush1.msra.mxu0 0.0
  %8401 = vmatprep.subr.mxu0 0.0
  %8402 = vmatpush1.msra.mxu0 0.0
  %8403 = vmatprep.subr.mxu0 0.0
  %8404 = vmatpush1.msra.mxu0 0.0
  %8405 = vmatprep.subr.mxu0 0.0
  %8406 = vmatpush1.msra.mxu0 0.0
  %8407 = vmatprep.subr.mxu0 0.0
  %8408 = vmatpush1.msra.mxu0 0.0
  %8409 = vmatprep.subr.mxu0 0.0
  %8410 = vmatpush1.msra.mxu0 0.0
  %8411 = vmatprep.subr.mxu0 0.0
  %8412 = vmatpush1.msra.mxu0 0.0
  %8413 = vmatprep.subr.mxu0 0.0
  %8414 = vmatpush1.msra.mxu0 0.0
  %8415 = vmatprep.subr.mxu0 0.0
  %8416 = vmatpush1.msra.mxu0 0.0
  %8417 = vmatprep.subr.mxu0 0.0
  %8418 = vmatpush1.msra.mxu0 0.0
  %8419 = vmatprep.subr.mxu0 0.0
  %8420 = vmatpush1.msra.mxu0 0.0
  %8421 = vmatprep.subr.mxu0 0.0
  %8422 = vmatpush1.msra.mxu0 0.0
  %8423 = vmatprep.subr.mxu0 0.0
  %8424 = vmatpush1.msra.mxu0 0.0
  %8425 = vmatprep.subr.mxu0 0.0
  %8426 = vmatpush1.msra.mxu0 0.0
  %8427 = vmatprep.subr.mxu0 0.0
  %8428 = vmatpush1.msra.mxu0 0.0
  %8429 = vmatprep.subr.mxu0 0.0
  %8430 = vmatpush1.msra.mxu0 0.0
  %8431 = vmatprep.subr.mxu0 0.0
  %8432 = vmatpush1.msra.mxu0 0.0
  %8433 = vmatprep.subr.mxu0 0.0
  %8434 = vmatpush1.msra.mxu0 0.0
  %8435 = vmatprep.subr.mxu0 0.0
  %8436 = vmatpush1.msra.mxu0 0.0
  %8437 = vmatprep.subr.mxu0 0.0
  %8438 = vmatpush1.msra.mxu0 0.0
  %8439 = vmatprep.subr.mxu0 0.0
  %8440 = vmatpush1.msra.mxu0 0.0
  %8441 = vmatprep.subr.mxu0 0.0
  %8442 = vmatpush1.msra.mxu0 0.0
  %8443 = vmatprep.subr.mxu0 0.0
  %8444 = vmatpush1.msra.mxu0 0.0
  %8445 = vmatprep.subr.mxu0 0.0
  %8446 = vmatpush1.msra.mxu0 0.0
  %8447 = vmatprep.subr.mxu0 0.0
  %8448 = vmatpush1.msra.mxu0 0.0
  %8449 = vmatprep.subr.mxu0 0.0
  %8450 = vmatpush1.msra.mxu0 0.0
  %8451 = vmatprep.subr.mxu0 0.0
  %8452 = vmatpush1.msra.mxu0 0.0
  %8453 = vmatprep.subr.mxu0 0.0
  %8454 = vmatpush1.msra.mxu0 0.0
  %8455 = vmatprep.mubr.f32.mxu0 0.0
  %8456 = vmatmul.mubr.f32.gmra.mrb[0].mxu0 %v8389
  %v8457 = vpop.f32.mrb[0].mxu0
  %v8458 = vadd.f32 %v8385, %v8457
  %v8459 = vpop.f32.mrb[0].mxu0
  %8460 = vdwg.mxu0
  %v8461 = vld [vmem:[%s27] sm:$0x1]
  %v8463 = vlaneseq
  %v8464 = vshrl.u32 %v8463, 7
  %v8465 = vsub.s32 0, %v8464
  %v8466 = vrot.slane %v8461, %v8465
  %v8468 = vadd.f32 %v8458, %v8466
  %8469 = vmatprep.subr.mxu0 0.0
  %8470 = vmatpush1.msra.mxu0 %v8468
  %8471 = vmatprep.subr.mxu0 0.0
  %8472 = vmatpush1.msra.mxu0 0.0
  %8473 = vmatprep.subr.mxu0 0.0
  %8474 = vmatpush1.msra.mxu0 0.0
  %8475 = vmatprep.subr.mxu0 0.0
  %8476 = vmatpush1.msra.mxu0 0.0
  %8477 = vmatprep.subr.mxu0 0.0
  %8478 = vmatpush1.msra.mxu0 0.0
  %8479 = vmatprep.subr.mxu0 0.0
  %8480 = vmatpush1.msra.mxu0 0.0
  %8481 = vmatprep.subr.mxu0 0.0
  %8482 = vmatpush1.msra.mxu0 0.0
  %8483 = vmatprep.subr.mxu0 0.0
  %8484 = vmatpush1.msra.mxu0 0.0
  %8485 = vmatprep.subr.mxu0 0.0
  %8486 = vmatpush1.msra.mxu0 0.0
  %8487 = vmatprep.subr.mxu0 0.0
  %8488 = vmatpush1.msra.mxu0 0.0
  %8489 = vmatprep.subr.mxu0 0.0
  %8490 = vmatpush1.msra.mxu0 0.0
  %8491 = vmatprep.subr.mxu0 0.0
  %8492 = vmatpush1.msra.mxu0 0.0
  %8493 = vmatprep.subr.mxu0 0.0
  %8494 = vmatpush1.msra.mxu0 0.0
  %8495 = vmatprep.subr.mxu0 0.0
  %8496 = vmatpush1.msra.mxu0 0.0
  %8497 = vmatprep.subr.mxu0 0.0
  %8498 = vmatpush1.msra.mxu0 0.0
  %8499 = vmatprep.subr.mxu0 0.0
  %8500 = vmatpush1.msra.mxu0 0.0
  %8501 = vmatprep.subr.mxu0 0.0
  %8502 = vmatpush1.msra.mxu0 0.0
  %8503 = vmatprep.subr.mxu0 0.0
  %8504 = vmatpush1.msra.mxu0 0.0
  %8505 = vmatprep.subr.mxu0 0.0
  %8506 = vmatpush1.msra.mxu0 0.0
  %8507 = vmatprep.subr.mxu0 0.0
  %8508 = vmatpush1.msra.mxu0 0.0
  %8509 = vmatprep.subr.mxu0 0.0
  %8510 = vmatpush1.msra.mxu0 0.0
  %8511 = vmatprep.subr.mxu0 0.0
  %8512 = vmatpush1.msra.mxu0 0.0
  %8513 = vmatprep.subr.mxu0 0.0
  %8514 = vmatpush1.msra.mxu0 0.0
  %8515 = vmatprep.subr.mxu0 0.0
  %8516 = vmatpush1.msra.mxu0 0.0
  %8517 = vmatprep.subr.mxu0 0.0
  %8518 = vmatpush1.msra.mxu0 0.0
  %8519 = vmatprep.subr.mxu0 0.0
  %8520 = vmatpush1.msra.mxu0 0.0
  %8521 = vmatprep.subr.mxu0 0.0
  %8522 = vmatpush1.msra.mxu0 0.0
  %8523 = vmatprep.subr.mxu0 0.0
  %8524 = vmatpush1.msra.mxu0 0.0
  %8525 = vmatprep.subr.mxu0 0.0
  %8526 = vmatpush1.msra.mxu0 0.0
  %8527 = vmatprep.subr.mxu0 0.0
  %8528 = vmatpush1.msra.mxu0 0.0
  %8529 = vmatprep.subr.mxu0 0.0
  %8530 = vmatpush1.msra.mxu0 0.0
  %8531 = vmatprep.subr.mxu0 0.0
  %8532 = vmatpush1.msra.mxu0 0.0
  %8533 = vmatprep.mubr.f32.mxu0 0.0
  %8534 = vmatmul.mubr.f32.gmra.mrb[0].mxu0 %v832
  %v8535 = vpop.f32.mrb[0].mxu0
  %v8536 = vadd.f32 0.0, %v8535
  %v8537 = vpop.f32.mrb[0].mxu0
  %8538 = vdwg.mxu0
  %v8540 = vsel %vm359, %v8468, 0
  %8542 = vmatprep.subr.mxu0 0.0
  %8543 = vmatpush1.msra.mxu0 %v8311
  %8544 = vmatprep.subr.mxu0 0.0
  %8545 = vmatpush1.msra.mxu0 %v8312
  %8546 = vmatprep.subr.mxu0 0.0
  %8547 = vmatpush1.msra.mxu0 %v8313
  %8548 = vmatprep.subr.mxu0 0.0
  %8549 = vmatpush1.msra.mxu0 %v8314
  %8550 = vmatprep.subr.mxu0 0.0
  %8551 = vmatpush1.msra.mxu0 0.0
  %8552 = vmatprep.subr.mxu0 0.0
  %8553 = vmatpush1.msra.mxu0 0.0
  %8554 = vmatprep.subr.mxu0 0.0
  %8555 = vmatpush1.msra.mxu0 0.0
  %8556 = vmatprep.subr.mxu0 0.0
  %8557 = vmatpush1.msra.mxu0 0.0
  %8558 = vmatprep.subr.mxu0 0.0
  %8559 = vmatpush1.msra.mxu0 0.0
  %8560 = vmatprep.subr.mxu0 0.0
  %8561 = vmatpush1.msra.mxu0 0.0
  %8562 = vmatprep.subr.mxu0 0.0
  %8563 = vmatpush1.msra.mxu0 0.0
  %8564 = vmatprep.subr.mxu0 0.0
  %8565 = vmatpush1.msra.mxu0 0.0
  %8566 = vmatprep.subr.mxu0 0.0
  %8567 = vmatpush1.msra.mxu0 0.0
  %8568 = vmatprep.subr.mxu0 0.0
  %8569 = vmatpush1.msra.mxu0 0.0
  %8570 = vmatprep.subr.mxu0 0.0
  %8571 = vmatpush1.msra.mxu0 0.0
  %8572 = vmatprep.subr.mxu0 0.0
  %8573 = vmatpush1.msra.mxu0 0.0
  %8574 = vmatprep.subr.mxu0 0.0
  %8575 = vmatpush1.msra.mxu0 0.0
  %8576 = vmatprep.subr.mxu0 0.0
  %8577 = vmatpush1.msra.mxu0 0.0
  %8578 = vmatprep.subr.mxu0 0.0
  %8579 = vmatpush1.msra.mxu0 0.0
  %8580 = vmatprep.subr.mxu0 0.0
  %8581 = vmatpush1.msra.mxu0 0.0
  %8582 = vmatprep.subr.mxu0 0.0
  %8583 = vmatpush1.msra.mxu0 0.0
  %8584 = vmatprep.subr.mxu0 0.0
  %8585 = vmatpush1.msra.mxu0 0.0
  %8586 = vmatprep.subr.mxu0 0.0
  %8587 = vmatpush1.msra.mxu0 0.0
  %8588 = vmatprep.subr.mxu0 0.0
  %8589 = vmatpush1.msra.mxu0 0.0
  %8590 = vmatprep.subr.mxu0 0.0
  %8591 = vmatpush1.msra.mxu0 0.0
  %8592 = vmatprep.subr.mxu0 0.0
  %8593 = vmatpush1.msra.mxu0 0.0
  %8594 = vmatprep.subr.mxu0 0.0
  %8595 = vmatpush1.msra.mxu0 0.0
  %8596 = vmatprep.subr.mxu0 0.0
  %8597 = vmatpush1.msra.mxu0 0.0
  %8598 = vmatprep.subr.mxu0 0.0
  %8599 = vmatpush1.msra.mxu0 0.0
  %8600 = vmatprep.subr.mxu0 0.0
  %8601 = vmatpush1.msra.mxu0 0.0
  %8602 = vmatprep.subr.mxu0 0.0
  %8603 = vmatpush1.msra.mxu0 0.0
  %8604 = vmatprep.subr.mxu0 0.0
  %8605 = vmatpush1.msra.mxu0 0.0
  %8606 = vmatprep.mubr.f32.mxu0 0.0
  %8607 = vmatmul.mubr.f32.gmra.mrb[0].mxu0 %v8540
  %v8608 = vpop.f32.mrb[0].mxu0
  %v8609 = vadd.f32 0.0, %v8608
  %v8610 = vpop.f32.mrb[0].mxu0
  %8611 = vdwg.mxu0
  %v8613 = vsel %vm359, %v8536, 0
  %8615 = vmatprep.subr.mxu0 0.0
  %8616 = vmatpush1.msra.mxu0 %v8307
  %8617 = vmatprep.subr.mxu0 0.0
  %8618 = vmatpush1.msra.mxu0 %v8308
  %8619 = vmatprep.subr.mxu0 0.0
  %8620 = vmatpush1.msra.mxu0 %v8309
  %8621 = vmatprep.subr.mxu0 0.0
  %8622 = vmatpush1.msra.mxu0 %v8310
  %8623 = vmatprep.subr.mxu0 0.0
  %8624 = vmatpush1.msra.mxu0 0.0
  %8625 = vmatprep.subr.mxu0 0.0
  %8626 = vmatpush1.msra.mxu0 0.0
  %8627 = vmatprep.subr.mxu0 0.0
  %8628 = vmatpush1.msra.mxu0 0.0
  %8629 = vmatprep.subr.mxu0 0.0
  %8630 = vmatpush1.msra.mxu0 0.0
  %8631 = vmatprep.subr.mxu0 0.0
  %8632 = vmatpush1.msra.mxu0 0.0
  %8633 = vmatprep.subr.mxu0 0.0
  %8634 = vmatpush1.msra.mxu0 0.0
  %8635 = vmatprep.subr.mxu0 0.0
  %8636 = vmatpush1.msra.mxu0 0.0
  %8637 = vmatprep.subr.mxu0 0.0
  %8638 = vmatpush1.msra.mxu0 0.0
  %8639 = vmatprep.subr.mxu0 0.0
  %8640 = vmatpush1.msra.mxu0 0.0
  %8641 = vmatprep.subr.mxu0 0.0
  %8642 = vmatpush1.msra.mxu0 0.0
  %8643 = vmatprep.subr.mxu0 0.0
  %8644 = vmatpush1.msra.mxu0 0.0
  %8645 = vmatprep.subr.mxu0 0.0
  %8646 = vmatpush1.msra.mxu0 0.0
  %8647 = vmatprep.subr.mxu0 0.0
  %8648 = vmatpush1.msra.mxu0 0.0
  %8649 = vmatprep.subr.mxu0 0.0
  %8650 = vmatpush1.msra.mxu0 0.0
  %8651 = vmatprep.subr.mxu0 0.0
  %8652 = vmatpush1.msra.mxu0 0.0
  %8653 = vmatprep.subr.mxu0 0.0
  %8654 = vmatpush1.msra.mxu0 0.0
  %8655 = vmatprep.subr.mxu0 0.0
  %8656 = vmatpush1.msra.mxu0 0.0
  %8657 = vmatprep.subr.mxu0 0.0
  %8658 = vmatpush1.msra.mxu0 0.0
  %8659 = vmatprep.subr.mxu0 0.0
  %8660 = vmatpush1.msra.mxu0 0.0
  %8661 = vmatprep.subr.mxu0 0.0
  %8662 = vmatpush1.msra.mxu0 0.0
  %8663 = vmatprep.subr.mxu0 0.0
  %8664 = vmatpush1.msra.mxu0 0.0
  %8665 = vmatprep.subr.mxu0 0.0
  %8666 = vmatpush1.msra.mxu0 0.0
  %8667 = vmatprep.subr.mxu0 0.0
  %8668 = vmatpush1.msra.mxu0 0.0
  %8669 = vmatprep.subr.mxu0 0.0
  %8670 = vmatpush1.msra.mxu0 0.0
  %8671 = vmatprep.subr.mxu0 0.0
  %8672 = vmatpush1.msra.mxu0 0.0
  %8673 = vmatprep.subr.mxu0 0.0
  %8674 = vmatpush1.msra.mxu0 0.0
  %8675 = vmatprep.subr.mxu0 0.0
  %8676 = vmatpush1.msra.mxu0 0.0
  %8677 = vmatprep.subr.mxu0 0.0
  %8678 = vmatpush1.msra.mxu0 0.0
  %8679 = vmatprep.mubr.f32.mxu0 0.0
  %8680 = vmatmul.mubr.f32.gmra.mrb[0].mxu0 %v8613
  %v8681 = vpop.f32.mrb[0].mxu0
  %v8682 = vadd.f32 %v8609, %v8681
  %v8683 = vpop.f32.mrb[0].mxu0
  %8684 = vdwg.mxu0
  %v8685 = vadd.f32 %v8682, %v8466
  %8686 = vmatprep.subr.mxu0 0.0
  %8687 = vmatpush1.msra.mxu0 %v8685
  %8688 = vmatprep.subr.mxu0 0.0
  %8689 = vmatpush1.msra.mxu0 0.0
  %8690 = vmatprep.subr.mxu0 0.0
  %8691 = vmatpush1.msra.mxu0 0.0
  %8692 = vmatprep.subr.mxu0 0.0
  %8693 = vmatpush1.msra.mxu0 0.0
  %8694 = vmatprep.subr.mxu0 0.0
  %8695 = vmatpush1.msra.mxu0 0.0
  %8696 = vmatprep.subr.mxu0 0.0
  %8697 = vmatpush1.msra.mxu0 0.0
  %8698 = vmatprep.subr.mxu0 0.0
  %8699 = vmatpush1.msra.mxu0 0.0
  %8700 = vmatprep.subr.mxu0 0.0
  %8701 = vmatpush1.msra.mxu0 0.0
  %8702 = vmatprep.subr.mxu0 0.0
  %8703 = vmatpush1.msra.mxu0 0.0
  %8704 = vmatprep.subr.mxu0 0.0
  %8705 = vmatpush1.msra.mxu0 0.0
  %8706 = vmatprep.subr.mxu0 0.0
  %8707 = vmatpush1.msra.mxu0 0.0
  %8708 = vmatprep.subr.mxu0 0.0
  %8709 = vmatpush1.msra.mxu0 0.0
  %8710 = vmatprep.subr.mxu0 0.0
  %8711 = vmatpush1.msra.mxu0 0.0
  %8712 = vmatprep.subr.mxu0 0.0
  %8713 = vmatpush1.msra.mxu0 0.0
  %8714 = vmatprep.subr.mxu0 0.0
  %8715 = vmatpush1.msra.mxu0 0.0
  %8716 = vmatprep.subr.mxu0 0.0
  %8717 = vmatpush1.msra.mxu0 0.0
  %8718 = vmatprep.subr.mxu0 0.0
  %8719 = vmatpush1.msra.mxu0 0.0
  %8720 = vmatprep.subr.mxu0 0.0
  %8721 = vmatpush1.msra.mxu0 0.0
  %8722 = vmatprep.subr.mxu0 0.0
  %8723 = vmatpush1.msra.mxu0 0.0
  %8724 = vmatprep.subr.mxu0 0.0
  %8725 = vmatpush1.msra.mxu0 0.0
  %8726 = vmatprep.subr.mxu0 0.0
  %8727 = vmatpush1.msra.mxu0 0.0
  %8728 = vmatprep.subr.mxu0 0.0
  %8729 = vmatpush1.msra.mxu0 0.0
  %8730 = vmatprep.subr.mxu0 0.0
  %8731 = vmatpush1.msra.mxu0 0.0
  %8732 = vmatprep.subr.mxu0 0.0
  %8733 = vmatpush1.msra.mxu0 0.0
  %8734 = vmatprep.subr.mxu0 0.0
  %8735 = vmatpush1.msra.mxu0 0.0
  %8736 = vmatprep.subr.mxu0 0.0
  %8737 = vmatpush1.msra.mxu0 0.0
  %8738 = vmatprep.subr.mxu0 0.0
  %8739 = vmatpush1.msra.mxu0 0.0
  %8740 = vmatprep.subr.mxu0 0.0
  %8741 = vmatpush1.msra.mxu0 0.0
  %8742 = vmatprep.subr.mxu0 0.0
  %8743 = vmatpush1.msra.mxu0 0.0
  %8744 = vmatprep.subr.mxu0 0.0
  %8745 = vmatpush1.msra.mxu0 0.0
  %8746 = vmatprep.subr.mxu0 0.0
  %8747 = vmatpush1.msra.mxu0 0.0
  %8748 = vmatprep.subr.mxu0 0.0
  %8749 = vmatpush1.msra.mxu0 0.0
  %8750 = vmatprep.mubr.f32.mxu0 0.0
  %8751 = vmatmul.mubr.f32.gmra.mrb[0].mxu0 %v832
  %v8752 = vpop.f32.mrb[0].mxu0
  %v8753 = vadd.f32 0.0, %v8752
  %v8754 = vpop.f32.mrb[0].mxu0
  %8755 = vdwg.mxu0
  %v8756 = vld [vmem:[%s29] sm:$0xff]
  %v8757 = vld [vmem:[%s29 + $0x8] sm:$0xff]
  %v8758 = vld [vmem:[%s29 + $0x10] sm:$0xff]
  %v8759 = vld [vmem:[%s29 + $0x18] sm:$0xff]
  %v8760 = vld [vmem:[%s31] sm:$0xff]
  %v8761 = vld [vmem:[%s31 + $0x8] sm:$0xff]
  %v8762 = vld [vmem:[%s31 + $0x10] sm:$0xff]
  %v8763 = vld [vmem:[%s31 + $0x18] sm:$0xff]
  %v8765 = vsel %vm359, %v8685, 0
  %8767 = vmatprep.subr.mxu0 0.0
  %8768 = vmatpush1.msra.mxu0 %v8760
  %8769 = vmatprep.subr.mxu0 0.0
  %8770 = vmatpush1.msra.mxu0 %v8761
  %8771 = vmatprep.subr.mxu0 0.0
  %8772 = vmatpush1.msra.mxu0 %v8762
  %8773 = vmatprep.subr.mxu0 0.0
  %8774 = vmatpush1.msra.mxu0 %v8763
  %8775 = vmatprep.subr.mxu0 0.0
  %8776 = vmatpush1.msra.mxu0 0.0
  %8777 = vmatprep.subr.mxu0 0.0
  %8778 = vmatpush1.msra.mxu0 0.0
  %8779 = vmatprep.subr.mxu0 0.0
  %8780 = vmatpush1.msra.mxu0 0.0
  %8781 = vmatprep.subr.mxu0 0.0
  %8782 = vmatpush1.msra.mxu0 0.0
  %8783 = vmatprep.subr.mxu0 0.0
  %8784 = vmatpush1.msra.mxu0 0.0
  %8785 = vmatprep.subr.mxu0 0.0
  %8786 = vmatpush1.msra.mxu0 0.0
  %8787 = vmatprep.subr.mxu0 0.0
  %8788 = vmatpush1.msra.mxu0 0.0
  %8789 = vmatprep.subr.mxu0 0.0
  %8790 = vmatpush1.msra.mxu0 0.0
  %8791 = vmatprep.subr.mxu0 0.0
  %8792 = vmatpush1.msra.mxu0 0.0
  %8793 = vmatprep.subr.mxu0 0.0
  %8794 = vmatpush1.msra.mxu0 0.0
  %8795 = vmatprep.subr.mxu0 0.0
  %8796 = vmatpush1.msra.mxu0 0.0
  %8797 = vmatprep.subr.mxu0 0.0
  %8798 = vmatpush1.msra.mxu0 0.0
  %8799 = vmatprep.subr.mxu0 0.0
  %8800 = vmatpush1.msra.mxu0 0.0
  %8801 = vmatprep.subr.mxu0 0.0
  %8802 = vmatpush1.msra.mxu0 0.0
  %8803 = vmatprep.subr.mxu0 0.0
  %8804 = vmatpush1.msra.mxu0 0.0
  %8805 = vmatprep.subr.mxu0 0.0
  %8806 = vmatpush1.msra.mxu0 0.0
  %8807 = vmatprep.subr.mxu0 0.0
  %8808 = vmatpush1.msra.mxu0 0.0
  %8809 = vmatprep.subr.mxu0 0.0
  %8810 = vmatpush1.msra.mxu0 0.0
  %8811 = vmatprep.subr.mxu0 0.0
  %8812 = vmatpush1.msra.mxu0 0.0
  %8813 = vmatprep.subr.mxu0 0.0
  %8814 = vmatpush1.msra.mxu0 0.0
  %8815 = vmatprep.subr.mxu0 0.0
  %8816 = vmatpush1.msra.mxu0 0.0
  %8817 = vmatprep.subr.mxu0 0.0
  %8818 = vmatpush1.msra.mxu0 0.0
  %8819 = vmatprep.subr.mxu0 0.0
  %8820 = vmatpush1.msra.mxu0 0.0
  %8821 = vmatprep.subr.mxu0 0.0
  %8822 = vmatpush1.msra.mxu0 0.0
  %8823 = vmatprep.subr.mxu0 0.0
  %8824 = vmatpush1.msra.mxu0 0.0
  %8825 = vmatprep.subr.mxu0 0.0
  %8826 = vmatpush1.msra.mxu0 0.0
  %8827 = vmatprep.subr.mxu0 0.0
  %8828 = vmatpush1.msra.mxu0 0.0
  %8829 = vmatprep.subr.mxu0 0.0
  %8830 = vmatpush1.msra.mxu0 0.0
  %8831 = vmatprep.mubr.f32.mxu0 0.0
  %8832 = vmatmul.mubr.f32.gmra.mrb[0].mxu0 %v8765
  %v8833 = vpop.f32.mrb[0].mxu0
  %v8834 = vadd.f32 0.0, %v8833
  %v8835 = vpop.f32.mrb[0].mxu0
  %8836 = vdwg.mxu0
  %v8838 = vsel %vm359, %v8753, 0
  %8840 = vmatprep.subr.mxu0 0.0
  %8841 = vmatpush1.msra.mxu0 %v8756
  %8842 = vmatprep.subr.mxu0 0.0
  %8843 = vmatpush1.msra.mxu0 %v8757
  %8844 = vmatprep.subr.mxu0 0.0
  %8845 = vmatpush1.msra.mxu0 %v8758
  %8846 = vmatprep.subr.mxu0 0.0
  %8847 = vmatpush1.msra.mxu0 %v8759
  %8848 = vmatprep.subr.mxu0 0.0
  %8849 = vmatpush1.msra.mxu0 0.0
  %8850 = vmatprep.subr.mxu0 0.0
  %8851 = vmatpush1.msra.mxu0 0.0
  %8852 = vmatprep.subr.mxu0 0.0
  %8853 = vmatpush1.msra.mxu0 0.0
  %8854 = vmatprep.subr.mxu0 0.0
  %8855 = vmatpush1.msra.mxu0 0.0
  %8856 = vmatprep.subr.mxu0 0.0
  %8857 = vmatpush1.msra.mxu0 0.0
  %8858 = vmatprep.subr.mxu0 0.0
  %8859 = vmatpush1.msra.mxu0 0.0
  %8860 = vmatprep.subr.mxu0 0.0
  %8861 = vmatpush1.msra.mxu0 0.0
  %8862 = vmatprep.subr.mxu0 0.0
  %8863 = vmatpush1.msra.mxu0 0.0
  %8864 = vmatprep.subr.mxu0 0.0
  %8865 = vmatpush1.msra.mxu0 0.0
  %8866 = vmatprep.subr.mxu0 0.0
  %8867 = vmatpush1.msra.mxu0 0.0
  %8868 = vmatprep.subr.mxu0 0.0
  %8869 = vmatpush1.msra.mxu0 0.0
  %8870 = vmatprep.subr.mxu0 0.0
  %8871 = vmatpush1.msra.mxu0 0.0
  %8872 = vmatprep.subr.mxu0 0.0
  %8873 = vmatpush1.msra.mxu0 0.0
  %8874 = vmatprep.subr.mxu0 0.0
  %8875 = vmatpush1.msra.mxu0 0.0
  %8876 = vmatprep.subr.mxu0 0.0
  %8877 = vmatpush1.msra.mxu0 0.0
  %8878 = vmatprep.subr.mxu0 0.0
  %8879 = vmatpush1.msra.mxu0 0.0
  %8880 = vmatprep.subr.mxu0 0.0
  %8881 = vmatpush1.msra.mxu0 0.0
  %8882 = vmatprep.subr.mxu0 0.0
  %8883 = vmatpush1.msra.mxu0 0.0
  %8884 = vmatprep.subr.mxu0 0.0
  %8885 = vmatpush1.msra.mxu0 0.0
  %8886 = vmatprep.subr.mxu0 0.0
  %8887 = vmatpush1.msra.mxu0 0.0
  %8888 = vmatprep.subr.mxu0 0.0
  %8889 = vmatpush1.msra.mxu0 0.0
  %8890 = vmatprep.subr.mxu0 0.0
  %8891 = vmatpush1.msra.mxu0 0.0
  %8892 = vmatprep.subr.mxu0 0.0
  %8893 = vmatpush1.msra.mxu0 0.0
  %8894 = vmatprep.subr.mxu0 0.0
  %8895 = vmatpush1.msra.mxu0 0.0
  %8896 = vmatprep.subr.mxu0 0.0
  %8897 = vmatpush1.msra.mxu0 0.0
  %8898 = vmatprep.subr.mxu0 0.0
  %8899 = vmatpush1.msra.mxu0 0.0
  %8900 = vmatprep.subr.mxu0 0.0
  %8901 = vmatpush1.msra.mxu0 0.0
  %8902 = vmatprep.subr.mxu0 0.0
  %8903 = vmatpush1.msra.mxu0 0.0
  %8904 = vmatprep.mubr.f32.mxu0 0.0
  %8905 = vmatmul.mubr.f32.gmra.mrb[0].mxu0 %v8838
  %v8906 = vpop.f32.mrb[0].mxu0
  %v8907 = vadd.f32 %v8834, %v8906
  %v8908 = vpop.f32.mrb[0].mxu0
  %8909 = vdwg.mxu0
  %v8910 = vld [vmem:[%s33] sm:$0x1]
  %v8912 = vlaneseq
  %v8913 = vshrl.u32 %v8912, 7
  %v8914 = vsub.s32 0, %v8913
  %v8915 = vrot.slane %v8910, %v8914
  %v8917 = vadd.f32 %v8907, %v8915
  %vm8918 = vcmask 31744
  %8919 = vst.msk [vmem:[%s61] sm:$0xff] %vm8918, %v8917
  // Predicated region
  $region122: #{year_gnn_forward.1} parent=0 // pred_check
    _
  $region123: #{year_gnn_forward.1} parent=0 // pred_check_branch
    %8921 = sbr.rel (0) target = $region125
  $region124: #{year_gnn_forward.1} parent=0 // pred_region
    _
  $region125: #{year_gnn_forward.1} parent=0 // pred_fallthru
    _
  // Predicated region
  $region126: #{year_gnn_forward.1} parent=0 // pred_check
    _
  $region127: #{year_gnn_forward.1} parent=0 // pred_check_branch
    %8923 = sbr.rel (0) target = $region129
  $region128: #{year_gnn_forward.1} parent=0 // pred_region
    _
  $region129: #{year_gnn_forward.1} parent=0 // pred_fallthru
    _

</llo_original>
